<compile_context>
chip_gen: v7x
topology: tpu7x:2x2x1
jax: 0.10.0
libtpu: 0.0.40
codegen_flags: <defaults>
</compile_context>

<pallas_src>
import functools

import jax
import jax.numpy as jnp
import numpy as np
from jax.experimental import pallas as pl
from jax.experimental.pallas import tpu as pltpu


_LAYER_DEFS = (
    # (param name, kernel size, padding, pool (ph, pw) or None)
    ("c0", 3, 1, (2, 2)),
    ("c1", 3, 1, (2, 2)),
    ("c2", 3, 1, None),
    ("c3", 3, 1, (2, 1)),
    ("c4", 3, 1, None),    # conv (no bias) + BatchNorm folded into scale/bias
    ("c5", 3, 1, (2, 1)),  # conv (no bias) + BatchNorm folded into scale/bias
    ("c6", 2, 0, None),
)


def _maxpool(a, ph, pw):
    """Floor-mode max pool of an (H, W, C) value held in vregs/VMEM."""
    H, W, C = a.shape
    Ho, Wo = H // ph, W // pw
    a = a[:Ho * ph, :Wo * pw, :]
    if ph > 1:
        a = jnp.max(a.reshape(Ho, ph, Wo * pw, C), axis=1)
    if pw > 1:
        a = jnp.max(a.reshape(Ho, Wo, pw, C), axis=2)
    return a


# -----------------------------------------------------------------------------
# Fused Pallas kernel (whole network, one batch element per grid step)
# -----------------------------------------------------------------------------
def _vgg_fused_kernel(x_ref, *refs, cfgs):
    """Whole VGG feature extractor for one batch element.

    refs layout:
      [w_0, b_0, ..., w_{L-1}, b_{L-1},  o_ref,  pbuf_0 .. pbuf_{L-1},  patch]
        w_l   : (KH*KW*Cin, Cout) im2col-packed, scale-folded, bf16 weights
        b_l   : (1, Cout) f32 bias (plain conv bias or folded BN bias)
        pbuf_l: (Hin+2*pad, Win+2*pad, Cin) f32 VMEM scratch (padded input)
        patch : (max Ho*Wo, max KH*KW*Cin) f32 shared im2col scratch
    """
    L = len(cfgs)
    o_ref = refs[2 * L]
    pbufs = refs[2 * L + 1: 3 * L + 1]
    patch = refs[3 * L + 1]

    def write_padded(cfg, pb, val):
        # Zero ONLY the halo ring (interior is fully overwritten below).
        # Done every grid step: under "parallel" each core has private scratch.
        pad, hin, win, cin = cfg["pad"], cfg["Hin"], cfg["Win"], cfg["Cin"]
        hp, wp = hin + 2 * pad, win + 2 * pad
        if pad > 0:
            zrow = jnp.zeros((pad, wp, cin), jnp.float32)
            pb[0:pad, :, :] = zrow
            pb[hp - pad:hp, :, :] = zrow
            zcol = jnp.zeros((hp, pad, cin), jnp.float32)
            pb[:, 0:pad, :] = zcol
            pb[:, wp - pad:wp, :] = zcol
        pb[pad:pad + hin, pad:pad + win, :] = val

    # Stage the network input into layer 0's padded scratch interior.
    write_padded(cfgs[0], pbufs[0], x_ref[0])

    for l, cfg in enumerate(cfgs):
        w_ref, b_ref = refs[2 * l], refs[2 * l + 1]
        pb = pbufs[l]
        KH, KW = cfg["KH"], cfg["KW"]
        Ho, Wo, Cin, Cout = cfg["Ho"], cfg["Wo"], cfg["Cin"], cfg["Cout"]
        M, K = Ho * Wo, KH * KW * Cin

        # im2col patch assembled once in shared VMEM scratch (no lane-narrow
        # concat of traced chunks): column block (kh*KW + kw)*Cin matches the
        # wrapper's weight packing order.
        for kh in range(KH):
            for kw in range(KW):
                col = (kh * KW + kw) * Cin
                patch[0:M, col:col + Cin] = (
                    pb[kh:kh + Ho, kw:kw + Wo, :].reshape(M, Cin))

        # Single MXU dot per layer: bf16 operands, f32 accumulation.
        acc = jnp.dot(patch[0:M, 0:K].astype(jnp.bfloat16), w_ref[...],
                      preferred_element_type=jnp.float32)

        # Scale already folded into the weights -> bias + ReLU only, then the
        # fused max-pool while the tile is still in vregs/VMEM.
        y = jnp.maximum(acc + b_ref[...], 0.0).reshape(Ho, Wo, Cout)
        if cfg["pool"] is not None:
            y = _maxpool(y, *cfg["pool"])

        # Write straight into the consumer: the next layer's padded-scratch
        # interior, or the kernel output for the last layer.
        if l + 1 < L:
            write_padded(cfgs[l + 1], pbufs[l + 1], y)
        else:
            o_ref[0] = y


# -----------------------------------------------------------------------------
# Wrapper: one pallas_call for the whole network
# -----------------------------------------------------------------------------
def vgg_feature_extractor(x_nchw, p):
    """NCHW in -> NCHW out; whole network in one fused Pallas call."""
    x = jnp.transpose(x_nchw, (0, 2, 3, 1)).astype(jnp.float32)  # NHWC
    N, H, W, C = x.shape

    cfgs, scratch, arrays = [], [], [x]
    in_specs = [pl.BlockSpec((1, H, W, C), lambda n: (n, 0, 0, 0))]

    h, w, c = H, W, C
    max_m, max_k = 0, 0
    for name, k, pad, pool in _LAYER_DEFS:
        wgt = p[name + "_w"].astype(jnp.float32)       # HWIO
        KH, KW, cin, cout = wgt.shape
        assert (KH, KW, cin) == (k, k, c)
        hp, wp = h + 2 * pad, w + 2 * pad
        ho, wo = hp - KH + 1, wp - KW + 1
        cfgs.append(dict(KH=KH, KW=KW, pad=pad, Hin=h, Win=w, Cin=cin,
                         Ho=ho, Wo=wo, Cout=cout, pool=pool))
        scratch.append(pltpu.VMEM((hp, wp, cin), jnp.float32))
        max_m, max_k = max(max_m, ho * wo), max(max_k, KH * KW * cin)

        # Fold per-channel scale (1.0 / BN gamma/sqrt(var+eps)) into the
        # im2col-packed weights in f32, then cast once to bf16 for the MXU.
        scale = p[name + "_scale"].astype(jnp.float32)
        w_packed = (wgt * scale[None, None, None, :]
                    ).reshape(KH * KW * cin, cout).astype(jnp.bfloat16)
        bias = p[name + "_bias"].reshape(1, cout).astype(jnp.float32)
        arrays += [w_packed, bias]
        in_specs += [
            # NOTE: at real CRNN widths add pipeline_mode=pl.Buffered(1) here
            # (grid-constant operands) and raise vmem_limit_bytes.
            pl.BlockSpec((KH * KW * cin, cout), lambda n: (0, 0)),
            pl.BlockSpec((1, cout), lambda n: (0, 0)),
        ]
        if pool is not None:
            ho, wo = ho // pool[0], wo // pool[1]
        h, w, c = ho, wo, cout

    # Shared im2col patch scratch, sized to the largest layer.
    scratch.append(pltpu.VMEM((max_m, max_k), jnp.float32))

    kernel = functools.partial(_vgg_fused_kernel, cfgs=tuple(cfgs))
    y = pl.pallas_call(
        kernel,
        out_shape=jax.ShapeDtypeStruct((N, h, w, c), jnp.float32),
        grid=(N,),
        in_specs=in_specs,
        out_specs=pl.BlockSpec((1, h, w, c), lambda n: (n, 0, 0, 0)),
        scratch_shapes=scratch,
        compiler_params=pltpu.CompilerParams(dimension_semantics=("parallel",)),
    )(*arrays)
    return jnp.transpose(y, (0, 3, 1, 2))  # back to NCHW


# -----------------------------------------------------------------------------
# Parameter construction (deterministic, synthetic — no checkpoint loading)
# -----------------------------------------------------------------------------
def make_params(key, input_channel, output_channel):
    oc = [output_channel // 8, output_channel // 4, output_channel // 2, output_channel]
    eps = 1e-5
    ks = jax.random.split(key, 32)
    ki = iter(range(32))

    def w_init(shape):
        return 0.1 * jax.random.normal(ks[next(ki)], shape, jnp.float32)

    p = {}
    conv_defs = [
        ("c0", 3, input_channel, oc[0]),
        ("c1", 3, oc[0], oc[1]),
        ("c2", 3, oc[1], oc[2]),
        ("c3", 3, oc[2], oc[2]),
        ("c4", 3, oc[2], oc[3]),   # no bias, BN
        ("c5", 3, oc[3], oc[3]),   # no bias, BN
        ("c6", 2, oc[3], oc[3]),
    ]
    for name, k, cin, cout in conv_defs:
        p[name + "_w"] = w_init((k, k, cin, cout))          # HWIO
    for name in ("c0", "c1", "c2", "c3", "c6"):
        cout = p[name + "_w"].shape[-1]
        p[name + "_scale"] = jnp.ones((cout,), jnp.float32)
        p[name + "_bias"] = 0.05 * jax.random.normal(ks[next(ki)], (cout,), jnp.float32)
    # Fold BatchNorm (eval mode): scale = g/sqrt(var+eps), bias = b - mean*scale
    for name in ("c4", "c5"):
        cout = p[name + "_w"].shape[-1]
        gamma = 1.0 + 0.1 * jax.random.normal(ks[next(ki)], (cout,), jnp.float32)
        beta = 0.05 * jax.random.normal(ks[next(ki)], (cout,), jnp.float32)
        mean = 0.1 * jax.random.normal(ks[next(ki)], (cout,), jnp.float32)
        var = 0.5 + jnp.abs(jax.random.normal(ks[next(ki)], (cout,), jnp.float32))
        scale = gamma / jnp.sqrt(var + eps)
        p[name + "_scale"] = scale
        p[name + "_bias"] = beta - mean * scale
    return p


# -----------------------------------------------------------------------------
# Pure-JAX references (for validation)
#   mxu_dtype=bf16 reproduces the kernel's MXU operand rounding exactly
#   (f32 accumulation), mxu_dtype=f32 is the full-precision module reference.
# -----------------------------------------------------------------------------
def ref_forward(x_nchw, p, mxu_dtype=jnp.float32):
    act = jnp.transpose(x_nchw, (0, 2, 3, 1)).astype(jnp.float32)
    for name, k, pad, pool in _LAYER_DEFS:
        wgt = p[name + "_w"].astype(jnp.float32)
        scale = p[name + "_scale"].astype(jnp.float32)
        bias = p[name + "_bias"].astype(jnp.float32)
        wf = (wgt * scale[None, None, None, :]).astype(mxu_dtype)
        y = jax.lax.conv_general_dilated(
            act.astype(mxu_dtype), wf, (1, 1), [(pad, pad), (pad, pad)],
            dimension_numbers=("NHWC", "HWIO", "NHWC"),
            preferred_element_type=jnp.float32)
        act = jax.nn.relu(y + bias.reshape(1, 1, 1, -1))
        if pool is not None:
            act = jax.lax.reduce_window(act, -jnp.inf, jax.lax.max,
                                        (1, pool[0], pool[1], 1),
                                        (1, pool[0], pool[1], 1), "VALID")
    return jnp.transpose(act, (0, 3, 1, 2))


# -----------------------------------------------------------------------------
if __name__ == "__main__":
    key = jax.random.PRNGKey(0)
    kx, kp = jax.random.split(key)

    # Small shapes consistent with the module: batch=2, input_channel=4,
    # H=32, W=16, output_channel=32 -> channels [4, 8, 16, 32].
    INPUT_CHANNEL, OUTPUT_CHANNEL = 4, 32
    x = jax.random.normal(kx, (2, INPUT_CHANNEL, 32, 16), jnp.float32)  # NCHW
    params = make_params(kp, INPUT_CHANNEL, OUTPUT_CHANNEL)

    fwd = jax.jit(vgg_feature_extractor)
    out = jax.block_until_ready(fwd(x, params))
    assert out.shape == (2, OUTPUT_CHANNEL, 1, 3), out.shape

    # 1) Tight check against a reference with identical bf16 MXU operand
    #    rounding (verifies im2col/padding/pooling/BN-fold structure exactly).
    ref_b16 = jax.block_until_ready(ref_forward(x, params, mxu_dtype=jnp.bfloat16))
    np.testing.assert_allclose(np.asarray(out), np.asarray(ref_b16),
                               rtol=1e-3, atol=1e-3)

    # 2) Loose check against the full-f32 module reference (bounds the bf16
    #    MXU quantization noise introduced per the perf review).
    ref_f32 = jax.block_until_ready(ref_forward(x, params, mxu_dtype=jnp.float32))
    np.testing.assert_allclose(np.asarray(out), np.asarray(ref_f32),
                               rtol=5e-2, atol=5e-2)

    print("KERNEL_OK")
</pallas_src>

<mosaic_0001>
module attributes {stable_mosaic.version = 11 : i64} {
  func.func @_vgg_fused_kernel(%arg0: i32, %arg1: memref<1x32x16x4xf32, #tpu.memory_space<vmem>>, %arg2: memref<36x4xbf16, #tpu.memory_space<vmem>>, %arg3: memref<1x4xf32, #tpu.memory_space<vmem>>, %arg4: memref<36x8xbf16, #tpu.memory_space<vmem>>, %arg5: memref<1x8xf32, #tpu.memory_space<vmem>>, %arg6: memref<72x16xbf16, #tpu.memory_space<vmem>>, %arg7: memref<1x16xf32, #tpu.memory_space<vmem>>, %arg8: memref<144x16xbf16, #tpu.memory_space<vmem>>, %arg9: memref<1x16xf32, #tpu.memory_space<vmem>>, %arg10: memref<144x32xbf16, #tpu.memory_space<vmem>>, %arg11: memref<1x32xf32, #tpu.memory_space<vmem>>, %arg12: memref<288x32xbf16, #tpu.memory_space<vmem>>, %arg13: memref<1x32xf32, #tpu.memory_space<vmem>>, %arg14: memref<128x32xbf16, #tpu.memory_space<vmem>>, %arg15: memref<1x32xf32, #tpu.memory_space<vmem>>, %arg16: memref<1x1x3x32xf32, #tpu.memory_space<vmem>>, %arg17: memref<34x18x4xf32, #tpu.memory_space<vmem>>, %arg18: memref<18x10x4xf32, #tpu.memory_space<vmem>>, %arg19: memref<10x6x8xf32, #tpu.memory_space<vmem>>, %arg20: memref<10x6x16xf32, #tpu.memory_space<vmem>>, %arg21: memref<6x6x16xf32, #tpu.memory_space<vmem>>, %arg22: memref<6x6x32xf32, #tpu.memory_space<vmem>>, %arg23: memref<2x4x32xf32, #tpu.memory_space<vmem>>, %arg24: memref<512x288xf32, #tpu.memory_space<vmem>>) attributes {dimension_semantics = [#tpu.dimension_semantics<parallel>], iteration_bounds = array<i64: 2>, scalar_prefetch = 0 : i64, scratch_operands = 8 : i64, tpu.core_type = #tpu.core_type<tc>, window_params = [{transform_indices = @transform_0, window_bounds = array<i64: 1, 32, 16, 4>}, {pipeline_mode = #tpu.pipeline_mode<synchronous>, transform_indices = @transform_1, window_bounds = array<i64: 36, 4>}, {pipeline_mode = #tpu.pipeline_mode<synchronous>, transform_indices = @transform_2, window_bounds = array<i64: 1, 4>}, {pipeline_mode = #tpu.pipeline_mode<synchronous>, transform_indices = @transform_3, window_bounds = array<i64: 36, 8>}, {pipeline_mode = #tpu.pipeline_mode<synchronous>, transform_indices = @transform_4, window_bounds = array<i64: 1, 8>}, {pipeline_mode = #tpu.pipeline_mode<synchronous>, transform_indices = @transform_5, window_bounds = array<i64: 72, 16>}, {pipeline_mode = #tpu.pipeline_mode<synchronous>, transform_indices = @transform_6, window_bounds = array<i64: 1, 16>}, {pipeline_mode = #tpu.pipeline_mode<synchronous>, transform_indices = @transform_7, window_bounds = array<i64: 144, 16>}, {pipeline_mode = #tpu.pipeline_mode<synchronous>, transform_indices = @transform_8, window_bounds = array<i64: 1, 16>}, {pipeline_mode = #tpu.pipeline_mode<synchronous>, transform_indices = @transform_9, window_bounds = array<i64: 144, 32>}, {pipeline_mode = #tpu.pipeline_mode<synchronous>, transform_indices = @transform_10, window_bounds = array<i64: 1, 32>}, {pipeline_mode = #tpu.pipeline_mode<synchronous>, transform_indices = @transform_11, window_bounds = array<i64: 288, 32>}, {pipeline_mode = #tpu.pipeline_mode<synchronous>, transform_indices = @transform_12, window_bounds = array<i64: 1, 32>}, {pipeline_mode = #tpu.pipeline_mode<synchronous>, transform_indices = @transform_13, window_bounds = array<i64: 128, 32>}, {pipeline_mode = #tpu.pipeline_mode<synchronous>, transform_indices = @transform_14, window_bounds = array<i64: 1, 32>}, {transform_indices = @transform_15, window_bounds = array<i64: 1, 1, 3, 32>}]} {
    %c0 = arith.constant 0 : index
    %c0_0 = arith.constant 0 : index
    %c0_1 = arith.constant 0 : index
    %c0_2 = arith.constant 0 : index
    %0 = vector.load %arg1[%c0, %c0_0, %c0_1, %c0_2] : memref<1x32x16x4xf32, #tpu.memory_space<vmem>>, vector<1x32x16x4xf32>
    %1 = vector.shape_cast %0 : vector<1x32x16x4xf32> to vector<32x16x4xf32>
    %cst = arith.constant 0.000000e+00 : f32
    %2 = vector.broadcast %cst : f32 to vector<1x18x4xf32>
    %c0_3 = arith.constant 0 : index
    %c0_4 = arith.constant 0 : index
    %c0_5 = arith.constant 0 : index
    %3 = vector.load %arg17[%c0_3, %c0_4, %c0_5] : memref<34x18x4xf32, #tpu.memory_space<vmem>>, vector<1x18x4xf32>
    tpu.vector_store %arg17[%c0_3, %c0_4, %c0_5], %2 {strides = array<i32>} : memref<34x18x4xf32, #tpu.memory_space<vmem>>, vector<1x18x4xf32>,
    %c33 = arith.constant 33 : index
    %c0_6 = arith.constant 0 : index
    %c0_7 = arith.constant 0 : index
    %4 = vector.load %arg17[%c33, %c0_6, %c0_7] : memref<34x18x4xf32, #tpu.memory_space<vmem>>, vector<1x18x4xf32>
    tpu.vector_store %arg17[%c33, %c0_6, %c0_7], %2 {strides = array<i32>} : memref<34x18x4xf32, #tpu.memory_space<vmem>>, vector<1x18x4xf32>,
    %cst_8 = arith.constant 0.000000e+00 : f32
    %5 = vector.broadcast %cst_8 : f32 to vector<34x1x4xf32>
    %c0_9 = arith.constant 0 : index
    %c0_10 = arith.constant 0 : index
    %c0_11 = arith.constant 0 : index
    %6 = vector.load %arg17[%c0_9, %c0_10, %c0_11] : memref<34x18x4xf32, #tpu.memory_space<vmem>>, vector<34x1x4xf32>
    tpu.vector_store %arg17[%c0_9, %c0_10, %c0_11], %5 {strides = array<i32>} : memref<34x18x4xf32, #tpu.memory_space<vmem>>, vector<34x1x4xf32>,
    %c0_12 = arith.constant 0 : index
    %c17 = arith.constant 17 : index
    %c0_13 = arith.constant 0 : index
    %7 = vector.load %arg17[%c0_12, %c17, %c0_13] : memref<34x18x4xf32, #tpu.memory_space<vmem>>, vector<34x1x4xf32>
    tpu.vector_store %arg17[%c0_12, %c17, %c0_13], %5 {strides = array<i32>} : memref<34x18x4xf32, #tpu.memory_space<vmem>>, vector<34x1x4xf32>,
    %c1 = arith.constant 1 : index
    %c1_14 = arith.constant 1 : index
    %c0_15 = arith.constant 0 : index
    %8 = vector.load %arg17[%c1, %c1_14, %c0_15] : memref<34x18x4xf32, #tpu.memory_space<vmem>>, vector<32x16x4xf32>
    tpu.vector_store %arg17[%c1, %c1_14, %c0_15], %1 {strides = array<i32>} : memref<34x18x4xf32, #tpu.memory_space<vmem>>, vector<32x16x4xf32>,
    %c0_16 = arith.constant 0 : index
    %c0_17 = arith.constant 0 : index
    %c0_18 = arith.constant 0 : index
    %9 = vector.load %arg17[%c0_16, %c0_17, %c0_18] : memref<34x18x4xf32, #tpu.memory_space<vmem>>, vector<32x16x4xf32>
    %10 = vector.shape_cast %9 : vector<32x16x4xf32> to vector<512x4xf32>
    %c0_19 = arith.constant 0 : index
    %c0_20 = arith.constant 0 : index
    %11 = vector.load %arg24[%c0_19, %c0_20] : memref<512x288xf32, #tpu.memory_space<vmem>>, vector<512x4xf32>
    tpu.vector_store %arg24[%c0_19, %c0_20], %10 {strides = array<i32>} : memref<512x288xf32, #tpu.memory_space<vmem>>, vector<512x4xf32>,
    %c0_21 = arith.constant 0 : index
    %c1_22 = arith.constant 1 : index
    %c0_23 = arith.constant 0 : index
    %12 = vector.load %arg17[%c0_21, %c1_22, %c0_23] : memref<34x18x4xf32, #tpu.memory_space<vmem>>, vector<32x16x4xf32>
    %13 = vector.shape_cast %12 : vector<32x16x4xf32> to vector<512x4xf32>
    %c0_24 = arith.constant 0 : index
    %c4 = arith.constant 4 : index
    %14 = vector.load %arg24[%c0_24, %c4] : memref<512x288xf32, #tpu.memory_space<vmem>>, vector<512x4xf32>
    tpu.vector_store %arg24[%c0_24, %c4], %13 {strides = array<i32>} : memref<512x288xf32, #tpu.memory_space<vmem>>, vector<512x4xf32>,
    %c0_25 = arith.constant 0 : index
    %c2 = arith.constant 2 : index
    %c0_26 = arith.constant 0 : index
    %15 = vector.load %arg17[%c0_25, %c2, %c0_26] : memref<34x18x4xf32, #tpu.memory_space<vmem>>, vector<32x16x4xf32>
    %16 = vector.shape_cast %15 : vector<32x16x4xf32> to vector<512x4xf32>
    %c0_27 = arith.constant 0 : index
    %c8 = arith.constant 8 : index
    %17 = vector.load %arg24[%c0_27, %c8] : memref<512x288xf32, #tpu.memory_space<vmem>>, vector<512x4xf32>
    tpu.vector_store %arg24[%c0_27, %c8], %16 {strides = array<i32>} : memref<512x288xf32, #tpu.memory_space<vmem>>, vector<512x4xf32>,
    %c1_28 = arith.constant 1 : index
    %c0_29 = arith.constant 0 : index
    %c0_30 = arith.constant 0 : index
    %18 = vector.load %arg17[%c1_28, %c0_29, %c0_30] : memref<34x18x4xf32, #tpu.memory_space<vmem>>, vector<32x16x4xf32>
    %19 = vector.shape_cast %18 : vector<32x16x4xf32> to vector<512x4xf32>
    %c0_31 = arith.constant 0 : index
    %c12 = arith.constant 12 : index
    %20 = vector.load %arg24[%c0_31, %c12] : memref<512x288xf32, #tpu.memory_space<vmem>>, vector<512x4xf32>
    tpu.vector_store %arg24[%c0_31, %c12], %19 {strides = array<i32>} : memref<512x288xf32, #tpu.memory_space<vmem>>, vector<512x4xf32>,
    %c1_32 = arith.constant 1 : index
    %c1_33 = arith.constant 1 : index
    %c0_34 = arith.constant 0 : index
    %21 = vector.load %arg17[%c1_32, %c1_33, %c0_34] : memref<34x18x4xf32, #tpu.memory_space<vmem>>, vector<32x16x4xf32>
    %22 = vector.shape_cast %21 : vector<32x16x4xf32> to vector<512x4xf32>
    %c0_35 = arith.constant 0 : index
    %c16 = arith.constant 16 : index
    %23 = vector.load %arg24[%c0_35, %c16] : memref<512x288xf32, #tpu.memory_space<vmem>>, vector<512x4xf32>
    tpu.vector_store %arg24[%c0_35, %c16], %22 {strides = array<i32>} : memref<512x288xf32, #tpu.memory_space<vmem>>, vector<512x4xf32>,
    %c1_36 = arith.constant 1 : index
    %c2_37 = arith.constant 2 : index
    %c0_38 = arith.constant 0 : index
    %24 = vector.load %arg17[%c1_36, %c2_37, %c0_38] : memref<34x18x4xf32, #tpu.memory_space<vmem>>, vector<32x16x4xf32>
    %25 = vector.shape_cast %24 : vector<32x16x4xf32> to vector<512x4xf32>
    %c0_39 = arith.constant 0 : index
    %c20 = arith.constant 20 : index
    %26 = vector.load %arg24[%c0_39, %c20] : memref<512x288xf32, #tpu.memory_space<vmem>>, vector<512x4xf32>
    tpu.vector_store %arg24[%c0_39, %c20], %25 {strides = array<i32>} : memref<512x288xf32, #tpu.memory_space<vmem>>, vector<512x4xf32>,
    %c2_40 = arith.constant 2 : index
    %c0_41 = arith.constant 0 : index
    %c0_42 = arith.constant 0 : index
    %27 = vector.load %arg17[%c2_40, %c0_41, %c0_42] : memref<34x18x4xf32, #tpu.memory_space<vmem>>, vector<32x16x4xf32>
    %28 = vector.shape_cast %27 : vector<32x16x4xf32> to vector<512x4xf32>
    %c0_43 = arith.constant 0 : index
    %c24 = arith.constant 24 : index
    %29 = vector.load %arg24[%c0_43, %c24] : memref<512x288xf32, #tpu.memory_space<vmem>>, vector<512x4xf32>
    tpu.vector_store %arg24[%c0_43, %c24], %28 {strides = array<i32>} : memref<512x288xf32, #tpu.memory_space<vmem>>, vector<512x4xf32>,
    %c2_44 = arith.constant 2 : index
    %c1_45 = arith.constant 1 : index
    %c0_46 = arith.constant 0 : index
    %30 = vector.load %arg17[%c2_44, %c1_45, %c0_46] : memref<34x18x4xf32, #tpu.memory_space<vmem>>, vector<32x16x4xf32>
    %31 = vector.shape_cast %30 : vector<32x16x4xf32> to vector<512x4xf32>
    %c0_47 = arith.constant 0 : index
    %c28 = arith.constant 28 : index
    %32 = vector.load %arg24[%c0_47, %c28] : memref<512x288xf32, #tpu.memory_space<vmem>>, vector<512x4xf32>
    tpu.vector_store %arg24[%c0_47, %c28], %31 {strides = array<i32>} : memref<512x288xf32, #tpu.memory_space<vmem>>, vector<512x4xf32>,
    %c2_48 = arith.constant 2 : index
    %c2_49 = arith.constant 2 : index
    %c0_50 = arith.constant 0 : index
    %33 = vector.load %arg17[%c2_48, %c2_49, %c0_50] : memref<34x18x4xf32, #tpu.memory_space<vmem>>, vector<32x16x4xf32>
    %34 = vector.shape_cast %33 : vector<32x16x4xf32> to vector<512x4xf32>
    %c0_51 = arith.constant 0 : index
    %c32 = arith.constant 32 : index
    %35 = vector.load %arg24[%c0_51, %c32] : memref<512x288xf32, #tpu.memory_space<vmem>>, vector<512x4xf32>
    tpu.vector_store %arg24[%c0_51, %c32], %34 {strides = array<i32>} : memref<512x288xf32, #tpu.memory_space<vmem>>, vector<512x4xf32>,
    %c0_52 = arith.constant 0 : index
    %c0_53 = arith.constant 0 : index
    %36 = vector.load %arg24[%c0_52, %c0_53] : memref<512x288xf32, #tpu.memory_space<vmem>>, vector<512x36xf32>
    %37 = arith.truncf %36 : vector<512x36xf32> to vector<512x36xbf16>
    %c0_54 = arith.constant 0 : index
    %c0_55 = arith.constant 0 : index
    %38 = vector.load %arg2[%c0_54, %c0_55] : memref<36x4xbf16, #tpu.memory_space<vmem>>, vector<36x4xbf16>
    %cst_56 = arith.constant dense<0.000000e+00> : vector<512x4xf32>
    %39 = tpu.matmul %37, %38, %cst_56 {dimension_numbers = #tpu.dot_dimension_numbers<[1], [0], [0], [1], [0, 0, 1, 1], [], []>} : vector<512x36xbf16>, vector<36x4xbf16>, vector<512x4xf32> -> vector<512x4xf32>
    %c0_57 = arith.constant 0 : index
    %c0_58 = arith.constant 0 : index
    %40 = vector.load %arg3[%c0_57, %c0_58] : memref<1x4xf32, #tpu.memory_space<vmem>>, vector<1x4xf32>
    %41 = vector.broadcast %40 : vector<1x4xf32> to vector<512x4xf32>
    %42 = arith.addf %39, %41 : vector<512x4xf32>
    %cst_59 = arith.constant 0.000000e+00 : f32
    %43 = vector.broadcast %cst_59 : f32 to vector<512x4xf32>
    %44 = arith.maximumf %42, %43 : vector<512x4xf32>
    %45 = vector.shape_cast %44 : vector<512x4xf32> to vector<32x16x4xf32>
    %46 = vector.shape_cast %45 : vector<32x16x4xf32> to vector<16x2x16x4xf32>
    %cst_60 = arith.constant dense<0xFF800000> : vector<16x16x4xf32>
    %47 = vector.multi_reduction <maximumf>, %46, %cst_60 [1] : vector<16x2x16x4xf32> to vector<16x16x4xf32>
    %48 = vector.shape_cast %47 : vector<16x16x4xf32> to vector<16x8x2x4xf32>
    %cst_61 = arith.constant dense<0xFF800000> : vector<16x8x4xf32>
    %49 = vector.multi_reduction <maximumf>, %48, %cst_61 [2] : vector<16x8x2x4xf32> to vector<16x8x4xf32>
    %cst_62 = arith.constant 0.000000e+00 : f32
    %50 = vector.broadcast %cst_62 : f32 to vector<1x10x4xf32>
    %c0_63 = arith.constant 0 : index
    %c0_64 = arith.constant 0 : index
    %c0_65 = arith.constant 0 : index
    %51 = vector.load %arg18[%c0_63, %c0_64, %c0_65] : memref<18x10x4xf32, #tpu.memory_space<vmem>>, vector<1x10x4xf32>
    tpu.vector_store %arg18[%c0_63, %c0_64, %c0_65], %50 {strides = array<i32>} : memref<18x10x4xf32, #tpu.memory_space<vmem>>, vector<1x10x4xf32>,
    %c17_66 = arith.constant 17 : index
    %c0_67 = arith.constant 0 : index
    %c0_68 = arith.constant 0 : index
    %52 = vector.load %arg18[%c17_66, %c0_67, %c0_68] : memref<18x10x4xf32, #tpu.memory_space<vmem>>, vector<1x10x4xf32>
    tpu.vector_store %arg18[%c17_66, %c0_67, %c0_68], %50 {strides = array<i32>} : memref<18x10x4xf32, #tpu.memory_space<vmem>>, vector<1x10x4xf32>,
    %cst_69 = arith.constant 0.000000e+00 : f32
    %53 = vector.broadcast %cst_69 : f32 to vector<18x1x4xf32>
    %c0_70 = arith.constant 0 : index
    %c0_71 = arith.constant 0 : index
    %c0_72 = arith.constant 0 : index
    %54 = vector.load %arg18[%c0_70, %c0_71, %c0_72] : memref<18x10x4xf32, #tpu.memory_space<vmem>>, vector<18x1x4xf32>
    tpu.vector_store %arg18[%c0_70, %c0_71, %c0_72], %53 {strides = array<i32>} : memref<18x10x4xf32, #tpu.memory_space<vmem>>, vector<18x1x4xf32>,
    %c0_73 = arith.constant 0 : index
    %c9 = arith.constant 9 : index
    %c0_74 = arith.constant 0 : index
    %55 = vector.load %arg18[%c0_73, %c9, %c0_74] : memref<18x10x4xf32, #tpu.memory_space<vmem>>, vector<18x1x4xf32>
    tpu.vector_store %arg18[%c0_73, %c9, %c0_74], %53 {strides = array<i32>} : memref<18x10x4xf32, #tpu.memory_space<vmem>>, vector<18x1x4xf32>,
    %c1_75 = arith.constant 1 : index
    %c1_76 = arith.constant 1 : index
    %c0_77 = arith.constant 0 : index
    %56 = vector.load %arg18[%c1_75, %c1_76, %c0_77] : memref<18x10x4xf32, #tpu.memory_space<vmem>>, vector<16x8x4xf32>
    tpu.vector_store %arg18[%c1_75, %c1_76, %c0_77], %49 {strides = array<i32>} : memref<18x10x4xf32, #tpu.memory_space<vmem>>, vector<16x8x4xf32>,
    %c0_78 = arith.constant 0 : index
    %c0_79 = arith.constant 0 : index
    %c0_80 = arith.constant 0 : index
    %57 = vector.load %arg18[%c0_78, %c0_79, %c0_80] : memref<18x10x4xf32, #tpu.memory_space<vmem>>, vector<16x8x4xf32>
    %58 = vector.shape_cast %57 : vector<16x8x4xf32> to vector<128x4xf32>
    %c0_81 = arith.constant 0 : index
    %c0_82 = arith.constant 0 : index
    %59 = vector.load %arg24[%c0_81, %c0_82] : memref<512x288xf32, #tpu.memory_space<vmem>>, vector<128x4xf32>
    tpu.vector_store %arg24[%c0_81, %c0_82], %58 {strides = array<i32>} : memref<512x288xf32, #tpu.memory_space<vmem>>, vector<128x4xf32>,
    %c0_83 = arith.constant 0 : index
    %c1_84 = arith.constant 1 : index
    %c0_85 = arith.constant 0 : index
    %60 = vector.load %arg18[%c0_83, %c1_84, %c0_85] : memref<18x10x4xf32, #tpu.memory_space<vmem>>, vector<16x8x4xf32>
    %61 = vector.shape_cast %60 : vector<16x8x4xf32> to vector<128x4xf32>
    %c0_86 = arith.constant 0 : index
    %c4_87 = arith.constant 4 : index
    %62 = vector.load %arg24[%c0_86, %c4_87] : memref<512x288xf32, #tpu.memory_space<vmem>>, vector<128x4xf32>
    tpu.vector_store %arg24[%c0_86, %c4_87], %61 {strides = array<i32>} : memref<512x288xf32, #tpu.memory_space<vmem>>, vector<128x4xf32>,
    %c0_88 = arith.constant 0 : index
    %c2_89 = arith.constant 2 : index
    %c0_90 = arith.constant 0 : index
    %63 = vector.load %arg18[%c0_88, %c2_89, %c0_90] : memref<18x10x4xf32, #tpu.memory_space<vmem>>, vector<16x8x4xf32>
    %64 = vector.shape_cast %63 : vector<16x8x4xf32> to vector<128x4xf32>
    %c0_91 = arith.constant 0 : index
    %c8_92 = arith.constant 8 : index
    %65 = vector.load %arg24[%c0_91, %c8_92] : memref<512x288xf32, #tpu.memory_space<vmem>>, vector<128x4xf32>
    tpu.vector_store %arg24[%c0_91, %c8_92], %64 {strides = array<i32>} : memref<512x288xf32, #tpu.memory_space<vmem>>, vector<128x4xf32>,
    %c1_93 = arith.constant 1 : index
    %c0_94 = arith.constant 0 : index
    %c0_95 = arith.constant 0 : index
    %66 = vector.load %arg18[%c1_93, %c0_94, %c0_95] : memref<18x10x4xf32, #tpu.memory_space<vmem>>, vector<16x8x4xf32>
    %67 = vector.shape_cast %66 : vector<16x8x4xf32> to vector<128x4xf32>
    %c0_96 = arith.constant 0 : index
    %c12_97 = arith.constant 12 : index
    %68 = vector.load %arg24[%c0_96, %c12_97] : memref<512x288xf32, #tpu.memory_space<vmem>>, vector<128x4xf32>
    tpu.vector_store %arg24[%c0_96, %c12_97], %67 {strides = array<i32>} : memref<512x288xf32, #tpu.memory_space<vmem>>, vector<128x4xf32>,
    %c1_98 = arith.constant 1 : index
    %c1_99 = arith.constant 1 : index
    %c0_100 = arith.constant 0 : index
    %69 = vector.load %arg18[%c1_98, %c1_99, %c0_100] : memref<18x10x4xf32, #tpu.memory_space<vmem>>, vector<16x8x4xf32>
    %70 = vector.shape_cast %69 : vector<16x8x4xf32> to vector<128x4xf32>
    %c0_101 = arith.constant 0 : index
    %c16_102 = arith.constant 16 : index
    %71 = vector.load %arg24[%c0_101, %c16_102] : memref<512x288xf32, #tpu.memory_space<vmem>>, vector<128x4xf32>
    tpu.vector_store %arg24[%c0_101, %c16_102], %70 {strides = array<i32>} : memref<512x288xf32, #tpu.memory_space<vmem>>, vector<128x4xf32>,
    %c1_103 = arith.constant 1 : index
    %c2_104 = arith.constant 2 : index
    %c0_105 = arith.constant 0 : index
    %72 = vector.load %arg18[%c1_103, %c2_104, %c0_105] : memref<18x10x4xf32, #tpu.memory_space<vmem>>, vector<16x8x4xf32>
    %73 = vector.shape_cast %72 : vector<16x8x4xf32> to vector<128x4xf32>
    %c0_106 = arith.constant 0 : index
    %c20_107 = arith.constant 20 : index
    %74 = vector.load %arg24[%c0_106, %c20_107] : memref<512x288xf32, #tpu.memory_space<vmem>>, vector<128x4xf32>
    tpu.vector_store %arg24[%c0_106, %c20_107], %73 {strides = array<i32>} : memref<512x288xf32, #tpu.memory_space<vmem>>, vector<128x4xf32>,
    %c2_108 = arith.constant 2 : index
    %c0_109 = arith.constant 0 : index
    %c0_110 = arith.constant 0 : index
    %75 = vector.load %arg18[%c2_108, %c0_109, %c0_110] : memref<18x10x4xf32, #tpu.memory_space<vmem>>, vector<16x8x4xf32>
    %76 = vector.shape_cast %75 : vector<16x8x4xf32> to vector<128x4xf32>
    %c0_111 = arith.constant 0 : index
    %c24_112 = arith.constant 24 : index
    %77 = vector.load %arg24[%c0_111, %c24_112] : memref<512x288xf32, #tpu.memory_space<vmem>>, vector<128x4xf32>
    tpu.vector_store %arg24[%c0_111, %c24_112], %76 {strides = array<i32>} : memref<512x288xf32, #tpu.memory_space<vmem>>, vector<128x4xf32>,
    %c2_113 = arith.constant 2 : index
    %c1_114 = arith.constant 1 : index
    %c0_115 = arith.constant 0 : index
    %78 = vector.load %arg18[%c2_113, %c1_114, %c0_115] : memref<18x10x4xf32, #tpu.memory_space<vmem>>, vector<16x8x4xf32>
    %79 = vector.shape_cast %78 : vector<16x8x4xf32> to vector<128x4xf32>
    %c0_116 = arith.constant 0 : index
    %c28_117 = arith.constant 28 : index
    %80 = vector.load %arg24[%c0_116, %c28_117] : memref<512x288xf32, #tpu.memory_space<vmem>>, vector<128x4xf32>
    tpu.vector_store %arg24[%c0_116, %c28_117], %79 {strides = array<i32>} : memref<512x288xf32, #tpu.memory_space<vmem>>, vector<128x4xf32>,
    %c2_118 = arith.constant 2 : index
    %c2_119 = arith.constant 2 : index
    %c0_120 = arith.constant 0 : index
    %81 = vector.load %arg18[%c2_118, %c2_119, %c0_120] : memref<18x10x4xf32, #tpu.memory_space<vmem>>, vector<16x8x4xf32>
    %82 = vector.shape_cast %81 : vector<16x8x4xf32> to vector<128x4xf32>
    %c0_121 = arith.constant 0 : index
    %c32_122 = arith.constant 32 : index
    %83 = vector.load %arg24[%c0_121, %c32_122] : memref<512x288xf32, #tpu.memory_space<vmem>>, vector<128x4xf32>
    tpu.vector_store %arg24[%c0_121, %c32_122], %82 {strides = array<i32>} : memref<512x288xf32, #tpu.memory_space<vmem>>, vector<128x4xf32>,
    %c0_123 = arith.constant 0 : index
    %c0_124 = arith.constant 0 : index
    %84 = vector.load %arg24[%c0_123, %c0_124] : memref<512x288xf32, #tpu.memory_space<vmem>>, vector<128x36xf32>
    %85 = arith.truncf %84 : vector<128x36xf32> to vector<128x36xbf16>
    %c0_125 = arith.constant 0 : index
    %c0_126 = arith.constant 0 : index
    %86 = vector.load %arg4[%c0_125, %c0_126] : memref<36x8xbf16, #tpu.memory_space<vmem>>, vector<36x8xbf16>
    %cst_127 = arith.constant dense<0.000000e+00> : vector<128x8xf32>
    %87 = tpu.matmul %85, %86, %cst_127 {dimension_numbers = #tpu.dot_dimension_numbers<[1], [0], [0], [1], [0, 0, 1, 1], [], []>} : vector<128x36xbf16>, vector<36x8xbf16>, vector<128x8xf32> -> vector<128x8xf32>
    %c0_128 = arith.constant 0 : index
    %c0_129 = arith.constant 0 : index
    %88 = vector.load %arg5[%c0_128, %c0_129] : memref<1x8xf32, #tpu.memory_space<vmem>>, vector<1x8xf32>
    %89 = vector.broadcast %88 : vector<1x8xf32> to vector<128x8xf32>
    %90 = arith.addf %87, %89 : vector<128x8xf32>
    %cst_130 = arith.constant 0.000000e+00 : f32
    %91 = vector.broadcast %cst_130 : f32 to vector<128x8xf32>
    %92 = arith.maximumf %90, %91 : vector<128x8xf32>
    %93 = vector.shape_cast %92 : vector<128x8xf32> to vector<16x8x8xf32>
    %94 = vector.shape_cast %93 : vector<16x8x8xf32> to vector<8x2x8x8xf32>
    %cst_131 = arith.constant dense<0xFF800000> : vector<8x8x8xf32>
    %95 = vector.multi_reduction <maximumf>, %94, %cst_131 [1] : vector<8x2x8x8xf32> to vector<8x8x8xf32>
    %96 = vector.shape_cast %95 : vector<8x8x8xf32> to vector<8x4x2x8xf32>
    %cst_132 = arith.constant dense<0xFF800000> : vector<8x4x8xf32>
    %97 = vector.multi_reduction <maximumf>, %96, %cst_132 [2] : vector<8x4x2x8xf32> to vector<8x4x8xf32>
    %cst_133 = arith.constant 0.000000e+00 : f32
    %98 = vector.broadcast %cst_133 : f32 to vector<1x6x8xf32>
    %c0_134 = arith.constant 0 : index
    %c0_135 = arith.constant 0 : index
    %c0_136 = arith.constant 0 : index
    %99 = vector.load %arg19[%c0_134, %c0_135, %c0_136] : memref<10x6x8xf32, #tpu.memory_space<vmem>>, vector<1x6x8xf32>
    tpu.vector_store %arg19[%c0_134, %c0_135, %c0_136], %98 {strides = array<i32>} : memref<10x6x8xf32, #tpu.memory_space<vmem>>, vector<1x6x8xf32>,
    %c9_137 = arith.constant 9 : index
    %c0_138 = arith.constant 0 : index
    %c0_139 = arith.constant 0 : index
    %100 = vector.load %arg19[%c9_137, %c0_138, %c0_139] : memref<10x6x8xf32, #tpu.memory_space<vmem>>, vector<1x6x8xf32>
    tpu.vector_store %arg19[%c9_137, %c0_138, %c0_139], %98 {strides = array<i32>} : memref<10x6x8xf32, #tpu.memory_space<vmem>>, vector<1x6x8xf32>,
    %cst_140 = arith.constant 0.000000e+00 : f32
    %101 = vector.broadcast %cst_140 : f32 to vector<10x1x8xf32>
    %c0_141 = arith.constant 0 : index
    %c0_142 = arith.constant 0 : index
    %c0_143 = arith.constant 0 : index
    %102 = vector.load %arg19[%c0_141, %c0_142, %c0_143] : memref<10x6x8xf32, #tpu.memory_space<vmem>>, vector<10x1x8xf32>
    tpu.vector_store %arg19[%c0_141, %c0_142, %c0_143], %101 {strides = array<i32>} : memref<10x6x8xf32, #tpu.memory_space<vmem>>, vector<10x1x8xf32>,
    %c0_144 = arith.constant 0 : index
    %c5 = arith.constant 5 : index
    %c0_145 = arith.constant 0 : index
    %103 = vector.load %arg19[%c0_144, %c5, %c0_145] : memref<10x6x8xf32, #tpu.memory_space<vmem>>, vector<10x1x8xf32>
    tpu.vector_store %arg19[%c0_144, %c5, %c0_145], %101 {strides = array<i32>} : memref<10x6x8xf32, #tpu.memory_space<vmem>>, vector<10x1x8xf32>,
    %c1_146 = arith.constant 1 : index
    %c1_147 = arith.constant 1 : index
    %c0_148 = arith.constant 0 : index
    %104 = vector.load %arg19[%c1_146, %c1_147, %c0_148] : memref<10x6x8xf32, #tpu.memory_space<vmem>>, vector<8x4x8xf32>
    tpu.vector_store %arg19[%c1_146, %c1_147, %c0_148], %97 {strides = array<i32>} : memref<10x6x8xf32, #tpu.memory_space<vmem>>, vector<8x4x8xf32>,
    %c0_149 = arith.constant 0 : index
    %c0_150 = arith.constant 0 : index
    %c0_151 = arith.constant 0 : index
    %105 = vector.load %arg19[%c0_149, %c0_150, %c0_151] : memref<10x6x8xf32, #tpu.memory_space<vmem>>, vector<8x4x8xf32>
    %106 = vector.shape_cast %105 : vector<8x4x8xf32> to vector<32x8xf32>
    %c0_152 = arith.constant 0 : index
    %c0_153 = arith.constant 0 : index
    %107 = vector.load %arg24[%c0_152, %c0_153] : memref<512x288xf32, #tpu.memory_space<vmem>>, vector<32x8xf32>
    tpu.vector_store %arg24[%c0_152, %c0_153], %106 {strides = array<i32>} : memref<512x288xf32, #tpu.memory_space<vmem>>, vector<32x8xf32>,
    %c0_154 = arith.constant 0 : index
    %c1_155 = arith.constant 1 : index
    %c0_156 = arith.constant 0 : index
    %108 = vector.load %arg19[%c0_154, %c1_155, %c0_156] : memref<10x6x8xf32, #tpu.memory_space<vmem>>, vector<8x4x8xf32>
    %109 = vector.shape_cast %108 : vector<8x4x8xf32> to vector<32x8xf32>
    %c0_157 = arith.constant 0 : index
    %c8_158 = arith.constant 8 : index
    %110 = vector.load %arg24[%c0_157, %c8_158] : memref<512x288xf32, #tpu.memory_space<vmem>>, vector<32x8xf32>
    tpu.vector_store %arg24[%c0_157, %c8_158], %109 {strides = array<i32>} : memref<512x288xf32, #tpu.memory_space<vmem>>, vector<32x8xf32>,
    %c0_159 = arith.constant 0 : index
    %c2_160 = arith.constant 2 : index
    %c0_161 = arith.constant 0 : index
    %111 = vector.load %arg19[%c0_159, %c2_160, %c0_161] : memref<10x6x8xf32, #tpu.memory_space<vmem>>, vector<8x4x8xf32>
    %112 = vector.shape_cast %111 : vector<8x4x8xf32> to vector<32x8xf32>
    %c0_162 = arith.constant 0 : index
    %c16_163 = arith.constant 16 : index
    %113 = vector.load %arg24[%c0_162, %c16_163] : memref<512x288xf32, #tpu.memory_space<vmem>>, vector<32x8xf32>
    tpu.vector_store %arg24[%c0_162, %c16_163], %112 {strides = array<i32>} : memref<512x288xf32, #tpu.memory_space<vmem>>, vector<32x8xf32>,
    %c1_164 = arith.constant 1 : index
    %c0_165 = arith.constant 0 : index
    %c0_166 = arith.constant 0 : index
    %114 = vector.load %arg19[%c1_164, %c0_165, %c0_166] : memref<10x6x8xf32, #tpu.memory_space<vmem>>, vector<8x4x8xf32>
    %115 = vector.shape_cast %114 : vector<8x4x8xf32> to vector<32x8xf32>
    %c0_167 = arith.constant 0 : index
    %c24_168 = arith.constant 24 : index
    %116 = vector.load %arg24[%c0_167, %c24_168] : memref<512x288xf32, #tpu.memory_space<vmem>>, vector<32x8xf32>
    tpu.vector_store %arg24[%c0_167, %c24_168], %115 {strides = array<i32>} : memref<512x288xf32, #tpu.memory_space<vmem>>, vector<32x8xf32>,
    %c1_169 = arith.constant 1 : index
    %c1_170 = arith.constant 1 : index
    %c0_171 = arith.constant 0 : index
    %117 = vector.load %arg19[%c1_169, %c1_170, %c0_171] : memref<10x6x8xf32, #tpu.memory_space<vmem>>, vector<8x4x8xf32>
    %118 = vector.shape_cast %117 : vector<8x4x8xf32> to vector<32x8xf32>
    %c0_172 = arith.constant 0 : index
    %c32_173 = arith.constant 32 : index
    %119 = vector.load %arg24[%c0_172, %c32_173] : memref<512x288xf32, #tpu.memory_space<vmem>>, vector<32x8xf32>
    tpu.vector_store %arg24[%c0_172, %c32_173], %118 {strides = array<i32>} : memref<512x288xf32, #tpu.memory_space<vmem>>, vector<32x8xf32>,
    %c1_174 = arith.constant 1 : index
    %c2_175 = arith.constant 2 : index
    %c0_176 = arith.constant 0 : index
    %120 = vector.load %arg19[%c1_174, %c2_175, %c0_176] : memref<10x6x8xf32, #tpu.memory_space<vmem>>, vector<8x4x8xf32>
    %121 = vector.shape_cast %120 : vector<8x4x8xf32> to vector<32x8xf32>
    %c0_177 = arith.constant 0 : index
    %c40 = arith.constant 40 : index
    %122 = vector.load %arg24[%c0_177, %c40] : memref<512x288xf32, #tpu.memory_space<vmem>>, vector<32x8xf32>
    tpu.vector_store %arg24[%c0_177, %c40], %121 {strides = array<i32>} : memref<512x288xf32, #tpu.memory_space<vmem>>, vector<32x8xf32>,
    %c2_178 = arith.constant 2 : index
    %c0_179 = arith.constant 0 : index
    %c0_180 = arith.constant 0 : index
    %123 = vector.load %arg19[%c2_178, %c0_179, %c0_180] : memref<10x6x8xf32, #tpu.memory_space<vmem>>, vector<8x4x8xf32>
    %124 = vector.shape_cast %123 : vector<8x4x8xf32> to vector<32x8xf32>
    %c0_181 = arith.constant 0 : index
    %c48 = arith.constant 48 : index
    %125 = vector.load %arg24[%c0_181, %c48] : memref<512x288xf32, #tpu.memory_space<vmem>>, vector<32x8xf32>
    tpu.vector_store %arg24[%c0_181, %c48], %124 {strides = array<i32>} : memref<512x288xf32, #tpu.memory_space<vmem>>, vector<32x8xf32>,
    %c2_182 = arith.constant 2 : index
    %c1_183 = arith.constant 1 : index
    %c0_184 = arith.constant 0 : index
    %126 = vector.load %arg19[%c2_182, %c1_183, %c0_184] : memref<10x6x8xf32, #tpu.memory_space<vmem>>, vector<8x4x8xf32>
    %127 = vector.shape_cast %126 : vector<8x4x8xf32> to vector<32x8xf32>
    %c0_185 = arith.constant 0 : index
    %c56 = arith.constant 56 : index
    %128 = vector.load %arg24[%c0_185, %c56] : memref<512x288xf32, #tpu.memory_space<vmem>>, vector<32x8xf32>
    tpu.vector_store %arg24[%c0_185, %c56], %127 {strides = array<i32>} : memref<512x288xf32, #tpu.memory_space<vmem>>, vector<32x8xf32>,
    %c2_186 = arith.constant 2 : index
    %c2_187 = arith.constant 2 : index
    %c0_188 = arith.constant 0 : index
    %129 = vector.load %arg19[%c2_186, %c2_187, %c0_188] : memref<10x6x8xf32, #tpu.memory_space<vmem>>, vector<8x4x8xf32>
    %130 = vector.shape_cast %129 : vector<8x4x8xf32> to vector<32x8xf32>
    %c0_189 = arith.constant 0 : index
    %c64 = arith.constant 64 : index
    %131 = vector.load %arg24[%c0_189, %c64] : memref<512x288xf32, #tpu.memory_space<vmem>>, vector<32x8xf32>
    tpu.vector_store %arg24[%c0_189, %c64], %130 {strides = array<i32>} : memref<512x288xf32, #tpu.memory_space<vmem>>, vector<32x8xf32>,
    %c0_190 = arith.constant 0 : index
    %c0_191 = arith.constant 0 : index
    %132 = vector.load %arg24[%c0_190, %c0_191] : memref<512x288xf32, #tpu.memory_space<vmem>>, vector<32x72xf32>
    %133 = arith.truncf %132 : vector<32x72xf32> to vector<32x72xbf16>
    %c0_192 = arith.constant 0 : index
    %c0_193 = arith.constant 0 : index
    %134 = vector.load %arg6[%c0_192, %c0_193] : memref<72x16xbf16, #tpu.memory_space<vmem>>, vector<72x16xbf16>
    %cst_194 = arith.constant dense<0.000000e+00> : vector<32x16xf32>
    %135 = tpu.matmul %133, %134, %cst_194 {dimension_numbers = #tpu.dot_dimension_numbers<[1], [0], [0], [1], [0, 0, 1, 1], [], []>} : vector<32x72xbf16>, vector<72x16xbf16>, vector<32x16xf32> -> vector<32x16xf32>
    %c0_195 = arith.constant 0 : index
    %c0_196 = arith.constant 0 : index
    %136 = vector.load %arg7[%c0_195, %c0_196] : memref<1x16xf32, #tpu.memory_space<vmem>>, vector<1x16xf32>
    %137 = vector.broadcast %136 : vector<1x16xf32> to vector<32x16xf32>
    %138 = arith.addf %135, %137 : vector<32x16xf32>
    %cst_197 = arith.constant 0.000000e+00 : f32
    %139 = vector.broadcast %cst_197 : f32 to vector<32x16xf32>
    %140 = arith.maximumf %138, %139 : vector<32x16xf32>
    %141 = vector.shape_cast %140 : vector<32x16xf32> to vector<8x4x16xf32>
    %cst_198 = arith.constant 0.000000e+00 : f32
    %142 = vector.broadcast %cst_198 : f32 to vector<1x6x16xf32>
    %c0_199 = arith.constant 0 : index
    %c0_200 = arith.constant 0 : index
    %c0_201 = arith.constant 0 : index
    %143 = vector.load %arg20[%c0_199, %c0_200, %c0_201] : memref<10x6x16xf32, #tpu.memory_space<vmem>>, vector<1x6x16xf32>
    tpu.vector_store %arg20[%c0_199, %c0_200, %c0_201], %142 {strides = array<i32>} : memref<10x6x16xf32, #tpu.memory_space<vmem>>, vector<1x6x16xf32>,
    %c9_202 = arith.constant 9 : index
    %c0_203 = arith.constant 0 : index
    %c0_204 = arith.constant 0 : index
    %144 = vector.load %arg20[%c9_202, %c0_203, %c0_204] : memref<10x6x16xf32, #tpu.memory_space<vmem>>, vector<1x6x16xf32>
    tpu.vector_store %arg20[%c9_202, %c0_203, %c0_204], %142 {strides = array<i32>} : memref<10x6x16xf32, #tpu.memory_space<vmem>>, vector<1x6x16xf32>,
    %cst_205 = arith.constant 0.000000e+00 : f32
    %145 = vector.broadcast %cst_205 : f32 to vector<10x1x16xf32>
    %c0_206 = arith.constant 0 : index
    %c0_207 = arith.constant 0 : index
    %c0_208 = arith.constant 0 : index
    %146 = vector.load %arg20[%c0_206, %c0_207, %c0_208] : memref<10x6x16xf32, #tpu.memory_space<vmem>>, vector<10x1x16xf32>
    tpu.vector_store %arg20[%c0_206, %c0_207, %c0_208], %145 {strides = array<i32>} : memref<10x6x16xf32, #tpu.memory_space<vmem>>, vector<10x1x16xf32>,
    %c0_209 = arith.constant 0 : index
    %c5_210 = arith.constant 5 : index
    %c0_211 = arith.constant 0 : index
    %147 = vector.load %arg20[%c0_209, %c5_210, %c0_211] : memref<10x6x16xf32, #tpu.memory_space<vmem>>, vector<10x1x16xf32>
    tpu.vector_store %arg20[%c0_209, %c5_210, %c0_211], %145 {strides = array<i32>} : memref<10x6x16xf32, #tpu.memory_space<vmem>>, vector<10x1x16xf32>,
    %c1_212 = arith.constant 1 : index
    %c1_213 = arith.constant 1 : index
    %c0_214 = arith.constant 0 : index
    %148 = vector.load %arg20[%c1_212, %c1_213, %c0_214] : memref<10x6x16xf32, #tpu.memory_space<vmem>>, vector<8x4x16xf32>
    tpu.vector_store %arg20[%c1_212, %c1_213, %c0_214], %141 {strides = array<i32>} : memref<10x6x16xf32, #tpu.memory_space<vmem>>, vector<8x4x16xf32>,
    %c0_215 = arith.constant 0 : index
    %c0_216 = arith.constant 0 : index
    %c0_217 = arith.constant 0 : index
    %149 = vector.load %arg20[%c0_215, %c0_216, %c0_217] : memref<10x6x16xf32, #tpu.memory_space<vmem>>, vector<8x4x16xf32>
    %150 = vector.shape_cast %149 : vector<8x4x16xf32> to vector<32x16xf32>
    %c0_218 = arith.constant 0 : index
    %c0_219 = arith.constant 0 : index
    %151 = vector.load %arg24[%c0_218, %c0_219] : memref<512x288xf32, #tpu.memory_space<vmem>>, vector<32x16xf32>
    tpu.vector_store %arg24[%c0_218, %c0_219], %150 {strides = array<i32>} : memref<512x288xf32, #tpu.memory_space<vmem>>, vector<32x16xf32>,
    %c0_220 = arith.constant 0 : index
    %c1_221 = arith.constant 1 : index
    %c0_222 = arith.constant 0 : index
    %152 = vector.load %arg20[%c0_220, %c1_221, %c0_222] : memref<10x6x16xf32, #tpu.memory_space<vmem>>, vector<8x4x16xf32>
    %153 = vector.shape_cast %152 : vector<8x4x16xf32> to vector<32x16xf32>
    %c0_223 = arith.constant 0 : index
    %c16_224 = arith.constant 16 : index
    %154 = vector.load %arg24[%c0_223, %c16_224] : memref<512x288xf32, #tpu.memory_space<vmem>>, vector<32x16xf32>
    tpu.vector_store %arg24[%c0_223, %c16_224], %153 {strides = array<i32>} : memref<512x288xf32, #tpu.memory_space<vmem>>, vector<32x16xf32>,
    %c0_225 = arith.constant 0 : index
    %c2_226 = arith.constant 2 : index
    %c0_227 = arith.constant 0 : index
    %155 = vector.load %arg20[%c0_225, %c2_226, %c0_227] : memref<10x6x16xf32, #tpu.memory_space<vmem>>, vector<8x4x16xf32>
    %156 = vector.shape_cast %155 : vector<8x4x16xf32> to vector<32x16xf32>
    %c0_228 = arith.constant 0 : index
    %c32_229 = arith.constant 32 : index
    %157 = vector.load %arg24[%c0_228, %c32_229] : memref<512x288xf32, #tpu.memory_space<vmem>>, vector<32x16xf32>
    tpu.vector_store %arg24[%c0_228, %c32_229], %156 {strides = array<i32>} : memref<512x288xf32, #tpu.memory_space<vmem>>, vector<32x16xf32>,
    %c1_230 = arith.constant 1 : index
    %c0_231 = arith.constant 0 : index
    %c0_232 = arith.constant 0 : index
    %158 = vector.load %arg20[%c1_230, %c0_231, %c0_232] : memref<10x6x16xf32, #tpu.memory_space<vmem>>, vector<8x4x16xf32>
    %159 = vector.shape_cast %158 : vector<8x4x16xf32> to vector<32x16xf32>
    %c0_233 = arith.constant 0 : index
    %c48_234 = arith.constant 48 : index
    %160 = vector.load %arg24[%c0_233, %c48_234] : memref<512x288xf32, #tpu.memory_space<vmem>>, vector<32x16xf32>
    tpu.vector_store %arg24[%c0_233, %c48_234], %159 {strides = array<i32>} : memref<512x288xf32, #tpu.memory_space<vmem>>, vector<32x16xf32>,
    %c1_235 = arith.constant 1 : index
    %c1_236 = arith.constant 1 : index
    %c0_237 = arith.constant 0 : index
    %161 = vector.load %arg20[%c1_235, %c1_236, %c0_237] : memref<10x6x16xf32, #tpu.memory_space<vmem>>, vector<8x4x16xf32>
    %162 = vector.shape_cast %161 : vector<8x4x16xf32> to vector<32x16xf32>
    %c0_238 = arith.constant 0 : index
    %c64_239 = arith.constant 64 : index
    %163 = vector.load %arg24[%c0_238, %c64_239] : memref<512x288xf32, #tpu.memory_space<vmem>>, vector<32x16xf32>
    tpu.vector_store %arg24[%c0_238, %c64_239], %162 {strides = array<i32>} : memref<512x288xf32, #tpu.memory_space<vmem>>, vector<32x16xf32>,
    %c1_240 = arith.constant 1 : index
    %c2_241 = arith.constant 2 : index
    %c0_242 = arith.constant 0 : index
    %164 = vector.load %arg20[%c1_240, %c2_241, %c0_242] : memref<10x6x16xf32, #tpu.memory_space<vmem>>, vector<8x4x16xf32>
    %165 = vector.shape_cast %164 : vector<8x4x16xf32> to vector<32x16xf32>
    %c0_243 = arith.constant 0 : index
    %c80 = arith.constant 80 : index
    %166 = vector.load %arg24[%c0_243, %c80] : memref<512x288xf32, #tpu.memory_space<vmem>>, vector<32x16xf32>
    tpu.vector_store %arg24[%c0_243, %c80], %165 {strides = array<i32>} : memref<512x288xf32, #tpu.memory_space<vmem>>, vector<32x16xf32>,
    %c2_244 = arith.constant 2 : index
    %c0_245 = arith.constant 0 : index
    %c0_246 = arith.constant 0 : index
    %167 = vector.load %arg20[%c2_244, %c0_245, %c0_246] : memref<10x6x16xf32, #tpu.memory_space<vmem>>, vector<8x4x16xf32>
    %168 = vector.shape_cast %167 : vector<8x4x16xf32> to vector<32x16xf32>
    %c0_247 = arith.constant 0 : index
    %c96 = arith.constant 96 : index
    %169 = vector.load %arg24[%c0_247, %c96] : memref<512x288xf32, #tpu.memory_space<vmem>>, vector<32x16xf32>
    tpu.vector_store %arg24[%c0_247, %c96], %168 {strides = array<i32>} : memref<512x288xf32, #tpu.memory_space<vmem>>, vector<32x16xf32>,
    %c2_248 = arith.constant 2 : index
    %c1_249 = arith.constant 1 : index
    %c0_250 = arith.constant 0 : index
    %170 = vector.load %arg20[%c2_248, %c1_249, %c0_250] : memref<10x6x16xf32, #tpu.memory_space<vmem>>, vector<8x4x16xf32>
    %171 = vector.shape_cast %170 : vector<8x4x16xf32> to vector<32x16xf32>
    %c0_251 = arith.constant 0 : index
    %c112 = arith.constant 112 : index
    %172 = vector.load %arg24[%c0_251, %c112] : memref<512x288xf32, #tpu.memory_space<vmem>>, vector<32x16xf32>
    tpu.vector_store %arg24[%c0_251, %c112], %171 {strides = array<i32>} : memref<512x288xf32, #tpu.memory_space<vmem>>, vector<32x16xf32>,
    %c2_252 = arith.constant 2 : index
    %c2_253 = arith.constant 2 : index
    %c0_254 = arith.constant 0 : index
    %173 = vector.load %arg20[%c2_252, %c2_253, %c0_254] : memref<10x6x16xf32, #tpu.memory_space<vmem>>, vector<8x4x16xf32>
    %174 = vector.shape_cast %173 : vector<8x4x16xf32> to vector<32x16xf32>
    %c0_255 = arith.constant 0 : index
    %c128 = arith.constant 128 : index
    %175 = vector.load %arg24[%c0_255, %c128] : memref<512x288xf32, #tpu.memory_space<vmem>>, vector<32x16xf32>
    tpu.vector_store %arg24[%c0_255, %c128], %174 {strides = array<i32>} : memref<512x288xf32, #tpu.memory_space<vmem>>, vector<32x16xf32>,
    %c0_256 = arith.constant 0 : index
    %c0_257 = arith.constant 0 : index
    %176 = vector.load %arg24[%c0_256, %c0_257] : memref<512x288xf32, #tpu.memory_space<vmem>>, vector<32x144xf32>
    %177 = arith.truncf %176 : vector<32x144xf32> to vector<32x144xbf16>
    %c0_258 = arith.constant 0 : index
    %c0_259 = arith.constant 0 : index
    %178 = vector.load %arg8[%c0_258, %c0_259] : memref<144x16xbf16, #tpu.memory_space<vmem>>, vector<144x16xbf16>
    %cst_260 = arith.constant dense<0.000000e+00> : vector<32x16xf32>
    %179 = tpu.matmul %177, %178, %cst_260 {dimension_numbers = #tpu.dot_dimension_numbers<[1], [0], [0], [1], [0, 0, 1, 1], [], []>} : vector<32x144xbf16>, vector<144x16xbf16>, vector<32x16xf32> -> vector<32x16xf32>
    %c0_261 = arith.constant 0 : index
    %c0_262 = arith.constant 0 : index
    %180 = vector.load %arg9[%c0_261, %c0_262] : memref<1x16xf32, #tpu.memory_space<vmem>>, vector<1x16xf32>
    %181 = vector.broadcast %180 : vector<1x16xf32> to vector<32x16xf32>
    %182 = arith.addf %179, %181 : vector<32x16xf32>
    %cst_263 = arith.constant 0.000000e+00 : f32
    %183 = vector.broadcast %cst_263 : f32 to vector<32x16xf32>
    %184 = arith.maximumf %182, %183 : vector<32x16xf32>
    %185 = vector.shape_cast %184 : vector<32x16xf32> to vector<8x4x16xf32>
    %186 = vector.shape_cast %185 : vector<8x4x16xf32> to vector<4x2x4x16xf32>
    %cst_264 = arith.constant dense<0xFF800000> : vector<4x4x16xf32>
    %187 = vector.multi_reduction <maximumf>, %186, %cst_264 [1] : vector<4x2x4x16xf32> to vector<4x4x16xf32>
    %cst_265 = arith.constant 0.000000e+00 : f32
    %188 = vector.broadcast %cst_265 : f32 to vector<1x6x16xf32>
    %c0_266 = arith.constant 0 : index
    %c0_267 = arith.constant 0 : index
    %c0_268 = arith.constant 0 : index
    %189 = vector.load %arg21[%c0_266, %c0_267, %c0_268] : memref<6x6x16xf32, #tpu.memory_space<vmem>>, vector<1x6x16xf32>
    tpu.vector_store %arg21[%c0_266, %c0_267, %c0_268], %188 {strides = array<i32>} : memref<6x6x16xf32, #tpu.memory_space<vmem>>, vector<1x6x16xf32>,
    %c5_269 = arith.constant 5 : index
    %c0_270 = arith.constant 0 : index
    %c0_271 = arith.constant 0 : index
    %190 = vector.load %arg21[%c5_269, %c0_270, %c0_271] : memref<6x6x16xf32, #tpu.memory_space<vmem>>, vector<1x6x16xf32>
    tpu.vector_store %arg21[%c5_269, %c0_270, %c0_271], %188 {strides = array<i32>} : memref<6x6x16xf32, #tpu.memory_space<vmem>>, vector<1x6x16xf32>,
    %cst_272 = arith.constant 0.000000e+00 : f32
    %191 = vector.broadcast %cst_272 : f32 to vector<6x1x16xf32>
    %c0_273 = arith.constant 0 : index
    %c0_274 = arith.constant 0 : index
    %c0_275 = arith.constant 0 : index
    %192 = vector.load %arg21[%c0_273, %c0_274, %c0_275] : memref<6x6x16xf32, #tpu.memory_space<vmem>>, vector<6x1x16xf32>
    tpu.vector_store %arg21[%c0_273, %c0_274, %c0_275], %191 {strides = array<i32>} : memref<6x6x16xf32, #tpu.memory_space<vmem>>, vector<6x1x16xf32>,
    %c0_276 = arith.constant 0 : index
    %c5_277 = arith.constant 5 : index
    %c0_278 = arith.constant 0 : index
    %193 = vector.load %arg21[%c0_276, %c5_277, %c0_278] : memref<6x6x16xf32, #tpu.memory_space<vmem>>, vector<6x1x16xf32>
    tpu.vector_store %arg21[%c0_276, %c5_277, %c0_278], %191 {strides = array<i32>} : memref<6x6x16xf32, #tpu.memory_space<vmem>>, vector<6x1x16xf32>,
    %c1_279 = arith.constant 1 : index
    %c1_280 = arith.constant 1 : index
    %c0_281 = arith.constant 0 : index
    %194 = vector.load %arg21[%c1_279, %c1_280, %c0_281] : memref<6x6x16xf32, #tpu.memory_space<vmem>>, vector<4x4x16xf32>
    tpu.vector_store %arg21[%c1_279, %c1_280, %c0_281], %187 {strides = array<i32>} : memref<6x6x16xf32, #tpu.memory_space<vmem>>, vector<4x4x16xf32>,
    %c0_282 = arith.constant 0 : index
    %c0_283 = arith.constant 0 : index
    %c0_284 = arith.constant 0 : index
    %195 = vector.load %arg21[%c0_282, %c0_283, %c0_284] : memref<6x6x16xf32, #tpu.memory_space<vmem>>, vector<4x4x16xf32>
    %196 = vector.shape_cast %195 : vector<4x4x16xf32> to vector<16x16xf32>
    %c0_285 = arith.constant 0 : index
    %c0_286 = arith.constant 0 : index
    %197 = vector.load %arg24[%c0_285, %c0_286] : memref<512x288xf32, #tpu.memory_space<vmem>>, vector<16x16xf32>
    tpu.vector_store %arg24[%c0_285, %c0_286], %196 {strides = array<i32>} : memref<512x288xf32, #tpu.memory_space<vmem>>, vector<16x16xf32>,
    %c0_287 = arith.constant 0 : index
    %c1_288 = arith.constant 1 : index
    %c0_289 = arith.constant 0 : index
    %198 = vector.load %arg21[%c0_287, %c1_288, %c0_289] : memref<6x6x16xf32, #tpu.memory_space<vmem>>, vector<4x4x16xf32>
    %199 = vector.shape_cast %198 : vector<4x4x16xf32> to vector<16x16xf32>
    %c0_290 = arith.constant 0 : index
    %c16_291 = arith.constant 16 : index
    %200 = vector.load %arg24[%c0_290, %c16_291] : memref<512x288xf32, #tpu.memory_space<vmem>>, vector<16x16xf32>
    tpu.vector_store %arg24[%c0_290, %c16_291], %199 {strides = array<i32>} : memref<512x288xf32, #tpu.memory_space<vmem>>, vector<16x16xf32>,
    %c0_292 = arith.constant 0 : index
    %c2_293 = arith.constant 2 : index
    %c0_294 = arith.constant 0 : index
    %201 = vector.load %arg21[%c0_292, %c2_293, %c0_294] : memref<6x6x16xf32, #tpu.memory_space<vmem>>, vector<4x4x16xf32>
    %202 = vector.shape_cast %201 : vector<4x4x16xf32> to vector<16x16xf32>
    %c0_295 = arith.constant 0 : index
    %c32_296 = arith.constant 32 : index
    %203 = vector.load %arg24[%c0_295, %c32_296] : memref<512x288xf32, #tpu.memory_space<vmem>>, vector<16x16xf32>
    tpu.vector_store %arg24[%c0_295, %c32_296], %202 {strides = array<i32>} : memref<512x288xf32, #tpu.memory_space<vmem>>, vector<16x16xf32>,
    %c1_297 = arith.constant 1 : index
    %c0_298 = arith.constant 0 : index
    %c0_299 = arith.constant 0 : index
    %204 = vector.load %arg21[%c1_297, %c0_298, %c0_299] : memref<6x6x16xf32, #tpu.memory_space<vmem>>, vector<4x4x16xf32>
    %205 = vector.shape_cast %204 : vector<4x4x16xf32> to vector<16x16xf32>
    %c0_300 = arith.constant 0 : index
    %c48_301 = arith.constant 48 : index
    %206 = vector.load %arg24[%c0_300, %c48_301] : memref<512x288xf32, #tpu.memory_space<vmem>>, vector<16x16xf32>
    tpu.vector_store %arg24[%c0_300, %c48_301], %205 {strides = array<i32>} : memref<512x288xf32, #tpu.memory_space<vmem>>, vector<16x16xf32>,
    %c1_302 = arith.constant 1 : index
    %c1_303 = arith.constant 1 : index
    %c0_304 = arith.constant 0 : index
    %207 = vector.load %arg21[%c1_302, %c1_303, %c0_304] : memref<6x6x16xf32, #tpu.memory_space<vmem>>, vector<4x4x16xf32>
    %208 = vector.shape_cast %207 : vector<4x4x16xf32> to vector<16x16xf32>
    %c0_305 = arith.constant 0 : index
    %c64_306 = arith.constant 64 : index
    %209 = vector.load %arg24[%c0_305, %c64_306] : memref<512x288xf32, #tpu.memory_space<vmem>>, vector<16x16xf32>
    tpu.vector_store %arg24[%c0_305, %c64_306], %208 {strides = array<i32>} : memref<512x288xf32, #tpu.memory_space<vmem>>, vector<16x16xf32>,
    %c1_307 = arith.constant 1 : index
    %c2_308 = arith.constant 2 : index
    %c0_309 = arith.constant 0 : index
    %210 = vector.load %arg21[%c1_307, %c2_308, %c0_309] : memref<6x6x16xf32, #tpu.memory_space<vmem>>, vector<4x4x16xf32>
    %211 = vector.shape_cast %210 : vector<4x4x16xf32> to vector<16x16xf32>
    %c0_310 = arith.constant 0 : index
    %c80_311 = arith.constant 80 : index
    %212 = vector.load %arg24[%c0_310, %c80_311] : memref<512x288xf32, #tpu.memory_space<vmem>>, vector<16x16xf32>
    tpu.vector_store %arg24[%c0_310, %c80_311], %211 {strides = array<i32>} : memref<512x288xf32, #tpu.memory_space<vmem>>, vector<16x16xf32>,
    %c2_312 = arith.constant 2 : index
    %c0_313 = arith.constant 0 : index
    %c0_314 = arith.constant 0 : index
    %213 = vector.load %arg21[%c2_312, %c0_313, %c0_314] : memref<6x6x16xf32, #tpu.memory_space<vmem>>, vector<4x4x16xf32>
    %214 = vector.shape_cast %213 : vector<4x4x16xf32> to vector<16x16xf32>
    %c0_315 = arith.constant 0 : index
    %c96_316 = arith.constant 96 : index
    %215 = vector.load %arg24[%c0_315, %c96_316] : memref<512x288xf32, #tpu.memory_space<vmem>>, vector<16x16xf32>
    tpu.vector_store %arg24[%c0_315, %c96_316], %214 {strides = array<i32>} : memref<512x288xf32, #tpu.memory_space<vmem>>, vector<16x16xf32>,
    %c2_317 = arith.constant 2 : index
    %c1_318 = arith.constant 1 : index
    %c0_319 = arith.constant 0 : index
    %216 = vector.load %arg21[%c2_317, %c1_318, %c0_319] : memref<6x6x16xf32, #tpu.memory_space<vmem>>, vector<4x4x16xf32>
    %217 = vector.shape_cast %216 : vector<4x4x16xf32> to vector<16x16xf32>
    %c0_320 = arith.constant 0 : index
    %c112_321 = arith.constant 112 : index
    %218 = vector.load %arg24[%c0_320, %c112_321] : memref<512x288xf32, #tpu.memory_space<vmem>>, vector<16x16xf32>
    tpu.vector_store %arg24[%c0_320, %c112_321], %217 {strides = array<i32>} : memref<512x288xf32, #tpu.memory_space<vmem>>, vector<16x16xf32>,
    %c2_322 = arith.constant 2 : index
    %c2_323 = arith.constant 2 : index
    %c0_324 = arith.constant 0 : index
    %219 = vector.load %arg21[%c2_322, %c2_323, %c0_324] : memref<6x6x16xf32, #tpu.memory_space<vmem>>, vector<4x4x16xf32>
    %220 = vector.shape_cast %219 : vector<4x4x16xf32> to vector<16x16xf32>
    %c0_325 = arith.constant 0 : index
    %c128_326 = arith.constant 128 : index
    %221 = vector.load %arg24[%c0_325, %c128_326] : memref<512x288xf32, #tpu.memory_space<vmem>>, vector<16x16xf32>
    tpu.vector_store %arg24[%c0_325, %c128_326], %220 {strides = array<i32>} : memref<512x288xf32, #tpu.memory_space<vmem>>, vector<16x16xf32>,
    %c0_327 = arith.constant 0 : index
    %c0_328 = arith.constant 0 : index
    %222 = vector.load %arg24[%c0_327, %c0_328] : memref<512x288xf32, #tpu.memory_space<vmem>>, vector<16x144xf32>
    %223 = arith.truncf %222 : vector<16x144xf32> to vector<16x144xbf16>
    %c0_329 = arith.constant 0 : index
    %c0_330 = arith.constant 0 : index
    %224 = vector.load %arg10[%c0_329, %c0_330] : memref<144x32xbf16, #tpu.memory_space<vmem>>, vector<144x32xbf16>
    %cst_331 = arith.constant dense<0.000000e+00> : vector<16x32xf32>
    %225 = tpu.matmul %223, %224, %cst_331 {dimension_numbers = #tpu.dot_dimension_numbers<[1], [0], [0], [1], [0, 0, 1, 1], [], []>} : vector<16x144xbf16>, vector<144x32xbf16>, vector<16x32xf32> -> vector<16x32xf32>
    %c0_332 = arith.constant 0 : index
    %c0_333 = arith.constant 0 : index
    %226 = vector.load %arg11[%c0_332, %c0_333] : memref<1x32xf32, #tpu.memory_space<vmem>>, vector<1x32xf32>
    %227 = vector.broadcast %226 : vector<1x32xf32> to vector<16x32xf32>
    %228 = arith.addf %225, %227 : vector<16x32xf32>
    %cst_334 = arith.constant 0.000000e+00 : f32
    %229 = vector.broadcast %cst_334 : f32 to vector<16x32xf32>
    %230 = arith.maximumf %228, %229 : vector<16x32xf32>
    %231 = vector.shape_cast %230 : vector<16x32xf32> to vector<4x4x32xf32>
    %cst_335 = arith.constant 0.000000e+00 : f32
    %232 = vector.broadcast %cst_335 : f32 to vector<1x6x32xf32>
    %c0_336 = arith.constant 0 : index
    %c0_337 = arith.constant 0 : index
    %c0_338 = arith.constant 0 : index
    %233 = vector.load %arg22[%c0_336, %c0_337, %c0_338] : memref<6x6x32xf32, #tpu.memory_space<vmem>>, vector<1x6x32xf32>
    tpu.vector_store %arg22[%c0_336, %c0_337, %c0_338], %232 {strides = array<i32>} : memref<6x6x32xf32, #tpu.memory_space<vmem>>, vector<1x6x32xf32>,
    %c5_339 = arith.constant 5 : index
    %c0_340 = arith.constant 0 : index
    %c0_341 = arith.constant 0 : index
    %234 = vector.load %arg22[%c5_339, %c0_340, %c0_341] : memref<6x6x32xf32, #tpu.memory_space<vmem>>, vector<1x6x32xf32>
    tpu.vector_store %arg22[%c5_339, %c0_340, %c0_341], %232 {strides = array<i32>} : memref<6x6x32xf32, #tpu.memory_space<vmem>>, vector<1x6x32xf32>,
    %cst_342 = arith.constant 0.000000e+00 : f32
    %235 = vector.broadcast %cst_342 : f32 to vector<6x1x32xf32>
    %c0_343 = arith.constant 0 : index
    %c0_344 = arith.constant 0 : index
    %c0_345 = arith.constant 0 : index
    %236 = vector.load %arg22[%c0_343, %c0_344, %c0_345] : memref<6x6x32xf32, #tpu.memory_space<vmem>>, vector<6x1x32xf32>
    tpu.vector_store %arg22[%c0_343, %c0_344, %c0_345], %235 {strides = array<i32>} : memref<6x6x32xf32, #tpu.memory_space<vmem>>, vector<6x1x32xf32>,
    %c0_346 = arith.constant 0 : index
    %c5_347 = arith.constant 5 : index
    %c0_348 = arith.constant 0 : index
    %237 = vector.load %arg22[%c0_346, %c5_347, %c0_348] : memref<6x6x32xf32, #tpu.memory_space<vmem>>, vector<6x1x32xf32>
    tpu.vector_store %arg22[%c0_346, %c5_347, %c0_348], %235 {strides = array<i32>} : memref<6x6x32xf32, #tpu.memory_space<vmem>>, vector<6x1x32xf32>,
    %c1_349 = arith.constant 1 : index
    %c1_350 = arith.constant 1 : index
    %c0_351 = arith.constant 0 : index
    %238 = vector.load %arg22[%c1_349, %c1_350, %c0_351] : memref<6x6x32xf32, #tpu.memory_space<vmem>>, vector<4x4x32xf32>
    tpu.vector_store %arg22[%c1_349, %c1_350, %c0_351], %231 {strides = array<i32>} : memref<6x6x32xf32, #tpu.memory_space<vmem>>, vector<4x4x32xf32>,
    %c0_352 = arith.constant 0 : index
    %c0_353 = arith.constant 0 : index
    %c0_354 = arith.constant 0 : index
    %239 = vector.load %arg22[%c0_352, %c0_353, %c0_354] : memref<6x6x32xf32, #tpu.memory_space<vmem>>, vector<4x4x32xf32>
    %240 = vector.shape_cast %239 : vector<4x4x32xf32> to vector<16x32xf32>
    %c0_355 = arith.constant 0 : index
    %c0_356 = arith.constant 0 : index
    %241 = vector.load %arg24[%c0_355, %c0_356] : memref<512x288xf32, #tpu.memory_space<vmem>>, vector<16x32xf32>
    tpu.vector_store %arg24[%c0_355, %c0_356], %240 {strides = array<i32>} : memref<512x288xf32, #tpu.memory_space<vmem>>, vector<16x32xf32>,
    %c0_357 = arith.constant 0 : index
    %c1_358 = arith.constant 1 : index
    %c0_359 = arith.constant 0 : index
    %242 = vector.load %arg22[%c0_357, %c1_358, %c0_359] : memref<6x6x32xf32, #tpu.memory_space<vmem>>, vector<4x4x32xf32>
    %243 = vector.shape_cast %242 : vector<4x4x32xf32> to vector<16x32xf32>
    %c0_360 = arith.constant 0 : index
    %c32_361 = arith.constant 32 : index
    %244 = vector.load %arg24[%c0_360, %c32_361] : memref<512x288xf32, #tpu.memory_space<vmem>>, vector<16x32xf32>
    tpu.vector_store %arg24[%c0_360, %c32_361], %243 {strides = array<i32>} : memref<512x288xf32, #tpu.memory_space<vmem>>, vector<16x32xf32>,
    %c0_362 = arith.constant 0 : index
    %c2_363 = arith.constant 2 : index
    %c0_364 = arith.constant 0 : index
    %245 = vector.load %arg22[%c0_362, %c2_363, %c0_364] : memref<6x6x32xf32, #tpu.memory_space<vmem>>, vector<4x4x32xf32>
    %246 = vector.shape_cast %245 : vector<4x4x32xf32> to vector<16x32xf32>
    %c0_365 = arith.constant 0 : index
    %c64_366 = arith.constant 64 : index
    %247 = vector.load %arg24[%c0_365, %c64_366] : memref<512x288xf32, #tpu.memory_space<vmem>>, vector<16x32xf32>
    tpu.vector_store %arg24[%c0_365, %c64_366], %246 {strides = array<i32>} : memref<512x288xf32, #tpu.memory_space<vmem>>, vector<16x32xf32>,
    %c1_367 = arith.constant 1 : index
    %c0_368 = arith.constant 0 : index
    %c0_369 = arith.constant 0 : index
    %248 = vector.load %arg22[%c1_367, %c0_368, %c0_369] : memref<6x6x32xf32, #tpu.memory_space<vmem>>, vector<4x4x32xf32>
    %249 = vector.shape_cast %248 : vector<4x4x32xf32> to vector<16x32xf32>
    %c0_370 = arith.constant 0 : index
    %c96_371 = arith.constant 96 : index
    %250 = vector.load %arg24[%c0_370, %c96_371] : memref<512x288xf32, #tpu.memory_space<vmem>>, vector<16x32xf32>
    tpu.vector_store %arg24[%c0_370, %c96_371], %249 {strides = array<i32>} : memref<512x288xf32, #tpu.memory_space<vmem>>, vector<16x32xf32>,
    %c1_372 = arith.constant 1 : index
    %c1_373 = arith.constant 1 : index
    %c0_374 = arith.constant 0 : index
    %251 = vector.load %arg22[%c1_372, %c1_373, %c0_374] : memref<6x6x32xf32, #tpu.memory_space<vmem>>, vector<4x4x32xf32>
    %252 = vector.shape_cast %251 : vector<4x4x32xf32> to vector<16x32xf32>
    %c0_375 = arith.constant 0 : index
    %c128_376 = arith.constant 128 : index
    %253 = vector.load %arg24[%c0_375, %c128_376] : memref<512x288xf32, #tpu.memory_space<vmem>>, vector<16x32xf32>
    tpu.vector_store %arg24[%c0_375, %c128_376], %252 {strides = array<i32>} : memref<512x288xf32, #tpu.memory_space<vmem>>, vector<16x32xf32>,
    %c1_377 = arith.constant 1 : index
    %c2_378 = arith.constant 2 : index
    %c0_379 = arith.constant 0 : index
    %254 = vector.load %arg22[%c1_377, %c2_378, %c0_379] : memref<6x6x32xf32, #tpu.memory_space<vmem>>, vector<4x4x32xf32>
    %255 = vector.shape_cast %254 : vector<4x4x32xf32> to vector<16x32xf32>
    %c0_380 = arith.constant 0 : index
    %c160 = arith.constant 160 : index
    %256 = vector.load %arg24[%c0_380, %c160] : memref<512x288xf32, #tpu.memory_space<vmem>>, vector<16x32xf32>
    tpu.vector_store %arg24[%c0_380, %c160], %255 {strides = array<i32>} : memref<512x288xf32, #tpu.memory_space<vmem>>, vector<16x32xf32>,
    %c2_381 = arith.constant 2 : index
    %c0_382 = arith.constant 0 : index
    %c0_383 = arith.constant 0 : index
    %257 = vector.load %arg22[%c2_381, %c0_382, %c0_383] : memref<6x6x32xf32, #tpu.memory_space<vmem>>, vector<4x4x32xf32>
    %258 = vector.shape_cast %257 : vector<4x4x32xf32> to vector<16x32xf32>
    %c0_384 = arith.constant 0 : index
    %c192 = arith.constant 192 : index
    %259 = vector.load %arg24[%c0_384, %c192] : memref<512x288xf32, #tpu.memory_space<vmem>>, vector<16x32xf32>
    tpu.vector_store %arg24[%c0_384, %c192], %258 {strides = array<i32>} : memref<512x288xf32, #tpu.memory_space<vmem>>, vector<16x32xf32>,
    %c2_385 = arith.constant 2 : index
    %c1_386 = arith.constant 1 : index
    %c0_387 = arith.constant 0 : index
    %260 = vector.load %arg22[%c2_385, %c1_386, %c0_387] : memref<6x6x32xf32, #tpu.memory_space<vmem>>, vector<4x4x32xf32>
    %261 = vector.shape_cast %260 : vector<4x4x32xf32> to vector<16x32xf32>
    %c0_388 = arith.constant 0 : index
    %c224 = arith.constant 224 : index
    %262 = vector.load %arg24[%c0_388, %c224] : memref<512x288xf32, #tpu.memory_space<vmem>>, vector<16x32xf32>
    tpu.vector_store %arg24[%c0_388, %c224], %261 {strides = array<i32>} : memref<512x288xf32, #tpu.memory_space<vmem>>, vector<16x32xf32>,
    %c2_389 = arith.constant 2 : index
    %c2_390 = arith.constant 2 : index
    %c0_391 = arith.constant 0 : index
    %263 = vector.load %arg22[%c2_389, %c2_390, %c0_391] : memref<6x6x32xf32, #tpu.memory_space<vmem>>, vector<4x4x32xf32>
    %264 = vector.shape_cast %263 : vector<4x4x32xf32> to vector<16x32xf32>
    %c0_392 = arith.constant 0 : index
    %c256 = arith.constant 256 : index
    %265 = vector.load %arg24[%c0_392, %c256] : memref<512x288xf32, #tpu.memory_space<vmem>>, vector<16x32xf32>
    tpu.vector_store %arg24[%c0_392, %c256], %264 {strides = array<i32>} : memref<512x288xf32, #tpu.memory_space<vmem>>, vector<16x32xf32>,
    %c0_393 = arith.constant 0 : index
    %c0_394 = arith.constant 0 : index
    %266 = vector.load %arg24[%c0_393, %c0_394] : memref<512x288xf32, #tpu.memory_space<vmem>>, vector<16x288xf32>
    %267 = arith.truncf %266 : vector<16x288xf32> to vector<16x288xbf16>
    %c0_395 = arith.constant 0 : index
    %c0_396 = arith.constant 0 : index
    %268 = vector.load %arg12[%c0_395, %c0_396] : memref<288x32xbf16, #tpu.memory_space<vmem>>, vector<288x32xbf16>
    %cst_397 = arith.constant dense<0.000000e+00> : vector<16x32xf32>
    %269 = tpu.matmul %267, %268, %cst_397 {dimension_numbers = #tpu.dot_dimension_numbers<[1], [0], [0], [1], [0, 0, 1, 1], [], []>} : vector<16x288xbf16>, vector<288x32xbf16>, vector<16x32xf32> -> vector<16x32xf32>
    %c0_398 = arith.constant 0 : index
    %c0_399 = arith.constant 0 : index
    %270 = vector.load %arg13[%c0_398, %c0_399] : memref<1x32xf32, #tpu.memory_space<vmem>>, vector<1x32xf32>
    %271 = vector.broadcast %270 : vector<1x32xf32> to vector<16x32xf32>
    %272 = arith.addf %269, %271 : vector<16x32xf32>
    %cst_400 = arith.constant 0.000000e+00 : f32
    %273 = vector.broadcast %cst_400 : f32 to vector<16x32xf32>
    %274 = arith.maximumf %272, %273 : vector<16x32xf32>
    %275 = vector.shape_cast %274 : vector<16x32xf32> to vector<4x4x32xf32>
    %276 = vector.shape_cast %275 : vector<4x4x32xf32> to vector<2x2x4x32xf32>
    %cst_401 = arith.constant dense<0xFF800000> : vector<2x4x32xf32>
    %277 = vector.multi_reduction <maximumf>, %276, %cst_401 [1] : vector<2x2x4x32xf32> to vector<2x4x32xf32>
    %c0_402 = arith.constant 0 : index
    %c0_403 = arith.constant 0 : index
    %c0_404 = arith.constant 0 : index
    %278 = vector.load %arg23[%c0_402, %c0_403, %c0_404] : memref<2x4x32xf32, #tpu.memory_space<vmem>>, vector<2x4x32xf32>
    tpu.vector_store %arg23[%c0_402, %c0_403, %c0_404], %277 {strides = array<i32>} : memref<2x4x32xf32, #tpu.memory_space<vmem>>, vector<2x4x32xf32>,
    %c0_405 = arith.constant 0 : index
    %c0_406 = arith.constant 0 : index
    %c0_407 = arith.constant 0 : index
    %279 = vector.load %arg23[%c0_405, %c0_406, %c0_407] : memref<2x4x32xf32, #tpu.memory_space<vmem>>, vector<1x3x32xf32>
    %280 = vector.shape_cast %279 : vector<1x3x32xf32> to vector<3x32xf32>
    %c0_408 = arith.constant 0 : index
    %c0_409 = arith.constant 0 : index
    %281 = vector.load %arg24[%c0_408, %c0_409] : memref<512x288xf32, #tpu.memory_space<vmem>>, vector<3x32xf32>
    tpu.vector_store %arg24[%c0_408, %c0_409], %280 {strides = array<i32>} : memref<512x288xf32, #tpu.memory_space<vmem>>, vector<3x32xf32>,
    %c0_410 = arith.constant 0 : index
    %c1_411 = arith.constant 1 : index
    %c0_412 = arith.constant 0 : index
    %282 = vector.load %arg23[%c0_410, %c1_411, %c0_412] : memref<2x4x32xf32, #tpu.memory_space<vmem>>, vector<1x3x32xf32>
    %283 = vector.shape_cast %282 : vector<1x3x32xf32> to vector<3x32xf32>
    %c0_413 = arith.constant 0 : index
    %c32_414 = arith.constant 32 : index
    %284 = vector.load %arg24[%c0_413, %c32_414] : memref<512x288xf32, #tpu.memory_space<vmem>>, vector<3x32xf32>
    tpu.vector_store %arg24[%c0_413, %c32_414], %283 {strides = array<i32>} : memref<512x288xf32, #tpu.memory_space<vmem>>, vector<3x32xf32>,
    %c1_415 = arith.constant 1 : index
    %c0_416 = arith.constant 0 : index
    %c0_417 = arith.constant 0 : index
    %285 = vector.load %arg23[%c1_415, %c0_416, %c0_417] : memref<2x4x32xf32, #tpu.memory_space<vmem>>, vector<1x3x32xf32>
    %286 = vector.shape_cast %285 : vector<1x3x32xf32> to vector<3x32xf32>
    %c0_418 = arith.constant 0 : index
    %c64_419 = arith.constant 64 : index
    %287 = vector.load %arg24[%c0_418, %c64_419] : memref<512x288xf32, #tpu.memory_space<vmem>>, vector<3x32xf32>
    tpu.vector_store %arg24[%c0_418, %c64_419], %286 {strides = array<i32>} : memref<512x288xf32, #tpu.memory_space<vmem>>, vector<3x32xf32>,
    %c1_420 = arith.constant 1 : index
    %c1_421 = arith.constant 1 : index
    %c0_422 = arith.constant 0 : index
    %288 = vector.load %arg23[%c1_420, %c1_421, %c0_422] : memref<2x4x32xf32, #tpu.memory_space<vmem>>, vector<1x3x32xf32>
    %289 = vector.shape_cast %288 : vector<1x3x32xf32> to vector<3x32xf32>
    %c0_423 = arith.constant 0 : index
    %c96_424 = arith.constant 96 : index
    %290 = vector.load %arg24[%c0_423, %c96_424] : memref<512x288xf32, #tpu.memory_space<vmem>>, vector<3x32xf32>
    tpu.vector_store %arg24[%c0_423, %c96_424], %289 {strides = array<i32>} : memref<512x288xf32, #tpu.memory_space<vmem>>, vector<3x32xf32>,
    %c0_425 = arith.constant 0 : index
    %c0_426 = arith.constant 0 : index
    %291 = vector.load %arg24[%c0_425, %c0_426] : memref<512x288xf32, #tpu.memory_space<vmem>>, vector<3x128xf32>
    %292 = arith.truncf %291 : vector<3x128xf32> to vector<3x128xbf16>
    %c0_427 = arith.constant 0 : index
    %c0_428 = arith.constant 0 : index
    %293 = vector.load %arg14[%c0_427, %c0_428] : memref<128x32xbf16, #tpu.memory_space<vmem>>, vector<128x32xbf16>
    %cst_429 = arith.constant dense<0.000000e+00> : vector<3x32xf32>
    %294 = tpu.matmul %292, %293, %cst_429 {dimension_numbers = #tpu.dot_dimension_numbers<[1], [0], [0], [1], [0, 0, 1, 1], [], []>} : vector<3x128xbf16>, vector<128x32xbf16>, vector<3x32xf32> -> vector<3x32xf32>
    %c0_430 = arith.constant 0 : index
    %c0_431 = arith.constant 0 : index
    %295 = vector.load %arg15[%c0_430, %c0_431] : memref<1x32xf32, #tpu.memory_space<vmem>>, vector<1x32xf32>
    %296 = vector.broadcast %295 : vector<1x32xf32> to vector<3x32xf32>
    %297 = arith.addf %294, %296 : vector<3x32xf32>
    %cst_432 = arith.constant 0.000000e+00 : f32
    %298 = vector.broadcast %cst_432 : f32 to vector<3x32xf32>
    %299 = arith.maximumf %297, %298 : vector<3x32xf32>
    %300 = vector.shape_cast %299 : vector<3x32xf32> to vector<1x3x32xf32>
    %c0_433 = arith.constant 0 : index
    %c0_434 = arith.constant 0 : index
    %c0_435 = arith.constant 0 : index
    %c0_436 = arith.constant 0 : index
    %301 = vector.load %arg16[%c0_433, %c0_434, %c0_435, %c0_436] : memref<1x1x3x32xf32, #tpu.memory_space<vmem>>, vector<1x1x3x32xf32>
    %302 = vector.shape_cast %301 : vector<1x1x3x32xf32> to vector<1x3x32xf32>
    %303 = vector.shape_cast %300 : vector<1x3x32xf32> to vector<1x1x3x32xf32>
    tpu.vector_store %arg16[%c0_433, %c0_434, %c0_435, %c0_436], %303 {strides = array<i32>} : memref<1x1x3x32xf32, #tpu.memory_space<vmem>>, vector<1x1x3x32xf32>,
    return
  }
  func.func @transform_0(%arg0: i32) -> (i32, i32, i32, i32) {
    %c0_i32 = arith.constant 0 : i32
    %c0_i32_0 = arith.constant 0 : i32
    %c0_i32_1 = arith.constant 0 : i32
    %c0_i32_2 = arith.constant 0 : i32
    return %arg0, %c0_i32, %c0_i32_0, %c0_i32_1 : i32, i32, i32, i32
  }
  func.func @transform_1(%arg0: i32) -> (i32, i32) {
    %c0_i32 = arith.constant 0 : i32
    %c0_i32_0 = arith.constant 0 : i32
    %c0_i32_1 = arith.constant 0 : i32
    return %c0_i32, %c0_i32_0 : i32, i32
  }
  func.func @transform_2(%arg0: i32) -> (i32, i32) {
    %c0_i32 = arith.constant 0 : i32
    %c0_i32_0 = arith.constant 0 : i32
    %c0_i32_1 = arith.constant 0 : i32
    return %c0_i32, %c0_i32_0 : i32, i32
  }
  func.func @transform_3(%arg0: i32) -> (i32, i32) {
    %c0_i32 = arith.constant 0 : i32
    %c0_i32_0 = arith.constant 0 : i32
    %c0_i32_1 = arith.constant 0 : i32
    return %c0_i32, %c0_i32_0 : i32, i32
  }
  func.func @transform_4(%arg0: i32) -> (i32, i32) {
    %c0_i32 = arith.constant 0 : i32
    %c0_i32_0 = arith.constant 0 : i32
    %c0_i32_1 = arith.constant 0 : i32
    return %c0_i32, %c0_i32_0 : i32, i32
  }
  func.func @transform_5(%arg0: i32) -> (i32, i32) {
    %c0_i32 = arith.constant 0 : i32
    %c0_i32_0 = arith.constant 0 : i32
    %c0_i32_1 = arith.constant 0 : i32
    return %c0_i32, %c0_i32_0 : i32, i32
  }
  func.func @transform_6(%arg0: i32) -> (i32, i32) {
    %c0_i32 = arith.constant 0 : i32
    %c0_i32_0 = arith.constant 0 : i32
    %c0_i32_1 = arith.constant 0 : i32
    return %c0_i32, %c0_i32_0 : i32, i32
  }
  func.func @transform_7(%arg0: i32) -> (i32, i32) {
    %c0_i32 = arith.constant 0 : i32
    %c0_i32_0 = arith.constant 0 : i32
    %c0_i32_1 = arith.constant 0 : i32
    return %c0_i32, %c0_i32_0 : i32, i32
  }
  func.func @transform_8(%arg0: i32) -> (i32, i32) {
    %c0_i32 = arith.constant 0 : i32
    %c0_i32_0 = arith.constant 0 : i32
    %c0_i32_1 = arith.constant 0 : i32
    return %c0_i32, %c0_i32_0 : i32, i32
  }
  func.func @transform_9(%arg0: i32) -> (i32, i32) {
    %c0_i32 = arith.constant 0 : i32
    %c0_i32_0 = arith.constant 0 : i32
    %c0_i32_1 = arith.constant 0 : i32
    return %c0_i32, %c0_i32_0 : i32, i32
  }
  func.func @transform_10(%arg0: i32) -> (i32, i32) {
    %c0_i32 = arith.constant 0 : i32
    %c0_i32_0 = arith.constant 0 : i32
    %c0_i32_1 = arith.constant 0 : i32
    return %c0_i32, %c0_i32_0 : i32, i32
  }
  func.func @transform_11(%arg0: i32) -> (i32, i32) {
    %c0_i32 = arith.constant 0 : i32
    %c0_i32_0 = arith.constant 0 : i32
    %c0_i32_1 = arith.constant 0 : i32
    return %c0_i32, %c0_i32_0 : i32, i32
  }
  func.func @transform_12(%arg0: i32) -> (i32, i32) {
    %c0_i32 = arith.constant 0 : i32
    %c0_i32_0 = arith.constant 0 : i32
    %c0_i32_1 = arith.constant 0 : i32
    return %c0_i32, %c0_i32_0 : i32, i32
  }
  func.func @transform_13(%arg0: i32) -> (i32, i32) {
    %c0_i32 = arith.constant 0 : i32
    %c0_i32_0 = arith.constant 0 : i32
    %c0_i32_1 = arith.constant 0 : i32
    return %c0_i32, %c0_i32_0 : i32, i32
  }
  func.func @transform_14(%arg0: i32) -> (i32, i32) {
    %c0_i32 = arith.constant 0 : i32
    %c0_i32_0 = arith.constant 0 : i32
    %c0_i32_1 = arith.constant 0 : i32
    return %c0_i32, %c0_i32_0 : i32, i32
  }
  func.func @transform_15(%arg0: i32) -> (i32, i32, i32, i32) {
    %c0_i32 = arith.constant 0 : i32
    %c0_i32_0 = arith.constant 0 : i32
    %c0_i32_1 = arith.constant 0 : i32
    %c0_i32_2 = arith.constant 0 : i32
    return %arg0, %c0_i32, %c0_i32_0, %c0_i32_1 : i32, i32, i32, i32
  }
}

</mosaic_0001>

<llo_original>
// kernel: vgg_feature_extractor.1
$region0: #{vgg_feature_extractor.1}
  #allocation0 [shape = 'u32[]', space=smem, size = 0x4, offset = 0x4, fixed_abs, tag = 'smem constant byte address 0x4 - core index']
  #allocation1 [shape = 'u32[144,128]{1,0:T(1,128)}', space=vmem, size = 0x12000, scoped, tag = 'internal scratch']
  #allocation2 [shape = 'f32[34,18,4]{2,1,0:T(8,128)}', space=vmem, size = 0x66000, scoped, tag = 'scratch operand']
  #allocation3 [shape = 'f32[18,10,4]{2,1,0:T(8,128)}', space=vmem, size = 0x24000, scoped, tag = 'scratch operand']
  #allocation4 [shape = 'f32[10,6,8]{2,1,0:T(8,128)}', space=vmem, size = 0xa000, scoped, tag = 'scratch operand']
  #allocation5 [shape = 'f32[10,6,16]{2,1,0:T(8,128)}', space=vmem, size = 0xa000, scoped, tag = 'scratch operand']
  #allocation6 [shape = 'f32[6,6,16]{2,1,0:T(8,128)}', space=vmem, size = 0x6000, scoped, tag = 'scratch operand']
  #allocation7 [shape = 'f32[6,6,32]{2,1,0:T(8,128)}', space=vmem, size = 0x6000, scoped, tag = 'scratch operand']
  #allocation8 [shape = 'f32[2,4,32]{2,1,0:T(4,128)}', space=vmem, size = 0x1000, scoped, tag = 'scratch operand']
  #allocation9 [shape = 'f32[512,288]{1,0:T(8,128)}', space=vmem, size = 0xc0000, scoped, tag = 'scratch operand']
  %s0 = inlined_call_operand.vmem [shape: f32[2,32,16,4], index: 0, kind: input, shape index: {}]
  %s1 = inlined_call_operand.vmem [shape: bf16[36,4], index: 1, kind: input, shape index: {}]
  %s2 = inlined_call_operand.vmem [shape: f32[1,4], index: 2, kind: input, shape index: {}]
  %s3 = inlined_call_operand.vmem [shape: bf16[36,8], index: 3, kind: input, shape index: {}]
  %s4 = inlined_call_operand.vmem [shape: f32[1,8], index: 4, kind: input, shape index: {}]
  %s5 = inlined_call_operand.vmem [shape: bf16[72,16], index: 5, kind: input, shape index: {}]
  %s6 = inlined_call_operand.vmem [shape: f32[1,16], index: 6, kind: input, shape index: {}]
  %s7 = inlined_call_operand.vmem [shape: bf16[144,16], index: 7, kind: input, shape index: {}]
  %s8 = inlined_call_operand.vmem [shape: f32[1,16], index: 8, kind: input, shape index: {}]
  %s9 = inlined_call_operand.vmem [shape: bf16[144,32], index: 9, kind: input, shape index: {}]
  %s10 = inlined_call_operand.vmem [shape: f32[1,32], index: 10, kind: input, shape index: {}]
  %s11 = inlined_call_operand.vmem [shape: bf16[288,32], index: 11, kind: input, shape index: {}]
  %s12 = inlined_call_operand.vmem [shape: f32[1,32], index: 12, kind: input, shape index: {}]
  %s13 = inlined_call_operand.vmem [shape: bf16[128,32], index: 13, kind: input, shape index: {}]
  %s14 = inlined_call_operand.vmem [shape: f32[1,32], index: 14, kind: input, shape index: {}]
  %s15 = inlined_call_operand.vmem [shape: f32[2,1,3,32], index: 15, kind: output, shape index: {}]
  %s16 = sld [smem:[#allocation0]]
  $region93: #{vgg_feature_extractor.1} parent=0
    _
  %s18 = ssub.s32 1, %s16
  %s19 = scalar_select 0, %s18, %s16
  loop: start=0, step=1, limit=4
  $region2: #{vgg_feature_extractor.1} parent=0 // loop_pre_header
    _
  $region3: #{vgg_feature_extractor.1} parent=0 // loop_header
    %s21 = sphi 0, %s25
    %p22 = scmp.ge.s32.totalorder %s21, 4
    %s31 = sphi 0, %s33
    %s34 = sphi 0, %s31
    %s35 = sphi 0, %s34
    %s51 = sphi 0, %s35
    %s55 = sphi 0, %s55
    %s57 = sphi 0, %s55
    %s58 = sphi 0, %s57
    %s72 = sphi 0, %s58
    %s76 = sphi 0, %s76
    %s78 = sphi 0, %s76
    %s79 = sphi 0, %s78
    %s93 = sphi 0, %s79
    %s97 = sphi 0, %s97
    %s99 = sphi 0, %s97
    %s100 = sphi 0, %s99
    %s114 = sphi 0, %s100
    %s118 = sphi 0, %s118
    %s120 = sphi 0, %s118
    %s121 = sphi 0, %s120
    %s135 = sphi 0, %s121
    %s139 = sphi 0, %s139
    %s141 = sphi 0, %s139
    %s142 = sphi 0, %s141
    %s156 = sphi 0, %s142
    %s160 = sphi 0, %s160
    %s162 = sphi 0, %s160
    %s163 = sphi 0, %s162
    %s177 = sphi 0, %s163
    %s181 = sphi 0, %s181
    %s183 = sphi 0, %s181
    %s184 = sphi 0, %s183
    %s198 = sphi 0, %s184
    %s202 = sphi 0, %s202
    %s204 = sphi 0, %s202
    %s205 = sphi 0, %s204
    %s219 = sphi 0, %s205
    %s223 = sphi 0, %s223
    %s225 = sphi 0, %s223
    %s226 = sphi 0, %s225
    %s240 = sphi 0, %s226
    %s244 = sphi 0, %s244
    %s246 = sphi 0, %s244
    %s247 = sphi 0, %s246
    %s261 = sphi 0, %s247
    %s265 = sphi 0, %s265
    %s267 = sphi 0, %s265
    %s268 = sphi 0, %s267
    %s282 = sphi 0, %s268
    %s286 = sphi 0, %s286
    %s288 = sphi 0, %s286
    %s289 = sphi 0, %s288
    %s303 = sphi 0, %s289
    %s307 = sphi 0, %s307
    %s309 = sphi 0, %s307
    %s310 = sphi 0, %s309
    %s324 = sphi 0, %s310
    %s328 = sphi 0, %s328
    %s330 = sphi 0, %s328
    %s331 = sphi 0, %s330
    %s345 = sphi 0, %s331
    %s351 = sphi 0, %s353
    %s354 = sphi 0, %s351
    %s355 = sphi 0, %s354
    %s371 = sphi 0, %s355
  $region4: #{vgg_feature_extractor.1} parent=0 // loop_header_branch
    %24 = sbr.rel (%p22) target = $region8
  $region5: #{vgg_feature_extractor.1} parent=0 // loop_body
    %s26 = ssub.s32 %s21, 1
    %s27 = ssub.s32 %s21, 2
    %s28 = sadd.s32 %s21, 1
    %s29 = ssub.s32 %s21, %s28
    %p30 = scmp.eq.s32.totalorder %s29, 0
    %s32 = sadd.s32 %s31, 1
    %s33 = scalar_select %p30, %s31, %s32
    %p36 = pneg %p30
    %p37 = scmp.eq.s32.totalorder %s21, 1
    %p38 = por %p36, %p37
    %p39 = scmp.ne.s32.totalorder %s31, %s34
    %p40 = scmp.eq.s32.totalorder %s21, 0
    %p41 = por %p39, %p40
    %p42 = scmp.ne.s32.totalorder %s31, %s34
    %p43 = scmp.eq.s32.totalorder %s26, 1
    %p44 = por %p42, %p43
    %p45 = scmp.ne.s32.totalorder %s34, %s35
    %p46 = scmp.eq.s32.totalorder %s26, 0
    %p47 = por %p45, %p46
    %p48 = scmp.ne.s32.totalorder %s34, %s35
    %p49 = scmp.eq.s32.totalorder %s27, 1
    %p50 = por %p48, %p49
    %p52 = scmp.ne.s32.totalorder %s35, %s51
    %p53 = scmp.eq.s32.totalorder %s27, 0
    %p54 = por %p52, %p53
    %s56 = sadd.s32 %s55, 1
    %p59 = scmp.eq.s32.totalorder %s21, 1
    %p60 = scmp.ne.s32.totalorder %s55, %s57
    %p61 = scmp.eq.s32.totalorder %s21, 0
    %p62 = por %p60, %p61
    %p63 = scmp.ne.s32.totalorder %s55, %s57
    %p64 = scmp.eq.s32.totalorder %s26, 1
    %p65 = por %p63, %p64
    %p66 = scmp.ne.s32.totalorder %s57, %s58
    %p67 = scmp.eq.s32.totalorder %s26, 0
    %p68 = por %p66, %p67
    %p69 = scmp.ne.s32.totalorder %s57, %s58
    %p70 = scmp.eq.s32.totalorder %s27, 1
    %p71 = por %p69, %p70
    %p73 = scmp.ne.s32.totalorder %s58, %s72
    %p74 = scmp.eq.s32.totalorder %s27, 0
    %p75 = por %p73, %p74
    %s77 = sadd.s32 %s76, 1
    %p80 = scmp.eq.s32.totalorder %s21, 1
    %p81 = scmp.ne.s32.totalorder %s76, %s78
    %p82 = scmp.eq.s32.totalorder %s21, 0
    %p83 = por %p81, %p82
    %p84 = scmp.ne.s32.totalorder %s76, %s78
    %p85 = scmp.eq.s32.totalorder %s26, 1
    %p86 = por %p84, %p85
    %p87 = scmp.ne.s32.totalorder %s78, %s79
    %p88 = scmp.eq.s32.totalorder %s26, 0
    %p89 = por %p87, %p88
    %p90 = scmp.ne.s32.totalorder %s78, %s79
    %p91 = scmp.eq.s32.totalorder %s27, 1
    %p92 = por %p90, %p91
    %p94 = scmp.ne.s32.totalorder %s79, %s93
    %p95 = scmp.eq.s32.totalorder %s27, 0
    %p96 = por %p94, %p95
    %s98 = sadd.s32 %s97, 1
    %p101 = scmp.eq.s32.totalorder %s21, 1
    %p102 = scmp.ne.s32.totalorder %s97, %s99
    %p103 = scmp.eq.s32.totalorder %s21, 0
    %p104 = por %p102, %p103
    %p105 = scmp.ne.s32.totalorder %s97, %s99
    %p106 = scmp.eq.s32.totalorder %s26, 1
    %p107 = por %p105, %p106
    %p108 = scmp.ne.s32.totalorder %s99, %s100
    %p109 = scmp.eq.s32.totalorder %s26, 0
    %p110 = por %p108, %p109
    %p111 = scmp.ne.s32.totalorder %s99, %s100
    %p112 = scmp.eq.s32.totalorder %s27, 1
    %p113 = por %p111, %p112
    %p115 = scmp.ne.s32.totalorder %s100, %s114
    %p116 = scmp.eq.s32.totalorder %s27, 0
    %p117 = por %p115, %p116
    %s119 = sadd.s32 %s118, 1
    %p122 = scmp.eq.s32.totalorder %s21, 1
    %p123 = scmp.ne.s32.totalorder %s118, %s120
    %p124 = scmp.eq.s32.totalorder %s21, 0
    %p125 = por %p123, %p124
    %p126 = scmp.ne.s32.totalorder %s118, %s120
    %p127 = scmp.eq.s32.totalorder %s26, 1
    %p128 = por %p126, %p127
    %p129 = scmp.ne.s32.totalorder %s120, %s121
    %p130 = scmp.eq.s32.totalorder %s26, 0
    %p131 = por %p129, %p130
    %p132 = scmp.ne.s32.totalorder %s120, %s121
    %p133 = scmp.eq.s32.totalorder %s27, 1
    %p134 = por %p132, %p133
    %p136 = scmp.ne.s32.totalorder %s121, %s135
    %p137 = scmp.eq.s32.totalorder %s27, 0
    %p138 = por %p136, %p137
    %s140 = sadd.s32 %s139, 1
    %p143 = scmp.eq.s32.totalorder %s21, 1
    %p144 = scmp.ne.s32.totalorder %s139, %s141
    %p145 = scmp.eq.s32.totalorder %s21, 0
    %p146 = por %p144, %p145
    %p147 = scmp.ne.s32.totalorder %s139, %s141
    %p148 = scmp.eq.s32.totalorder %s26, 1
    %p149 = por %p147, %p148
    %p150 = scmp.ne.s32.totalorder %s141, %s142
    %p151 = scmp.eq.s32.totalorder %s26, 0
    %p152 = por %p150, %p151
    %p153 = scmp.ne.s32.totalorder %s141, %s142
    %p154 = scmp.eq.s32.totalorder %s27, 1
    %p155 = por %p153, %p154
    %p157 = scmp.ne.s32.totalorder %s142, %s156
    %p158 = scmp.eq.s32.totalorder %s27, 0
    %p159 = por %p157, %p158
    %s161 = sadd.s32 %s160, 1
    %p164 = scmp.eq.s32.totalorder %s21, 1
    %p165 = scmp.ne.s32.totalorder %s160, %s162
    %p166 = scmp.eq.s32.totalorder %s21, 0
    %p167 = por %p165, %p166
    %p168 = scmp.ne.s32.totalorder %s160, %s162
    %p169 = scmp.eq.s32.totalorder %s26, 1
    %p170 = por %p168, %p169
    %p171 = scmp.ne.s32.totalorder %s162, %s163
    %p172 = scmp.eq.s32.totalorder %s26, 0
    %p173 = por %p171, %p172
    %p174 = scmp.ne.s32.totalorder %s162, %s163
    %p175 = scmp.eq.s32.totalorder %s27, 1
    %p176 = por %p174, %p175
    %p178 = scmp.ne.s32.totalorder %s163, %s177
    %p179 = scmp.eq.s32.totalorder %s27, 0
    %p180 = por %p178, %p179
    %s182 = sadd.s32 %s181, 1
    %p185 = scmp.eq.s32.totalorder %s21, 1
    %p186 = scmp.ne.s32.totalorder %s181, %s183
    %p187 = scmp.eq.s32.totalorder %s21, 0
    %p188 = por %p186, %p187
    %p189 = scmp.ne.s32.totalorder %s181, %s183
    %p190 = scmp.eq.s32.totalorder %s26, 1
    %p191 = por %p189, %p190
    %p192 = scmp.ne.s32.totalorder %s183, %s184
    %p193 = scmp.eq.s32.totalorder %s26, 0
    %p194 = por %p192, %p193
    %p195 = scmp.ne.s32.totalorder %s183, %s184
    %p196 = scmp.eq.s32.totalorder %s27, 1
    %p197 = por %p195, %p196
    %p199 = scmp.ne.s32.totalorder %s184, %s198
    %p200 = scmp.eq.s32.totalorder %s27, 0
    %p201 = por %p199, %p200
    %s203 = sadd.s32 %s202, 1
    %p206 = scmp.eq.s32.totalorder %s21, 1
    %p207 = scmp.ne.s32.totalorder %s202, %s204
    %p208 = scmp.eq.s32.totalorder %s21, 0
    %p209 = por %p207, %p208
    %p210 = scmp.ne.s32.totalorder %s202, %s204
    %p211 = scmp.eq.s32.totalorder %s26, 1
    %p212 = por %p210, %p211
    %p213 = scmp.ne.s32.totalorder %s204, %s205
    %p214 = scmp.eq.s32.totalorder %s26, 0
    %p215 = por %p213, %p214
    %p216 = scmp.ne.s32.totalorder %s204, %s205
    %p217 = scmp.eq.s32.totalorder %s27, 1
    %p218 = por %p216, %p217
    %p220 = scmp.ne.s32.totalorder %s205, %s219
    %p221 = scmp.eq.s32.totalorder %s27, 0
    %p222 = por %p220, %p221
    %s224 = sadd.s32 %s223, 1
    %p227 = scmp.eq.s32.totalorder %s21, 1
    %p228 = scmp.ne.s32.totalorder %s223, %s225
    %p229 = scmp.eq.s32.totalorder %s21, 0
    %p230 = por %p228, %p229
    %p231 = scmp.ne.s32.totalorder %s223, %s225
    %p232 = scmp.eq.s32.totalorder %s26, 1
    %p233 = por %p231, %p232
    %p234 = scmp.ne.s32.totalorder %s225, %s226
    %p235 = scmp.eq.s32.totalorder %s26, 0
    %p236 = por %p234, %p235
    %p237 = scmp.ne.s32.totalorder %s225, %s226
    %p238 = scmp.eq.s32.totalorder %s27, 1
    %p239 = por %p237, %p238
    %p241 = scmp.ne.s32.totalorder %s226, %s240
    %p242 = scmp.eq.s32.totalorder %s27, 0
    %p243 = por %p241, %p242
    %s245 = sadd.s32 %s244, 1
    %p248 = scmp.eq.s32.totalorder %s21, 1
    %p249 = scmp.ne.s32.totalorder %s244, %s246
    %p250 = scmp.eq.s32.totalorder %s21, 0
    %p251 = por %p249, %p250
    %p252 = scmp.ne.s32.totalorder %s244, %s246
    %p253 = scmp.eq.s32.totalorder %s26, 1
    %p254 = por %p252, %p253
    %p255 = scmp.ne.s32.totalorder %s246, %s247
    %p256 = scmp.eq.s32.totalorder %s26, 0
    %p257 = por %p255, %p256
    %p258 = scmp.ne.s32.totalorder %s246, %s247
    %p259 = scmp.eq.s32.totalorder %s27, 1
    %p260 = por %p258, %p259
    %p262 = scmp.ne.s32.totalorder %s247, %s261
    %p263 = scmp.eq.s32.totalorder %s27, 0
    %p264 = por %p262, %p263
    %s266 = sadd.s32 %s265, 1
    %p269 = scmp.eq.s32.totalorder %s21, 1
    %p270 = scmp.ne.s32.totalorder %s265, %s267
    %p271 = scmp.eq.s32.totalorder %s21, 0
    %p272 = por %p270, %p271
    %p273 = scmp.ne.s32.totalorder %s265, %s267
    %p274 = scmp.eq.s32.totalorder %s26, 1
    %p275 = por %p273, %p274
    %p276 = scmp.ne.s32.totalorder %s267, %s268
    %p277 = scmp.eq.s32.totalorder %s26, 0
    %p278 = por %p276, %p277
    %p279 = scmp.ne.s32.totalorder %s267, %s268
    %p280 = scmp.eq.s32.totalorder %s27, 1
    %p281 = por %p279, %p280
    %p283 = scmp.ne.s32.totalorder %s268, %s282
    %p284 = scmp.eq.s32.totalorder %s27, 0
    %p285 = por %p283, %p284
    %s287 = sadd.s32 %s286, 1
    %p290 = scmp.eq.s32.totalorder %s21, 1
    %p291 = scmp.ne.s32.totalorder %s286, %s288
    %p292 = scmp.eq.s32.totalorder %s21, 0
    %p293 = por %p291, %p292
    %p294 = scmp.ne.s32.totalorder %s286, %s288
    %p295 = scmp.eq.s32.totalorder %s26, 1
    %p296 = por %p294, %p295
    %p297 = scmp.ne.s32.totalorder %s288, %s289
    %p298 = scmp.eq.s32.totalorder %s26, 0
    %p299 = por %p297, %p298
    %p300 = scmp.ne.s32.totalorder %s288, %s289
    %p301 = scmp.eq.s32.totalorder %s27, 1
    %p302 = por %p300, %p301
    %p304 = scmp.ne.s32.totalorder %s289, %s303
    %p305 = scmp.eq.s32.totalorder %s27, 0
    %p306 = por %p304, %p305
    %s308 = sadd.s32 %s307, 1
    %p311 = scmp.eq.s32.totalorder %s21, 1
    %p312 = scmp.ne.s32.totalorder %s307, %s309
    %p313 = scmp.eq.s32.totalorder %s21, 0
    %p314 = por %p312, %p313
    %p315 = scmp.ne.s32.totalorder %s307, %s309
    %p316 = scmp.eq.s32.totalorder %s26, 1
    %p317 = por %p315, %p316
    %p318 = scmp.ne.s32.totalorder %s309, %s310
    %p319 = scmp.eq.s32.totalorder %s26, 0
    %p320 = por %p318, %p319
    %p321 = scmp.ne.s32.totalorder %s309, %s310
    %p322 = scmp.eq.s32.totalorder %s27, 1
    %p323 = por %p321, %p322
    %p325 = scmp.ne.s32.totalorder %s310, %s324
    %p326 = scmp.eq.s32.totalorder %s27, 0
    %p327 = por %p325, %p326
    %s329 = sadd.s32 %s328, 1
    %p332 = scmp.eq.s32.totalorder %s21, 1
    %p333 = scmp.ne.s32.totalorder %s328, %s330
    %p334 = scmp.eq.s32.totalorder %s21, 0
    %p335 = por %p333, %p334
    %p336 = scmp.ne.s32.totalorder %s328, %s330
    %p337 = scmp.eq.s32.totalorder %s26, 1
    %p338 = por %p336, %p337
    %p339 = scmp.ne.s32.totalorder %s330, %s331
    %p340 = scmp.eq.s32.totalorder %s26, 0
    %p341 = por %p339, %p340
    %p342 = scmp.ne.s32.totalorder %s330, %s331
    %p343 = scmp.eq.s32.totalorder %s27, 1
    %p344 = por %p342, %p343
    %p346 = scmp.ne.s32.totalorder %s331, %s345
    %p347 = scmp.eq.s32.totalorder %s27, 0
    %p348 = por %p346, %p347
    %s349 = ssub.s32 %s21, %s28
    %p350 = scmp.eq.s32.totalorder %s349, 0
    %s352 = sadd.s32 %s351, 1
    %s353 = scalar_select %p350, %s351, %s352
    %p356 = pneg %p350
    %p357 = scmp.eq.s32.totalorder %s21, 1
    %p358 = por %p356, %p357
    %p359 = scmp.ne.s32.totalorder %s351, %s354
    %p360 = scmp.eq.s32.totalorder %s21, 0
    %p361 = por %p359, %p360
    %p362 = scmp.ne.s32.totalorder %s351, %s354
    %p363 = scmp.eq.s32.totalorder %s26, 1
    %p364 = por %p362, %p363
    %p365 = scmp.ne.s32.totalorder %s354, %s355
    %p366 = scmp.eq.s32.totalorder %s26, 0
    %p367 = por %p365, %p366
    %p368 = scmp.ne.s32.totalorder %s354, %s355
    %p369 = scmp.eq.s32.totalorder %s27, 1
    %p370 = por %p368, %p369
    %p372 = scmp.ne.s32.totalorder %s355, %s371
    %p373 = scmp.eq.s32.totalorder %s27, 0
    %p374 = por %p372, %p373
    %p375 = scmp.le.s32.totalorder 1, %s21
    %p376 = scmp.lt.s32.totalorder %s21, 3
    %p377 = pnand %p375, %p376
    %p378 = pneg %p377
    // Predicated region
    $region9: #{vgg_feature_extractor.1} parent=5 // pred_check
      _
    $region10: #{vgg_feature_extractor.1} parent=5 // pred_check_branch
      %380 = sbr.rel (%p377) target = $region12
    $region11: #{vgg_feature_extractor.1} parent=5 // pred_region
      %s381 = ssub.s32 %s21, 1
      // Predicated region
      $region13: #{vgg_feature_extractor.1} parent=11 // pred_check
        %p382 = pneg %p68
      $region14: #{vgg_feature_extractor.1} parent=11 // pred_check_branch
        %384 = sbr.rel (%p382) target = $region16
      $region15: #{vgg_feature_extractor.1} parent=11 // pred_region
        _
      $region16: #{vgg_feature_extractor.1} parent=11 // pred_fallthru
        _
      // Predicated region
      $region17: #{vgg_feature_extractor.1} parent=11 // pred_check
        %p385 = pneg %p89
      $region18: #{vgg_feature_extractor.1} parent=11 // pred_check_branch
        %387 = sbr.rel (%p385) target = $region20
      $region19: #{vgg_feature_extractor.1} parent=11 // pred_region
        _
      $region20: #{vgg_feature_extractor.1} parent=11 // pred_fallthru
        _
      // Predicated region
      $region21: #{vgg_feature_extractor.1} parent=11 // pred_check
        %p388 = pneg %p110
      $region22: #{vgg_feature_extractor.1} parent=11 // pred_check_branch
        %390 = sbr.rel (%p388) target = $region24
      $region23: #{vgg_feature_extractor.1} parent=11 // pred_region
        _
      $region24: #{vgg_feature_extractor.1} parent=11 // pred_fallthru
        _
      // Predicated region
      $region25: #{vgg_feature_extractor.1} parent=11 // pred_check
        %p391 = pneg %p131
      $region26: #{vgg_feature_extractor.1} parent=11 // pred_check_branch
        %393 = sbr.rel (%p391) target = $region28
      $region27: #{vgg_feature_extractor.1} parent=11 // pred_region
        _
      $region28: #{vgg_feature_extractor.1} parent=11 // pred_fallthru
        _
      // Predicated region
      $region29: #{vgg_feature_extractor.1} parent=11 // pred_check
        %p394 = pneg %p152
      $region30: #{vgg_feature_extractor.1} parent=11 // pred_check_branch
        %396 = sbr.rel (%p394) target = $region32
      $region31: #{vgg_feature_extractor.1} parent=11 // pred_region
        _
      $region32: #{vgg_feature_extractor.1} parent=11 // pred_fallthru
        _
      // Predicated region
      $region33: #{vgg_feature_extractor.1} parent=11 // pred_check
        %p397 = pneg %p173
      $region34: #{vgg_feature_extractor.1} parent=11 // pred_check_branch
        %399 = sbr.rel (%p397) target = $region36
      $region35: #{vgg_feature_extractor.1} parent=11 // pred_region
        _
      $region36: #{vgg_feature_extractor.1} parent=11 // pred_fallthru
        _
      // Predicated region
      $region37: #{vgg_feature_extractor.1} parent=11 // pred_check
        %p400 = pneg %p194
      $region38: #{vgg_feature_extractor.1} parent=11 // pred_check_branch
        %402 = sbr.rel (%p400) target = $region40
      $region39: #{vgg_feature_extractor.1} parent=11 // pred_region
        _
      $region40: #{vgg_feature_extractor.1} parent=11 // pred_fallthru
        _
      // Predicated region
      $region41: #{vgg_feature_extractor.1} parent=11 // pred_check
        %p403 = pneg %p215
      $region42: #{vgg_feature_extractor.1} parent=11 // pred_check_branch
        %405 = sbr.rel (%p403) target = $region44
      $region43: #{vgg_feature_extractor.1} parent=11 // pred_region
        _
      $region44: #{vgg_feature_extractor.1} parent=11 // pred_fallthru
        _
      // Predicated region
      $region45: #{vgg_feature_extractor.1} parent=11 // pred_check
        %p406 = pneg %p236
      $region46: #{vgg_feature_extractor.1} parent=11 // pred_check_branch
        %408 = sbr.rel (%p406) target = $region48
      $region47: #{vgg_feature_extractor.1} parent=11 // pred_region
        _
      $region48: #{vgg_feature_extractor.1} parent=11 // pred_fallthru
        _
      // Predicated region
      $region49: #{vgg_feature_extractor.1} parent=11 // pred_check
        %p409 = pneg %p257
      $region50: #{vgg_feature_extractor.1} parent=11 // pred_check_branch
        %411 = sbr.rel (%p409) target = $region52
      $region51: #{vgg_feature_extractor.1} parent=11 // pred_region
        _
      $region52: #{vgg_feature_extractor.1} parent=11 // pred_fallthru
        _
      // Predicated region
      $region53: #{vgg_feature_extractor.1} parent=11 // pred_check
        %p412 = pneg %p278
      $region54: #{vgg_feature_extractor.1} parent=11 // pred_check_branch
        %414 = sbr.rel (%p412) target = $region56
      $region55: #{vgg_feature_extractor.1} parent=11 // pred_region
        _
      $region56: #{vgg_feature_extractor.1} parent=11 // pred_fallthru
        _
      // Predicated region
      $region57: #{vgg_feature_extractor.1} parent=11 // pred_check
        %p415 = pneg %p299
      $region58: #{vgg_feature_extractor.1} parent=11 // pred_check_branch
        %417 = sbr.rel (%p415) target = $region60
      $region59: #{vgg_feature_extractor.1} parent=11 // pred_region
        _
      $region60: #{vgg_feature_extractor.1} parent=11 // pred_fallthru
        _
      // Predicated region
      $region61: #{vgg_feature_extractor.1} parent=11 // pred_check
        %p418 = pneg %p320
      $region62: #{vgg_feature_extractor.1} parent=11 // pred_check_branch
        %420 = sbr.rel (%p418) target = $region64
      $region63: #{vgg_feature_extractor.1} parent=11 // pred_region
        _
      $region64: #{vgg_feature_extractor.1} parent=11 // pred_fallthru
        _
      // Predicated region
      $region65: #{vgg_feature_extractor.1} parent=11 // pred_check
        %p421 = pneg %p341
      $region66: #{vgg_feature_extractor.1} parent=11 // pred_check_branch
        %423 = sbr.rel (%p421) target = $region68
      $region67: #{vgg_feature_extractor.1} parent=11 // pred_region
        _
      $region68: #{vgg_feature_extractor.1} parent=11 // pred_fallthru
        _
    $region12: #{vgg_feature_extractor.1} parent=5 // pred_fallthru
      _
    %p424 = scmp.lt.s32.totalorder %s21, 2
    // Predicated region
    $region69: #{vgg_feature_extractor.1} parent=5 // pred_check
      %p425 = pneg %p424
    $region70: #{vgg_feature_extractor.1} parent=5 // pred_check_branch
      %427 = sbr.rel (%p425) target = $region72
    $region71: #{vgg_feature_extractor.1} parent=5 // pred_region
      // Predicated region
      $region73: #{vgg_feature_extractor.1} parent=71 // pred_check
        %p428 = pneg %p41
      $region74: #{vgg_feature_extractor.1} parent=71 // pred_check_branch
        %430 = sbr.rel (%p428) target = $region76
      $region75: #{vgg_feature_extractor.1} parent=71 // pred_region
        %p431 = scmp.lt.s32.totalorder %s21, 1
        %s432 = scalar_select %p431, %s21, 1
        %s433 = smul.addr %s432, 64
        %s434 = smul.addr %s433, 8
        %s435 = scalar_lea.vmem %s0, %s434
      $region76: #{vgg_feature_extractor.1} parent=71 // pred_fallthru
        _
    $region72: #{vgg_feature_extractor.1} parent=5 // pred_fallthru
      _
    %p436 = scmp.le.s32.totalorder 1, %s21
    %p437 = scmp.lt.s32.totalorder %s21, 3
    %p438 = pnand %p436, %p437
    %p439 = pneg %p438
    // Predicated region
    $region77: #{vgg_feature_extractor.1} parent=5 // pred_check
      _
    $region78: #{vgg_feature_extractor.1} parent=5 // pred_check_branch
      %441 = sbr.rel (%p438) target = $region80
    $region79: #{vgg_feature_extractor.1} parent=5 // pred_region
      %s442 = ssub.s32 %s21, 1
      %p443 = scmp.lt.s32.totalorder %s26, 1
      %s444 = scalar_select %p443, %s26, 1
      %s445 = smul.addr %s444, 64
      %s446 = smul.addr %s445, 8
      %s447 = scalar_lea.vmem %s0, %s446
      %p448 = pneg %p47
      %p449 = pneg %p44
      %p450 = pneg %p68
      %p451 = pneg %p65
      %p452 = pneg %p89
      %p453 = pneg %p86
      %p454 = pneg %p110
      %p455 = pneg %p107
      %p456 = pneg %p131
      %p457 = pneg %p128
      %p458 = pneg %p152
      %p459 = pneg %p149
      %p460 = pneg %p173
      %p461 = pneg %p170
      %p462 = pneg %p194
      %p463 = pneg %p191
      %p464 = pneg %p215
      %p465 = pneg %p212
      %p466 = pneg %p236
      %p467 = pneg %p233
      %p468 = pneg %p257
      %p469 = pneg %p254
      %p470 = pneg %p278
      %p471 = pneg %p275
      %p472 = pneg %p299
      %p473 = pneg %p296
      %p474 = pneg %p320
      %p475 = pneg %p317
      %p476 = pneg %p341
      %p477 = pneg %p338
      %p478 = pneg %p367
      %p479 = pneg %p364
      %p480 = scmp.lt.s32.totalorder %s26, 1
      %s481 = scalar_select %p480, %s26, 1
      %s482 = smul.addr %s481, 4
      %s483 = scalar_lea.vmem %s15, %s482
      %p484 = scmp.lt.s32.totalorder %s26, 1
      %s485 = scalar_select %p484, %s26, 1
      %s486 = smul.addr %s485, 64
      %s487 = smul.addr %s486, 8
      %s488 = scalar_lea.vmem %s0, %s487
      %p489 = scmp.lt.s32.totalorder %s26, 1
      %s490 = scalar_select %p489, %s26, 1
      %s491 = smul.addr %s490, 4
      %s492 = scalar_lea.vmem %s15, %s491
      %v494 = vld [vmem:[%s488] sm:$0xff]
      %v495 = vld [vmem:[%s488 + $0x8] sm:$0xff]
      %v496 = vld [vmem:[%s488 + $0x10] sm:$0xff]
      %v497 = vld [vmem:[%s488 + $0x18] sm:$0xff]
      %v498 = vld [vmem:[%s488 + $0x20] sm:$0xff]
      %v499 = vld [vmem:[%s488 + $0x28] sm:$0xff]
      %v500 = vld [vmem:[%s488 + $0x30] sm:$0xff]
      %v501 = vld [vmem:[%s488 + $0x38] sm:$0xff]
      %v502 = vld [vmem:[%s488 + $0x40] sm:$0xff]
      %v503 = vld [vmem:[%s488 + $0x48] sm:$0xff]
      %v504 = vld [vmem:[%s488 + $0x50] sm:$0xff]
      %v505 = vld [vmem:[%s488 + $0x58] sm:$0xff]
      %v506 = vld [vmem:[%s488 + $0x60] sm:$0xff]
      %v507 = vld [vmem:[%s488 + $0x68] sm:$0xff]
      %v508 = vld [vmem:[%s488 + $0x70] sm:$0xff]
      %v509 = vld [vmem:[%s488 + $0x78] sm:$0xff]
      %v510 = vld [vmem:[%s488 + $0x80] sm:$0xff]
      %v511 = vld [vmem:[%s488 + $0x88] sm:$0xff]
      %v512 = vld [vmem:[%s488 + $0x90] sm:$0xff]
      %v513 = vld [vmem:[%s488 + $0x98] sm:$0xff]
      %v514 = vld [vmem:[%s488 + $0xa0] sm:$0xff]
      %v515 = vld [vmem:[%s488 + $0xa8] sm:$0xff]
      %v516 = vld [vmem:[%s488 + $0xb0] sm:$0xff]
      %v517 = vld [vmem:[%s488 + $0xb8] sm:$0xff]
      %v518 = vld [vmem:[%s488 + $0xc0] sm:$0xff]
      %v519 = vld [vmem:[%s488 + $0xc8] sm:$0xff]
      %v520 = vld [vmem:[%s488 + $0xd0] sm:$0xff]
      %v521 = vld [vmem:[%s488 + $0xd8] sm:$0xff]
      %v522 = vld [vmem:[%s488 + $0xe0] sm:$0xff]
      %v523 = vld [vmem:[%s488 + $0xe8] sm:$0xff]
      %v524 = vld [vmem:[%s488 + $0xf0] sm:$0xff]
      %v525 = vld [vmem:[%s488 + $0xf8] sm:$0xff]
      %v526 = vld [vmem:[%s488 + $0x100] sm:$0xff]
      %v527 = vld [vmem:[%s488 + $0x108] sm:$0xff]
      %v528 = vld [vmem:[%s488 + $0x110] sm:$0xff]
      %v529 = vld [vmem:[%s488 + $0x118] sm:$0xff]
      %v530 = vld [vmem:[%s488 + $0x120] sm:$0xff]
      %v531 = vld [vmem:[%s488 + $0x128] sm:$0xff]
      %v532 = vld [vmem:[%s488 + $0x130] sm:$0xff]
      %v533 = vld [vmem:[%s488 + $0x138] sm:$0xff]
      %v534 = vld [vmem:[%s488 + $0x140] sm:$0xff]
      %v535 = vld [vmem:[%s488 + $0x148] sm:$0xff]
      %v536 = vld [vmem:[%s488 + $0x150] sm:$0xff]
      %v537 = vld [vmem:[%s488 + $0x158] sm:$0xff]
      %v538 = vld [vmem:[%s488 + $0x160] sm:$0xff]
      %v539 = vld [vmem:[%s488 + $0x168] sm:$0xff]
      %v540 = vld [vmem:[%s488 + $0x170] sm:$0xff]
      %v541 = vld [vmem:[%s488 + $0x178] sm:$0xff]
      %v542 = vld [vmem:[%s488 + $0x180] sm:$0xff]
      %v543 = vld [vmem:[%s488 + $0x188] sm:$0xff]
      %v544 = vld [vmem:[%s488 + $0x190] sm:$0xff]
      %v545 = vld [vmem:[%s488 + $0x198] sm:$0xff]
      %v546 = vld [vmem:[%s488 + $0x1a0] sm:$0xff]
      %v547 = vld [vmem:[%s488 + $0x1a8] sm:$0xff]
      %v548 = vld [vmem:[%s488 + $0x1b0] sm:$0xff]
      %v549 = vld [vmem:[%s488 + $0x1b8] sm:$0xff]
      %v550 = vld [vmem:[%s488 + $0x1c0] sm:$0xff]
      %v551 = vld [vmem:[%s488 + $0x1c8] sm:$0xff]
      %v552 = vld [vmem:[%s488 + $0x1d0] sm:$0xff]
      %v553 = vld [vmem:[%s488 + $0x1d8] sm:$0xff]
      %v554 = vld [vmem:[%s488 + $0x1e0] sm:$0xff]
      %v555 = vld [vmem:[%s488 + $0x1e8] sm:$0xff]
      %v556 = vld [vmem:[%s488 + $0x1f0] sm:$0xff]
      %v557 = vld [vmem:[%s488 + $0x1f8] sm:$0xff]
      %vm558 = vcmask 31744
      %559 = vst.msk [vmem:[#allocation2] sm:$0xff] %vm558, 0.0
      %560 = vst.msk [vmem:[#allocation2 + $0x8] sm:$0xff] %vm558, 0.0
      %vm561 = vcmask 25600
      %562 = vst.msk [vmem:[#allocation2 + $0x10] sm:$0x3] %vm561, 0.0
      %s563 = scalar_lea.vmem [#allocation2], 792
      %564 = vst.msk [vmem:[%s563] sm:$0xff] %vm558, 0.0
      %565 = vst.msk [vmem:[%s563 + $0x8] sm:$0xff] %vm558, 0.0
      %566 = vst.msk [vmem:[%s563 + $0x10] sm:$0x3] %vm561, 0.0
      %vm567 = vcmask 24576
      %568 = vst.msk [vmem:[#allocation2] sm:$0x1] %vm567, 0.0
      %569 = vst.msk [vmem:[#allocation2 + $0x18] sm:$0x1] %vm567, 0.0
      %570 = vst.msk [vmem:[#allocation2 + $0x30] sm:$0x1] %vm567, 0.0
      %571 = vst.msk [vmem:[#allocation2 + $0x48] sm:$0x1] %vm567, 0.0
      %572 = vst.msk [vmem:[#allocation2 + $0x60] sm:$0x1] %vm567, 0.0
      %573 = vst.msk [vmem:[#allocation2 + $0x78] sm:$0x1] %vm567, 0.0
      %574 = vst.msk [vmem:[#allocation2 + $0x90] sm:$0x1] %vm567, 0.0
      %575 = vst.msk [vmem:[#allocation2 + $0xa8] sm:$0x1] %vm567, 0.0
      %576 = vst.msk [vmem:[#allocation2 + $0xc0] sm:$0x1] %vm567, 0.0
      %577 = vst.msk [vmem:[#allocation2 + $0xd8] sm:$0x1] %vm567, 0.0
      %578 = vst.msk [vmem:[#allocation2 + $0xf0] sm:$0x1] %vm567, 0.0
      %579 = vst.msk [vmem:[#allocation2 + $0x108] sm:$0x1] %vm567, 0.0
      %580 = vst.msk [vmem:[#allocation2 + $0x120] sm:$0x1] %vm567, 0.0
      %581 = vst.msk [vmem:[#allocation2 + $0x138] sm:$0x1] %vm567, 0.0
      %582 = vst.msk [vmem:[#allocation2 + $0x150] sm:$0x1] %vm567, 0.0
      %583 = vst.msk [vmem:[#allocation2 + $0x168] sm:$0x1] %vm567, 0.0
      %584 = vst.msk [vmem:[#allocation2 + $0x180] sm:$0x1] %vm567, 0.0
      %585 = vst.msk [vmem:[#allocation2 + $0x198] sm:$0x1] %vm567, 0.0
      %586 = vst.msk [vmem:[#allocation2 + $0x1b0] sm:$0x1] %vm567, 0.0
      %587 = vst.msk [vmem:[#allocation2 + $0x1c8] sm:$0x1] %vm567, 0.0
      %588 = vst.msk [vmem:[#allocation2 + $0x1e0] sm:$0x1] %vm567, 0.0
      %589 = vst.msk [vmem:[#allocation2 + $0x1f8] sm:$0x1] %vm567, 0.0
      %590 = vst.msk [vmem:[#allocation2 + $0x210] sm:$0x1] %vm567, 0.0
      %591 = vst.msk [vmem:[#allocation2 + $0x228] sm:$0x1] %vm567, 0.0
      %592 = vst.msk [vmem:[#allocation2 + $0x240] sm:$0x1] %vm567, 0.0
      %593 = vst.msk [vmem:[#allocation2 + $0x258] sm:$0x1] %vm567, 0.0
      %594 = vst.msk [vmem:[#allocation2 + $0x270] sm:$0x1] %vm567, 0.0
      %595 = vst.msk [vmem:[#allocation2 + $0x288] sm:$0x1] %vm567, 0.0
      %596 = vst.msk [vmem:[#allocation2 + $0x2a0] sm:$0x1] %vm567, 0.0
      %597 = vst.msk [vmem:[#allocation2 + $0x2b8] sm:$0x1] %vm567, 0.0
      %598 = vst.msk [vmem:[#allocation2 + $0x2d0] sm:$0x1] %vm567, 0.0
      %599 = vst.msk [vmem:[#allocation2 + $0x2e8] sm:$0x1] %vm567, 0.0
      %600 = vst.msk [vmem:[#allocation2 + $0x300] sm:$0x1] %vm567, 0.0
      %601 = vst.msk [vmem:[#allocation2 + $0x318] sm:$0x1] %vm567, 0.0
      %602 = vst.msk [vmem:[#allocation2 + $0x11] sm:$0x1] %vm567, 0.0
      %603 = vst.msk [vmem:[#allocation2 + $0x29] sm:$0x1] %vm567, 0.0
      %604 = vst.msk [vmem:[#allocation2 + $0x41] sm:$0x1] %vm567, 0.0
      %605 = vst.msk [vmem:[#allocation2 + $0x59] sm:$0x1] %vm567, 0.0
      %606 = vst.msk [vmem:[#allocation2 + $0x71] sm:$0x1] %vm567, 0.0
      %607 = vst.msk [vmem:[#allocation2 + $0x89] sm:$0x1] %vm567, 0.0
      %608 = vst.msk [vmem:[#allocation2 + $0xa1] sm:$0x1] %vm567, 0.0
      %609 = vst.msk [vmem:[#allocation2 + $0xb9] sm:$0x1] %vm567, 0.0
      %610 = vst.msk [vmem:[#allocation2 + $0xd1] sm:$0x1] %vm567, 0.0
      %611 = vst.msk [vmem:[#allocation2 + $0xe9] sm:$0x1] %vm567, 0.0
      %612 = vst.msk [vmem:[#allocation2 + $0x101] sm:$0x1] %vm567, 0.0
      %613 = vst.msk [vmem:[#allocation2 + $0x119] sm:$0x1] %vm567, 0.0
      %614 = vst.msk [vmem:[#allocation2 + $0x131] sm:$0x1] %vm567, 0.0
      %615 = vst.msk [vmem:[#allocation2 + $0x149] sm:$0x1] %vm567, 0.0
      %616 = vst.msk [vmem:[#allocation2 + $0x161] sm:$0x1] %vm567, 0.0
      %617 = vst.msk [vmem:[#allocation2 + $0x179] sm:$0x1] %vm567, 0.0
      %618 = vst.msk [vmem:[#allocation2 + $0x191] sm:$0x1] %vm567, 0.0
      %619 = vst.msk [vmem:[#allocation2 + $0x1a9] sm:$0x1] %vm567, 0.0
      %620 = vst.msk [vmem:[#allocation2 + $0x1c1] sm:$0x1] %vm567, 0.0
      %621 = vst.msk [vmem:[#allocation2 + $0x1d9] sm:$0x1] %vm567, 0.0
      %622 = vst.msk [vmem:[#allocation2 + $0x1f1] sm:$0x1] %vm567, 0.0
      %623 = vst.msk [vmem:[#allocation2 + $0x209] sm:$0x1] %vm567, 0.0
      %624 = vst.msk [vmem:[#allocation2 + $0x221] sm:$0x1] %vm567, 0.0
      %625 = vst.msk [vmem:[#allocation2 + $0x239] sm:$0x1] %vm567, 0.0
      %626 = vst.msk [vmem:[#allocation2 + $0x251] sm:$0x1] %vm567, 0.0
      %627 = vst.msk [vmem:[#allocation2 + $0x269] sm:$0x1] %vm567, 0.0
      %628 = vst.msk [vmem:[#allocation2 + $0x281] sm:$0x1] %vm567, 0.0
      %629 = vst.msk [vmem:[#allocation2 + $0x299] sm:$0x1] %vm567, 0.0
      %630 = vst.msk [vmem:[#allocation2 + $0x2b1] sm:$0x1] %vm567, 0.0
      %631 = vst.msk [vmem:[#allocation2 + $0x2c9] sm:$0x1] %vm567, 0.0
      %632 = vst.msk [vmem:[#allocation2 + $0x2e1] sm:$0x1] %vm567, 0.0
      %633 = vst.msk [vmem:[#allocation2 + $0x2f9] sm:$0x1] %vm567, 0.0
      %634 = vst.msk [vmem:[#allocation2 + $0x311] sm:$0x1] %vm567, 0.0
      %635 = vst.msk [vmem:[#allocation2 + $0x329] sm:$0x1] %vm567, 0.0
      %s636 = scalar_lea.vmem [#allocation2], 24
      %637 = vst.msk [vmem:[%s636 + $0x1] sm:$0xff] %vm558, %v494
      %638 = vst.msk [vmem:[%s636 + $0x9] sm:$0xff] %vm558, %v495
      %639 = vst.msk [vmem:[%s636 + $0x19] sm:$0xff] %vm558, %v496
      %640 = vst.msk [vmem:[%s636 + $0x21] sm:$0xff] %vm558, %v497
      %641 = vst.msk [vmem:[%s636 + $0x31] sm:$0xff] %vm558, %v498
      %642 = vst.msk [vmem:[%s636 + $0x39] sm:$0xff] %vm558, %v499
      %643 = vst.msk [vmem:[%s636 + $0x49] sm:$0xff] %vm558, %v500
      %644 = vst.msk [vmem:[%s636 + $0x51] sm:$0xff] %vm558, %v501
      %645 = vst.msk [vmem:[%s636 + $0x61] sm:$0xff] %vm558, %v502
      %646 = vst.msk [vmem:[%s636 + $0x69] sm:$0xff] %vm558, %v503
      %647 = vst.msk [vmem:[%s636 + $0x79] sm:$0xff] %vm558, %v504
      %648 = vst.msk [vmem:[%s636 + $0x81] sm:$0xff] %vm558, %v505
      %649 = vst.msk [vmem:[%s636 + $0x91] sm:$0xff] %vm558, %v506
      %650 = vst.msk [vmem:[%s636 + $0x99] sm:$0xff] %vm558, %v507
      %651 = vst.msk [vmem:[%s636 + $0xa9] sm:$0xff] %vm558, %v508
      %652 = vst.msk [vmem:[%s636 + $0xb1] sm:$0xff] %vm558, %v509
      %653 = vst.msk [vmem:[%s636 + $0xc1] sm:$0xff] %vm558, %v510
      %654 = vst.msk [vmem:[%s636 + $0xc9] sm:$0xff] %vm558, %v511
      %655 = vst.msk [vmem:[%s636 + $0xd9] sm:$0xff] %vm558, %v512
      %656 = vst.msk [vmem:[%s636 + $0xe1] sm:$0xff] %vm558, %v513
      %657 = vst.msk [vmem:[%s636 + $0xf1] sm:$0xff] %vm558, %v514
      %658 = vst.msk [vmem:[%s636 + $0xf9] sm:$0xff] %vm558, %v515
      %659 = vst.msk [vmem:[%s636 + $0x109] sm:$0xff] %vm558, %v516
      %660 = vst.msk [vmem:[%s636 + $0x111] sm:$0xff] %vm558, %v517
      %661 = vst.msk [vmem:[%s636 + $0x121] sm:$0xff] %vm558, %v518
      %662 = vst.msk [vmem:[%s636 + $0x129] sm:$0xff] %vm558, %v519
      %663 = vst.msk [vmem:[%s636 + $0x139] sm:$0xff] %vm558, %v520
      %664 = vst.msk [vmem:[%s636 + $0x141] sm:$0xff] %vm558, %v521
      %665 = vst.msk [vmem:[%s636 + $0x151] sm:$0xff] %vm558, %v522
      %666 = vst.msk [vmem:[%s636 + $0x159] sm:$0xff] %vm558, %v523
      %667 = vst.msk [vmem:[%s636 + $0x169] sm:$0xff] %vm558, %v524
      %668 = vst.msk [vmem:[%s636 + $0x171] sm:$0xff] %vm558, %v525
      %669 = vst.msk [vmem:[%s636 + $0x181] sm:$0xff] %vm558, %v526
      %670 = vst.msk [vmem:[%s636 + $0x189] sm:$0xff] %vm558, %v527
      %671 = vst.msk [vmem:[%s636 + $0x199] sm:$0xff] %vm558, %v528
      %672 = vst.msk [vmem:[%s636 + $0x1a1] sm:$0xff] %vm558, %v529
      %673 = vst.msk [vmem:[%s636 + $0x1b1] sm:$0xff] %vm558, %v530
      %674 = vst.msk [vmem:[%s636 + $0x1b9] sm:$0xff] %vm558, %v531
      %675 = vst.msk [vmem:[%s636 + $0x1c9] sm:$0xff] %vm558, %v532
      %676 = vst.msk [vmem:[%s636 + $0x1d1] sm:$0xff] %vm558, %v533
      %677 = vst.msk [vmem:[%s636 + $0x1e1] sm:$0xff] %vm558, %v534
      %678 = vst.msk [vmem:[%s636 + $0x1e9] sm:$0xff] %vm558, %v535
      %679 = vst.msk [vmem:[%s636 + $0x1f9] sm:$0xff] %vm558, %v536
      %680 = vst.msk [vmem:[%s636 + $0x201] sm:$0xff] %vm558, %v537
      %681 = vst.msk [vmem:[%s636 + $0x211] sm:$0xff] %vm558, %v538
      %682 = vst.msk [vmem:[%s636 + $0x219] sm:$0xff] %vm558, %v539
      %683 = vst.msk [vmem:[%s636 + $0x229] sm:$0xff] %vm558, %v540
      %684 = vst.msk [vmem:[%s636 + $0x231] sm:$0xff] %vm558, %v541
      %685 = vst.msk [vmem:[%s636 + $0x241] sm:$0xff] %vm558, %v542
      %686 = vst.msk [vmem:[%s636 + $0x249] sm:$0xff] %vm558, %v543
      %687 = vst.msk [vmem:[%s636 + $0x259] sm:$0xff] %vm558, %v544
      %688 = vst.msk [vmem:[%s636 + $0x261] sm:$0xff] %vm558, %v545
      %689 = vst.msk [vmem:[%s636 + $0x271] sm:$0xff] %vm558, %v546
      %690 = vst.msk [vmem:[%s636 + $0x279] sm:$0xff] %vm558, %v547
      %691 = vst.msk [vmem:[%s636 + $0x289] sm:$0xff] %vm558, %v548
      %692 = vst.msk [vmem:[%s636 + $0x291] sm:$0xff] %vm558, %v549
      %693 = vst.msk [vmem:[%s636 + $0x2a1] sm:$0xff] %vm558, %v550
      %694 = vst.msk [vmem:[%s636 + $0x2a9] sm:$0xff] %vm558, %v551
      %695 = vst.msk [vmem:[%s636 + $0x2b9] sm:$0xff] %vm558, %v552
      %696 = vst.msk [vmem:[%s636 + $0x2c1] sm:$0xff] %vm558, %v553
      %697 = vst.msk [vmem:[%s636 + $0x2d1] sm:$0xff] %vm558, %v554
      %698 = vst.msk [vmem:[%s636 + $0x2d9] sm:$0xff] %vm558, %v555
      %699 = vst.msk [vmem:[%s636 + $0x2e9] sm:$0xff] %vm558, %v556
      %700 = vst.msk [vmem:[%s636 + $0x2f1] sm:$0xff] %vm558, %v557
      %v701 = vld [vmem:[#allocation2] sm:$0xff]
      %v702 = vld [vmem:[#allocation2 + $0x8] sm:$0xff]
      %v703 = vld [vmem:[#allocation2 + $0x18] sm:$0xff]
      %v704 = vld [vmem:[#allocation2 + $0x20] sm:$0xff]
      %v705 = vld [vmem:[#allocation2 + $0x30] sm:$0xff]
      %v706 = vld [vmem:[#allocation2 + $0x38] sm:$0xff]
      %v707 = vld [vmem:[#allocation2 + $0x48] sm:$0xff]
      %v708 = vld [vmem:[#allocation2 + $0x50] sm:$0xff]
      %v709 = vld [vmem:[#allocation2 + $0x60] sm:$0xff]
      %v710 = vld [vmem:[#allocation2 + $0x68] sm:$0xff]
      %v711 = vld [vmem:[#allocation2 + $0x78] sm:$0xff]
      %v712 = vld [vmem:[#allocation2 + $0x80] sm:$0xff]
      %v713 = vld [vmem:[#allocation2 + $0x90] sm:$0xff]
      %v714 = vld [vmem:[#allocation2 + $0x98] sm:$0xff]
      %v715 = vld [vmem:[#allocation2 + $0xa8] sm:$0xff]
      %v716 = vld [vmem:[#allocation2 + $0xb0] sm:$0xff]
      %v717 = vld [vmem:[#allocation2 + $0xc0] sm:$0xff]
      %v718 = vld [vmem:[#allocation2 + $0xc8] sm:$0xff]
      %v719 = vld [vmem:[#allocation2 + $0xd8] sm:$0xff]
      %v720 = vld [vmem:[#allocation2 + $0xe0] sm:$0xff]
      %v721 = vld [vmem:[#allocation2 + $0xf0] sm:$0xff]
      %v722 = vld [vmem:[#allocation2 + $0xf8] sm:$0xff]
      %v723 = vld [vmem:[#allocation2 + $0x108] sm:$0xff]
      %v724 = vld [vmem:[#allocation2 + $0x110] sm:$0xff]
      %v725 = vld [vmem:[#allocation2 + $0x120] sm:$0xff]
      %v726 = vld [vmem:[#allocation2 + $0x128] sm:$0xff]
      %v727 = vld [vmem:[#allocation2 + $0x138] sm:$0xff]
      %v728 = vld [vmem:[#allocation2 + $0x140] sm:$0xff]
      %v729 = vld [vmem:[#allocation2 + $0x150] sm:$0xff]
      %v730 = vld [vmem:[#allocation2 + $0x158] sm:$0xff]
      %v731 = vld [vmem:[#allocation2 + $0x168] sm:$0xff]
      %v732 = vld [vmem:[#allocation2 + $0x170] sm:$0xff]
      %v733 = vld [vmem:[#allocation2 + $0x180] sm:$0xff]
      %v734 = vld [vmem:[#allocation2 + $0x188] sm:$0xff]
      %v735 = vld [vmem:[#allocation2 + $0x198] sm:$0xff]
      %v736 = vld [vmem:[#allocation2 + $0x1a0] sm:$0xff]
      %v737 = vld [vmem:[#allocation2 + $0x1b0] sm:$0xff]
      %v738 = vld [vmem:[#allocation2 + $0x1b8] sm:$0xff]
      %v739 = vld [vmem:[#allocation2 + $0x1c8] sm:$0xff]
      %v740 = vld [vmem:[#allocation2 + $0x1d0] sm:$0xff]
      %v741 = vld [vmem:[#allocation2 + $0x1e0] sm:$0xff]
      %v742 = vld [vmem:[#allocation2 + $0x1e8] sm:$0xff]
      %v743 = vld [vmem:[#allocation2 + $0x1f8] sm:$0xff]
      %v744 = vld [vmem:[#allocation2 + $0x200] sm:$0xff]
      %v745 = vld [vmem:[#allocation2 + $0x210] sm:$0xff]
      %v746 = vld [vmem:[#allocation2 + $0x218] sm:$0xff]
      %v747 = vld [vmem:[#allocation2 + $0x228] sm:$0xff]
      %v748 = vld [vmem:[#allocation2 + $0x230] sm:$0xff]
      %v749 = vld [vmem:[#allocation2 + $0x240] sm:$0xff]
      %v750 = vld [vmem:[#allocation2 + $0x248] sm:$0xff]
      %v751 = vld [vmem:[#allocation2 + $0x258] sm:$0xff]
      %v752 = vld [vmem:[#allocation2 + $0x260] sm:$0xff]
      %v753 = vld [vmem:[#allocation2 + $0x270] sm:$0xff]
      %v754 = vld [vmem:[#allocation2 + $0x278] sm:$0xff]
      %v755 = vld [vmem:[#allocation2 + $0x288] sm:$0xff]
      %v756 = vld [vmem:[#allocation2 + $0x290] sm:$0xff]
      %v757 = vld [vmem:[#allocation2 + $0x2a0] sm:$0xff]
      %v758 = vld [vmem:[#allocation2 + $0x2a8] sm:$0xff]
      %v759 = vld [vmem:[#allocation2 + $0x2b8] sm:$0xff]
      %v760 = vld [vmem:[#allocation2 + $0x2c0] sm:$0xff]
      %v761 = vld [vmem:[#allocation2 + $0x2d0] sm:$0xff]
      %v762 = vld [vmem:[#allocation2 + $0x2d8] sm:$0xff]
      %v763 = vld [vmem:[#allocation2 + $0x2e8] sm:$0xff]
      %v764 = vld [vmem:[#allocation2 + $0x2f0] sm:$0xff]
      %765 = vst.msk [vmem:[#allocation9] sm:$0xff] %vm558, %v701
      %766 = vst.msk [vmem:[#allocation9 + $0x18] sm:$0xff] %vm558, %v702
      %767 = vst.msk [vmem:[#allocation9 + $0x30] sm:$0xff] %vm558, %v703
      %768 = vst.msk [vmem:[#allocation9 + $0x48] sm:$0xff] %vm558, %v704
      %769 = vst.msk [vmem:[#allocation9 + $0x60] sm:$0xff] %vm558, %v705
      %770 = vst.msk [vmem:[#allocation9 + $0x78] sm:$0xff] %vm558, %v706
      %771 = vst.msk [vmem:[#allocation9 + $0x90] sm:$0xff] %vm558, %v707
      %772 = vst.msk [vmem:[#allocation9 + $0xa8] sm:$0xff] %vm558, %v708
      %773 = vst.msk [vmem:[#allocation9 + $0xc0] sm:$0xff] %vm558, %v709
      %774 = vst.msk [vmem:[#allocation9 + $0xd8] sm:$0xff] %vm558, %v710
      %775 = vst.msk [vmem:[#allocation9 + $0xf0] sm:$0xff] %vm558, %v711
      %776 = vst.msk [vmem:[#allocation9 + $0x108] sm:$0xff] %vm558, %v712
      %777 = vst.msk [vmem:[#allocation9 + $0x120] sm:$0xff] %vm558, %v713
      %778 = vst.msk [vmem:[#allocation9 + $0x138] sm:$0xff] %vm558, %v714
      %779 = vst.msk [vmem:[#allocation9 + $0x150] sm:$0xff] %vm558, %v715
      %780 = vst.msk [vmem:[#allocation9 + $0x168] sm:$0xff] %vm558, %v716
      %781 = vst.msk [vmem:[#allocation9 + $0x180] sm:$0xff] %vm558, %v717
      %782 = vst.msk [vmem:[#allocation9 + $0x198] sm:$0xff] %vm558, %v718
      %783 = vst.msk [vmem:[#allocation9 + $0x1b0] sm:$0xff] %vm558, %v719
      %784 = vst.msk [vmem:[#allocation9 + $0x1c8] sm:$0xff] %vm558, %v720
      %785 = vst.msk [vmem:[#allocation9 + $0x1e0] sm:$0xff] %vm558, %v721
      %786 = vst.msk [vmem:[#allocation9 + $0x1f8] sm:$0xff] %vm558, %v722
      %787 = vst.msk [vmem:[#allocation9 + $0x210] sm:$0xff] %vm558, %v723
      %788 = vst.msk [vmem:[#allocation9 + $0x228] sm:$0xff] %vm558, %v724
      %789 = vst.msk [vmem:[#allocation9 + $0x240] sm:$0xff] %vm558, %v725
      %790 = vst.msk [vmem:[#allocation9 + $0x258] sm:$0xff] %vm558, %v726
      %791 = vst.msk [vmem:[#allocation9 + $0x270] sm:$0xff] %vm558, %v727
      %792 = vst.msk [vmem:[#allocation9 + $0x288] sm:$0xff] %vm558, %v728
      %793 = vst.msk [vmem:[#allocation9 + $0x2a0] sm:$0xff] %vm558, %v729
      %794 = vst.msk [vmem:[#allocation9 + $0x2b8] sm:$0xff] %vm558, %v730
      %795 = vst.msk [vmem:[#allocation9 + $0x2d0] sm:$0xff] %vm558, %v731
      %796 = vst.msk [vmem:[#allocation9 + $0x2e8] sm:$0xff] %vm558, %v732
      %797 = vst.msk [vmem:[#allocation9 + $0x300] sm:$0xff] %vm558, %v733
      %798 = vst.msk [vmem:[#allocation9 + $0x318] sm:$0xff] %vm558, %v734
      %799 = vst.msk [vmem:[#allocation9 + $0x330] sm:$0xff] %vm558, %v735
      %800 = vst.msk [vmem:[#allocation9 + $0x348] sm:$0xff] %vm558, %v736
      %801 = vst.msk [vmem:[#allocation9 + $0x360] sm:$0xff] %vm558, %v737
      %802 = vst.msk [vmem:[#allocation9 + $0x378] sm:$0xff] %vm558, %v738
      %803 = vst.msk [vmem:[#allocation9 + $0x390] sm:$0xff] %vm558, %v739
      %804 = vst.msk [vmem:[#allocation9 + $0x3a8] sm:$0xff] %vm558, %v740
      %805 = vst.msk [vmem:[#allocation9 + $0x3c0] sm:$0xff] %vm558, %v741
      %806 = vst.msk [vmem:[#allocation9 + $0x3d8] sm:$0xff] %vm558, %v742
      %807 = vst.msk [vmem:[#allocation9 + $0x3f0] sm:$0xff] %vm558, %v743
      %808 = vst.msk [vmem:[#allocation9 + $0x408] sm:$0xff] %vm558, %v744
      %809 = vst.msk [vmem:[#allocation9 + $0x420] sm:$0xff] %vm558, %v745
      %810 = vst.msk [vmem:[#allocation9 + $0x438] sm:$0xff] %vm558, %v746
      %811 = vst.msk [vmem:[#allocation9 + $0x450] sm:$0xff] %vm558, %v747
      %812 = vst.msk [vmem:[#allocation9 + $0x468] sm:$0xff] %vm558, %v748
      %813 = vst.msk [vmem:[#allocation9 + $0x480] sm:$0xff] %vm558, %v749
      %814 = vst.msk [vmem:[#allocation9 + $0x498] sm:$0xff] %vm558, %v750
      %815 = vst.msk [vmem:[#allocation9 + $0x4b0] sm:$0xff] %vm558, %v751
      %816 = vst.msk [vmem:[#allocation9 + $0x4c8] sm:$0xff] %vm558, %v752
      %817 = vst.msk [vmem:[#allocation9 + $0x4e0] sm:$0xff] %vm558, %v753
      %818 = vst.msk [vmem:[#allocation9 + $0x4f8] sm:$0xff] %vm558, %v754
      %819 = vst.msk [vmem:[#allocation9 + $0x510] sm:$0xff] %vm558, %v755
      %820 = vst.msk [vmem:[#allocation9 + $0x528] sm:$0xff] %vm558, %v756
      %821 = vst.msk [vmem:[#allocation9 + $0x540] sm:$0xff] %vm558, %v757
      %822 = vst.msk [vmem:[#allocation9 + $0x558] sm:$0xff] %vm558, %v758
      %823 = vst.msk [vmem:[#allocation9 + $0x570] sm:$0xff] %vm558, %v759
      %824 = vst.msk [vmem:[#allocation9 + $0x588] sm:$0xff] %vm558, %v760
      %825 = vst.msk [vmem:[#allocation9 + $0x5a0] sm:$0xff] %vm558, %v761
      %826 = vst.msk [vmem:[#allocation9 + $0x5b8] sm:$0xff] %vm558, %v762
      %827 = vst.msk [vmem:[#allocation9 + $0x5d0] sm:$0xff] %vm558, %v763
      %828 = vst.msk [vmem:[#allocation9 + $0x5e8] sm:$0xff] %vm558, %v764
      %v829 = vld [vmem:[#allocation2 + $0x1] sm:$0xff]
      %v830 = vld [vmem:[#allocation2 + $0x9] sm:$0xff]
      %v831 = vld [vmem:[#allocation2 + $0x19] sm:$0xff]
      %v832 = vld [vmem:[#allocation2 + $0x21] sm:$0xff]
      %v833 = vld [vmem:[#allocation2 + $0x31] sm:$0xff]
      %v834 = vld [vmem:[#allocation2 + $0x39] sm:$0xff]
      %v835 = vld [vmem:[#allocation2 + $0x49] sm:$0xff]
      %v836 = vld [vmem:[#allocation2 + $0x51] sm:$0xff]
      %v837 = vld [vmem:[#allocation2 + $0x61] sm:$0xff]
      %v838 = vld [vmem:[#allocation2 + $0x69] sm:$0xff]
      %v839 = vld [vmem:[#allocation2 + $0x79] sm:$0xff]
      %v840 = vld [vmem:[#allocation2 + $0x81] sm:$0xff]
      %v841 = vld [vmem:[#allocation2 + $0x91] sm:$0xff]
      %v842 = vld [vmem:[#allocation2 + $0x99] sm:$0xff]
      %v843 = vld [vmem:[#allocation2 + $0xa9] sm:$0xff]
      %v844 = vld [vmem:[#allocation2 + $0xb1] sm:$0xff]
      %v845 = vld [vmem:[#allocation2 + $0xc1] sm:$0xff]
      %v846 = vld [vmem:[#allocation2 + $0xc9] sm:$0xff]
      %v847 = vld [vmem:[#allocation2 + $0xd9] sm:$0xff]
      %v848 = vld [vmem:[#allocation2 + $0xe1] sm:$0xff]
      %v849 = vld [vmem:[#allocation2 + $0xf1] sm:$0xff]
      %v850 = vld [vmem:[#allocation2 + $0xf9] sm:$0xff]
      %v851 = vld [vmem:[#allocation2 + $0x109] sm:$0xff]
      %v852 = vld [vmem:[#allocation2 + $0x111] sm:$0xff]
      %v853 = vld [vmem:[#allocation2 + $0x121] sm:$0xff]
      %v854 = vld [vmem:[#allocation2 + $0x129] sm:$0xff]
      %v855 = vld [vmem:[#allocation2 + $0x139] sm:$0xff]
      %v856 = vld [vmem:[#allocation2 + $0x141] sm:$0xff]
      %v857 = vld [vmem:[#allocation2 + $0x151] sm:$0xff]
      %v858 = vld [vmem:[#allocation2 + $0x159] sm:$0xff]
      %v859 = vld [vmem:[#allocation2 + $0x169] sm:$0xff]
      %v860 = vld [vmem:[#allocation2 + $0x171] sm:$0xff]
      %v861 = vld [vmem:[#allocation2 + $0x181] sm:$0xff]
      %v862 = vld [vmem:[#allocation2 + $0x189] sm:$0xff]
      %v863 = vld [vmem:[#allocation2 + $0x199] sm:$0xff]
      %v864 = vld [vmem:[#allocation2 + $0x1a1] sm:$0xff]
      %v865 = vld [vmem:[#allocation2 + $0x1b1] sm:$0xff]
      %v866 = vld [vmem:[#allocation2 + $0x1b9] sm:$0xff]
      %v867 = vld [vmem:[#allocation2 + $0x1c9] sm:$0xff]
      %v868 = vld [vmem:[#allocation2 + $0x1d1] sm:$0xff]
      %v869 = vld [vmem:[#allocation2 + $0x1e1] sm:$0xff]
      %v870 = vld [vmem:[#allocation2 + $0x1e9] sm:$0xff]
      %v871 = vld [vmem:[#allocation2 + $0x1f9] sm:$0xff]
      %v872 = vld [vmem:[#allocation2 + $0x201] sm:$0xff]
      %v873 = vld [vmem:[#allocation2 + $0x211] sm:$0xff]
      %v874 = vld [vmem:[#allocation2 + $0x219] sm:$0xff]
      %v875 = vld [vmem:[#allocation2 + $0x229] sm:$0xff]
      %v876 = vld [vmem:[#allocation2 + $0x231] sm:$0xff]
      %v877 = vld [vmem:[#allocation2 + $0x241] sm:$0xff]
      %v878 = vld [vmem:[#allocation2 + $0x249] sm:$0xff]
      %v879 = vld [vmem:[#allocation2 + $0x259] sm:$0xff]
      %v880 = vld [vmem:[#allocation2 + $0x261] sm:$0xff]
      %v881 = vld [vmem:[#allocation2 + $0x271] sm:$0xff]
      %v882 = vld [vmem:[#allocation2 + $0x279] sm:$0xff]
      %v883 = vld [vmem:[#allocation2 + $0x289] sm:$0xff]
      %v884 = vld [vmem:[#allocation2 + $0x291] sm:$0xff]
      %v885 = vld [vmem:[#allocation2 + $0x2a1] sm:$0xff]
      %v886 = vld [vmem:[#allocation2 + $0x2a9] sm:$0xff]
      %v887 = vld [vmem:[#allocation2 + $0x2b9] sm:$0xff]
      %v888 = vld [vmem:[#allocation2 + $0x2c1] sm:$0xff]
      %v889 = vld [vmem:[#allocation2 + $0x2d1] sm:$0xff]
      %v890 = vld [vmem:[#allocation2 + $0x2d9] sm:$0xff]
      %v891 = vld [vmem:[#allocation2 + $0x2e9] sm:$0xff]
      %v892 = vld [vmem:[#allocation2 + $0x2f1] sm:$0xff]
      %957 = vrot.lane.b32.xlu0 %v829, 4
      %v958 = vpop.permute.xlu0 %957
      %959 = vrot.lane.b32.xlu0 %v830, 4
      %v960 = vpop.permute.xlu0 %959
      %961 = vrot.lane.b32.xlu0 %v831, 4
      %v962 = vpop.permute.xlu0 %961
      %963 = vrot.lane.b32.xlu0 %v832, 4
      %v964 = vpop.permute.xlu0 %963
      %965 = vrot.lane.b32.xlu0 %v833, 4
      %v966 = vpop.permute.xlu0 %965
      %967 = vrot.lane.b32.xlu0 %v834, 4
      %v968 = vpop.permute.xlu0 %967
      %969 = vrot.lane.b32.xlu0 %v835, 4
      %v970 = vpop.permute.xlu0 %969
      %971 = vrot.lane.b32.xlu0 %v836, 4
      %v972 = vpop.permute.xlu0 %971
      %973 = vrot.lane.b32.xlu0 %v837, 4
      %v974 = vpop.permute.xlu0 %973
      %975 = vrot.lane.b32.xlu0 %v838, 4
      %v976 = vpop.permute.xlu0 %975
      %977 = vrot.lane.b32.xlu0 %v839, 4
      %v978 = vpop.permute.xlu0 %977
      %979 = vrot.lane.b32.xlu0 %v840, 4
      %v980 = vpop.permute.xlu0 %979
      %981 = vrot.lane.b32.xlu0 %v841, 4
      %v982 = vpop.permute.xlu0 %981
      %983 = vrot.lane.b32.xlu0 %v842, 4
      %v984 = vpop.permute.xlu0 %983
      %985 = vrot.lane.b32.xlu0 %v843, 4
      %v986 = vpop.permute.xlu0 %985
      %987 = vrot.lane.b32.xlu0 %v844, 4
      %v988 = vpop.permute.xlu0 %987
      %989 = vrot.lane.b32.xlu0 %v845, 4
      %v990 = vpop.permute.xlu0 %989
      %991 = vrot.lane.b32.xlu0 %v846, 4
      %v992 = vpop.permute.xlu0 %991
      %993 = vrot.lane.b32.xlu0 %v847, 4
      %v994 = vpop.permute.xlu0 %993
      %995 = vrot.lane.b32.xlu0 %v848, 4
      %v996 = vpop.permute.xlu0 %995
      %997 = vrot.lane.b32.xlu0 %v849, 4
      %v998 = vpop.permute.xlu0 %997
      %999 = vrot.lane.b32.xlu0 %v850, 4
      %v1000 = vpop.permute.xlu0 %999
      %1001 = vrot.lane.b32.xlu0 %v851, 4
      %v1002 = vpop.permute.xlu0 %1001
      %1003 = vrot.lane.b32.xlu0 %v852, 4
      %v1004 = vpop.permute.xlu0 %1003
      %1005 = vrot.lane.b32.xlu0 %v853, 4
      %v1006 = vpop.permute.xlu0 %1005
      %1007 = vrot.lane.b32.xlu0 %v854, 4
      %v1008 = vpop.permute.xlu0 %1007
      %1009 = vrot.lane.b32.xlu0 %v855, 4
      %v1010 = vpop.permute.xlu0 %1009
      %1011 = vrot.lane.b32.xlu0 %v856, 4
      %v1012 = vpop.permute.xlu0 %1011
      %1013 = vrot.lane.b32.xlu0 %v857, 4
      %v1014 = vpop.permute.xlu0 %1013
      %1015 = vrot.lane.b32.xlu0 %v858, 4
      %v1016 = vpop.permute.xlu0 %1015
      %1017 = vrot.lane.b32.xlu0 %v859, 4
      %v1018 = vpop.permute.xlu0 %1017
      %1019 = vrot.lane.b32.xlu0 %v860, 4
      %v1020 = vpop.permute.xlu0 %1019
      %1021 = vrot.lane.b32.xlu0 %v861, 4
      %v1022 = vpop.permute.xlu0 %1021
      %1023 = vrot.lane.b32.xlu0 %v862, 4
      %v1024 = vpop.permute.xlu0 %1023
      %1025 = vrot.lane.b32.xlu0 %v863, 4
      %v1026 = vpop.permute.xlu0 %1025
      %1027 = vrot.lane.b32.xlu0 %v864, 4
      %v1028 = vpop.permute.xlu0 %1027
      %1029 = vrot.lane.b32.xlu0 %v865, 4
      %v1030 = vpop.permute.xlu0 %1029
      %1031 = vrot.lane.b32.xlu0 %v866, 4
      %v1032 = vpop.permute.xlu0 %1031
      %1033 = vrot.lane.b32.xlu0 %v867, 4
      %v1034 = vpop.permute.xlu0 %1033
      %1035 = vrot.lane.b32.xlu0 %v868, 4
      %v1036 = vpop.permute.xlu0 %1035
      %1037 = vrot.lane.b32.xlu0 %v869, 4
      %v1038 = vpop.permute.xlu0 %1037
      %1039 = vrot.lane.b32.xlu0 %v870, 4
      %v1040 = vpop.permute.xlu0 %1039
      %1041 = vrot.lane.b32.xlu0 %v871, 4
      %v1042 = vpop.permute.xlu0 %1041
      %1043 = vrot.lane.b32.xlu0 %v872, 4
      %v1044 = vpop.permute.xlu0 %1043
      %1045 = vrot.lane.b32.xlu0 %v873, 4
      %v1046 = vpop.permute.xlu0 %1045
      %1047 = vrot.lane.b32.xlu0 %v874, 4
      %v1048 = vpop.permute.xlu0 %1047
      %1049 = vrot.lane.b32.xlu0 %v875, 4
      %v1050 = vpop.permute.xlu0 %1049
      %1051 = vrot.lane.b32.xlu0 %v876, 4
      %v1052 = vpop.permute.xlu0 %1051
      %1053 = vrot.lane.b32.xlu0 %v877, 4
      %v1054 = vpop.permute.xlu0 %1053
      %1055 = vrot.lane.b32.xlu0 %v878, 4
      %v1056 = vpop.permute.xlu0 %1055
      %1057 = vrot.lane.b32.xlu0 %v879, 4
      %v1058 = vpop.permute.xlu0 %1057
      %1059 = vrot.lane.b32.xlu0 %v880, 4
      %v1060 = vpop.permute.xlu0 %1059
      %1061 = vrot.lane.b32.xlu0 %v881, 4
      %v1062 = vpop.permute.xlu0 %1061
      %1063 = vrot.lane.b32.xlu0 %v882, 4
      %v1064 = vpop.permute.xlu0 %1063
      %1065 = vrot.lane.b32.xlu0 %v883, 4
      %v1066 = vpop.permute.xlu0 %1065
      %1067 = vrot.lane.b32.xlu0 %v884, 4
      %v1068 = vpop.permute.xlu0 %1067
      %1069 = vrot.lane.b32.xlu0 %v885, 4
      %v1070 = vpop.permute.xlu0 %1069
      %1071 = vrot.lane.b32.xlu0 %v886, 4
      %v1072 = vpop.permute.xlu0 %1071
      %1073 = vrot.lane.b32.xlu0 %v887, 4
      %v1074 = vpop.permute.xlu0 %1073
      %1075 = vrot.lane.b32.xlu0 %v888, 4
      %v1076 = vpop.permute.xlu0 %1075
      %1077 = vrot.lane.b32.xlu0 %v889, 4
      %v1078 = vpop.permute.xlu0 %1077
      %1079 = vrot.lane.b32.xlu0 %v890, 4
      %v1080 = vpop.permute.xlu0 %1079
      %1081 = vrot.lane.b32.xlu0 %v891, 4
      %v1082 = vpop.permute.xlu0 %1081
      %1083 = vrot.lane.b32.xlu0 %v892, 4
      %v1084 = vpop.permute.xlu0 %1083
      %vm1149 = vcmask 64544
      %1150 = vst.msk [vmem:[#allocation9] sm:$0xff] %vm1149, %v958
      %1151 = vst.msk [vmem:[#allocation9 + $0x18] sm:$0xff] %vm1149, %v960
      %1152 = vst.msk [vmem:[#allocation9 + $0x30] sm:$0xff] %vm1149, %v962
      %1153 = vst.msk [vmem:[#allocation9 + $0x48] sm:$0xff] %vm1149, %v964
      %1154 = vst.msk [vmem:[#allocation9 + $0x60] sm:$0xff] %vm1149, %v966
      %1155 = vst.msk [vmem:[#allocation9 + $0x78] sm:$0xff] %vm1149, %v968
      %1156 = vst.msk [vmem:[#allocation9 + $0x90] sm:$0xff] %vm1149, %v970
      %1157 = vst.msk [vmem:[#allocation9 + $0xa8] sm:$0xff] %vm1149, %v972
      %1158 = vst.msk [vmem:[#allocation9 + $0xc0] sm:$0xff] %vm1149, %v974
      %1159 = vst.msk [vmem:[#allocation9 + $0xd8] sm:$0xff] %vm1149, %v976
      %1160 = vst.msk [vmem:[#allocation9 + $0xf0] sm:$0xff] %vm1149, %v978
      %1161 = vst.msk [vmem:[#allocation9 + $0x108] sm:$0xff] %vm1149, %v980
      %1162 = vst.msk [vmem:[#allocation9 + $0x120] sm:$0xff] %vm1149, %v982
      %1163 = vst.msk [vmem:[#allocation9 + $0x138] sm:$0xff] %vm1149, %v984
      %1164 = vst.msk [vmem:[#allocation9 + $0x150] sm:$0xff] %vm1149, %v986
      %1165 = vst.msk [vmem:[#allocation9 + $0x168] sm:$0xff] %vm1149, %v988
      %1166 = vst.msk [vmem:[#allocation9 + $0x180] sm:$0xff] %vm1149, %v990
      %1167 = vst.msk [vmem:[#allocation9 + $0x198] sm:$0xff] %vm1149, %v992
      %1168 = vst.msk [vmem:[#allocation9 + $0x1b0] sm:$0xff] %vm1149, %v994
      %1169 = vst.msk [vmem:[#allocation9 + $0x1c8] sm:$0xff] %vm1149, %v996
      %1170 = vst.msk [vmem:[#allocation9 + $0x1e0] sm:$0xff] %vm1149, %v998
      %1171 = vst.msk [vmem:[#allocation9 + $0x1f8] sm:$0xff] %vm1149, %v1000
      %1172 = vst.msk [vmem:[#allocation9 + $0x210] sm:$0xff] %vm1149, %v1002
      %1173 = vst.msk [vmem:[#allocation9 + $0x228] sm:$0xff] %vm1149, %v1004
      %1174 = vst.msk [vmem:[#allocation9 + $0x240] sm:$0xff] %vm1149, %v1006
      %1175 = vst.msk [vmem:[#allocation9 + $0x258] sm:$0xff] %vm1149, %v1008
      %1176 = vst.msk [vmem:[#allocation9 + $0x270] sm:$0xff] %vm1149, %v1010
      %1177 = vst.msk [vmem:[#allocation9 + $0x288] sm:$0xff] %vm1149, %v1012
      %1178 = vst.msk [vmem:[#allocation9 + $0x2a0] sm:$0xff] %vm1149, %v1014
      %1179 = vst.msk [vmem:[#allocation9 + $0x2b8] sm:$0xff] %vm1149, %v1016
      %1180 = vst.msk [vmem:[#allocation9 + $0x2d0] sm:$0xff] %vm1149, %v1018
      %1181 = vst.msk [vmem:[#allocation9 + $0x2e8] sm:$0xff] %vm1149, %v1020
      %1182 = vst.msk [vmem:[#allocation9 + $0x300] sm:$0xff] %vm1149, %v1022
      %1183 = vst.msk [vmem:[#allocation9 + $0x318] sm:$0xff] %vm1149, %v1024
      %1184 = vst.msk [vmem:[#allocation9 + $0x330] sm:$0xff] %vm1149, %v1026
      %1185 = vst.msk [vmem:[#allocation9 + $0x348] sm:$0xff] %vm1149, %v1028
      %1186 = vst.msk [vmem:[#allocation9 + $0x360] sm:$0xff] %vm1149, %v1030
      %1187 = vst.msk [vmem:[#allocation9 + $0x378] sm:$0xff] %vm1149, %v1032
      %1188 = vst.msk [vmem:[#allocation9 + $0x390] sm:$0xff] %vm1149, %v1034
      %1189 = vst.msk [vmem:[#allocation9 + $0x3a8] sm:$0xff] %vm1149, %v1036
      %1190 = vst.msk [vmem:[#allocation9 + $0x3c0] sm:$0xff] %vm1149, %v1038
      %1191 = vst.msk [vmem:[#allocation9 + $0x3d8] sm:$0xff] %vm1149, %v1040
      %1192 = vst.msk [vmem:[#allocation9 + $0x3f0] sm:$0xff] %vm1149, %v1042
      %1193 = vst.msk [vmem:[#allocation9 + $0x408] sm:$0xff] %vm1149, %v1044
      %1194 = vst.msk [vmem:[#allocation9 + $0x420] sm:$0xff] %vm1149, %v1046
      %1195 = vst.msk [vmem:[#allocation9 + $0x438] sm:$0xff] %vm1149, %v1048
      %1196 = vst.msk [vmem:[#allocation9 + $0x450] sm:$0xff] %vm1149, %v1050
      %1197 = vst.msk [vmem:[#allocation9 + $0x468] sm:$0xff] %vm1149, %v1052
      %1198 = vst.msk [vmem:[#allocation9 + $0x480] sm:$0xff] %vm1149, %v1054
      %1199 = vst.msk [vmem:[#allocation9 + $0x498] sm:$0xff] %vm1149, %v1056
      %1200 = vst.msk [vmem:[#allocation9 + $0x4b0] sm:$0xff] %vm1149, %v1058
      %1201 = vst.msk [vmem:[#allocation9 + $0x4c8] sm:$0xff] %vm1149, %v1060
      %1202 = vst.msk [vmem:[#allocation9 + $0x4e0] sm:$0xff] %vm1149, %v1062
      %1203 = vst.msk [vmem:[#allocation9 + $0x4f8] sm:$0xff] %vm1149, %v1064
      %1204 = vst.msk [vmem:[#allocation9 + $0x510] sm:$0xff] %vm1149, %v1066
      %1205 = vst.msk [vmem:[#allocation9 + $0x528] sm:$0xff] %vm1149, %v1068
      %1206 = vst.msk [vmem:[#allocation9 + $0x540] sm:$0xff] %vm1149, %v1070
      %1207 = vst.msk [vmem:[#allocation9 + $0x558] sm:$0xff] %vm1149, %v1072
      %1208 = vst.msk [vmem:[#allocation9 + $0x570] sm:$0xff] %vm1149, %v1074
      %1209 = vst.msk [vmem:[#allocation9 + $0x588] sm:$0xff] %vm1149, %v1076
      %1210 = vst.msk [vmem:[#allocation9 + $0x5a0] sm:$0xff] %vm1149, %v1078
      %1211 = vst.msk [vmem:[#allocation9 + $0x5b8] sm:$0xff] %vm1149, %v1080
      %1212 = vst.msk [vmem:[#allocation9 + $0x5d0] sm:$0xff] %vm1149, %v1082
      %1213 = vst.msk [vmem:[#allocation9 + $0x5e8] sm:$0xff] %vm1149, %v1084
      %v1214 = vld [vmem:[#allocation2 + $0x2] sm:$0xff]
      %v1215 = vld [vmem:[#allocation2 + $0xa] sm:$0xff]
      %v1216 = vld [vmem:[#allocation2 + $0x1a] sm:$0xff]
      %v1217 = vld [vmem:[#allocation2 + $0x22] sm:$0xff]
      %v1218 = vld [vmem:[#allocation2 + $0x32] sm:$0xff]
      %v1219 = vld [vmem:[#allocation2 + $0x3a] sm:$0xff]
      %v1220 = vld [vmem:[#allocation2 + $0x4a] sm:$0xff]
      %v1221 = vld [vmem:[#allocation2 + $0x52] sm:$0xff]
      %v1222 = vld [vmem:[#allocation2 + $0x62] sm:$0xff]
      %v1223 = vld [vmem:[#allocation2 + $0x6a] sm:$0xff]
      %v1224 = vld [vmem:[#allocation2 + $0x7a] sm:$0xff]
      %v1225 = vld [vmem:[#allocation2 + $0x82] sm:$0xff]
      %v1226 = vld [vmem:[#allocation2 + $0x92] sm:$0xff]
      %v1227 = vld [vmem:[#allocation2 + $0x9a] sm:$0xff]
      %v1228 = vld [vmem:[#allocation2 + $0xaa] sm:$0xff]
      %v1229 = vld [vmem:[#allocation2 + $0xb2] sm:$0xff]
      %v1230 = vld [vmem:[#allocation2 + $0xc2] sm:$0xff]
      %v1231 = vld [vmem:[#allocation2 + $0xca] sm:$0xff]
      %v1232 = vld [vmem:[#allocation2 + $0xda] sm:$0xff]
      %v1233 = vld [vmem:[#allocation2 + $0xe2] sm:$0xff]
      %v1234 = vld [vmem:[#allocation2 + $0xf2] sm:$0xff]
      %v1235 = vld [vmem:[#allocation2 + $0xfa] sm:$0xff]
      %v1236 = vld [vmem:[#allocation2 + $0x10a] sm:$0xff]
      %v1237 = vld [vmem:[#allocation2 + $0x112] sm:$0xff]
      %v1238 = vld [vmem:[#allocation2 + $0x122] sm:$0xff]
      %v1239 = vld [vmem:[#allocation2 + $0x12a] sm:$0xff]
      %v1240 = vld [vmem:[#allocation2 + $0x13a] sm:$0xff]
      %v1241 = vld [vmem:[#allocation2 + $0x142] sm:$0xff]
      %v1242 = vld [vmem:[#allocation2 + $0x152] sm:$0xff]
      %v1243 = vld [vmem:[#allocation2 + $0x15a] sm:$0xff]
      %v1244 = vld [vmem:[#allocation2 + $0x16a] sm:$0xff]
      %v1245 = vld [vmem:[#allocation2 + $0x172] sm:$0xff]
      %v1246 = vld [vmem:[#allocation2 + $0x182] sm:$0xff]
      %v1247 = vld [vmem:[#allocation2 + $0x18a] sm:$0xff]
      %v1248 = vld [vmem:[#allocation2 + $0x19a] sm:$0xff]
      %v1249 = vld [vmem:[#allocation2 + $0x1a2] sm:$0xff]
      %v1250 = vld [vmem:[#allocation2 + $0x1b2] sm:$0xff]
      %v1251 = vld [vmem:[#allocation2 + $0x1ba] sm:$0xff]
      %v1252 = vld [vmem:[#allocation2 + $0x1ca] sm:$0xff]
      %v1253 = vld [vmem:[#allocation2 + $0x1d2] sm:$0xff]
      %v1254 = vld [vmem:[#allocation2 + $0x1e2] sm:$0xff]
      %v1255 = vld [vmem:[#allocation2 + $0x1ea] sm:$0xff]
      %v1256 = vld [vmem:[#allocation2 + $0x1fa] sm:$0xff]
      %v1257 = vld [vmem:[#allocation2 + $0x202] sm:$0xff]
      %v1258 = vld [vmem:[#allocation2 + $0x212] sm:$0xff]
      %v1259 = vld [vmem:[#allocation2 + $0x21a] sm:$0xff]
      %v1260 = vld [vmem:[#allocation2 + $0x22a] sm:$0xff]
      %v1261 = vld [vmem:[#allocation2 + $0x232] sm:$0xff]
      %v1262 = vld [vmem:[#allocation2 + $0x242] sm:$0xff]
      %v1263 = vld [vmem:[#allocation2 + $0x24a] sm:$0xff]
      %v1264 = vld [vmem:[#allocation2 + $0x25a] sm:$0xff]
      %v1265 = vld [vmem:[#allocation2 + $0x262] sm:$0xff]
      %v1266 = vld [vmem:[#allocation2 + $0x272] sm:$0xff]
      %v1267 = vld [vmem:[#allocation2 + $0x27a] sm:$0xff]
      %v1268 = vld [vmem:[#allocation2 + $0x28a] sm:$0xff]
      %v1269 = vld [vmem:[#allocation2 + $0x292] sm:$0xff]
      %v1270 = vld [vmem:[#allocation2 + $0x2a2] sm:$0xff]
      %v1271 = vld [vmem:[#allocation2 + $0x2aa] sm:$0xff]
      %v1272 = vld [vmem:[#allocation2 + $0x2ba] sm:$0xff]
      %v1273 = vld [vmem:[#allocation2 + $0x2c2] sm:$0xff]
      %v1274 = vld [vmem:[#allocation2 + $0x2d2] sm:$0xff]
      %v1275 = vld [vmem:[#allocation2 + $0x2da] sm:$0xff]
      %v1276 = vld [vmem:[#allocation2 + $0x2ea] sm:$0xff]
      %v1277 = vld [vmem:[#allocation2 + $0x2f2] sm:$0xff]
      %1342 = vrot.lane.b32.xlu0 %v1214, 8
      %v1343 = vpop.permute.xlu0 %1342
      %1344 = vrot.lane.b32.xlu0 %v1215, 8
      %v1345 = vpop.permute.xlu0 %1344
      %1346 = vrot.lane.b32.xlu0 %v1216, 8
      %v1347 = vpop.permute.xlu0 %1346
      %1348 = vrot.lane.b32.xlu0 %v1217, 8
      %v1349 = vpop.permute.xlu0 %1348
      %1350 = vrot.lane.b32.xlu0 %v1218, 8
      %v1351 = vpop.permute.xlu0 %1350
      %1352 = vrot.lane.b32.xlu0 %v1219, 8
      %v1353 = vpop.permute.xlu0 %1352
      %1354 = vrot.lane.b32.xlu0 %v1220, 8
      %v1355 = vpop.permute.xlu0 %1354
      %1356 = vrot.lane.b32.xlu0 %v1221, 8
      %v1357 = vpop.permute.xlu0 %1356
      %1358 = vrot.lane.b32.xlu0 %v1222, 8
      %v1359 = vpop.permute.xlu0 %1358
      %1360 = vrot.lane.b32.xlu0 %v1223, 8
      %v1361 = vpop.permute.xlu0 %1360
      %1362 = vrot.lane.b32.xlu0 %v1224, 8
      %v1363 = vpop.permute.xlu0 %1362
      %1364 = vrot.lane.b32.xlu0 %v1225, 8
      %v1365 = vpop.permute.xlu0 %1364
      %1366 = vrot.lane.b32.xlu0 %v1226, 8
      %v1367 = vpop.permute.xlu0 %1366
      %1368 = vrot.lane.b32.xlu0 %v1227, 8
      %v1369 = vpop.permute.xlu0 %1368
      %1370 = vrot.lane.b32.xlu0 %v1228, 8
      %v1371 = vpop.permute.xlu0 %1370
      %1372 = vrot.lane.b32.xlu0 %v1229, 8
      %v1373 = vpop.permute.xlu0 %1372
      %1374 = vrot.lane.b32.xlu0 %v1230, 8
      %v1375 = vpop.permute.xlu0 %1374
      %1376 = vrot.lane.b32.xlu0 %v1231, 8
      %v1377 = vpop.permute.xlu0 %1376
      %1378 = vrot.lane.b32.xlu0 %v1232, 8
      %v1379 = vpop.permute.xlu0 %1378
      %1380 = vrot.lane.b32.xlu0 %v1233, 8
      %v1381 = vpop.permute.xlu0 %1380
      %1382 = vrot.lane.b32.xlu0 %v1234, 8
      %v1383 = vpop.permute.xlu0 %1382
      %1384 = vrot.lane.b32.xlu0 %v1235, 8
      %v1385 = vpop.permute.xlu0 %1384
      %1386 = vrot.lane.b32.xlu0 %v1236, 8
      %v1387 = vpop.permute.xlu0 %1386
      %1388 = vrot.lane.b32.xlu0 %v1237, 8
      %v1389 = vpop.permute.xlu0 %1388
      %1390 = vrot.lane.b32.xlu0 %v1238, 8
      %v1391 = vpop.permute.xlu0 %1390
      %1392 = vrot.lane.b32.xlu0 %v1239, 8
      %v1393 = vpop.permute.xlu0 %1392
      %1394 = vrot.lane.b32.xlu0 %v1240, 8
      %v1395 = vpop.permute.xlu0 %1394
      %1396 = vrot.lane.b32.xlu0 %v1241, 8
      %v1397 = vpop.permute.xlu0 %1396
      %1398 = vrot.lane.b32.xlu0 %v1242, 8
      %v1399 = vpop.permute.xlu0 %1398
      %1400 = vrot.lane.b32.xlu0 %v1243, 8
      %v1401 = vpop.permute.xlu0 %1400
      %1402 = vrot.lane.b32.xlu0 %v1244, 8
      %v1403 = vpop.permute.xlu0 %1402
      %1404 = vrot.lane.b32.xlu0 %v1245, 8
      %v1405 = vpop.permute.xlu0 %1404
      %1406 = vrot.lane.b32.xlu0 %v1246, 8
      %v1407 = vpop.permute.xlu0 %1406
      %1408 = vrot.lane.b32.xlu0 %v1247, 8
      %v1409 = vpop.permute.xlu0 %1408
      %1410 = vrot.lane.b32.xlu0 %v1248, 8
      %v1411 = vpop.permute.xlu0 %1410
      %1412 = vrot.lane.b32.xlu0 %v1249, 8
      %v1413 = vpop.permute.xlu0 %1412
      %1414 = vrot.lane.b32.xlu0 %v1250, 8
      %v1415 = vpop.permute.xlu0 %1414
      %1416 = vrot.lane.b32.xlu0 %v1251, 8
      %v1417 = vpop.permute.xlu0 %1416
      %1418 = vrot.lane.b32.xlu0 %v1252, 8
      %v1419 = vpop.permute.xlu0 %1418
      %1420 = vrot.lane.b32.xlu0 %v1253, 8
      %v1421 = vpop.permute.xlu0 %1420
      %1422 = vrot.lane.b32.xlu0 %v1254, 8
      %v1423 = vpop.permute.xlu0 %1422
      %1424 = vrot.lane.b32.xlu0 %v1255, 8
      %v1425 = vpop.permute.xlu0 %1424
      %1426 = vrot.lane.b32.xlu0 %v1256, 8
      %v1427 = vpop.permute.xlu0 %1426
      %1428 = vrot.lane.b32.xlu0 %v1257, 8
      %v1429 = vpop.permute.xlu0 %1428
      %1430 = vrot.lane.b32.xlu0 %v1258, 8
      %v1431 = vpop.permute.xlu0 %1430
      %1432 = vrot.lane.b32.xlu0 %v1259, 8
      %v1433 = vpop.permute.xlu0 %1432
      %1434 = vrot.lane.b32.xlu0 %v1260, 8
      %v1435 = vpop.permute.xlu0 %1434
      %1436 = vrot.lane.b32.xlu0 %v1261, 8
      %v1437 = vpop.permute.xlu0 %1436
      %1438 = vrot.lane.b32.xlu0 %v1262, 8
      %v1439 = vpop.permute.xlu0 %1438
      %1440 = vrot.lane.b32.xlu0 %v1263, 8
      %v1441 = vpop.permute.xlu0 %1440
      %1442 = vrot.lane.b32.xlu0 %v1264, 8
      %v1443 = vpop.permute.xlu0 %1442
      %1444 = vrot.lane.b32.xlu0 %v1265, 8
      %v1445 = vpop.permute.xlu0 %1444
      %1446 = vrot.lane.b32.xlu0 %v1266, 8
      %v1447 = vpop.permute.xlu0 %1446
      %1448 = vrot.lane.b32.xlu0 %v1267, 8
      %v1449 = vpop.permute.xlu0 %1448
      %1450 = vrot.lane.b32.xlu0 %v1268, 8
      %v1451 = vpop.permute.xlu0 %1450
      %1452 = vrot.lane.b32.xlu0 %v1269, 8
      %v1453 = vpop.permute.xlu0 %1452
      %1454 = vrot.lane.b32.xlu0 %v1270, 8
      %v1455 = vpop.permute.xlu0 %1454
      %1456 = vrot.lane.b32.xlu0 %v1271, 8
      %v1457 = vpop.permute.xlu0 %1456
      %1458 = vrot.lane.b32.xlu0 %v1272, 8
      %v1459 = vpop.permute.xlu0 %1458
      %1460 = vrot.lane.b32.xlu0 %v1273, 8
      %v1461 = vpop.permute.xlu0 %1460
      %1462 = vrot.lane.b32.xlu0 %v1274, 8
      %v1463 = vpop.permute.xlu0 %1462
      %1464 = vrot.lane.b32.xlu0 %v1275, 8
      %v1465 = vpop.permute.xlu0 %1464
      %1466 = vrot.lane.b32.xlu0 %v1276, 8
      %v1467 = vpop.permute.xlu0 %1466
      %1468 = vrot.lane.b32.xlu0 %v1277, 8
      %v1469 = vpop.permute.xlu0 %1468
      %vm1534 = vcmask 97344
      %1535 = vst.msk [vmem:[#allocation9] sm:$0xff] %vm1534, %v1343
      %1536 = vst.msk [vmem:[#allocation9 + $0x18] sm:$0xff] %vm1534, %v1345
      %1537 = vst.msk [vmem:[#allocation9 + $0x30] sm:$0xff] %vm1534, %v1347
      %1538 = vst.msk [vmem:[#allocation9 + $0x48] sm:$0xff] %vm1534, %v1349
      %1539 = vst.msk [vmem:[#allocation9 + $0x60] sm:$0xff] %vm1534, %v1351
      %1540 = vst.msk [vmem:[#allocation9 + $0x78] sm:$0xff] %vm1534, %v1353
      %1541 = vst.msk [vmem:[#allocation9 + $0x90] sm:$0xff] %vm1534, %v1355
      %1542 = vst.msk [vmem:[#allocation9 + $0xa8] sm:$0xff] %vm1534, %v1357
      %1543 = vst.msk [vmem:[#allocation9 + $0xc0] sm:$0xff] %vm1534, %v1359
      %1544 = vst.msk [vmem:[#allocation9 + $0xd8] sm:$0xff] %vm1534, %v1361
      %1545 = vst.msk [vmem:[#allocation9 + $0xf0] sm:$0xff] %vm1534, %v1363
      %1546 = vst.msk [vmem:[#allocation9 + $0x108] sm:$0xff] %vm1534, %v1365
      %1547 = vst.msk [vmem:[#allocation9 + $0x120] sm:$0xff] %vm1534, %v1367
      %1548 = vst.msk [vmem:[#allocation9 + $0x138] sm:$0xff] %vm1534, %v1369
      %1549 = vst.msk [vmem:[#allocation9 + $0x150] sm:$0xff] %vm1534, %v1371
      %1550 = vst.msk [vmem:[#allocation9 + $0x168] sm:$0xff] %vm1534, %v1373
      %1551 = vst.msk [vmem:[#allocation9 + $0x180] sm:$0xff] %vm1534, %v1375
      %1552 = vst.msk [vmem:[#allocation9 + $0x198] sm:$0xff] %vm1534, %v1377
      %1553 = vst.msk [vmem:[#allocation9 + $0x1b0] sm:$0xff] %vm1534, %v1379
      %1554 = vst.msk [vmem:[#allocation9 + $0x1c8] sm:$0xff] %vm1534, %v1381
      %1555 = vst.msk [vmem:[#allocation9 + $0x1e0] sm:$0xff] %vm1534, %v1383
      %1556 = vst.msk [vmem:[#allocation9 + $0x1f8] sm:$0xff] %vm1534, %v1385
      %1557 = vst.msk [vmem:[#allocation9 + $0x210] sm:$0xff] %vm1534, %v1387
      %1558 = vst.msk [vmem:[#allocation9 + $0x228] sm:$0xff] %vm1534, %v1389
      %1559 = vst.msk [vmem:[#allocation9 + $0x240] sm:$0xff] %vm1534, %v1391
      %1560 = vst.msk [vmem:[#allocation9 + $0x258] sm:$0xff] %vm1534, %v1393
      %1561 = vst.msk [vmem:[#allocation9 + $0x270] sm:$0xff] %vm1534, %v1395
      %1562 = vst.msk [vmem:[#allocation9 + $0x288] sm:$0xff] %vm1534, %v1397
      %1563 = vst.msk [vmem:[#allocation9 + $0x2a0] sm:$0xff] %vm1534, %v1399
      %1564 = vst.msk [vmem:[#allocation9 + $0x2b8] sm:$0xff] %vm1534, %v1401
      %1565 = vst.msk [vmem:[#allocation9 + $0x2d0] sm:$0xff] %vm1534, %v1403
      %1566 = vst.msk [vmem:[#allocation9 + $0x2e8] sm:$0xff] %vm1534, %v1405
      %1567 = vst.msk [vmem:[#allocation9 + $0x300] sm:$0xff] %vm1534, %v1407
      %1568 = vst.msk [vmem:[#allocation9 + $0x318] sm:$0xff] %vm1534, %v1409
      %1569 = vst.msk [vmem:[#allocation9 + $0x330] sm:$0xff] %vm1534, %v1411
      %1570 = vst.msk [vmem:[#allocation9 + $0x348] sm:$0xff] %vm1534, %v1413
      %1571 = vst.msk [vmem:[#allocation9 + $0x360] sm:$0xff] %vm1534, %v1415
      %1572 = vst.msk [vmem:[#allocation9 + $0x378] sm:$0xff] %vm1534, %v1417
      %1573 = vst.msk [vmem:[#allocation9 + $0x390] sm:$0xff] %vm1534, %v1419
      %1574 = vst.msk [vmem:[#allocation9 + $0x3a8] sm:$0xff] %vm1534, %v1421
      %1575 = vst.msk [vmem:[#allocation9 + $0x3c0] sm:$0xff] %vm1534, %v1423
      %1576 = vst.msk [vmem:[#allocation9 + $0x3d8] sm:$0xff] %vm1534, %v1425
      %1577 = vst.msk [vmem:[#allocation9 + $0x3f0] sm:$0xff] %vm1534, %v1427
      %1578 = vst.msk [vmem:[#allocation9 + $0x408] sm:$0xff] %vm1534, %v1429
      %1579 = vst.msk [vmem:[#allocation9 + $0x420] sm:$0xff] %vm1534, %v1431
      %1580 = vst.msk [vmem:[#allocation9 + $0x438] sm:$0xff] %vm1534, %v1433
      %1581 = vst.msk [vmem:[#allocation9 + $0x450] sm:$0xff] %vm1534, %v1435
      %1582 = vst.msk [vmem:[#allocation9 + $0x468] sm:$0xff] %vm1534, %v1437
      %1583 = vst.msk [vmem:[#allocation9 + $0x480] sm:$0xff] %vm1534, %v1439
      %1584 = vst.msk [vmem:[#allocation9 + $0x498] sm:$0xff] %vm1534, %v1441
      %1585 = vst.msk [vmem:[#allocation9 + $0x4b0] sm:$0xff] %vm1534, %v1443
      %1586 = vst.msk [vmem:[#allocation9 + $0x4c8] sm:$0xff] %vm1534, %v1445
      %1587 = vst.msk [vmem:[#allocation9 + $0x4e0] sm:$0xff] %vm1534, %v1447
      %1588 = vst.msk [vmem:[#allocation9 + $0x4f8] sm:$0xff] %vm1534, %v1449
      %1589 = vst.msk [vmem:[#allocation9 + $0x510] sm:$0xff] %vm1534, %v1451
      %1590 = vst.msk [vmem:[#allocation9 + $0x528] sm:$0xff] %vm1534, %v1453
      %1591 = vst.msk [vmem:[#allocation9 + $0x540] sm:$0xff] %vm1534, %v1455
      %1592 = vst.msk [vmem:[#allocation9 + $0x558] sm:$0xff] %vm1534, %v1457
      %1593 = vst.msk [vmem:[#allocation9 + $0x570] sm:$0xff] %vm1534, %v1459
      %1594 = vst.msk [vmem:[#allocation9 + $0x588] sm:$0xff] %vm1534, %v1461
      %1595 = vst.msk [vmem:[#allocation9 + $0x5a0] sm:$0xff] %vm1534, %v1463
      %1596 = vst.msk [vmem:[#allocation9 + $0x5b8] sm:$0xff] %vm1534, %v1465
      %1597 = vst.msk [vmem:[#allocation9 + $0x5d0] sm:$0xff] %vm1534, %v1467
      %1598 = vst.msk [vmem:[#allocation9 + $0x5e8] sm:$0xff] %vm1534, %v1469
      %v1599 = vld [vmem:[%s636] sm:$0xff]
      %v1600 = vld [vmem:[%s636 + $0x8] sm:$0xff]
      %v1601 = vld [vmem:[%s636 + $0x18] sm:$0xff]
      %v1602 = vld [vmem:[%s636 + $0x20] sm:$0xff]
      %v1603 = vld [vmem:[%s636 + $0x30] sm:$0xff]
      %v1604 = vld [vmem:[%s636 + $0x38] sm:$0xff]
      %v1605 = vld [vmem:[%s636 + $0x48] sm:$0xff]
      %v1606 = vld [vmem:[%s636 + $0x50] sm:$0xff]
      %v1607 = vld [vmem:[%s636 + $0x60] sm:$0xff]
      %v1608 = vld [vmem:[%s636 + $0x68] sm:$0xff]
      %v1609 = vld [vmem:[%s636 + $0x78] sm:$0xff]
      %v1610 = vld [vmem:[%s636 + $0x80] sm:$0xff]
      %v1611 = vld [vmem:[%s636 + $0x90] sm:$0xff]
      %v1612 = vld [vmem:[%s636 + $0x98] sm:$0xff]
      %v1613 = vld [vmem:[%s636 + $0xa8] sm:$0xff]
      %v1614 = vld [vmem:[%s636 + $0xb0] sm:$0xff]
      %v1615 = vld [vmem:[%s636 + $0xc0] sm:$0xff]
      %v1616 = vld [vmem:[%s636 + $0xc8] sm:$0xff]
      %v1617 = vld [vmem:[%s636 + $0xd8] sm:$0xff]
      %v1618 = vld [vmem:[%s636 + $0xe0] sm:$0xff]
      %v1619 = vld [vmem:[%s636 + $0xf0] sm:$0xff]
      %v1620 = vld [vmem:[%s636 + $0xf8] sm:$0xff]
      %v1621 = vld [vmem:[%s636 + $0x108] sm:$0xff]
      %v1622 = vld [vmem:[%s636 + $0x110] sm:$0xff]
      %v1623 = vld [vmem:[%s636 + $0x120] sm:$0xff]
      %v1624 = vld [vmem:[%s636 + $0x128] sm:$0xff]
      %v1625 = vld [vmem:[%s636 + $0x138] sm:$0xff]
      %v1626 = vld [vmem:[%s636 + $0x140] sm:$0xff]
      %v1627 = vld [vmem:[%s636 + $0x150] sm:$0xff]
      %v1628 = vld [vmem:[%s636 + $0x158] sm:$0xff]
      %v1629 = vld [vmem:[%s636 + $0x168] sm:$0xff]
      %v1630 = vld [vmem:[%s636 + $0x170] sm:$0xff]
      %v1631 = vld [vmem:[%s636 + $0x180] sm:$0xff]
      %v1632 = vld [vmem:[%s636 + $0x188] sm:$0xff]
      %v1633 = vld [vmem:[%s636 + $0x198] sm:$0xff]
      %v1634 = vld [vmem:[%s636 + $0x1a0] sm:$0xff]
      %v1635 = vld [vmem:[%s636 + $0x1b0] sm:$0xff]
      %v1636 = vld [vmem:[%s636 + $0x1b8] sm:$0xff]
      %v1637 = vld [vmem:[%s636 + $0x1c8] sm:$0xff]
      %v1638 = vld [vmem:[%s636 + $0x1d0] sm:$0xff]
      %v1639 = vld [vmem:[%s636 + $0x1e0] sm:$0xff]
      %v1640 = vld [vmem:[%s636 + $0x1e8] sm:$0xff]
      %v1641 = vld [vmem:[%s636 + $0x1f8] sm:$0xff]
      %v1642 = vld [vmem:[%s636 + $0x200] sm:$0xff]
      %v1643 = vld [vmem:[%s636 + $0x210] sm:$0xff]
      %v1644 = vld [vmem:[%s636 + $0x218] sm:$0xff]
      %v1645 = vld [vmem:[%s636 + $0x228] sm:$0xff]
      %v1646 = vld [vmem:[%s636 + $0x230] sm:$0xff]
      %v1647 = vld [vmem:[%s636 + $0x240] sm:$0xff]
      %v1648 = vld [vmem:[%s636 + $0x248] sm:$0xff]
      %v1649 = vld [vmem:[%s636 + $0x258] sm:$0xff]
      %v1650 = vld [vmem:[%s636 + $0x260] sm:$0xff]
      %v1651 = vld [vmem:[%s636 + $0x270] sm:$0xff]
      %v1652 = vld [vmem:[%s636 + $0x278] sm:$0xff]
      %v1653 = vld [vmem:[%s636 + $0x288] sm:$0xff]
      %v1654 = vld [vmem:[%s636 + $0x290] sm:$0xff]
      %v1655 = vld [vmem:[%s636 + $0x2a0] sm:$0xff]
      %v1656 = vld [vmem:[%s636 + $0x2a8] sm:$0xff]
      %v1657 = vld [vmem:[%s636 + $0x2b8] sm:$0xff]
      %v1658 = vld [vmem:[%s636 + $0x2c0] sm:$0xff]
      %v1659 = vld [vmem:[%s636 + $0x2d0] sm:$0xff]
      %v1660 = vld [vmem:[%s636 + $0x2d8] sm:$0xff]
      %v1661 = vld [vmem:[%s636 + $0x2e8] sm:$0xff]
      %v1662 = vld [vmem:[%s636 + $0x2f0] sm:$0xff]
      %1727 = vrot.lane.b32.xlu0 %v1599, 12
      %v1728 = vpop.permute.xlu0 %1727
      %1729 = vrot.lane.b32.xlu0 %v1600, 12
      %v1730 = vpop.permute.xlu0 %1729
      %1731 = vrot.lane.b32.xlu0 %v1601, 12
      %v1732 = vpop.permute.xlu0 %1731
      %1733 = vrot.lane.b32.xlu0 %v1602, 12
      %v1734 = vpop.permute.xlu0 %1733
      %1735 = vrot.lane.b32.xlu0 %v1603, 12
      %v1736 = vpop.permute.xlu0 %1735
      %1737 = vrot.lane.b32.xlu0 %v1604, 12
      %v1738 = vpop.permute.xlu0 %1737
      %1739 = vrot.lane.b32.xlu0 %v1605, 12
      %v1740 = vpop.permute.xlu0 %1739
      %1741 = vrot.lane.b32.xlu0 %v1606, 12
      %v1742 = vpop.permute.xlu0 %1741
      %1743 = vrot.lane.b32.xlu0 %v1607, 12
      %v1744 = vpop.permute.xlu0 %1743
      %1745 = vrot.lane.b32.xlu0 %v1608, 12
      %v1746 = vpop.permute.xlu0 %1745
      %1747 = vrot.lane.b32.xlu0 %v1609, 12
      %v1748 = vpop.permute.xlu0 %1747
      %1749 = vrot.lane.b32.xlu0 %v1610, 12
      %v1750 = vpop.permute.xlu0 %1749
      %1751 = vrot.lane.b32.xlu0 %v1611, 12
      %v1752 = vpop.permute.xlu0 %1751
      %1753 = vrot.lane.b32.xlu0 %v1612, 12
      %v1754 = vpop.permute.xlu0 %1753
      %1755 = vrot.lane.b32.xlu0 %v1613, 12
      %v1756 = vpop.permute.xlu0 %1755
      %1757 = vrot.lane.b32.xlu0 %v1614, 12
      %v1758 = vpop.permute.xlu0 %1757
      %1759 = vrot.lane.b32.xlu0 %v1615, 12
      %v1760 = vpop.permute.xlu0 %1759
      %1761 = vrot.lane.b32.xlu0 %v1616, 12
      %v1762 = vpop.permute.xlu0 %1761
      %1763 = vrot.lane.b32.xlu0 %v1617, 12
      %v1764 = vpop.permute.xlu0 %1763
      %1765 = vrot.lane.b32.xlu0 %v1618, 12
      %v1766 = vpop.permute.xlu0 %1765
      %1767 = vrot.lane.b32.xlu0 %v1619, 12
      %v1768 = vpop.permute.xlu0 %1767
      %1769 = vrot.lane.b32.xlu0 %v1620, 12
      %v1770 = vpop.permute.xlu0 %1769
      %1771 = vrot.lane.b32.xlu0 %v1621, 12
      %v1772 = vpop.permute.xlu0 %1771
      %1773 = vrot.lane.b32.xlu0 %v1622, 12
      %v1774 = vpop.permute.xlu0 %1773
      %1775 = vrot.lane.b32.xlu0 %v1623, 12
      %v1776 = vpop.permute.xlu0 %1775
      %1777 = vrot.lane.b32.xlu0 %v1624, 12
      %v1778 = vpop.permute.xlu0 %1777
      %1779 = vrot.lane.b32.xlu0 %v1625, 12
      %v1780 = vpop.permute.xlu0 %1779
      %1781 = vrot.lane.b32.xlu0 %v1626, 12
      %v1782 = vpop.permute.xlu0 %1781
      %1783 = vrot.lane.b32.xlu0 %v1627, 12
      %v1784 = vpop.permute.xlu0 %1783
      %1785 = vrot.lane.b32.xlu0 %v1628, 12
      %v1786 = vpop.permute.xlu0 %1785
      %1787 = vrot.lane.b32.xlu0 %v1629, 12
      %v1788 = vpop.permute.xlu0 %1787
      %1789 = vrot.lane.b32.xlu0 %v1630, 12
      %v1790 = vpop.permute.xlu0 %1789
      %1791 = vrot.lane.b32.xlu0 %v1631, 12
      %v1792 = vpop.permute.xlu0 %1791
      %1793 = vrot.lane.b32.xlu0 %v1632, 12
      %v1794 = vpop.permute.xlu0 %1793
      %1795 = vrot.lane.b32.xlu0 %v1633, 12
      %v1796 = vpop.permute.xlu0 %1795
      %1797 = vrot.lane.b32.xlu0 %v1634, 12
      %v1798 = vpop.permute.xlu0 %1797
      %1799 = vrot.lane.b32.xlu0 %v1635, 12
      %v1800 = vpop.permute.xlu0 %1799
      %1801 = vrot.lane.b32.xlu0 %v1636, 12
      %v1802 = vpop.permute.xlu0 %1801
      %1803 = vrot.lane.b32.xlu0 %v1637, 12
      %v1804 = vpop.permute.xlu0 %1803
      %1805 = vrot.lane.b32.xlu0 %v1638, 12
      %v1806 = vpop.permute.xlu0 %1805
      %1807 = vrot.lane.b32.xlu0 %v1639, 12
      %v1808 = vpop.permute.xlu0 %1807
      %1809 = vrot.lane.b32.xlu0 %v1640, 12
      %v1810 = vpop.permute.xlu0 %1809
      %1811 = vrot.lane.b32.xlu0 %v1641, 12
      %v1812 = vpop.permute.xlu0 %1811
      %1813 = vrot.lane.b32.xlu0 %v1642, 12
      %v1814 = vpop.permute.xlu0 %1813
      %1815 = vrot.lane.b32.xlu0 %v1643, 12
      %v1816 = vpop.permute.xlu0 %1815
      %1817 = vrot.lane.b32.xlu0 %v1644, 12
      %v1818 = vpop.permute.xlu0 %1817
      %1819 = vrot.lane.b32.xlu0 %v1645, 12
      %v1820 = vpop.permute.xlu0 %1819
      %1821 = vrot.lane.b32.xlu0 %v1646, 12
      %v1822 = vpop.permute.xlu0 %1821
      %1823 = vrot.lane.b32.xlu0 %v1647, 12
      %v1824 = vpop.permute.xlu0 %1823
      %1825 = vrot.lane.b32.xlu0 %v1648, 12
      %v1826 = vpop.permute.xlu0 %1825
      %1827 = vrot.lane.b32.xlu0 %v1649, 12
      %v1828 = vpop.permute.xlu0 %1827
      %1829 = vrot.lane.b32.xlu0 %v1650, 12
      %v1830 = vpop.permute.xlu0 %1829
      %1831 = vrot.lane.b32.xlu0 %v1651, 12
      %v1832 = vpop.permute.xlu0 %1831
      %1833 = vrot.lane.b32.xlu0 %v1652, 12
      %v1834 = vpop.permute.xlu0 %1833
      %1835 = vrot.lane.b32.xlu0 %v1653, 12
      %v1836 = vpop.permute.xlu0 %1835
      %1837 = vrot.lane.b32.xlu0 %v1654, 12
      %v1838 = vpop.permute.xlu0 %1837
      %1839 = vrot.lane.b32.xlu0 %v1655, 12
      %v1840 = vpop.permute.xlu0 %1839
      %1841 = vrot.lane.b32.xlu0 %v1656, 12
      %v1842 = vpop.permute.xlu0 %1841
      %1843 = vrot.lane.b32.xlu0 %v1657, 12
      %v1844 = vpop.permute.xlu0 %1843
      %1845 = vrot.lane.b32.xlu0 %v1658, 12
      %v1846 = vpop.permute.xlu0 %1845
      %1847 = vrot.lane.b32.xlu0 %v1659, 12
      %v1848 = vpop.permute.xlu0 %1847
      %1849 = vrot.lane.b32.xlu0 %v1660, 12
      %v1850 = vpop.permute.xlu0 %1849
      %1851 = vrot.lane.b32.xlu0 %v1661, 12
      %v1852 = vpop.permute.xlu0 %1851
      %1853 = vrot.lane.b32.xlu0 %v1662, 12
      %v1854 = vpop.permute.xlu0 %1853
      %vm1919 = vcmask 130144
      %1920 = vst.msk [vmem:[#allocation9] sm:$0xff] %vm1919, %v1728
      %1921 = vst.msk [vmem:[#allocation9 + $0x18] sm:$0xff] %vm1919, %v1730
      %1922 = vst.msk [vmem:[#allocation9 + $0x30] sm:$0xff] %vm1919, %v1732
      %1923 = vst.msk [vmem:[#allocation9 + $0x48] sm:$0xff] %vm1919, %v1734
      %1924 = vst.msk [vmem:[#allocation9 + $0x60] sm:$0xff] %vm1919, %v1736
      %1925 = vst.msk [vmem:[#allocation9 + $0x78] sm:$0xff] %vm1919, %v1738
      %1926 = vst.msk [vmem:[#allocation9 + $0x90] sm:$0xff] %vm1919, %v1740
      %1927 = vst.msk [vmem:[#allocation9 + $0xa8] sm:$0xff] %vm1919, %v1742
      %1928 = vst.msk [vmem:[#allocation9 + $0xc0] sm:$0xff] %vm1919, %v1744
      %1929 = vst.msk [vmem:[#allocation9 + $0xd8] sm:$0xff] %vm1919, %v1746
      %1930 = vst.msk [vmem:[#allocation9 + $0xf0] sm:$0xff] %vm1919, %v1748
      %1931 = vst.msk [vmem:[#allocation9 + $0x108] sm:$0xff] %vm1919, %v1750
      %1932 = vst.msk [vmem:[#allocation9 + $0x120] sm:$0xff] %vm1919, %v1752
      %1933 = vst.msk [vmem:[#allocation9 + $0x138] sm:$0xff] %vm1919, %v1754
      %1934 = vst.msk [vmem:[#allocation9 + $0x150] sm:$0xff] %vm1919, %v1756
      %1935 = vst.msk [vmem:[#allocation9 + $0x168] sm:$0xff] %vm1919, %v1758
      %1936 = vst.msk [vmem:[#allocation9 + $0x180] sm:$0xff] %vm1919, %v1760
      %1937 = vst.msk [vmem:[#allocation9 + $0x198] sm:$0xff] %vm1919, %v1762
      %1938 = vst.msk [vmem:[#allocation9 + $0x1b0] sm:$0xff] %vm1919, %v1764
      %1939 = vst.msk [vmem:[#allocation9 + $0x1c8] sm:$0xff] %vm1919, %v1766
      %1940 = vst.msk [vmem:[#allocation9 + $0x1e0] sm:$0xff] %vm1919, %v1768
      %1941 = vst.msk [vmem:[#allocation9 + $0x1f8] sm:$0xff] %vm1919, %v1770
      %1942 = vst.msk [vmem:[#allocation9 + $0x210] sm:$0xff] %vm1919, %v1772
      %1943 = vst.msk [vmem:[#allocation9 + $0x228] sm:$0xff] %vm1919, %v1774
      %1944 = vst.msk [vmem:[#allocation9 + $0x240] sm:$0xff] %vm1919, %v1776
      %1945 = vst.msk [vmem:[#allocation9 + $0x258] sm:$0xff] %vm1919, %v1778
      %1946 = vst.msk [vmem:[#allocation9 + $0x270] sm:$0xff] %vm1919, %v1780
      %1947 = vst.msk [vmem:[#allocation9 + $0x288] sm:$0xff] %vm1919, %v1782
      %1948 = vst.msk [vmem:[#allocation9 + $0x2a0] sm:$0xff] %vm1919, %v1784
      %1949 = vst.msk [vmem:[#allocation9 + $0x2b8] sm:$0xff] %vm1919, %v1786
      %1950 = vst.msk [vmem:[#allocation9 + $0x2d0] sm:$0xff] %vm1919, %v1788
      %1951 = vst.msk [vmem:[#allocation9 + $0x2e8] sm:$0xff] %vm1919, %v1790
      %1952 = vst.msk [vmem:[#allocation9 + $0x300] sm:$0xff] %vm1919, %v1792
      %1953 = vst.msk [vmem:[#allocation9 + $0x318] sm:$0xff] %vm1919, %v1794
      %1954 = vst.msk [vmem:[#allocation9 + $0x330] sm:$0xff] %vm1919, %v1796
      %1955 = vst.msk [vmem:[#allocation9 + $0x348] sm:$0xff] %vm1919, %v1798
      %1956 = vst.msk [vmem:[#allocation9 + $0x360] sm:$0xff] %vm1919, %v1800
      %1957 = vst.msk [vmem:[#allocation9 + $0x378] sm:$0xff] %vm1919, %v1802
      %1958 = vst.msk [vmem:[#allocation9 + $0x390] sm:$0xff] %vm1919, %v1804
      %1959 = vst.msk [vmem:[#allocation9 + $0x3a8] sm:$0xff] %vm1919, %v1806
      %1960 = vst.msk [vmem:[#allocation9 + $0x3c0] sm:$0xff] %vm1919, %v1808
      %1961 = vst.msk [vmem:[#allocation9 + $0x3d8] sm:$0xff] %vm1919, %v1810
      %1962 = vst.msk [vmem:[#allocation9 + $0x3f0] sm:$0xff] %vm1919, %v1812
      %1963 = vst.msk [vmem:[#allocation9 + $0x408] sm:$0xff] %vm1919, %v1814
      %1964 = vst.msk [vmem:[#allocation9 + $0x420] sm:$0xff] %vm1919, %v1816
      %1965 = vst.msk [vmem:[#allocation9 + $0x438] sm:$0xff] %vm1919, %v1818
      %1966 = vst.msk [vmem:[#allocation9 + $0x450] sm:$0xff] %vm1919, %v1820
      %1967 = vst.msk [vmem:[#allocation9 + $0x468] sm:$0xff] %vm1919, %v1822
      %1968 = vst.msk [vmem:[#allocation9 + $0x480] sm:$0xff] %vm1919, %v1824
      %1969 = vst.msk [vmem:[#allocation9 + $0x498] sm:$0xff] %vm1919, %v1826
      %1970 = vst.msk [vmem:[#allocation9 + $0x4b0] sm:$0xff] %vm1919, %v1828
      %1971 = vst.msk [vmem:[#allocation9 + $0x4c8] sm:$0xff] %vm1919, %v1830
      %1972 = vst.msk [vmem:[#allocation9 + $0x4e0] sm:$0xff] %vm1919, %v1832
      %1973 = vst.msk [vmem:[#allocation9 + $0x4f8] sm:$0xff] %vm1919, %v1834
      %1974 = vst.msk [vmem:[#allocation9 + $0x510] sm:$0xff] %vm1919, %v1836
      %1975 = vst.msk [vmem:[#allocation9 + $0x528] sm:$0xff] %vm1919, %v1838
      %1976 = vst.msk [vmem:[#allocation9 + $0x540] sm:$0xff] %vm1919, %v1840
      %1977 = vst.msk [vmem:[#allocation9 + $0x558] sm:$0xff] %vm1919, %v1842
      %1978 = vst.msk [vmem:[#allocation9 + $0x570] sm:$0xff] %vm1919, %v1844
      %1979 = vst.msk [vmem:[#allocation9 + $0x588] sm:$0xff] %vm1919, %v1846
      %1980 = vst.msk [vmem:[#allocation9 + $0x5a0] sm:$0xff] %vm1919, %v1848
      %1981 = vst.msk [vmem:[#allocation9 + $0x5b8] sm:$0xff] %vm1919, %v1850
      %1982 = vst.msk [vmem:[#allocation9 + $0x5d0] sm:$0xff] %vm1919, %v1852
      %1983 = vst.msk [vmem:[#allocation9 + $0x5e8] sm:$0xff] %vm1919, %v1854
      %v1984 = vld [vmem:[%s636 + $0x1] sm:$0xff]
      %v1985 = vld [vmem:[%s636 + $0x9] sm:$0xff]
      %v1986 = vld [vmem:[%s636 + $0x19] sm:$0xff]
      %v1987 = vld [vmem:[%s636 + $0x21] sm:$0xff]
      %v1988 = vld [vmem:[%s636 + $0x31] sm:$0xff]
      %v1989 = vld [vmem:[%s636 + $0x39] sm:$0xff]
      %v1990 = vld [vmem:[%s636 + $0x49] sm:$0xff]
      %v1991 = vld [vmem:[%s636 + $0x51] sm:$0xff]
      %v1992 = vld [vmem:[%s636 + $0x61] sm:$0xff]
      %v1993 = vld [vmem:[%s636 + $0x69] sm:$0xff]
      %v1994 = vld [vmem:[%s636 + $0x79] sm:$0xff]
      %v1995 = vld [vmem:[%s636 + $0x81] sm:$0xff]
      %v1996 = vld [vmem:[%s636 + $0x91] sm:$0xff]
      %v1997 = vld [vmem:[%s636 + $0x99] sm:$0xff]
      %v1998 = vld [vmem:[%s636 + $0xa9] sm:$0xff]
      %v1999 = vld [vmem:[%s636 + $0xb1] sm:$0xff]
      %v2000 = vld [vmem:[%s636 + $0xc1] sm:$0xff]
      %v2001 = vld [vmem:[%s636 + $0xc9] sm:$0xff]
      %v2002 = vld [vmem:[%s636 + $0xd9] sm:$0xff]
      %v2003 = vld [vmem:[%s636 + $0xe1] sm:$0xff]
      %v2004 = vld [vmem:[%s636 + $0xf1] sm:$0xff]
      %v2005 = vld [vmem:[%s636 + $0xf9] sm:$0xff]
      %v2006 = vld [vmem:[%s636 + $0x109] sm:$0xff]
      %v2007 = vld [vmem:[%s636 + $0x111] sm:$0xff]
      %v2008 = vld [vmem:[%s636 + $0x121] sm:$0xff]
      %v2009 = vld [vmem:[%s636 + $0x129] sm:$0xff]
      %v2010 = vld [vmem:[%s636 + $0x139] sm:$0xff]
      %v2011 = vld [vmem:[%s636 + $0x141] sm:$0xff]
      %v2012 = vld [vmem:[%s636 + $0x151] sm:$0xff]
      %v2013 = vld [vmem:[%s636 + $0x159] sm:$0xff]
      %v2014 = vld [vmem:[%s636 + $0x169] sm:$0xff]
      %v2015 = vld [vmem:[%s636 + $0x171] sm:$0xff]
      %v2016 = vld [vmem:[%s636 + $0x181] sm:$0xff]
      %v2017 = vld [vmem:[%s636 + $0x189] sm:$0xff]
      %v2018 = vld [vmem:[%s636 + $0x199] sm:$0xff]
      %v2019 = vld [vmem:[%s636 + $0x1a1] sm:$0xff]
      %v2020 = vld [vmem:[%s636 + $0x1b1] sm:$0xff]
      %v2021 = vld [vmem:[%s636 + $0x1b9] sm:$0xff]
      %v2022 = vld [vmem:[%s636 + $0x1c9] sm:$0xff]
      %v2023 = vld [vmem:[%s636 + $0x1d1] sm:$0xff]
      %v2024 = vld [vmem:[%s636 + $0x1e1] sm:$0xff]
      %v2025 = vld [vmem:[%s636 + $0x1e9] sm:$0xff]
      %v2026 = vld [vmem:[%s636 + $0x1f9] sm:$0xff]
      %v2027 = vld [vmem:[%s636 + $0x201] sm:$0xff]
      %v2028 = vld [vmem:[%s636 + $0x211] sm:$0xff]
      %v2029 = vld [vmem:[%s636 + $0x219] sm:$0xff]
      %v2030 = vld [vmem:[%s636 + $0x229] sm:$0xff]
      %v2031 = vld [vmem:[%s636 + $0x231] sm:$0xff]
      %v2032 = vld [vmem:[%s636 + $0x241] sm:$0xff]
      %v2033 = vld [vmem:[%s636 + $0x249] sm:$0xff]
      %v2034 = vld [vmem:[%s636 + $0x259] sm:$0xff]
      %v2035 = vld [vmem:[%s636 + $0x261] sm:$0xff]
      %v2036 = vld [vmem:[%s636 + $0x271] sm:$0xff]
      %v2037 = vld [vmem:[%s636 + $0x279] sm:$0xff]
      %v2038 = vld [vmem:[%s636 + $0x289] sm:$0xff]
      %v2039 = vld [vmem:[%s636 + $0x291] sm:$0xff]
      %v2040 = vld [vmem:[%s636 + $0x2a1] sm:$0xff]
      %v2041 = vld [vmem:[%s636 + $0x2a9] sm:$0xff]
      %v2042 = vld [vmem:[%s636 + $0x2b9] sm:$0xff]
      %v2043 = vld [vmem:[%s636 + $0x2c1] sm:$0xff]
      %v2044 = vld [vmem:[%s636 + $0x2d1] sm:$0xff]
      %v2045 = vld [vmem:[%s636 + $0x2d9] sm:$0xff]
      %v2046 = vld [vmem:[%s636 + $0x2e9] sm:$0xff]
      %v2047 = vld [vmem:[%s636 + $0x2f1] sm:$0xff]
      %2112 = vrot.lane.b32.xlu0 %v1984, 16
      %v2113 = vpop.permute.xlu0 %2112
      %2114 = vrot.lane.b32.xlu0 %v1985, 16
      %v2115 = vpop.permute.xlu0 %2114
      %2116 = vrot.lane.b32.xlu0 %v1986, 16
      %v2117 = vpop.permute.xlu0 %2116
      %2118 = vrot.lane.b32.xlu0 %v1987, 16
      %v2119 = vpop.permute.xlu0 %2118
      %2120 = vrot.lane.b32.xlu0 %v1988, 16
      %v2121 = vpop.permute.xlu0 %2120
      %2122 = vrot.lane.b32.xlu0 %v1989, 16
      %v2123 = vpop.permute.xlu0 %2122
      %2124 = vrot.lane.b32.xlu0 %v1990, 16
      %v2125 = vpop.permute.xlu0 %2124
      %2126 = vrot.lane.b32.xlu0 %v1991, 16
      %v2127 = vpop.permute.xlu0 %2126
      %2128 = vrot.lane.b32.xlu0 %v1992, 16
      %v2129 = vpop.permute.xlu0 %2128
      %2130 = vrot.lane.b32.xlu0 %v1993, 16
      %v2131 = vpop.permute.xlu0 %2130
      %2132 = vrot.lane.b32.xlu0 %v1994, 16
      %v2133 = vpop.permute.xlu0 %2132
      %2134 = vrot.lane.b32.xlu0 %v1995, 16
      %v2135 = vpop.permute.xlu0 %2134
      %2136 = vrot.lane.b32.xlu0 %v1996, 16
      %v2137 = vpop.permute.xlu0 %2136
      %2138 = vrot.lane.b32.xlu0 %v1997, 16
      %v2139 = vpop.permute.xlu0 %2138
      %2140 = vrot.lane.b32.xlu0 %v1998, 16
      %v2141 = vpop.permute.xlu0 %2140
      %2142 = vrot.lane.b32.xlu0 %v1999, 16
      %v2143 = vpop.permute.xlu0 %2142
      %2144 = vrot.lane.b32.xlu0 %v2000, 16
      %v2145 = vpop.permute.xlu0 %2144
      %2146 = vrot.lane.b32.xlu0 %v2001, 16
      %v2147 = vpop.permute.xlu0 %2146
      %2148 = vrot.lane.b32.xlu0 %v2002, 16
      %v2149 = vpop.permute.xlu0 %2148
      %2150 = vrot.lane.b32.xlu0 %v2003, 16
      %v2151 = vpop.permute.xlu0 %2150
      %2152 = vrot.lane.b32.xlu0 %v2004, 16
      %v2153 = vpop.permute.xlu0 %2152
      %2154 = vrot.lane.b32.xlu0 %v2005, 16
      %v2155 = vpop.permute.xlu0 %2154
      %2156 = vrot.lane.b32.xlu0 %v2006, 16
      %v2157 = vpop.permute.xlu0 %2156
      %2158 = vrot.lane.b32.xlu0 %v2007, 16
      %v2159 = vpop.permute.xlu0 %2158
      %2160 = vrot.lane.b32.xlu0 %v2008, 16
      %v2161 = vpop.permute.xlu0 %2160
      %2162 = vrot.lane.b32.xlu0 %v2009, 16
      %v2163 = vpop.permute.xlu0 %2162
      %2164 = vrot.lane.b32.xlu0 %v2010, 16
      %v2165 = vpop.permute.xlu0 %2164
      %2166 = vrot.lane.b32.xlu0 %v2011, 16
      %v2167 = vpop.permute.xlu0 %2166
      %2168 = vrot.lane.b32.xlu0 %v2012, 16
      %v2169 = vpop.permute.xlu0 %2168
      %2170 = vrot.lane.b32.xlu0 %v2013, 16
      %v2171 = vpop.permute.xlu0 %2170
      %2172 = vrot.lane.b32.xlu0 %v2014, 16
      %v2173 = vpop.permute.xlu0 %2172
      %2174 = vrot.lane.b32.xlu0 %v2015, 16
      %v2175 = vpop.permute.xlu0 %2174
      %2176 = vrot.lane.b32.xlu0 %v2016, 16
      %v2177 = vpop.permute.xlu0 %2176
      %2178 = vrot.lane.b32.xlu0 %v2017, 16
      %v2179 = vpop.permute.xlu0 %2178
      %2180 = vrot.lane.b32.xlu0 %v2018, 16
      %v2181 = vpop.permute.xlu0 %2180
      %2182 = vrot.lane.b32.xlu0 %v2019, 16
      %v2183 = vpop.permute.xlu0 %2182
      %2184 = vrot.lane.b32.xlu0 %v2020, 16
      %v2185 = vpop.permute.xlu0 %2184
      %2186 = vrot.lane.b32.xlu0 %v2021, 16
      %v2187 = vpop.permute.xlu0 %2186
      %2188 = vrot.lane.b32.xlu0 %v2022, 16
      %v2189 = vpop.permute.xlu0 %2188
      %2190 = vrot.lane.b32.xlu0 %v2023, 16
      %v2191 = vpop.permute.xlu0 %2190
      %2192 = vrot.lane.b32.xlu0 %v2024, 16
      %v2193 = vpop.permute.xlu0 %2192
      %2194 = vrot.lane.b32.xlu0 %v2025, 16
      %v2195 = vpop.permute.xlu0 %2194
      %2196 = vrot.lane.b32.xlu0 %v2026, 16
      %v2197 = vpop.permute.xlu0 %2196
      %2198 = vrot.lane.b32.xlu0 %v2027, 16
      %v2199 = vpop.permute.xlu0 %2198
      %2200 = vrot.lane.b32.xlu0 %v2028, 16
      %v2201 = vpop.permute.xlu0 %2200
      %2202 = vrot.lane.b32.xlu0 %v2029, 16
      %v2203 = vpop.permute.xlu0 %2202
      %2204 = vrot.lane.b32.xlu0 %v2030, 16
      %v2205 = vpop.permute.xlu0 %2204
      %2206 = vrot.lane.b32.xlu0 %v2031, 16
      %v2207 = vpop.permute.xlu0 %2206
      %2208 = vrot.lane.b32.xlu0 %v2032, 16
      %v2209 = vpop.permute.xlu0 %2208
      %2210 = vrot.lane.b32.xlu0 %v2033, 16
      %v2211 = vpop.permute.xlu0 %2210
      %2212 = vrot.lane.b32.xlu0 %v2034, 16
      %v2213 = vpop.permute.xlu0 %2212
      %2214 = vrot.lane.b32.xlu0 %v2035, 16
      %v2215 = vpop.permute.xlu0 %2214
      %2216 = vrot.lane.b32.xlu0 %v2036, 16
      %v2217 = vpop.permute.xlu0 %2216
      %2218 = vrot.lane.b32.xlu0 %v2037, 16
      %v2219 = vpop.permute.xlu0 %2218
      %2220 = vrot.lane.b32.xlu0 %v2038, 16
      %v2221 = vpop.permute.xlu0 %2220
      %2222 = vrot.lane.b32.xlu0 %v2039, 16
      %v2223 = vpop.permute.xlu0 %2222
      %2224 = vrot.lane.b32.xlu0 %v2040, 16
      %v2225 = vpop.permute.xlu0 %2224
      %2226 = vrot.lane.b32.xlu0 %v2041, 16
      %v2227 = vpop.permute.xlu0 %2226
      %2228 = vrot.lane.b32.xlu0 %v2042, 16
      %v2229 = vpop.permute.xlu0 %2228
      %2230 = vrot.lane.b32.xlu0 %v2043, 16
      %v2231 = vpop.permute.xlu0 %2230
      %2232 = vrot.lane.b32.xlu0 %v2044, 16
      %v2233 = vpop.permute.xlu0 %2232
      %2234 = vrot.lane.b32.xlu0 %v2045, 16
      %v2235 = vpop.permute.xlu0 %2234
      %2236 = vrot.lane.b32.xlu0 %v2046, 16
      %v2237 = vpop.permute.xlu0 %2236
      %2238 = vrot.lane.b32.xlu0 %v2047, 16
      %v2239 = vpop.permute.xlu0 %2238
      %vm2304 = vcmask 162944
      %2305 = vst.msk [vmem:[#allocation9] sm:$0xff] %vm2304, %v2113
      %2306 = vst.msk [vmem:[#allocation9 + $0x18] sm:$0xff] %vm2304, %v2115
      %2307 = vst.msk [vmem:[#allocation9 + $0x30] sm:$0xff] %vm2304, %v2117
      %2308 = vst.msk [vmem:[#allocation9 + $0x48] sm:$0xff] %vm2304, %v2119
      %2309 = vst.msk [vmem:[#allocation9 + $0x60] sm:$0xff] %vm2304, %v2121
      %2310 = vst.msk [vmem:[#allocation9 + $0x78] sm:$0xff] %vm2304, %v2123
      %2311 = vst.msk [vmem:[#allocation9 + $0x90] sm:$0xff] %vm2304, %v2125
      %2312 = vst.msk [vmem:[#allocation9 + $0xa8] sm:$0xff] %vm2304, %v2127
      %2313 = vst.msk [vmem:[#allocation9 + $0xc0] sm:$0xff] %vm2304, %v2129
      %2314 = vst.msk [vmem:[#allocation9 + $0xd8] sm:$0xff] %vm2304, %v2131
      %2315 = vst.msk [vmem:[#allocation9 + $0xf0] sm:$0xff] %vm2304, %v2133
      %2316 = vst.msk [vmem:[#allocation9 + $0x108] sm:$0xff] %vm2304, %v2135
      %2317 = vst.msk [vmem:[#allocation9 + $0x120] sm:$0xff] %vm2304, %v2137
      %2318 = vst.msk [vmem:[#allocation9 + $0x138] sm:$0xff] %vm2304, %v2139
      %2319 = vst.msk [vmem:[#allocation9 + $0x150] sm:$0xff] %vm2304, %v2141
      %2320 = vst.msk [vmem:[#allocation9 + $0x168] sm:$0xff] %vm2304, %v2143
      %2321 = vst.msk [vmem:[#allocation9 + $0x180] sm:$0xff] %vm2304, %v2145
      %2322 = vst.msk [vmem:[#allocation9 + $0x198] sm:$0xff] %vm2304, %v2147
      %2323 = vst.msk [vmem:[#allocation9 + $0x1b0] sm:$0xff] %vm2304, %v2149
      %2324 = vst.msk [vmem:[#allocation9 + $0x1c8] sm:$0xff] %vm2304, %v2151
      %2325 = vst.msk [vmem:[#allocation9 + $0x1e0] sm:$0xff] %vm2304, %v2153
      %2326 = vst.msk [vmem:[#allocation9 + $0x1f8] sm:$0xff] %vm2304, %v2155
      %2327 = vst.msk [vmem:[#allocation9 + $0x210] sm:$0xff] %vm2304, %v2157
      %2328 = vst.msk [vmem:[#allocation9 + $0x228] sm:$0xff] %vm2304, %v2159
      %2329 = vst.msk [vmem:[#allocation9 + $0x240] sm:$0xff] %vm2304, %v2161
      %2330 = vst.msk [vmem:[#allocation9 + $0x258] sm:$0xff] %vm2304, %v2163
      %2331 = vst.msk [vmem:[#allocation9 + $0x270] sm:$0xff] %vm2304, %v2165
      %2332 = vst.msk [vmem:[#allocation9 + $0x288] sm:$0xff] %vm2304, %v2167
      %2333 = vst.msk [vmem:[#allocation9 + $0x2a0] sm:$0xff] %vm2304, %v2169
      %2334 = vst.msk [vmem:[#allocation9 + $0x2b8] sm:$0xff] %vm2304, %v2171
      %2335 = vst.msk [vmem:[#allocation9 + $0x2d0] sm:$0xff] %vm2304, %v2173
      %2336 = vst.msk [vmem:[#allocation9 + $0x2e8] sm:$0xff] %vm2304, %v2175
      %2337 = vst.msk [vmem:[#allocation9 + $0x300] sm:$0xff] %vm2304, %v2177
      %2338 = vst.msk [vmem:[#allocation9 + $0x318] sm:$0xff] %vm2304, %v2179
      %2339 = vst.msk [vmem:[#allocation9 + $0x330] sm:$0xff] %vm2304, %v2181
      %2340 = vst.msk [vmem:[#allocation9 + $0x348] sm:$0xff] %vm2304, %v2183
      %2341 = vst.msk [vmem:[#allocation9 + $0x360] sm:$0xff] %vm2304, %v2185
      %2342 = vst.msk [vmem:[#allocation9 + $0x378] sm:$0xff] %vm2304, %v2187
      %2343 = vst.msk [vmem:[#allocation9 + $0x390] sm:$0xff] %vm2304, %v2189
      %2344 = vst.msk [vmem:[#allocation9 + $0x3a8] sm:$0xff] %vm2304, %v2191
      %2345 = vst.msk [vmem:[#allocation9 + $0x3c0] sm:$0xff] %vm2304, %v2193
      %2346 = vst.msk [vmem:[#allocation9 + $0x3d8] sm:$0xff] %vm2304, %v2195
      %2347 = vst.msk [vmem:[#allocation9 + $0x3f0] sm:$0xff] %vm2304, %v2197
      %2348 = vst.msk [vmem:[#allocation9 + $0x408] sm:$0xff] %vm2304, %v2199
      %2349 = vst.msk [vmem:[#allocation9 + $0x420] sm:$0xff] %vm2304, %v2201
      %2350 = vst.msk [vmem:[#allocation9 + $0x438] sm:$0xff] %vm2304, %v2203
      %2351 = vst.msk [vmem:[#allocation9 + $0x450] sm:$0xff] %vm2304, %v2205
      %2352 = vst.msk [vmem:[#allocation9 + $0x468] sm:$0xff] %vm2304, %v2207
      %2353 = vst.msk [vmem:[#allocation9 + $0x480] sm:$0xff] %vm2304, %v2209
      %2354 = vst.msk [vmem:[#allocation9 + $0x498] sm:$0xff] %vm2304, %v2211
      %2355 = vst.msk [vmem:[#allocation9 + $0x4b0] sm:$0xff] %vm2304, %v2213
      %2356 = vst.msk [vmem:[#allocation9 + $0x4c8] sm:$0xff] %vm2304, %v2215
      %2357 = vst.msk [vmem:[#allocation9 + $0x4e0] sm:$0xff] %vm2304, %v2217
      %2358 = vst.msk [vmem:[#allocation9 + $0x4f8] sm:$0xff] %vm2304, %v2219
      %2359 = vst.msk [vmem:[#allocation9 + $0x510] sm:$0xff] %vm2304, %v2221
      %2360 = vst.msk [vmem:[#allocation9 + $0x528] sm:$0xff] %vm2304, %v2223
      %2361 = vst.msk [vmem:[#allocation9 + $0x540] sm:$0xff] %vm2304, %v2225
      %2362 = vst.msk [vmem:[#allocation9 + $0x558] sm:$0xff] %vm2304, %v2227
      %2363 = vst.msk [vmem:[#allocation9 + $0x570] sm:$0xff] %vm2304, %v2229
      %2364 = vst.msk [vmem:[#allocation9 + $0x588] sm:$0xff] %vm2304, %v2231
      %2365 = vst.msk [vmem:[#allocation9 + $0x5a0] sm:$0xff] %vm2304, %v2233
      %2366 = vst.msk [vmem:[#allocation9 + $0x5b8] sm:$0xff] %vm2304, %v2235
      %2367 = vst.msk [vmem:[#allocation9 + $0x5d0] sm:$0xff] %vm2304, %v2237
      %2368 = vst.msk [vmem:[#allocation9 + $0x5e8] sm:$0xff] %vm2304, %v2239
      %v2369 = vld [vmem:[%s636 + $0x2] sm:$0xff]
      %v2370 = vld [vmem:[%s636 + $0xa] sm:$0xff]
      %v2371 = vld [vmem:[%s636 + $0x1a] sm:$0xff]
      %v2372 = vld [vmem:[%s636 + $0x22] sm:$0xff]
      %v2373 = vld [vmem:[%s636 + $0x32] sm:$0xff]
      %v2374 = vld [vmem:[%s636 + $0x3a] sm:$0xff]
      %v2375 = vld [vmem:[%s636 + $0x4a] sm:$0xff]
      %v2376 = vld [vmem:[%s636 + $0x52] sm:$0xff]
      %v2377 = vld [vmem:[%s636 + $0x62] sm:$0xff]
      %v2378 = vld [vmem:[%s636 + $0x6a] sm:$0xff]
      %v2379 = vld [vmem:[%s636 + $0x7a] sm:$0xff]
      %v2380 = vld [vmem:[%s636 + $0x82] sm:$0xff]
      %v2381 = vld [vmem:[%s636 + $0x92] sm:$0xff]
      %v2382 = vld [vmem:[%s636 + $0x9a] sm:$0xff]
      %v2383 = vld [vmem:[%s636 + $0xaa] sm:$0xff]
      %v2384 = vld [vmem:[%s636 + $0xb2] sm:$0xff]
      %v2385 = vld [vmem:[%s636 + $0xc2] sm:$0xff]
      %v2386 = vld [vmem:[%s636 + $0xca] sm:$0xff]
      %v2387 = vld [vmem:[%s636 + $0xda] sm:$0xff]
      %v2388 = vld [vmem:[%s636 + $0xe2] sm:$0xff]
      %v2389 = vld [vmem:[%s636 + $0xf2] sm:$0xff]
      %v2390 = vld [vmem:[%s636 + $0xfa] sm:$0xff]
      %v2391 = vld [vmem:[%s636 + $0x10a] sm:$0xff]
      %v2392 = vld [vmem:[%s636 + $0x112] sm:$0xff]
      %v2393 = vld [vmem:[%s636 + $0x122] sm:$0xff]
      %v2394 = vld [vmem:[%s636 + $0x12a] sm:$0xff]
      %v2395 = vld [vmem:[%s636 + $0x13a] sm:$0xff]
      %v2396 = vld [vmem:[%s636 + $0x142] sm:$0xff]
      %v2397 = vld [vmem:[%s636 + $0x152] sm:$0xff]
      %v2398 = vld [vmem:[%s636 + $0x15a] sm:$0xff]
      %v2399 = vld [vmem:[%s636 + $0x16a] sm:$0xff]
      %v2400 = vld [vmem:[%s636 + $0x172] sm:$0xff]
      %v2401 = vld [vmem:[%s636 + $0x182] sm:$0xff]
      %v2402 = vld [vmem:[%s636 + $0x18a] sm:$0xff]
      %v2403 = vld [vmem:[%s636 + $0x19a] sm:$0xff]
      %v2404 = vld [vmem:[%s636 + $0x1a2] sm:$0xff]
      %v2405 = vld [vmem:[%s636 + $0x1b2] sm:$0xff]
      %v2406 = vld [vmem:[%s636 + $0x1ba] sm:$0xff]
      %v2407 = vld [vmem:[%s636 + $0x1ca] sm:$0xff]
      %v2408 = vld [vmem:[%s636 + $0x1d2] sm:$0xff]
      %v2409 = vld [vmem:[%s636 + $0x1e2] sm:$0xff]
      %v2410 = vld [vmem:[%s636 + $0x1ea] sm:$0xff]
      %v2411 = vld [vmem:[%s636 + $0x1fa] sm:$0xff]
      %v2412 = vld [vmem:[%s636 + $0x202] sm:$0xff]
      %v2413 = vld [vmem:[%s636 + $0x212] sm:$0xff]
      %v2414 = vld [vmem:[%s636 + $0x21a] sm:$0xff]
      %v2415 = vld [vmem:[%s636 + $0x22a] sm:$0xff]
      %v2416 = vld [vmem:[%s636 + $0x232] sm:$0xff]
      %v2417 = vld [vmem:[%s636 + $0x242] sm:$0xff]
      %v2418 = vld [vmem:[%s636 + $0x24a] sm:$0xff]
      %v2419 = vld [vmem:[%s636 + $0x25a] sm:$0xff]
      %v2420 = vld [vmem:[%s636 + $0x262] sm:$0xff]
      %v2421 = vld [vmem:[%s636 + $0x272] sm:$0xff]
      %v2422 = vld [vmem:[%s636 + $0x27a] sm:$0xff]
      %v2423 = vld [vmem:[%s636 + $0x28a] sm:$0xff]
      %v2424 = vld [vmem:[%s636 + $0x292] sm:$0xff]
      %v2425 = vld [vmem:[%s636 + $0x2a2] sm:$0xff]
      %v2426 = vld [vmem:[%s636 + $0x2aa] sm:$0xff]
      %v2427 = vld [vmem:[%s636 + $0x2ba] sm:$0xff]
      %v2428 = vld [vmem:[%s636 + $0x2c2] sm:$0xff]
      %v2429 = vld [vmem:[%s636 + $0x2d2] sm:$0xff]
      %v2430 = vld [vmem:[%s636 + $0x2da] sm:$0xff]
      %v2431 = vld [vmem:[%s636 + $0x2ea] sm:$0xff]
      %v2432 = vld [vmem:[%s636 + $0x2f2] sm:$0xff]
      %2497 = vrot.lane.b32.xlu0 %v2369, 20
      %v2498 = vpop.permute.xlu0 %2497
      %2499 = vrot.lane.b32.xlu0 %v2370, 20
      %v2500 = vpop.permute.xlu0 %2499
      %2501 = vrot.lane.b32.xlu0 %v2371, 20
      %v2502 = vpop.permute.xlu0 %2501
      %2503 = vrot.lane.b32.xlu0 %v2372, 20
      %v2504 = vpop.permute.xlu0 %2503
      %2505 = vrot.lane.b32.xlu0 %v2373, 20
      %v2506 = vpop.permute.xlu0 %2505
      %2507 = vrot.lane.b32.xlu0 %v2374, 20
      %v2508 = vpop.permute.xlu0 %2507
      %2509 = vrot.lane.b32.xlu0 %v2375, 20
      %v2510 = vpop.permute.xlu0 %2509
      %2511 = vrot.lane.b32.xlu0 %v2376, 20
      %v2512 = vpop.permute.xlu0 %2511
      %2513 = vrot.lane.b32.xlu0 %v2377, 20
      %v2514 = vpop.permute.xlu0 %2513
      %2515 = vrot.lane.b32.xlu0 %v2378, 20
      %v2516 = vpop.permute.xlu0 %2515
      %2517 = vrot.lane.b32.xlu0 %v2379, 20
      %v2518 = vpop.permute.xlu0 %2517
      %2519 = vrot.lane.b32.xlu0 %v2380, 20
      %v2520 = vpop.permute.xlu0 %2519
      %2521 = vrot.lane.b32.xlu0 %v2381, 20
      %v2522 = vpop.permute.xlu0 %2521
      %2523 = vrot.lane.b32.xlu0 %v2382, 20
      %v2524 = vpop.permute.xlu0 %2523
      %2525 = vrot.lane.b32.xlu0 %v2383, 20
      %v2526 = vpop.permute.xlu0 %2525
      %2527 = vrot.lane.b32.xlu0 %v2384, 20
      %v2528 = vpop.permute.xlu0 %2527
      %2529 = vrot.lane.b32.xlu0 %v2385, 20
      %v2530 = vpop.permute.xlu0 %2529
      %2531 = vrot.lane.b32.xlu0 %v2386, 20
      %v2532 = vpop.permute.xlu0 %2531
      %2533 = vrot.lane.b32.xlu0 %v2387, 20
      %v2534 = vpop.permute.xlu0 %2533
      %2535 = vrot.lane.b32.xlu0 %v2388, 20
      %v2536 = vpop.permute.xlu0 %2535
      %2537 = vrot.lane.b32.xlu0 %v2389, 20
      %v2538 = vpop.permute.xlu0 %2537
      %2539 = vrot.lane.b32.xlu0 %v2390, 20
      %v2540 = vpop.permute.xlu0 %2539
      %2541 = vrot.lane.b32.xlu0 %v2391, 20
      %v2542 = vpop.permute.xlu0 %2541
      %2543 = vrot.lane.b32.xlu0 %v2392, 20
      %v2544 = vpop.permute.xlu0 %2543
      %2545 = vrot.lane.b32.xlu0 %v2393, 20
      %v2546 = vpop.permute.xlu0 %2545
      %2547 = vrot.lane.b32.xlu0 %v2394, 20
      %v2548 = vpop.permute.xlu0 %2547
      %2549 = vrot.lane.b32.xlu0 %v2395, 20
      %v2550 = vpop.permute.xlu0 %2549
      %2551 = vrot.lane.b32.xlu0 %v2396, 20
      %v2552 = vpop.permute.xlu0 %2551
      %2553 = vrot.lane.b32.xlu0 %v2397, 20
      %v2554 = vpop.permute.xlu0 %2553
      %2555 = vrot.lane.b32.xlu0 %v2398, 20
      %v2556 = vpop.permute.xlu0 %2555
      %2557 = vrot.lane.b32.xlu0 %v2399, 20
      %v2558 = vpop.permute.xlu0 %2557
      %2559 = vrot.lane.b32.xlu0 %v2400, 20
      %v2560 = vpop.permute.xlu0 %2559
      %2561 = vrot.lane.b32.xlu0 %v2401, 20
      %v2562 = vpop.permute.xlu0 %2561
      %2563 = vrot.lane.b32.xlu0 %v2402, 20
      %v2564 = vpop.permute.xlu0 %2563
      %2565 = vrot.lane.b32.xlu0 %v2403, 20
      %v2566 = vpop.permute.xlu0 %2565
      %2567 = vrot.lane.b32.xlu0 %v2404, 20
      %v2568 = vpop.permute.xlu0 %2567
      %2569 = vrot.lane.b32.xlu0 %v2405, 20
      %v2570 = vpop.permute.xlu0 %2569
      %2571 = vrot.lane.b32.xlu0 %v2406, 20
      %v2572 = vpop.permute.xlu0 %2571
      %2573 = vrot.lane.b32.xlu0 %v2407, 20
      %v2574 = vpop.permute.xlu0 %2573
      %2575 = vrot.lane.b32.xlu0 %v2408, 20
      %v2576 = vpop.permute.xlu0 %2575
      %2577 = vrot.lane.b32.xlu0 %v2409, 20
      %v2578 = vpop.permute.xlu0 %2577
      %2579 = vrot.lane.b32.xlu0 %v2410, 20
      %v2580 = vpop.permute.xlu0 %2579
      %2581 = vrot.lane.b32.xlu0 %v2411, 20
      %v2582 = vpop.permute.xlu0 %2581
      %2583 = vrot.lane.b32.xlu0 %v2412, 20
      %v2584 = vpop.permute.xlu0 %2583
      %2585 = vrot.lane.b32.xlu0 %v2413, 20
      %v2586 = vpop.permute.xlu0 %2585
      %2587 = vrot.lane.b32.xlu0 %v2414, 20
      %v2588 = vpop.permute.xlu0 %2587
      %2589 = vrot.lane.b32.xlu0 %v2415, 20
      %v2590 = vpop.permute.xlu0 %2589
      %2591 = vrot.lane.b32.xlu0 %v2416, 20
      %v2592 = vpop.permute.xlu0 %2591
      %2593 = vrot.lane.b32.xlu0 %v2417, 20
      %v2594 = vpop.permute.xlu0 %2593
      %2595 = vrot.lane.b32.xlu0 %v2418, 20
      %v2596 = vpop.permute.xlu0 %2595
      %2597 = vrot.lane.b32.xlu0 %v2419, 20
      %v2598 = vpop.permute.xlu0 %2597
      %2599 = vrot.lane.b32.xlu0 %v2420, 20
      %v2600 = vpop.permute.xlu0 %2599
      %2601 = vrot.lane.b32.xlu0 %v2421, 20
      %v2602 = vpop.permute.xlu0 %2601
      %2603 = vrot.lane.b32.xlu0 %v2422, 20
      %v2604 = vpop.permute.xlu0 %2603
      %2605 = vrot.lane.b32.xlu0 %v2423, 20
      %v2606 = vpop.permute.xlu0 %2605
      %2607 = vrot.lane.b32.xlu0 %v2424, 20
      %v2608 = vpop.permute.xlu0 %2607
      %2609 = vrot.lane.b32.xlu0 %v2425, 20
      %v2610 = vpop.permute.xlu0 %2609
      %2611 = vrot.lane.b32.xlu0 %v2426, 20
      %v2612 = vpop.permute.xlu0 %2611
      %2613 = vrot.lane.b32.xlu0 %v2427, 20
      %v2614 = vpop.permute.xlu0 %2613
      %2615 = vrot.lane.b32.xlu0 %v2428, 20
      %v2616 = vpop.permute.xlu0 %2615
      %2617 = vrot.lane.b32.xlu0 %v2429, 20
      %v2618 = vpop.permute.xlu0 %2617
      %2619 = vrot.lane.b32.xlu0 %v2430, 20
      %v2620 = vpop.permute.xlu0 %2619
      %2621 = vrot.lane.b32.xlu0 %v2431, 20
      %v2622 = vpop.permute.xlu0 %2621
      %2623 = vrot.lane.b32.xlu0 %v2432, 20
      %v2624 = vpop.permute.xlu0 %2623
      %vm2689 = vcmask 195744
      %2690 = vst.msk [vmem:[#allocation9] sm:$0xff] %vm2689, %v2498
      %2691 = vst.msk [vmem:[#allocation9 + $0x18] sm:$0xff] %vm2689, %v2500
      %2692 = vst.msk [vmem:[#allocation9 + $0x30] sm:$0xff] %vm2689, %v2502
      %2693 = vst.msk [vmem:[#allocation9 + $0x48] sm:$0xff] %vm2689, %v2504
      %2694 = vst.msk [vmem:[#allocation9 + $0x60] sm:$0xff] %vm2689, %v2506
      %2695 = vst.msk [vmem:[#allocation9 + $0x78] sm:$0xff] %vm2689, %v2508
      %2696 = vst.msk [vmem:[#allocation9 + $0x90] sm:$0xff] %vm2689, %v2510
      %2697 = vst.msk [vmem:[#allocation9 + $0xa8] sm:$0xff] %vm2689, %v2512
      %2698 = vst.msk [vmem:[#allocation9 + $0xc0] sm:$0xff] %vm2689, %v2514
      %2699 = vst.msk [vmem:[#allocation9 + $0xd8] sm:$0xff] %vm2689, %v2516
      %2700 = vst.msk [vmem:[#allocation9 + $0xf0] sm:$0xff] %vm2689, %v2518
      %2701 = vst.msk [vmem:[#allocation9 + $0x108] sm:$0xff] %vm2689, %v2520
      %2702 = vst.msk [vmem:[#allocation9 + $0x120] sm:$0xff] %vm2689, %v2522
      %2703 = vst.msk [vmem:[#allocation9 + $0x138] sm:$0xff] %vm2689, %v2524
      %2704 = vst.msk [vmem:[#allocation9 + $0x150] sm:$0xff] %vm2689, %v2526
      %2705 = vst.msk [vmem:[#allocation9 + $0x168] sm:$0xff] %vm2689, %v2528
      %2706 = vst.msk [vmem:[#allocation9 + $0x180] sm:$0xff] %vm2689, %v2530
      %2707 = vst.msk [vmem:[#allocation9 + $0x198] sm:$0xff] %vm2689, %v2532
      %2708 = vst.msk [vmem:[#allocation9 + $0x1b0] sm:$0xff] %vm2689, %v2534
      %2709 = vst.msk [vmem:[#allocation9 + $0x1c8] sm:$0xff] %vm2689, %v2536
      %2710 = vst.msk [vmem:[#allocation9 + $0x1e0] sm:$0xff] %vm2689, %v2538
      %2711 = vst.msk [vmem:[#allocation9 + $0x1f8] sm:$0xff] %vm2689, %v2540
      %2712 = vst.msk [vmem:[#allocation9 + $0x210] sm:$0xff] %vm2689, %v2542
      %2713 = vst.msk [vmem:[#allocation9 + $0x228] sm:$0xff] %vm2689, %v2544
      %2714 = vst.msk [vmem:[#allocation9 + $0x240] sm:$0xff] %vm2689, %v2546
      %2715 = vst.msk [vmem:[#allocation9 + $0x258] sm:$0xff] %vm2689, %v2548
      %2716 = vst.msk [vmem:[#allocation9 + $0x270] sm:$0xff] %vm2689, %v2550
      %2717 = vst.msk [vmem:[#allocation9 + $0x288] sm:$0xff] %vm2689, %v2552
      %2718 = vst.msk [vmem:[#allocation9 + $0x2a0] sm:$0xff] %vm2689, %v2554
      %2719 = vst.msk [vmem:[#allocation9 + $0x2b8] sm:$0xff] %vm2689, %v2556
      %2720 = vst.msk [vmem:[#allocation9 + $0x2d0] sm:$0xff] %vm2689, %v2558
      %2721 = vst.msk [vmem:[#allocation9 + $0x2e8] sm:$0xff] %vm2689, %v2560
      %2722 = vst.msk [vmem:[#allocation9 + $0x300] sm:$0xff] %vm2689, %v2562
      %2723 = vst.msk [vmem:[#allocation9 + $0x318] sm:$0xff] %vm2689, %v2564
      %2724 = vst.msk [vmem:[#allocation9 + $0x330] sm:$0xff] %vm2689, %v2566
      %2725 = vst.msk [vmem:[#allocation9 + $0x348] sm:$0xff] %vm2689, %v2568
      %2726 = vst.msk [vmem:[#allocation9 + $0x360] sm:$0xff] %vm2689, %v2570
      %2727 = vst.msk [vmem:[#allocation9 + $0x378] sm:$0xff] %vm2689, %v2572
      %2728 = vst.msk [vmem:[#allocation9 + $0x390] sm:$0xff] %vm2689, %v2574
      %2729 = vst.msk [vmem:[#allocation9 + $0x3a8] sm:$0xff] %vm2689, %v2576
      %2730 = vst.msk [vmem:[#allocation9 + $0x3c0] sm:$0xff] %vm2689, %v2578
      %2731 = vst.msk [vmem:[#allocation9 + $0x3d8] sm:$0xff] %vm2689, %v2580
      %2732 = vst.msk [vmem:[#allocation9 + $0x3f0] sm:$0xff] %vm2689, %v2582
      %2733 = vst.msk [vmem:[#allocation9 + $0x408] sm:$0xff] %vm2689, %v2584
      %2734 = vst.msk [vmem:[#allocation9 + $0x420] sm:$0xff] %vm2689, %v2586
      %2735 = vst.msk [vmem:[#allocation9 + $0x438] sm:$0xff] %vm2689, %v2588
      %2736 = vst.msk [vmem:[#allocation9 + $0x450] sm:$0xff] %vm2689, %v2590
      %2737 = vst.msk [vmem:[#allocation9 + $0x468] sm:$0xff] %vm2689, %v2592
      %2738 = vst.msk [vmem:[#allocation9 + $0x480] sm:$0xff] %vm2689, %v2594
      %2739 = vst.msk [vmem:[#allocation9 + $0x498] sm:$0xff] %vm2689, %v2596
      %2740 = vst.msk [vmem:[#allocation9 + $0x4b0] sm:$0xff] %vm2689, %v2598
      %2741 = vst.msk [vmem:[#allocation9 + $0x4c8] sm:$0xff] %vm2689, %v2600
      %2742 = vst.msk [vmem:[#allocation9 + $0x4e0] sm:$0xff] %vm2689, %v2602
      %2743 = vst.msk [vmem:[#allocation9 + $0x4f8] sm:$0xff] %vm2689, %v2604
      %2744 = vst.msk [vmem:[#allocation9 + $0x510] sm:$0xff] %vm2689, %v2606
      %2745 = vst.msk [vmem:[#allocation9 + $0x528] sm:$0xff] %vm2689, %v2608
      %2746 = vst.msk [vmem:[#allocation9 + $0x540] sm:$0xff] %vm2689, %v2610
      %2747 = vst.msk [vmem:[#allocation9 + $0x558] sm:$0xff] %vm2689, %v2612
      %2748 = vst.msk [vmem:[#allocation9 + $0x570] sm:$0xff] %vm2689, %v2614
      %2749 = vst.msk [vmem:[#allocation9 + $0x588] sm:$0xff] %vm2689, %v2616
      %2750 = vst.msk [vmem:[#allocation9 + $0x5a0] sm:$0xff] %vm2689, %v2618
      %2751 = vst.msk [vmem:[#allocation9 + $0x5b8] sm:$0xff] %vm2689, %v2620
      %2752 = vst.msk [vmem:[#allocation9 + $0x5d0] sm:$0xff] %vm2689, %v2622
      %2753 = vst.msk [vmem:[#allocation9 + $0x5e8] sm:$0xff] %vm2689, %v2624
      %s2754 = scalar_lea.vmem [#allocation2], 48
      %v2755 = vld [vmem:[%s2754] sm:$0xff]
      %v2756 = vld [vmem:[%s2754 + $0x8] sm:$0xff]
      %v2757 = vld [vmem:[%s2754 + $0x18] sm:$0xff]
      %v2758 = vld [vmem:[%s2754 + $0x20] sm:$0xff]
      %v2759 = vld [vmem:[%s2754 + $0x30] sm:$0xff]
      %v2760 = vld [vmem:[%s2754 + $0x38] sm:$0xff]
      %v2761 = vld [vmem:[%s2754 + $0x48] sm:$0xff]
      %v2762 = vld [vmem:[%s2754 + $0x50] sm:$0xff]
      %v2763 = vld [vmem:[%s2754 + $0x60] sm:$0xff]
      %v2764 = vld [vmem:[%s2754 + $0x68] sm:$0xff]
      %v2765 = vld [vmem:[%s2754 + $0x78] sm:$0xff]
      %v2766 = vld [vmem:[%s2754 + $0x80] sm:$0xff]
      %v2767 = vld [vmem:[%s2754 + $0x90] sm:$0xff]
      %v2768 = vld [vmem:[%s2754 + $0x98] sm:$0xff]
      %v2769 = vld [vmem:[%s2754 + $0xa8] sm:$0xff]
      %v2770 = vld [vmem:[%s2754 + $0xb0] sm:$0xff]
      %v2771 = vld [vmem:[%s2754 + $0xc0] sm:$0xff]
      %v2772 = vld [vmem:[%s2754 + $0xc8] sm:$0xff]
      %v2773 = vld [vmem:[%s2754 + $0xd8] sm:$0xff]
      %v2774 = vld [vmem:[%s2754 + $0xe0] sm:$0xff]
      %v2775 = vld [vmem:[%s2754 + $0xf0] sm:$0xff]
      %v2776 = vld [vmem:[%s2754 + $0xf8] sm:$0xff]
      %v2777 = vld [vmem:[%s2754 + $0x108] sm:$0xff]
      %v2778 = vld [vmem:[%s2754 + $0x110] sm:$0xff]
      %v2779 = vld [vmem:[%s2754 + $0x120] sm:$0xff]
      %v2780 = vld [vmem:[%s2754 + $0x128] sm:$0xff]
      %v2781 = vld [vmem:[%s2754 + $0x138] sm:$0xff]
      %v2782 = vld [vmem:[%s2754 + $0x140] sm:$0xff]
      %v2783 = vld [vmem:[%s2754 + $0x150] sm:$0xff]
      %v2784 = vld [vmem:[%s2754 + $0x158] sm:$0xff]
      %v2785 = vld [vmem:[%s2754 + $0x168] sm:$0xff]
      %v2786 = vld [vmem:[%s2754 + $0x170] sm:$0xff]
      %v2787 = vld [vmem:[%s2754 + $0x180] sm:$0xff]
      %v2788 = vld [vmem:[%s2754 + $0x188] sm:$0xff]
      %v2789 = vld [vmem:[%s2754 + $0x198] sm:$0xff]
      %v2790 = vld [vmem:[%s2754 + $0x1a0] sm:$0xff]
      %v2791 = vld [vmem:[%s2754 + $0x1b0] sm:$0xff]
      %v2792 = vld [vmem:[%s2754 + $0x1b8] sm:$0xff]
      %v2793 = vld [vmem:[%s2754 + $0x1c8] sm:$0xff]
      %v2794 = vld [vmem:[%s2754 + $0x1d0] sm:$0xff]
      %v2795 = vld [vmem:[%s2754 + $0x1e0] sm:$0xff]
      %v2796 = vld [vmem:[%s2754 + $0x1e8] sm:$0xff]
      %v2797 = vld [vmem:[%s2754 + $0x1f8] sm:$0xff]
      %v2798 = vld [vmem:[%s2754 + $0x200] sm:$0xff]
      %v2799 = vld [vmem:[%s2754 + $0x210] sm:$0xff]
      %v2800 = vld [vmem:[%s2754 + $0x218] sm:$0xff]
      %v2801 = vld [vmem:[%s2754 + $0x228] sm:$0xff]
      %v2802 = vld [vmem:[%s2754 + $0x230] sm:$0xff]
      %v2803 = vld [vmem:[%s2754 + $0x240] sm:$0xff]
      %v2804 = vld [vmem:[%s2754 + $0x248] sm:$0xff]
      %v2805 = vld [vmem:[%s2754 + $0x258] sm:$0xff]
      %v2806 = vld [vmem:[%s2754 + $0x260] sm:$0xff]
      %v2807 = vld [vmem:[%s2754 + $0x270] sm:$0xff]
      %v2808 = vld [vmem:[%s2754 + $0x278] sm:$0xff]
      %v2809 = vld [vmem:[%s2754 + $0x288] sm:$0xff]
      %v2810 = vld [vmem:[%s2754 + $0x290] sm:$0xff]
      %v2811 = vld [vmem:[%s2754 + $0x2a0] sm:$0xff]
      %v2812 = vld [vmem:[%s2754 + $0x2a8] sm:$0xff]
      %v2813 = vld [vmem:[%s2754 + $0x2b8] sm:$0xff]
      %v2814 = vld [vmem:[%s2754 + $0x2c0] sm:$0xff]
      %v2815 = vld [vmem:[%s2754 + $0x2d0] sm:$0xff]
      %v2816 = vld [vmem:[%s2754 + $0x2d8] sm:$0xff]
      %v2817 = vld [vmem:[%s2754 + $0x2e8] sm:$0xff]
      %v2818 = vld [vmem:[%s2754 + $0x2f0] sm:$0xff]
      %2883 = vrot.lane.b32.xlu0 %v2755, 24
      %v2884 = vpop.permute.xlu0 %2883
      %2885 = vrot.lane.b32.xlu0 %v2756, 24
      %v2886 = vpop.permute.xlu0 %2885
      %2887 = vrot.lane.b32.xlu0 %v2757, 24
      %v2888 = vpop.permute.xlu0 %2887
      %2889 = vrot.lane.b32.xlu0 %v2758, 24
      %v2890 = vpop.permute.xlu0 %2889
      %2891 = vrot.lane.b32.xlu0 %v2759, 24
      %v2892 = vpop.permute.xlu0 %2891
      %2893 = vrot.lane.b32.xlu0 %v2760, 24
      %v2894 = vpop.permute.xlu0 %2893
      %2895 = vrot.lane.b32.xlu0 %v2761, 24
      %v2896 = vpop.permute.xlu0 %2895
      %2897 = vrot.lane.b32.xlu0 %v2762, 24
      %v2898 = vpop.permute.xlu0 %2897
      %2899 = vrot.lane.b32.xlu0 %v2763, 24
      %v2900 = vpop.permute.xlu0 %2899
      %2901 = vrot.lane.b32.xlu0 %v2764, 24
      %v2902 = vpop.permute.xlu0 %2901
      %2903 = vrot.lane.b32.xlu0 %v2765, 24
      %v2904 = vpop.permute.xlu0 %2903
      %2905 = vrot.lane.b32.xlu0 %v2766, 24
      %v2906 = vpop.permute.xlu0 %2905
      %2907 = vrot.lane.b32.xlu0 %v2767, 24
      %v2908 = vpop.permute.xlu0 %2907
      %2909 = vrot.lane.b32.xlu0 %v2768, 24
      %v2910 = vpop.permute.xlu0 %2909
      %2911 = vrot.lane.b32.xlu0 %v2769, 24
      %v2912 = vpop.permute.xlu0 %2911
      %2913 = vrot.lane.b32.xlu0 %v2770, 24
      %v2914 = vpop.permute.xlu0 %2913
      %2915 = vrot.lane.b32.xlu0 %v2771, 24
      %v2916 = vpop.permute.xlu0 %2915
      %2917 = vrot.lane.b32.xlu0 %v2772, 24
      %v2918 = vpop.permute.xlu0 %2917
      %2919 = vrot.lane.b32.xlu0 %v2773, 24
      %v2920 = vpop.permute.xlu0 %2919
      %2921 = vrot.lane.b32.xlu0 %v2774, 24
      %v2922 = vpop.permute.xlu0 %2921
      %2923 = vrot.lane.b32.xlu0 %v2775, 24
      %v2924 = vpop.permute.xlu0 %2923
      %2925 = vrot.lane.b32.xlu0 %v2776, 24
      %v2926 = vpop.permute.xlu0 %2925
      %2927 = vrot.lane.b32.xlu0 %v2777, 24
      %v2928 = vpop.permute.xlu0 %2927
      %2929 = vrot.lane.b32.xlu0 %v2778, 24
      %v2930 = vpop.permute.xlu0 %2929
      %2931 = vrot.lane.b32.xlu0 %v2779, 24
      %v2932 = vpop.permute.xlu0 %2931
      %2933 = vrot.lane.b32.xlu0 %v2780, 24
      %v2934 = vpop.permute.xlu0 %2933
      %2935 = vrot.lane.b32.xlu0 %v2781, 24
      %v2936 = vpop.permute.xlu0 %2935
      %2937 = vrot.lane.b32.xlu0 %v2782, 24
      %v2938 = vpop.permute.xlu0 %2937
      %2939 = vrot.lane.b32.xlu0 %v2783, 24
      %v2940 = vpop.permute.xlu0 %2939
      %2941 = vrot.lane.b32.xlu0 %v2784, 24
      %v2942 = vpop.permute.xlu0 %2941
      %2943 = vrot.lane.b32.xlu0 %v2785, 24
      %v2944 = vpop.permute.xlu0 %2943
      %2945 = vrot.lane.b32.xlu0 %v2786, 24
      %v2946 = vpop.permute.xlu0 %2945
      %2947 = vrot.lane.b32.xlu0 %v2787, 24
      %v2948 = vpop.permute.xlu0 %2947
      %2949 = vrot.lane.b32.xlu0 %v2788, 24
      %v2950 = vpop.permute.xlu0 %2949
      %2951 = vrot.lane.b32.xlu0 %v2789, 24
      %v2952 = vpop.permute.xlu0 %2951
      %2953 = vrot.lane.b32.xlu0 %v2790, 24
      %v2954 = vpop.permute.xlu0 %2953
      %2955 = vrot.lane.b32.xlu0 %v2791, 24
      %v2956 = vpop.permute.xlu0 %2955
      %2957 = vrot.lane.b32.xlu0 %v2792, 24
      %v2958 = vpop.permute.xlu0 %2957
      %2959 = vrot.lane.b32.xlu0 %v2793, 24
      %v2960 = vpop.permute.xlu0 %2959
      %2961 = vrot.lane.b32.xlu0 %v2794, 24
      %v2962 = vpop.permute.xlu0 %2961
      %2963 = vrot.lane.b32.xlu0 %v2795, 24
      %v2964 = vpop.permute.xlu0 %2963
      %2965 = vrot.lane.b32.xlu0 %v2796, 24
      %v2966 = vpop.permute.xlu0 %2965
      %2967 = vrot.lane.b32.xlu0 %v2797, 24
      %v2968 = vpop.permute.xlu0 %2967
      %2969 = vrot.lane.b32.xlu0 %v2798, 24
      %v2970 = vpop.permute.xlu0 %2969
      %2971 = vrot.lane.b32.xlu0 %v2799, 24
      %v2972 = vpop.permute.xlu0 %2971
      %2973 = vrot.lane.b32.xlu0 %v2800, 24
      %v2974 = vpop.permute.xlu0 %2973
      %2975 = vrot.lane.b32.xlu0 %v2801, 24
      %v2976 = vpop.permute.xlu0 %2975
      %2977 = vrot.lane.b32.xlu0 %v2802, 24
      %v2978 = vpop.permute.xlu0 %2977
      %2979 = vrot.lane.b32.xlu0 %v2803, 24
      %v2980 = vpop.permute.xlu0 %2979
      %2981 = vrot.lane.b32.xlu0 %v2804, 24
      %v2982 = vpop.permute.xlu0 %2981
      %2983 = vrot.lane.b32.xlu0 %v2805, 24
      %v2984 = vpop.permute.xlu0 %2983
      %2985 = vrot.lane.b32.xlu0 %v2806, 24
      %v2986 = vpop.permute.xlu0 %2985
      %2987 = vrot.lane.b32.xlu0 %v2807, 24
      %v2988 = vpop.permute.xlu0 %2987
      %2989 = vrot.lane.b32.xlu0 %v2808, 24
      %v2990 = vpop.permute.xlu0 %2989
      %2991 = vrot.lane.b32.xlu0 %v2809, 24
      %v2992 = vpop.permute.xlu0 %2991
      %2993 = vrot.lane.b32.xlu0 %v2810, 24
      %v2994 = vpop.permute.xlu0 %2993
      %2995 = vrot.lane.b32.xlu0 %v2811, 24
      %v2996 = vpop.permute.xlu0 %2995
      %2997 = vrot.lane.b32.xlu0 %v2812, 24
      %v2998 = vpop.permute.xlu0 %2997
      %2999 = vrot.lane.b32.xlu0 %v2813, 24
      %v3000 = vpop.permute.xlu0 %2999
      %3001 = vrot.lane.b32.xlu0 %v2814, 24
      %v3002 = vpop.permute.xlu0 %3001
      %3003 = vrot.lane.b32.xlu0 %v2815, 24
      %v3004 = vpop.permute.xlu0 %3003
      %3005 = vrot.lane.b32.xlu0 %v2816, 24
      %v3006 = vpop.permute.xlu0 %3005
      %3007 = vrot.lane.b32.xlu0 %v2817, 24
      %v3008 = vpop.permute.xlu0 %3007
      %3009 = vrot.lane.b32.xlu0 %v2818, 24
      %v3010 = vpop.permute.xlu0 %3009
      %vm3075 = vcmask 228544
      %3076 = vst.msk [vmem:[#allocation9] sm:$0xff] %vm3075, %v2884
      %3077 = vst.msk [vmem:[#allocation9 + $0x18] sm:$0xff] %vm3075, %v2886
      %3078 = vst.msk [vmem:[#allocation9 + $0x30] sm:$0xff] %vm3075, %v2888
      %3079 = vst.msk [vmem:[#allocation9 + $0x48] sm:$0xff] %vm3075, %v2890
      %3080 = vst.msk [vmem:[#allocation9 + $0x60] sm:$0xff] %vm3075, %v2892
      %3081 = vst.msk [vmem:[#allocation9 + $0x78] sm:$0xff] %vm3075, %v2894
      %3082 = vst.msk [vmem:[#allocation9 + $0x90] sm:$0xff] %vm3075, %v2896
      %3083 = vst.msk [vmem:[#allocation9 + $0xa8] sm:$0xff] %vm3075, %v2898
      %3084 = vst.msk [vmem:[#allocation9 + $0xc0] sm:$0xff] %vm3075, %v2900
      %3085 = vst.msk [vmem:[#allocation9 + $0xd8] sm:$0xff] %vm3075, %v2902
      %3086 = vst.msk [vmem:[#allocation9 + $0xf0] sm:$0xff] %vm3075, %v2904
      %3087 = vst.msk [vmem:[#allocation9 + $0x108] sm:$0xff] %vm3075, %v2906
      %3088 = vst.msk [vmem:[#allocation9 + $0x120] sm:$0xff] %vm3075, %v2908
      %3089 = vst.msk [vmem:[#allocation9 + $0x138] sm:$0xff] %vm3075, %v2910
      %3090 = vst.msk [vmem:[#allocation9 + $0x150] sm:$0xff] %vm3075, %v2912
      %3091 = vst.msk [vmem:[#allocation9 + $0x168] sm:$0xff] %vm3075, %v2914
      %3092 = vst.msk [vmem:[#allocation9 + $0x180] sm:$0xff] %vm3075, %v2916
      %3093 = vst.msk [vmem:[#allocation9 + $0x198] sm:$0xff] %vm3075, %v2918
      %3094 = vst.msk [vmem:[#allocation9 + $0x1b0] sm:$0xff] %vm3075, %v2920
      %3095 = vst.msk [vmem:[#allocation9 + $0x1c8] sm:$0xff] %vm3075, %v2922
      %3096 = vst.msk [vmem:[#allocation9 + $0x1e0] sm:$0xff] %vm3075, %v2924
      %3097 = vst.msk [vmem:[#allocation9 + $0x1f8] sm:$0xff] %vm3075, %v2926
      %3098 = vst.msk [vmem:[#allocation9 + $0x210] sm:$0xff] %vm3075, %v2928
      %3099 = vst.msk [vmem:[#allocation9 + $0x228] sm:$0xff] %vm3075, %v2930
      %3100 = vst.msk [vmem:[#allocation9 + $0x240] sm:$0xff] %vm3075, %v2932
      %3101 = vst.msk [vmem:[#allocation9 + $0x258] sm:$0xff] %vm3075, %v2934
      %3102 = vst.msk [vmem:[#allocation9 + $0x270] sm:$0xff] %vm3075, %v2936
      %3103 = vst.msk [vmem:[#allocation9 + $0x288] sm:$0xff] %vm3075, %v2938
      %3104 = vst.msk [vmem:[#allocation9 + $0x2a0] sm:$0xff] %vm3075, %v2940
      %3105 = vst.msk [vmem:[#allocation9 + $0x2b8] sm:$0xff] %vm3075, %v2942
      %3106 = vst.msk [vmem:[#allocation9 + $0x2d0] sm:$0xff] %vm3075, %v2944
      %3107 = vst.msk [vmem:[#allocation9 + $0x2e8] sm:$0xff] %vm3075, %v2946
      %3108 = vst.msk [vmem:[#allocation9 + $0x300] sm:$0xff] %vm3075, %v2948
      %3109 = vst.msk [vmem:[#allocation9 + $0x318] sm:$0xff] %vm3075, %v2950
      %3110 = vst.msk [vmem:[#allocation9 + $0x330] sm:$0xff] %vm3075, %v2952
      %3111 = vst.msk [vmem:[#allocation9 + $0x348] sm:$0xff] %vm3075, %v2954
      %3112 = vst.msk [vmem:[#allocation9 + $0x360] sm:$0xff] %vm3075, %v2956
      %3113 = vst.msk [vmem:[#allocation9 + $0x378] sm:$0xff] %vm3075, %v2958
      %3114 = vst.msk [vmem:[#allocation9 + $0x390] sm:$0xff] %vm3075, %v2960
      %3115 = vst.msk [vmem:[#allocation9 + $0x3a8] sm:$0xff] %vm3075, %v2962
      %3116 = vst.msk [vmem:[#allocation9 + $0x3c0] sm:$0xff] %vm3075, %v2964
      %3117 = vst.msk [vmem:[#allocation9 + $0x3d8] sm:$0xff] %vm3075, %v2966
      %3118 = vst.msk [vmem:[#allocation9 + $0x3f0] sm:$0xff] %vm3075, %v2968
      %3119 = vst.msk [vmem:[#allocation9 + $0x408] sm:$0xff] %vm3075, %v2970
      %3120 = vst.msk [vmem:[#allocation9 + $0x420] sm:$0xff] %vm3075, %v2972
      %3121 = vst.msk [vmem:[#allocation9 + $0x438] sm:$0xff] %vm3075, %v2974
      %3122 = vst.msk [vmem:[#allocation9 + $0x450] sm:$0xff] %vm3075, %v2976
      %3123 = vst.msk [vmem:[#allocation9 + $0x468] sm:$0xff] %vm3075, %v2978
      %3124 = vst.msk [vmem:[#allocation9 + $0x480] sm:$0xff] %vm3075, %v2980
      %3125 = vst.msk [vmem:[#allocation9 + $0x498] sm:$0xff] %vm3075, %v2982
      %3126 = vst.msk [vmem:[#allocation9 + $0x4b0] sm:$0xff] %vm3075, %v2984
      %3127 = vst.msk [vmem:[#allocation9 + $0x4c8] sm:$0xff] %vm3075, %v2986
      %3128 = vst.msk [vmem:[#allocation9 + $0x4e0] sm:$0xff] %vm3075, %v2988
      %3129 = vst.msk [vmem:[#allocation9 + $0x4f8] sm:$0xff] %vm3075, %v2990
      %3130 = vst.msk [vmem:[#allocation9 + $0x510] sm:$0xff] %vm3075, %v2992
      %3131 = vst.msk [vmem:[#allocation9 + $0x528] sm:$0xff] %vm3075, %v2994
      %3132 = vst.msk [vmem:[#allocation9 + $0x540] sm:$0xff] %vm3075, %v2996
      %3133 = vst.msk [vmem:[#allocation9 + $0x558] sm:$0xff] %vm3075, %v2998
      %3134 = vst.msk [vmem:[#allocation9 + $0x570] sm:$0xff] %vm3075, %v3000
      %3135 = vst.msk [vmem:[#allocation9 + $0x588] sm:$0xff] %vm3075, %v3002
      %3136 = vst.msk [vmem:[#allocation9 + $0x5a0] sm:$0xff] %vm3075, %v3004
      %3137 = vst.msk [vmem:[#allocation9 + $0x5b8] sm:$0xff] %vm3075, %v3006
      %3138 = vst.msk [vmem:[#allocation9 + $0x5d0] sm:$0xff] %vm3075, %v3008
      %3139 = vst.msk [vmem:[#allocation9 + $0x5e8] sm:$0xff] %vm3075, %v3010
      %v3140 = vld [vmem:[%s2754 + $0x1] sm:$0xff]
      %v3141 = vld [vmem:[%s2754 + $0x9] sm:$0xff]
      %v3142 = vld [vmem:[%s2754 + $0x19] sm:$0xff]
      %v3143 = vld [vmem:[%s2754 + $0x21] sm:$0xff]
      %v3144 = vld [vmem:[%s2754 + $0x31] sm:$0xff]
      %v3145 = vld [vmem:[%s2754 + $0x39] sm:$0xff]
      %v3146 = vld [vmem:[%s2754 + $0x49] sm:$0xff]
      %v3147 = vld [vmem:[%s2754 + $0x51] sm:$0xff]
      %v3148 = vld [vmem:[%s2754 + $0x61] sm:$0xff]
      %v3149 = vld [vmem:[%s2754 + $0x69] sm:$0xff]
      %v3150 = vld [vmem:[%s2754 + $0x79] sm:$0xff]
      %v3151 = vld [vmem:[%s2754 + $0x81] sm:$0xff]
      %v3152 = vld [vmem:[%s2754 + $0x91] sm:$0xff]
      %v3153 = vld [vmem:[%s2754 + $0x99] sm:$0xff]
      %v3154 = vld [vmem:[%s2754 + $0xa9] sm:$0xff]
      %v3155 = vld [vmem:[%s2754 + $0xb1] sm:$0xff]
      %v3156 = vld [vmem:[%s2754 + $0xc1] sm:$0xff]
      %v3157 = vld [vmem:[%s2754 + $0xc9] sm:$0xff]
      %v3158 = vld [vmem:[%s2754 + $0xd9] sm:$0xff]
      %v3159 = vld [vmem:[%s2754 + $0xe1] sm:$0xff]
      %v3160 = vld [vmem:[%s2754 + $0xf1] sm:$0xff]
      %v3161 = vld [vmem:[%s2754 + $0xf9] sm:$0xff]
      %v3162 = vld [vmem:[%s2754 + $0x109] sm:$0xff]
      %v3163 = vld [vmem:[%s2754 + $0x111] sm:$0xff]
      %v3164 = vld [vmem:[%s2754 + $0x121] sm:$0xff]
      %v3165 = vld [vmem:[%s2754 + $0x129] sm:$0xff]
      %v3166 = vld [vmem:[%s2754 + $0x139] sm:$0xff]
      %v3167 = vld [vmem:[%s2754 + $0x141] sm:$0xff]
      %v3168 = vld [vmem:[%s2754 + $0x151] sm:$0xff]
      %v3169 = vld [vmem:[%s2754 + $0x159] sm:$0xff]
      %v3170 = vld [vmem:[%s2754 + $0x169] sm:$0xff]
      %v3171 = vld [vmem:[%s2754 + $0x171] sm:$0xff]
      %v3172 = vld [vmem:[%s2754 + $0x181] sm:$0xff]
      %v3173 = vld [vmem:[%s2754 + $0x189] sm:$0xff]
      %v3174 = vld [vmem:[%s2754 + $0x199] sm:$0xff]
      %v3175 = vld [vmem:[%s2754 + $0x1a1] sm:$0xff]
      %v3176 = vld [vmem:[%s2754 + $0x1b1] sm:$0xff]
      %v3177 = vld [vmem:[%s2754 + $0x1b9] sm:$0xff]
      %v3178 = vld [vmem:[%s2754 + $0x1c9] sm:$0xff]
      %v3179 = vld [vmem:[%s2754 + $0x1d1] sm:$0xff]
      %v3180 = vld [vmem:[%s2754 + $0x1e1] sm:$0xff]
      %v3181 = vld [vmem:[%s2754 + $0x1e9] sm:$0xff]
      %v3182 = vld [vmem:[%s2754 + $0x1f9] sm:$0xff]
      %v3183 = vld [vmem:[%s2754 + $0x201] sm:$0xff]
      %v3184 = vld [vmem:[%s2754 + $0x211] sm:$0xff]
      %v3185 = vld [vmem:[%s2754 + $0x219] sm:$0xff]
      %v3186 = vld [vmem:[%s2754 + $0x229] sm:$0xff]
      %v3187 = vld [vmem:[%s2754 + $0x231] sm:$0xff]
      %v3188 = vld [vmem:[%s2754 + $0x241] sm:$0xff]
      %v3189 = vld [vmem:[%s2754 + $0x249] sm:$0xff]
      %v3190 = vld [vmem:[%s2754 + $0x259] sm:$0xff]
      %v3191 = vld [vmem:[%s2754 + $0x261] sm:$0xff]
      %v3192 = vld [vmem:[%s2754 + $0x271] sm:$0xff]
      %v3193 = vld [vmem:[%s2754 + $0x279] sm:$0xff]
      %v3194 = vld [vmem:[%s2754 + $0x289] sm:$0xff]
      %v3195 = vld [vmem:[%s2754 + $0x291] sm:$0xff]
      %v3196 = vld [vmem:[%s2754 + $0x2a1] sm:$0xff]
      %v3197 = vld [vmem:[%s2754 + $0x2a9] sm:$0xff]
      %v3198 = vld [vmem:[%s2754 + $0x2b9] sm:$0xff]
      %v3199 = vld [vmem:[%s2754 + $0x2c1] sm:$0xff]
      %v3200 = vld [vmem:[%s2754 + $0x2d1] sm:$0xff]
      %v3201 = vld [vmem:[%s2754 + $0x2d9] sm:$0xff]
      %v3202 = vld [vmem:[%s2754 + $0x2e9] sm:$0xff]
      %v3203 = vld [vmem:[%s2754 + $0x2f1] sm:$0xff]
      %3268 = vrot.lane.b32.xlu0 %v3140, 28
      %v3269 = vpop.permute.xlu0 %3268
      %3270 = vrot.lane.b32.xlu0 %v3141, 28
      %v3271 = vpop.permute.xlu0 %3270
      %3272 = vrot.lane.b32.xlu0 %v3142, 28
      %v3273 = vpop.permute.xlu0 %3272
      %3274 = vrot.lane.b32.xlu0 %v3143, 28
      %v3275 = vpop.permute.xlu0 %3274
      %3276 = vrot.lane.b32.xlu0 %v3144, 28
      %v3277 = vpop.permute.xlu0 %3276
      %3278 = vrot.lane.b32.xlu0 %v3145, 28
      %v3279 = vpop.permute.xlu0 %3278
      %3280 = vrot.lane.b32.xlu0 %v3146, 28
      %v3281 = vpop.permute.xlu0 %3280
      %3282 = vrot.lane.b32.xlu0 %v3147, 28
      %v3283 = vpop.permute.xlu0 %3282
      %3284 = vrot.lane.b32.xlu0 %v3148, 28
      %v3285 = vpop.permute.xlu0 %3284
      %3286 = vrot.lane.b32.xlu0 %v3149, 28
      %v3287 = vpop.permute.xlu0 %3286
      %3288 = vrot.lane.b32.xlu0 %v3150, 28
      %v3289 = vpop.permute.xlu0 %3288
      %3290 = vrot.lane.b32.xlu0 %v3151, 28
      %v3291 = vpop.permute.xlu0 %3290
      %3292 = vrot.lane.b32.xlu0 %v3152, 28
      %v3293 = vpop.permute.xlu0 %3292
      %3294 = vrot.lane.b32.xlu0 %v3153, 28
      %v3295 = vpop.permute.xlu0 %3294
      %3296 = vrot.lane.b32.xlu0 %v3154, 28
      %v3297 = vpop.permute.xlu0 %3296
      %3298 = vrot.lane.b32.xlu0 %v3155, 28
      %v3299 = vpop.permute.xlu0 %3298
      %3300 = vrot.lane.b32.xlu0 %v3156, 28
      %v3301 = vpop.permute.xlu0 %3300
      %3302 = vrot.lane.b32.xlu0 %v3157, 28
      %v3303 = vpop.permute.xlu0 %3302
      %3304 = vrot.lane.b32.xlu0 %v3158, 28
      %v3305 = vpop.permute.xlu0 %3304
      %3306 = vrot.lane.b32.xlu0 %v3159, 28
      %v3307 = vpop.permute.xlu0 %3306
      %3308 = vrot.lane.b32.xlu0 %v3160, 28
      %v3309 = vpop.permute.xlu0 %3308
      %3310 = vrot.lane.b32.xlu0 %v3161, 28
      %v3311 = vpop.permute.xlu0 %3310
      %3312 = vrot.lane.b32.xlu0 %v3162, 28
      %v3313 = vpop.permute.xlu0 %3312
      %3314 = vrot.lane.b32.xlu0 %v3163, 28
      %v3315 = vpop.permute.xlu0 %3314
      %3316 = vrot.lane.b32.xlu0 %v3164, 28
      %v3317 = vpop.permute.xlu0 %3316
      %3318 = vrot.lane.b32.xlu0 %v3165, 28
      %v3319 = vpop.permute.xlu0 %3318
      %3320 = vrot.lane.b32.xlu0 %v3166, 28
      %v3321 = vpop.permute.xlu0 %3320
      %3322 = vrot.lane.b32.xlu0 %v3167, 28
      %v3323 = vpop.permute.xlu0 %3322
      %3324 = vrot.lane.b32.xlu0 %v3168, 28
      %v3325 = vpop.permute.xlu0 %3324
      %3326 = vrot.lane.b32.xlu0 %v3169, 28
      %v3327 = vpop.permute.xlu0 %3326
      %3328 = vrot.lane.b32.xlu0 %v3170, 28
      %v3329 = vpop.permute.xlu0 %3328
      %3330 = vrot.lane.b32.xlu0 %v3171, 28
      %v3331 = vpop.permute.xlu0 %3330
      %3332 = vrot.lane.b32.xlu0 %v3172, 28
      %v3333 = vpop.permute.xlu0 %3332
      %3334 = vrot.lane.b32.xlu0 %v3173, 28
      %v3335 = vpop.permute.xlu0 %3334
      %3336 = vrot.lane.b32.xlu0 %v3174, 28
      %v3337 = vpop.permute.xlu0 %3336
      %3338 = vrot.lane.b32.xlu0 %v3175, 28
      %v3339 = vpop.permute.xlu0 %3338
      %3340 = vrot.lane.b32.xlu0 %v3176, 28
      %v3341 = vpop.permute.xlu0 %3340
      %3342 = vrot.lane.b32.xlu0 %v3177, 28
      %v3343 = vpop.permute.xlu0 %3342
      %3344 = vrot.lane.b32.xlu0 %v3178, 28
      %v3345 = vpop.permute.xlu0 %3344
      %3346 = vrot.lane.b32.xlu0 %v3179, 28
      %v3347 = vpop.permute.xlu0 %3346
      %3348 = vrot.lane.b32.xlu0 %v3180, 28
      %v3349 = vpop.permute.xlu0 %3348
      %3350 = vrot.lane.b32.xlu0 %v3181, 28
      %v3351 = vpop.permute.xlu0 %3350
      %3352 = vrot.lane.b32.xlu0 %v3182, 28
      %v3353 = vpop.permute.xlu0 %3352
      %3354 = vrot.lane.b32.xlu0 %v3183, 28
      %v3355 = vpop.permute.xlu0 %3354
      %3356 = vrot.lane.b32.xlu0 %v3184, 28
      %v3357 = vpop.permute.xlu0 %3356
      %3358 = vrot.lane.b32.xlu0 %v3185, 28
      %v3359 = vpop.permute.xlu0 %3358
      %3360 = vrot.lane.b32.xlu0 %v3186, 28
      %v3361 = vpop.permute.xlu0 %3360
      %3362 = vrot.lane.b32.xlu0 %v3187, 28
      %v3363 = vpop.permute.xlu0 %3362
      %3364 = vrot.lane.b32.xlu0 %v3188, 28
      %v3365 = vpop.permute.xlu0 %3364
      %3366 = vrot.lane.b32.xlu0 %v3189, 28
      %v3367 = vpop.permute.xlu0 %3366
      %3368 = vrot.lane.b32.xlu0 %v3190, 28
      %v3369 = vpop.permute.xlu0 %3368
      %3370 = vrot.lane.b32.xlu0 %v3191, 28
      %v3371 = vpop.permute.xlu0 %3370
      %3372 = vrot.lane.b32.xlu0 %v3192, 28
      %v3373 = vpop.permute.xlu0 %3372
      %3374 = vrot.lane.b32.xlu0 %v3193, 28
      %v3375 = vpop.permute.xlu0 %3374
      %3376 = vrot.lane.b32.xlu0 %v3194, 28
      %v3377 = vpop.permute.xlu0 %3376
      %3378 = vrot.lane.b32.xlu0 %v3195, 28
      %v3379 = vpop.permute.xlu0 %3378
      %3380 = vrot.lane.b32.xlu0 %v3196, 28
      %v3381 = vpop.permute.xlu0 %3380
      %3382 = vrot.lane.b32.xlu0 %v3197, 28
      %v3383 = vpop.permute.xlu0 %3382
      %3384 = vrot.lane.b32.xlu0 %v3198, 28
      %v3385 = vpop.permute.xlu0 %3384
      %3386 = vrot.lane.b32.xlu0 %v3199, 28
      %v3387 = vpop.permute.xlu0 %3386
      %3388 = vrot.lane.b32.xlu0 %v3200, 28
      %v3389 = vpop.permute.xlu0 %3388
      %3390 = vrot.lane.b32.xlu0 %v3201, 28
      %v3391 = vpop.permute.xlu0 %3390
      %3392 = vrot.lane.b32.xlu0 %v3202, 28
      %v3393 = vpop.permute.xlu0 %3392
      %3394 = vrot.lane.b32.xlu0 %v3203, 28
      %v3395 = vpop.permute.xlu0 %3394
      %vm3460 = vcmask 261344
      %3461 = vst.msk [vmem:[#allocation9] sm:$0xff] %vm3460, %v3269
      %3462 = vst.msk [vmem:[#allocation9 + $0x18] sm:$0xff] %vm3460, %v3271
      %3463 = vst.msk [vmem:[#allocation9 + $0x30] sm:$0xff] %vm3460, %v3273
      %3464 = vst.msk [vmem:[#allocation9 + $0x48] sm:$0xff] %vm3460, %v3275
      %3465 = vst.msk [vmem:[#allocation9 + $0x60] sm:$0xff] %vm3460, %v3277
      %3466 = vst.msk [vmem:[#allocation9 + $0x78] sm:$0xff] %vm3460, %v3279
      %3467 = vst.msk [vmem:[#allocation9 + $0x90] sm:$0xff] %vm3460, %v3281
      %3468 = vst.msk [vmem:[#allocation9 + $0xa8] sm:$0xff] %vm3460, %v3283
      %3469 = vst.msk [vmem:[#allocation9 + $0xc0] sm:$0xff] %vm3460, %v3285
      %3470 = vst.msk [vmem:[#allocation9 + $0xd8] sm:$0xff] %vm3460, %v3287
      %3471 = vst.msk [vmem:[#allocation9 + $0xf0] sm:$0xff] %vm3460, %v3289
      %3472 = vst.msk [vmem:[#allocation9 + $0x108] sm:$0xff] %vm3460, %v3291
      %3473 = vst.msk [vmem:[#allocation9 + $0x120] sm:$0xff] %vm3460, %v3293
      %3474 = vst.msk [vmem:[#allocation9 + $0x138] sm:$0xff] %vm3460, %v3295
      %3475 = vst.msk [vmem:[#allocation9 + $0x150] sm:$0xff] %vm3460, %v3297
      %3476 = vst.msk [vmem:[#allocation9 + $0x168] sm:$0xff] %vm3460, %v3299
      %3477 = vst.msk [vmem:[#allocation9 + $0x180] sm:$0xff] %vm3460, %v3301
      %3478 = vst.msk [vmem:[#allocation9 + $0x198] sm:$0xff] %vm3460, %v3303
      %3479 = vst.msk [vmem:[#allocation9 + $0x1b0] sm:$0xff] %vm3460, %v3305
      %3480 = vst.msk [vmem:[#allocation9 + $0x1c8] sm:$0xff] %vm3460, %v3307
      %3481 = vst.msk [vmem:[#allocation9 + $0x1e0] sm:$0xff] %vm3460, %v3309
      %3482 = vst.msk [vmem:[#allocation9 + $0x1f8] sm:$0xff] %vm3460, %v3311
      %3483 = vst.msk [vmem:[#allocation9 + $0x210] sm:$0xff] %vm3460, %v3313
      %3484 = vst.msk [vmem:[#allocation9 + $0x228] sm:$0xff] %vm3460, %v3315
      %3485 = vst.msk [vmem:[#allocation9 + $0x240] sm:$0xff] %vm3460, %v3317
      %3486 = vst.msk [vmem:[#allocation9 + $0x258] sm:$0xff] %vm3460, %v3319
      %3487 = vst.msk [vmem:[#allocation9 + $0x270] sm:$0xff] %vm3460, %v3321
      %3488 = vst.msk [vmem:[#allocation9 + $0x288] sm:$0xff] %vm3460, %v3323
      %3489 = vst.msk [vmem:[#allocation9 + $0x2a0] sm:$0xff] %vm3460, %v3325
      %3490 = vst.msk [vmem:[#allocation9 + $0x2b8] sm:$0xff] %vm3460, %v3327
      %3491 = vst.msk [vmem:[#allocation9 + $0x2d0] sm:$0xff] %vm3460, %v3329
      %3492 = vst.msk [vmem:[#allocation9 + $0x2e8] sm:$0xff] %vm3460, %v3331
      %3493 = vst.msk [vmem:[#allocation9 + $0x300] sm:$0xff] %vm3460, %v3333
      %3494 = vst.msk [vmem:[#allocation9 + $0x318] sm:$0xff] %vm3460, %v3335
      %3495 = vst.msk [vmem:[#allocation9 + $0x330] sm:$0xff] %vm3460, %v3337
      %3496 = vst.msk [vmem:[#allocation9 + $0x348] sm:$0xff] %vm3460, %v3339
      %3497 = vst.msk [vmem:[#allocation9 + $0x360] sm:$0xff] %vm3460, %v3341
      %3498 = vst.msk [vmem:[#allocation9 + $0x378] sm:$0xff] %vm3460, %v3343
      %3499 = vst.msk [vmem:[#allocation9 + $0x390] sm:$0xff] %vm3460, %v3345
      %3500 = vst.msk [vmem:[#allocation9 + $0x3a8] sm:$0xff] %vm3460, %v3347
      %3501 = vst.msk [vmem:[#allocation9 + $0x3c0] sm:$0xff] %vm3460, %v3349
      %3502 = vst.msk [vmem:[#allocation9 + $0x3d8] sm:$0xff] %vm3460, %v3351
      %3503 = vst.msk [vmem:[#allocation9 + $0x3f0] sm:$0xff] %vm3460, %v3353
      %3504 = vst.msk [vmem:[#allocation9 + $0x408] sm:$0xff] %vm3460, %v3355
      %3505 = vst.msk [vmem:[#allocation9 + $0x420] sm:$0xff] %vm3460, %v3357
      %3506 = vst.msk [vmem:[#allocation9 + $0x438] sm:$0xff] %vm3460, %v3359
      %3507 = vst.msk [vmem:[#allocation9 + $0x450] sm:$0xff] %vm3460, %v3361
      %3508 = vst.msk [vmem:[#allocation9 + $0x468] sm:$0xff] %vm3460, %v3363
      %3509 = vst.msk [vmem:[#allocation9 + $0x480] sm:$0xff] %vm3460, %v3365
      %3510 = vst.msk [vmem:[#allocation9 + $0x498] sm:$0xff] %vm3460, %v3367
      %3511 = vst.msk [vmem:[#allocation9 + $0x4b0] sm:$0xff] %vm3460, %v3369
      %3512 = vst.msk [vmem:[#allocation9 + $0x4c8] sm:$0xff] %vm3460, %v3371
      %3513 = vst.msk [vmem:[#allocation9 + $0x4e0] sm:$0xff] %vm3460, %v3373
      %3514 = vst.msk [vmem:[#allocation9 + $0x4f8] sm:$0xff] %vm3460, %v3375
      %3515 = vst.msk [vmem:[#allocation9 + $0x510] sm:$0xff] %vm3460, %v3377
      %3516 = vst.msk [vmem:[#allocation9 + $0x528] sm:$0xff] %vm3460, %v3379
      %3517 = vst.msk [vmem:[#allocation9 + $0x540] sm:$0xff] %vm3460, %v3381
      %3518 = vst.msk [vmem:[#allocation9 + $0x558] sm:$0xff] %vm3460, %v3383
      %3519 = vst.msk [vmem:[#allocation9 + $0x570] sm:$0xff] %vm3460, %v3385
      %3520 = vst.msk [vmem:[#allocation9 + $0x588] sm:$0xff] %vm3460, %v3387
      %3521 = vst.msk [vmem:[#allocation9 + $0x5a0] sm:$0xff] %vm3460, %v3389
      %3522 = vst.msk [vmem:[#allocation9 + $0x5b8] sm:$0xff] %vm3460, %v3391
      %3523 = vst.msk [vmem:[#allocation9 + $0x5d0] sm:$0xff] %vm3460, %v3393
      %3524 = vst.msk [vmem:[#allocation9 + $0x5e8] sm:$0xff] %vm3460, %v3395
      %v3525 = vld [vmem:[%s2754 + $0x2] sm:$0xff]
      %v3526 = vld [vmem:[%s2754 + $0xa] sm:$0xff]
      %v3527 = vld [vmem:[%s2754 + $0x1a] sm:$0xff]
      %v3528 = vld [vmem:[%s2754 + $0x22] sm:$0xff]
      %v3529 = vld [vmem:[%s2754 + $0x32] sm:$0xff]
      %v3530 = vld [vmem:[%s2754 + $0x3a] sm:$0xff]
      %v3531 = vld [vmem:[%s2754 + $0x4a] sm:$0xff]
      %v3532 = vld [vmem:[%s2754 + $0x52] sm:$0xff]
      %v3533 = vld [vmem:[%s2754 + $0x62] sm:$0xff]
      %v3534 = vld [vmem:[%s2754 + $0x6a] sm:$0xff]
      %v3535 = vld [vmem:[%s2754 + $0x7a] sm:$0xff]
      %v3536 = vld [vmem:[%s2754 + $0x82] sm:$0xff]
      %v3537 = vld [vmem:[%s2754 + $0x92] sm:$0xff]
      %v3538 = vld [vmem:[%s2754 + $0x9a] sm:$0xff]
      %v3539 = vld [vmem:[%s2754 + $0xaa] sm:$0xff]
      %v3540 = vld [vmem:[%s2754 + $0xb2] sm:$0xff]
      %v3541 = vld [vmem:[%s2754 + $0xc2] sm:$0xff]
      %v3542 = vld [vmem:[%s2754 + $0xca] sm:$0xff]
      %v3543 = vld [vmem:[%s2754 + $0xda] sm:$0xff]
      %v3544 = vld [vmem:[%s2754 + $0xe2] sm:$0xff]
      %v3545 = vld [vmem:[%s2754 + $0xf2] sm:$0xff]
      %v3546 = vld [vmem:[%s2754 + $0xfa] sm:$0xff]
      %v3547 = vld [vmem:[%s2754 + $0x10a] sm:$0xff]
      %v3548 = vld [vmem:[%s2754 + $0x112] sm:$0xff]
      %v3549 = vld [vmem:[%s2754 + $0x122] sm:$0xff]
      %v3550 = vld [vmem:[%s2754 + $0x12a] sm:$0xff]
      %v3551 = vld [vmem:[%s2754 + $0x13a] sm:$0xff]
      %v3552 = vld [vmem:[%s2754 + $0x142] sm:$0xff]
      %v3553 = vld [vmem:[%s2754 + $0x152] sm:$0xff]
      %v3554 = vld [vmem:[%s2754 + $0x15a] sm:$0xff]
      %v3555 = vld [vmem:[%s2754 + $0x16a] sm:$0xff]
      %v3556 = vld [vmem:[%s2754 + $0x172] sm:$0xff]
      %v3557 = vld [vmem:[%s2754 + $0x182] sm:$0xff]
      %v3558 = vld [vmem:[%s2754 + $0x18a] sm:$0xff]
      %v3559 = vld [vmem:[%s2754 + $0x19a] sm:$0xff]
      %v3560 = vld [vmem:[%s2754 + $0x1a2] sm:$0xff]
      %v3561 = vld [vmem:[%s2754 + $0x1b2] sm:$0xff]
      %v3562 = vld [vmem:[%s2754 + $0x1ba] sm:$0xff]
      %v3563 = vld [vmem:[%s2754 + $0x1ca] sm:$0xff]
      %v3564 = vld [vmem:[%s2754 + $0x1d2] sm:$0xff]
      %v3565 = vld [vmem:[%s2754 + $0x1e2] sm:$0xff]
      %v3566 = vld [vmem:[%s2754 + $0x1ea] sm:$0xff]
      %v3567 = vld [vmem:[%s2754 + $0x1fa] sm:$0xff]
      %v3568 = vld [vmem:[%s2754 + $0x202] sm:$0xff]
      %v3569 = vld [vmem:[%s2754 + $0x212] sm:$0xff]
      %v3570 = vld [vmem:[%s2754 + $0x21a] sm:$0xff]
      %v3571 = vld [vmem:[%s2754 + $0x22a] sm:$0xff]
      %v3572 = vld [vmem:[%s2754 + $0x232] sm:$0xff]
      %v3573 = vld [vmem:[%s2754 + $0x242] sm:$0xff]
      %v3574 = vld [vmem:[%s2754 + $0x24a] sm:$0xff]
      %v3575 = vld [vmem:[%s2754 + $0x25a] sm:$0xff]
      %v3576 = vld [vmem:[%s2754 + $0x262] sm:$0xff]
      %v3577 = vld [vmem:[%s2754 + $0x272] sm:$0xff]
      %v3578 = vld [vmem:[%s2754 + $0x27a] sm:$0xff]
      %v3579 = vld [vmem:[%s2754 + $0x28a] sm:$0xff]
      %v3580 = vld [vmem:[%s2754 + $0x292] sm:$0xff]
      %v3581 = vld [vmem:[%s2754 + $0x2a2] sm:$0xff]
      %v3582 = vld [vmem:[%s2754 + $0x2aa] sm:$0xff]
      %v3583 = vld [vmem:[%s2754 + $0x2ba] sm:$0xff]
      %v3584 = vld [vmem:[%s2754 + $0x2c2] sm:$0xff]
      %v3585 = vld [vmem:[%s2754 + $0x2d2] sm:$0xff]
      %v3586 = vld [vmem:[%s2754 + $0x2da] sm:$0xff]
      %v3587 = vld [vmem:[%s2754 + $0x2ea] sm:$0xff]
      %v3588 = vld [vmem:[%s2754 + $0x2f2] sm:$0xff]
      %3653 = vrot.lane.b32.xlu0 %v3525, 32
      %v3654 = vpop.permute.xlu0 %3653
      %3655 = vrot.lane.b32.xlu0 %v3526, 32
      %v3656 = vpop.permute.xlu0 %3655
      %3657 = vrot.lane.b32.xlu0 %v3527, 32
      %v3658 = vpop.permute.xlu0 %3657
      %3659 = vrot.lane.b32.xlu0 %v3528, 32
      %v3660 = vpop.permute.xlu0 %3659
      %3661 = vrot.lane.b32.xlu0 %v3529, 32
      %v3662 = vpop.permute.xlu0 %3661
      %3663 = vrot.lane.b32.xlu0 %v3530, 32
      %v3664 = vpop.permute.xlu0 %3663
      %3665 = vrot.lane.b32.xlu0 %v3531, 32
      %v3666 = vpop.permute.xlu0 %3665
      %3667 = vrot.lane.b32.xlu0 %v3532, 32
      %v3668 = vpop.permute.xlu0 %3667
      %3669 = vrot.lane.b32.xlu0 %v3533, 32
      %v3670 = vpop.permute.xlu0 %3669
      %3671 = vrot.lane.b32.xlu0 %v3534, 32
      %v3672 = vpop.permute.xlu0 %3671
      %3673 = vrot.lane.b32.xlu0 %v3535, 32
      %v3674 = vpop.permute.xlu0 %3673
      %3675 = vrot.lane.b32.xlu0 %v3536, 32
      %v3676 = vpop.permute.xlu0 %3675
      %3677 = vrot.lane.b32.xlu0 %v3537, 32
      %v3678 = vpop.permute.xlu0 %3677
      %3679 = vrot.lane.b32.xlu0 %v3538, 32
      %v3680 = vpop.permute.xlu0 %3679
      %3681 = vrot.lane.b32.xlu0 %v3539, 32
      %v3682 = vpop.permute.xlu0 %3681
      %3683 = vrot.lane.b32.xlu0 %v3540, 32
      %v3684 = vpop.permute.xlu0 %3683
      %3685 = vrot.lane.b32.xlu0 %v3541, 32
      %v3686 = vpop.permute.xlu0 %3685
      %3687 = vrot.lane.b32.xlu0 %v3542, 32
      %v3688 = vpop.permute.xlu0 %3687
      %3689 = vrot.lane.b32.xlu0 %v3543, 32
      %v3690 = vpop.permute.xlu0 %3689
      %3691 = vrot.lane.b32.xlu0 %v3544, 32
      %v3692 = vpop.permute.xlu0 %3691
      %3693 = vrot.lane.b32.xlu0 %v3545, 32
      %v3694 = vpop.permute.xlu0 %3693
      %3695 = vrot.lane.b32.xlu0 %v3546, 32
      %v3696 = vpop.permute.xlu0 %3695
      %3697 = vrot.lane.b32.xlu0 %v3547, 32
      %v3698 = vpop.permute.xlu0 %3697
      %3699 = vrot.lane.b32.xlu0 %v3548, 32
      %v3700 = vpop.permute.xlu0 %3699
      %3701 = vrot.lane.b32.xlu0 %v3549, 32
      %v3702 = vpop.permute.xlu0 %3701
      %3703 = vrot.lane.b32.xlu0 %v3550, 32
      %v3704 = vpop.permute.xlu0 %3703
      %3705 = vrot.lane.b32.xlu0 %v3551, 32
      %v3706 = vpop.permute.xlu0 %3705
      %3707 = vrot.lane.b32.xlu0 %v3552, 32
      %v3708 = vpop.permute.xlu0 %3707
      %3709 = vrot.lane.b32.xlu0 %v3553, 32
      %v3710 = vpop.permute.xlu0 %3709
      %3711 = vrot.lane.b32.xlu0 %v3554, 32
      %v3712 = vpop.permute.xlu0 %3711
      %3713 = vrot.lane.b32.xlu0 %v3555, 32
      %v3714 = vpop.permute.xlu0 %3713
      %3715 = vrot.lane.b32.xlu0 %v3556, 32
      %v3716 = vpop.permute.xlu0 %3715
      %3717 = vrot.lane.b32.xlu0 %v3557, 32
      %v3718 = vpop.permute.xlu0 %3717
      %3719 = vrot.lane.b32.xlu0 %v3558, 32
      %v3720 = vpop.permute.xlu0 %3719
      %3721 = vrot.lane.b32.xlu0 %v3559, 32
      %v3722 = vpop.permute.xlu0 %3721
      %3723 = vrot.lane.b32.xlu0 %v3560, 32
      %v3724 = vpop.permute.xlu0 %3723
      %3725 = vrot.lane.b32.xlu0 %v3561, 32
      %v3726 = vpop.permute.xlu0 %3725
      %3727 = vrot.lane.b32.xlu0 %v3562, 32
      %v3728 = vpop.permute.xlu0 %3727
      %3729 = vrot.lane.b32.xlu0 %v3563, 32
      %v3730 = vpop.permute.xlu0 %3729
      %3731 = vrot.lane.b32.xlu0 %v3564, 32
      %v3732 = vpop.permute.xlu0 %3731
      %3733 = vrot.lane.b32.xlu0 %v3565, 32
      %v3734 = vpop.permute.xlu0 %3733
      %3735 = vrot.lane.b32.xlu0 %v3566, 32
      %v3736 = vpop.permute.xlu0 %3735
      %3737 = vrot.lane.b32.xlu0 %v3567, 32
      %v3738 = vpop.permute.xlu0 %3737
      %3739 = vrot.lane.b32.xlu0 %v3568, 32
      %v3740 = vpop.permute.xlu0 %3739
      %3741 = vrot.lane.b32.xlu0 %v3569, 32
      %v3742 = vpop.permute.xlu0 %3741
      %3743 = vrot.lane.b32.xlu0 %v3570, 32
      %v3744 = vpop.permute.xlu0 %3743
      %3745 = vrot.lane.b32.xlu0 %v3571, 32
      %v3746 = vpop.permute.xlu0 %3745
      %3747 = vrot.lane.b32.xlu0 %v3572, 32
      %v3748 = vpop.permute.xlu0 %3747
      %3749 = vrot.lane.b32.xlu0 %v3573, 32
      %v3750 = vpop.permute.xlu0 %3749
      %3751 = vrot.lane.b32.xlu0 %v3574, 32
      %v3752 = vpop.permute.xlu0 %3751
      %3753 = vrot.lane.b32.xlu0 %v3575, 32
      %v3754 = vpop.permute.xlu0 %3753
      %3755 = vrot.lane.b32.xlu0 %v3576, 32
      %v3756 = vpop.permute.xlu0 %3755
      %3757 = vrot.lane.b32.xlu0 %v3577, 32
      %v3758 = vpop.permute.xlu0 %3757
      %3759 = vrot.lane.b32.xlu0 %v3578, 32
      %v3760 = vpop.permute.xlu0 %3759
      %3761 = vrot.lane.b32.xlu0 %v3579, 32
      %v3762 = vpop.permute.xlu0 %3761
      %3763 = vrot.lane.b32.xlu0 %v3580, 32
      %v3764 = vpop.permute.xlu0 %3763
      %3765 = vrot.lane.b32.xlu0 %v3581, 32
      %v3766 = vpop.permute.xlu0 %3765
      %3767 = vrot.lane.b32.xlu0 %v3582, 32
      %v3768 = vpop.permute.xlu0 %3767
      %3769 = vrot.lane.b32.xlu0 %v3583, 32
      %v3770 = vpop.permute.xlu0 %3769
      %3771 = vrot.lane.b32.xlu0 %v3584, 32
      %v3772 = vpop.permute.xlu0 %3771
      %3773 = vrot.lane.b32.xlu0 %v3585, 32
      %v3774 = vpop.permute.xlu0 %3773
      %3775 = vrot.lane.b32.xlu0 %v3586, 32
      %v3776 = vpop.permute.xlu0 %3775
      %3777 = vrot.lane.b32.xlu0 %v3587, 32
      %v3778 = vpop.permute.xlu0 %3777
      %3779 = vrot.lane.b32.xlu0 %v3588, 32
      %v3780 = vpop.permute.xlu0 %3779
      %vm3845 = vcmask 294144
      %3846 = vst.msk [vmem:[#allocation9] sm:$0xff] %vm3845, %v3654
      %3847 = vst.msk [vmem:[#allocation9 + $0x18] sm:$0xff] %vm3845, %v3656
      %3848 = vst.msk [vmem:[#allocation9 + $0x30] sm:$0xff] %vm3845, %v3658
      %3849 = vst.msk [vmem:[#allocation9 + $0x48] sm:$0xff] %vm3845, %v3660
      %3850 = vst.msk [vmem:[#allocation9 + $0x60] sm:$0xff] %vm3845, %v3662
      %3851 = vst.msk [vmem:[#allocation9 + $0x78] sm:$0xff] %vm3845, %v3664
      %3852 = vst.msk [vmem:[#allocation9 + $0x90] sm:$0xff] %vm3845, %v3666
      %3853 = vst.msk [vmem:[#allocation9 + $0xa8] sm:$0xff] %vm3845, %v3668
      %3854 = vst.msk [vmem:[#allocation9 + $0xc0] sm:$0xff] %vm3845, %v3670
      %3855 = vst.msk [vmem:[#allocation9 + $0xd8] sm:$0xff] %vm3845, %v3672
      %3856 = vst.msk [vmem:[#allocation9 + $0xf0] sm:$0xff] %vm3845, %v3674
      %3857 = vst.msk [vmem:[#allocation9 + $0x108] sm:$0xff] %vm3845, %v3676
      %3858 = vst.msk [vmem:[#allocation9 + $0x120] sm:$0xff] %vm3845, %v3678
      %3859 = vst.msk [vmem:[#allocation9 + $0x138] sm:$0xff] %vm3845, %v3680
      %3860 = vst.msk [vmem:[#allocation9 + $0x150] sm:$0xff] %vm3845, %v3682
      %3861 = vst.msk [vmem:[#allocation9 + $0x168] sm:$0xff] %vm3845, %v3684
      %3862 = vst.msk [vmem:[#allocation9 + $0x180] sm:$0xff] %vm3845, %v3686
      %3863 = vst.msk [vmem:[#allocation9 + $0x198] sm:$0xff] %vm3845, %v3688
      %3864 = vst.msk [vmem:[#allocation9 + $0x1b0] sm:$0xff] %vm3845, %v3690
      %3865 = vst.msk [vmem:[#allocation9 + $0x1c8] sm:$0xff] %vm3845, %v3692
      %3866 = vst.msk [vmem:[#allocation9 + $0x1e0] sm:$0xff] %vm3845, %v3694
      %3867 = vst.msk [vmem:[#allocation9 + $0x1f8] sm:$0xff] %vm3845, %v3696
      %3868 = vst.msk [vmem:[#allocation9 + $0x210] sm:$0xff] %vm3845, %v3698
      %3869 = vst.msk [vmem:[#allocation9 + $0x228] sm:$0xff] %vm3845, %v3700
      %3870 = vst.msk [vmem:[#allocation9 + $0x240] sm:$0xff] %vm3845, %v3702
      %3871 = vst.msk [vmem:[#allocation9 + $0x258] sm:$0xff] %vm3845, %v3704
      %3872 = vst.msk [vmem:[#allocation9 + $0x270] sm:$0xff] %vm3845, %v3706
      %3873 = vst.msk [vmem:[#allocation9 + $0x288] sm:$0xff] %vm3845, %v3708
      %3874 = vst.msk [vmem:[#allocation9 + $0x2a0] sm:$0xff] %vm3845, %v3710
      %3875 = vst.msk [vmem:[#allocation9 + $0x2b8] sm:$0xff] %vm3845, %v3712
      %3876 = vst.msk [vmem:[#allocation9 + $0x2d0] sm:$0xff] %vm3845, %v3714
      %3877 = vst.msk [vmem:[#allocation9 + $0x2e8] sm:$0xff] %vm3845, %v3716
      %3878 = vst.msk [vmem:[#allocation9 + $0x300] sm:$0xff] %vm3845, %v3718
      %3879 = vst.msk [vmem:[#allocation9 + $0x318] sm:$0xff] %vm3845, %v3720
      %3880 = vst.msk [vmem:[#allocation9 + $0x330] sm:$0xff] %vm3845, %v3722
      %3881 = vst.msk [vmem:[#allocation9 + $0x348] sm:$0xff] %vm3845, %v3724
      %3882 = vst.msk [vmem:[#allocation9 + $0x360] sm:$0xff] %vm3845, %v3726
      %3883 = vst.msk [vmem:[#allocation9 + $0x378] sm:$0xff] %vm3845, %v3728
      %3884 = vst.msk [vmem:[#allocation9 + $0x390] sm:$0xff] %vm3845, %v3730
      %3885 = vst.msk [vmem:[#allocation9 + $0x3a8] sm:$0xff] %vm3845, %v3732
      %3886 = vst.msk [vmem:[#allocation9 + $0x3c0] sm:$0xff] %vm3845, %v3734
      %3887 = vst.msk [vmem:[#allocation9 + $0x3d8] sm:$0xff] %vm3845, %v3736
      %3888 = vst.msk [vmem:[#allocation9 + $0x3f0] sm:$0xff] %vm3845, %v3738
      %3889 = vst.msk [vmem:[#allocation9 + $0x408] sm:$0xff] %vm3845, %v3740
      %3890 = vst.msk [vmem:[#allocation9 + $0x420] sm:$0xff] %vm3845, %v3742
      %3891 = vst.msk [vmem:[#allocation9 + $0x438] sm:$0xff] %vm3845, %v3744
      %3892 = vst.msk [vmem:[#allocation9 + $0x450] sm:$0xff] %vm3845, %v3746
      %3893 = vst.msk [vmem:[#allocation9 + $0x468] sm:$0xff] %vm3845, %v3748
      %3894 = vst.msk [vmem:[#allocation9 + $0x480] sm:$0xff] %vm3845, %v3750
      %3895 = vst.msk [vmem:[#allocation9 + $0x498] sm:$0xff] %vm3845, %v3752
      %3896 = vst.msk [vmem:[#allocation9 + $0x4b0] sm:$0xff] %vm3845, %v3754
      %3897 = vst.msk [vmem:[#allocation9 + $0x4c8] sm:$0xff] %vm3845, %v3756
      %3898 = vst.msk [vmem:[#allocation9 + $0x4e0] sm:$0xff] %vm3845, %v3758
      %3899 = vst.msk [vmem:[#allocation9 + $0x4f8] sm:$0xff] %vm3845, %v3760
      %3900 = vst.msk [vmem:[#allocation9 + $0x510] sm:$0xff] %vm3845, %v3762
      %3901 = vst.msk [vmem:[#allocation9 + $0x528] sm:$0xff] %vm3845, %v3764
      %3902 = vst.msk [vmem:[#allocation9 + $0x540] sm:$0xff] %vm3845, %v3766
      %3903 = vst.msk [vmem:[#allocation9 + $0x558] sm:$0xff] %vm3845, %v3768
      %3904 = vst.msk [vmem:[#allocation9 + $0x570] sm:$0xff] %vm3845, %v3770
      %3905 = vst.msk [vmem:[#allocation9 + $0x588] sm:$0xff] %vm3845, %v3772
      %3906 = vst.msk [vmem:[#allocation9 + $0x5a0] sm:$0xff] %vm3845, %v3774
      %3907 = vst.msk [vmem:[#allocation9 + $0x5b8] sm:$0xff] %vm3845, %v3776
      %3908 = vst.msk [vmem:[#allocation9 + $0x5d0] sm:$0xff] %vm3845, %v3778
      %3909 = vst.msk [vmem:[#allocation9 + $0x5e8] sm:$0xff] %vm3845, %v3780
      %v3910 = vld [vmem:[#allocation9] sm:$0xff]
      %v3911 = vld [vmem:[#allocation9 + $0x18] sm:$0xff]
      %v3912 = vld [vmem:[#allocation9 + $0x30] sm:$0xff]
      %v3913 = vld [vmem:[#allocation9 + $0x48] sm:$0xff]
      %v3914 = vld [vmem:[#allocation9 + $0x60] sm:$0xff]
      %v3915 = vld [vmem:[#allocation9 + $0x78] sm:$0xff]
      %v3916 = vld [vmem:[#allocation9 + $0x90] sm:$0xff]
      %v3917 = vld [vmem:[#allocation9 + $0xa8] sm:$0xff]
      %v3918 = vld [vmem:[#allocation9 + $0xc0] sm:$0xff]
      %v3919 = vld [vmem:[#allocation9 + $0xd8] sm:$0xff]
      %v3920 = vld [vmem:[#allocation9 + $0xf0] sm:$0xff]
      %v3921 = vld [vmem:[#allocation9 + $0x108] sm:$0xff]
      %v3922 = vld [vmem:[#allocation9 + $0x120] sm:$0xff]
      %v3923 = vld [vmem:[#allocation9 + $0x138] sm:$0xff]
      %v3924 = vld [vmem:[#allocation9 + $0x150] sm:$0xff]
      %v3925 = vld [vmem:[#allocation9 + $0x168] sm:$0xff]
      %v3926 = vld [vmem:[#allocation9 + $0x180] sm:$0xff]
      %v3927 = vld [vmem:[#allocation9 + $0x198] sm:$0xff]
      %v3928 = vld [vmem:[#allocation9 + $0x1b0] sm:$0xff]
      %v3929 = vld [vmem:[#allocation9 + $0x1c8] sm:$0xff]
      %v3930 = vld [vmem:[#allocation9 + $0x1e0] sm:$0xff]
      %v3931 = vld [vmem:[#allocation9 + $0x1f8] sm:$0xff]
      %v3932 = vld [vmem:[#allocation9 + $0x210] sm:$0xff]
      %v3933 = vld [vmem:[#allocation9 + $0x228] sm:$0xff]
      %v3934 = vld [vmem:[#allocation9 + $0x240] sm:$0xff]
      %v3935 = vld [vmem:[#allocation9 + $0x258] sm:$0xff]
      %v3936 = vld [vmem:[#allocation9 + $0x270] sm:$0xff]
      %v3937 = vld [vmem:[#allocation9 + $0x288] sm:$0xff]
      %v3938 = vld [vmem:[#allocation9 + $0x2a0] sm:$0xff]
      %v3939 = vld [vmem:[#allocation9 + $0x2b8] sm:$0xff]
      %v3940 = vld [vmem:[#allocation9 + $0x2d0] sm:$0xff]
      %v3941 = vld [vmem:[#allocation9 + $0x2e8] sm:$0xff]
      %v3942 = vld [vmem:[#allocation9 + $0x300] sm:$0xff]
      %v3943 = vld [vmem:[#allocation9 + $0x318] sm:$0xff]
      %v3944 = vld [vmem:[#allocation9 + $0x330] sm:$0xff]
      %v3945 = vld [vmem:[#allocation9 + $0x348] sm:$0xff]
      %v3946 = vld [vmem:[#allocation9 + $0x360] sm:$0xff]
      %v3947 = vld [vmem:[#allocation9 + $0x378] sm:$0xff]
      %v3948 = vld [vmem:[#allocation9 + $0x390] sm:$0xff]
      %v3949 = vld [vmem:[#allocation9 + $0x3a8] sm:$0xff]
      %v3950 = vld [vmem:[#allocation9 + $0x3c0] sm:$0xff]
      %v3951 = vld [vmem:[#allocation9 + $0x3d8] sm:$0xff]
      %v3952 = vld [vmem:[#allocation9 + $0x3f0] sm:$0xff]
      %v3953 = vld [vmem:[#allocation9 + $0x408] sm:$0xff]
      %v3954 = vld [vmem:[#allocation9 + $0x420] sm:$0xff]
      %v3955 = vld [vmem:[#allocation9 + $0x438] sm:$0xff]
      %v3956 = vld [vmem:[#allocation9 + $0x450] sm:$0xff]
      %v3957 = vld [vmem:[#allocation9 + $0x468] sm:$0xff]
      %v3958 = vld [vmem:[#allocation9 + $0x480] sm:$0xff]
      %v3959 = vld [vmem:[#allocation9 + $0x498] sm:$0xff]
      %v3960 = vld [vmem:[#allocation9 + $0x4b0] sm:$0xff]
      %v3961 = vld [vmem:[#allocation9 + $0x4c8] sm:$0xff]
      %v3962 = vld [vmem:[#allocation9 + $0x4e0] sm:$0xff]
      %v3963 = vld [vmem:[#allocation9 + $0x4f8] sm:$0xff]
      %v3964 = vld [vmem:[#allocation9 + $0x510] sm:$0xff]
      %v3965 = vld [vmem:[#allocation9 + $0x528] sm:$0xff]
      %v3966 = vld [vmem:[#allocation9 + $0x540] sm:$0xff]
      %v3967 = vld [vmem:[#allocation9 + $0x558] sm:$0xff]
      %v3968 = vld [vmem:[#allocation9 + $0x570] sm:$0xff]
      %v3969 = vld [vmem:[#allocation9 + $0x588] sm:$0xff]
      %v3970 = vld [vmem:[#allocation9 + $0x5a0] sm:$0xff]
      %v3971 = vld [vmem:[#allocation9 + $0x5b8] sm:$0xff]
      %v3972 = vld [vmem:[#allocation9 + $0x5d0] sm:$0xff]
      %v3973 = vld [vmem:[#allocation9 + $0x5e8] sm:$0xff]
      %v3974 = vpack.c.bf16 %v3911, %v3910
      %v3975 = vpack.c.bf16 %v3913, %v3912
      %v3976 = vpack.c.bf16 %v3915, %v3914
      %v3977 = vpack.c.bf16 %v3917, %v3916
      %v3978 = vpack.c.bf16 %v3919, %v3918
      %v3979 = vpack.c.bf16 %v3921, %v3920
      %v3980 = vpack.c.bf16 %v3923, %v3922
      %v3981 = vpack.c.bf16 %v3925, %v3924
      %v3982 = vpack.c.bf16 %v3927, %v3926
      %v3983 = vpack.c.bf16 %v3929, %v3928
      %v3984 = vpack.c.bf16 %v3931, %v3930
      %v3985 = vpack.c.bf16 %v3933, %v3932
      %v3986 = vpack.c.bf16 %v3935, %v3934
      %v3987 = vpack.c.bf16 %v3937, %v3936
      %v3988 = vpack.c.bf16 %v3939, %v3938
      %v3989 = vpack.c.bf16 %v3941, %v3940
      %v3990 = vpack.c.bf16 %v3943, %v3942
      %v3991 = vpack.c.bf16 %v3945, %v3944
      %v3992 = vpack.c.bf16 %v3947, %v3946
      %v3993 = vpack.c.bf16 %v3949, %v3948
      %v3994 = vpack.c.bf16 %v3951, %v3950
      %v3995 = vpack.c.bf16 %v3953, %v3952
      %v3996 = vpack.c.bf16 %v3955, %v3954
      %v3997 = vpack.c.bf16 %v3957, %v3956
      %v3998 = vpack.c.bf16 %v3959, %v3958
      %v3999 = vpack.c.bf16 %v3961, %v3960
      %v4000 = vpack.c.bf16 %v3963, %v3962
      %v4001 = vpack.c.bf16 %v3965, %v3964
      %v4002 = vpack.c.bf16 %v3967, %v3966
      %v4003 = vpack.c.bf16 %v3969, %v3968
      %v4004 = vpack.c.bf16 %v3971, %v3970
      %v4005 = vpack.c.bf16 %v3973, %v3972
      %v4006 = vld [vmem:[%s1] sm:$0xf]
      %v4007 = vld [vmem:[%s1 + $0x4] sm:$0xf]
      %v4008 = vld [vmem:[%s1 + $0x8] sm:$0xf]
      %v4009 = vld [vmem:[%s1 + $0xc] sm:$0xf]
      %v4010 = vld [vmem:[%s1 + $0x10] sm:$0x3]
      %v4011 = vld [vmem:[%s2] sm:$0x1]
      %v4013 = vlaneseq
      %v4014 = vshrl.u32 %v4013, 7
      %v4015 = vsub.s32 0, %v4014
      %v4016 = vrot.slane %v4011, %v4015
      %v4023 = vunpack.c.l.b16 %v4006
      %v4024 = vunpack.c.l.b16 %v4007
      %v4025 = vunpack.c.l.b16 %v4008
      %v4026 = vunpack.c.l.b16 %v4009
      %v4027 = vunpack.c.l.b16 %v4010
      %v4028 = vpack.c.b16 %v4024, %v4023
      %v4029 = vpack.c.b16 %v4026, %v4025
      %v4030 = vpack.c.b16 %v4027, %v4027
      %vm4033 = vcmask 293888
      %v4035 = vsel %vm4033, %v3974, 0
      %v4038 = vsel %vm4033, %v3975, 0
      %v4041 = vsel %vm4033, %v3976, 0
      %v4044 = vsel %vm4033, %v3977, 0
      %v4047 = vsel %vm4033, %v3978, 0
      %v4050 = vsel %vm4033, %v3979, 0
      %v4053 = vsel %vm4033, %v3980, 0
      %v4056 = vsel %vm4033, %v3981, 0
      %v4059 = vsel %vm4033, %v3982, 0
      %v4062 = vsel %vm4033, %v3983, 0
      %v4065 = vsel %vm4033, %v3984, 0
      %v4068 = vsel %vm4033, %v3985, 0
      %v4071 = vsel %vm4033, %v3986, 0
      %v4074 = vsel %vm4033, %v3987, 0
      %v4077 = vsel %vm4033, %v3988, 0
      %v4080 = vsel %vm4033, %v3989, 0
      %v4083 = vsel %vm4033, %v3990, 0
      %v4086 = vsel %vm4033, %v3991, 0
      %v4089 = vsel %vm4033, %v3992, 0
      %v4092 = vsel %vm4033, %v3993, 0
      %v4095 = vsel %vm4033, %v3994, 0
      %v4098 = vsel %vm4033, %v3995, 0
      %v4101 = vsel %vm4033, %v3996, 0
      %v4104 = vsel %vm4033, %v3997, 0
      %v4107 = vsel %vm4033, %v3998, 0
      %v4110 = vsel %vm4033, %v3999, 0
      %v4113 = vsel %vm4033, %v4000, 0
      %v4116 = vsel %vm4033, %v4001, 0
      %v4119 = vsel %vm4033, %v4002, 0
      %v4122 = vsel %vm4033, %v4003, 0
      %v4125 = vsel %vm4033, %v4004, 0
      %v4128 = vsel %vm4033, %v4005, 0
      %vm4130 = vcmask 1041408
      %v4132 = vsel %vm4130, %v4030, 0
      %4134 = vmatprep.subr.bf16.mxu0 0
      %4135 = vmatpush1.bf16.msra.mxu0 %v4028
      %4136 = vmatprep.subr.bf16.mxu0 0
      %4137 = vmatpush1.bf16.msra.mxu0 %v4029
      %4138 = vmatprep.subr.bf16.mxu0 0
      %4139 = vmatpush1.bf16.msra.mxu0 %v4132
      %4140 = vmatprep.subr.bf16.mxu0 0
      %4141 = vmatpush1.bf16.msra.mxu0 0
      %4142 = vmatprep.subr.bf16.mxu0 0
      %4143 = vmatpush1.bf16.msra.mxu0 0
      %4144 = vmatprep.subr.bf16.mxu0 0
      %4145 = vmatpush1.bf16.msra.mxu0 0
      %4146 = vmatprep.subr.bf16.mxu0 0
      %4147 = vmatpush1.bf16.msra.mxu0 0
      %4148 = vmatprep.subr.bf16.mxu0 0
      %4149 = vmatpush1.bf16.msra.mxu0 0
      %4150 = vmatprep.subr.bf16.mxu0 0
      %4151 = vmatpush1.bf16.msra.mxu0 0
      %4152 = vmatprep.subr.bf16.mxu0 0
      %4153 = vmatpush1.bf16.msra.mxu0 0
      %4154 = vmatprep.subr.bf16.mxu0 0
      %4155 = vmatpush1.bf16.msra.mxu0 0
      %4156 = vmatprep.subr.bf16.mxu0 0
      %4157 = vmatpush1.bf16.msra.mxu0 0
      %4158 = vmatprep.subr.bf16.mxu0 0
      %4159 = vmatpush1.bf16.msra.mxu0 0
      %4160 = vmatprep.subr.bf16.mxu0 0
      %4161 = vmatpush1.bf16.msra.mxu0 0
      %4162 = vmatprep.subr.bf16.mxu0 0
      %4163 = vmatpush1.bf16.msra.mxu0 0
      %4164 = vmatprep.subr.bf16.mxu0 0
      %4165 = vmatpush1.bf16.msra.mxu0 0
      %4166 = vmatprep.mubr.bf16.mxu0 0
      %4167 = vmatmul.mubr.bf16.gmra.mrb[0].mxu0 %v4035
      %v4168 = vpop.f32.mrb[0].mxu0
      %v4169 = vadd.f32 %v4016, %v4168
      %v4170 = vpop.f32.mrb[0].mxu0
      %v4171 = vpop.f32.mrb[0].mxu0
      %v4172 = vadd.f32 %v4016, %v4171
      %v4173 = vpop.f32.mrb[0].mxu0
      %4174 = vmatprep.mubr.bf16.mxu0 0
      %4175 = vmatmul.mubr.bf16.gmra.mrb[0].mxu0 %v4038
      %v4176 = vpop.f32.mrb[0].mxu0
      %v4177 = vadd.f32 %v4016, %v4176
      %v4178 = vpop.f32.mrb[0].mxu0
      %v4179 = vpop.f32.mrb[0].mxu0
      %v4180 = vadd.f32 %v4016, %v4179
      %v4181 = vpop.f32.mrb[0].mxu0
      %4182 = vmatprep.mubr.bf16.mxu0 0
      %4183 = vmatmul.mubr.bf16.gmra.mrb[0].mxu0 %v4041
      %v4184 = vpop.f32.mrb[0].mxu0
      %v4185 = vadd.f32 %v4016, %v4184
      %v4186 = vpop.f32.mrb[0].mxu0
      %v4187 = vpop.f32.mrb[0].mxu0
      %v4188 = vadd.f32 %v4016, %v4187
      %v4189 = vpop.f32.mrb[0].mxu0
      %4190 = vmatprep.mubr.bf16.mxu0 0
      %4191 = vmatmul.mubr.bf16.gmra.mrb[0].mxu0 %v4044
      %v4192 = vpop.f32.mrb[0].mxu0
      %v4193 = vadd.f32 %v4016, %v4192
      %v4194 = vpop.f32.mrb[0].mxu0
      %v4195 = vpop.f32.mrb[0].mxu0
      %v4196 = vadd.f32 %v4016, %v4195
      %v4197 = vpop.f32.mrb[0].mxu0
      %4198 = vmatprep.mubr.bf16.mxu0 0
      %4199 = vmatmul.mubr.bf16.gmra.mrb[0].mxu0 %v4047
      %v4200 = vpop.f32.mrb[0].mxu0
      %v4201 = vadd.f32 %v4016, %v4200
      %v4202 = vpop.f32.mrb[0].mxu0
      %v4203 = vpop.f32.mrb[0].mxu0
      %v4204 = vadd.f32 %v4016, %v4203
      %v4205 = vpop.f32.mrb[0].mxu0
      %4206 = vmatprep.mubr.bf16.mxu0 0
      %4207 = vmatmul.mubr.bf16.gmra.mrb[0].mxu0 %v4050
      %v4208 = vpop.f32.mrb[0].mxu0
      %v4209 = vadd.f32 %v4016, %v4208
      %v4210 = vpop.f32.mrb[0].mxu0
      %v4211 = vpop.f32.mrb[0].mxu0
      %v4212 = vadd.f32 %v4016, %v4211
      %v4213 = vpop.f32.mrb[0].mxu0
      %4214 = vmatprep.mubr.bf16.mxu0 0
      %4215 = vmatmul.mubr.bf16.gmra.mrb[0].mxu0 %v4053
      %v4216 = vpop.f32.mrb[0].mxu0
      %v4217 = vadd.f32 %v4016, %v4216
      %v4218 = vpop.f32.mrb[0].mxu0
      %v4219 = vpop.f32.mrb[0].mxu0
      %v4220 = vadd.f32 %v4016, %v4219
      %v4221 = vpop.f32.mrb[0].mxu0
      %4222 = vmatprep.mubr.bf16.mxu0 0
      %4223 = vmatmul.mubr.bf16.gmra.mrb[0].mxu0 %v4056
      %v4224 = vpop.f32.mrb[0].mxu0
      %v4225 = vadd.f32 %v4016, %v4224
      %v4226 = vpop.f32.mrb[0].mxu0
      %v4227 = vpop.f32.mrb[0].mxu0
      %v4228 = vadd.f32 %v4016, %v4227
      %v4229 = vpop.f32.mrb[0].mxu0
      %4230 = vmatprep.mubr.bf16.mxu0 0
      %4231 = vmatmul.mubr.bf16.gmra.mrb[0].mxu0 %v4059
      %v4232 = vpop.f32.mrb[0].mxu0
      %v4233 = vadd.f32 %v4016, %v4232
      %v4234 = vpop.f32.mrb[0].mxu0
      %v4235 = vpop.f32.mrb[0].mxu0
      %v4236 = vadd.f32 %v4016, %v4235
      %v4237 = vpop.f32.mrb[0].mxu0
      %4238 = vmatprep.mubr.bf16.mxu0 0
      %4239 = vmatmul.mubr.bf16.gmra.mrb[0].mxu0 %v4062
      %v4240 = vpop.f32.mrb[0].mxu0
      %v4241 = vadd.f32 %v4016, %v4240
      %v4242 = vpop.f32.mrb[0].mxu0
      %v4243 = vpop.f32.mrb[0].mxu0
      %v4244 = vadd.f32 %v4016, %v4243
      %v4245 = vpop.f32.mrb[0].mxu0
      %4246 = vmatprep.mubr.bf16.mxu0 0
      %4247 = vmatmul.mubr.bf16.gmra.mrb[0].mxu0 %v4065
      %v4248 = vpop.f32.mrb[0].mxu0
      %v4249 = vadd.f32 %v4016, %v4248
      %v4250 = vpop.f32.mrb[0].mxu0
      %v4251 = vpop.f32.mrb[0].mxu0
      %v4252 = vadd.f32 %v4016, %v4251
      %v4253 = vpop.f32.mrb[0].mxu0
      %4254 = vmatprep.mubr.bf16.mxu0 0
      %4255 = vmatmul.mubr.bf16.gmra.mrb[0].mxu0 %v4068
      %v4256 = vpop.f32.mrb[0].mxu0
      %v4257 = vadd.f32 %v4016, %v4256
      %v4258 = vpop.f32.mrb[0].mxu0
      %v4259 = vpop.f32.mrb[0].mxu0
      %v4260 = vadd.f32 %v4016, %v4259
      %v4261 = vpop.f32.mrb[0].mxu0
      %4262 = vmatprep.mubr.bf16.mxu0 0
      %4263 = vmatmul.mubr.bf16.gmra.mrb[0].mxu0 %v4071
      %v4264 = vpop.f32.mrb[0].mxu0
      %v4265 = vadd.f32 %v4016, %v4264
      %v4266 = vpop.f32.mrb[0].mxu0
      %v4267 = vpop.f32.mrb[0].mxu0
      %v4268 = vadd.f32 %v4016, %v4267
      %v4269 = vpop.f32.mrb[0].mxu0
      %4270 = vmatprep.mubr.bf16.mxu0 0
      %4271 = vmatmul.mubr.bf16.gmra.mrb[0].mxu0 %v4074
      %v4272 = vpop.f32.mrb[0].mxu0
      %v4273 = vadd.f32 %v4016, %v4272
      %v4274 = vpop.f32.mrb[0].mxu0
      %v4275 = vpop.f32.mrb[0].mxu0
      %v4276 = vadd.f32 %v4016, %v4275
      %v4277 = vpop.f32.mrb[0].mxu0
      %4278 = vmatprep.mubr.bf16.mxu0 0
      %4279 = vmatmul.mubr.bf16.gmra.mrb[0].mxu0 %v4077
      %v4280 = vpop.f32.mrb[0].mxu0
      %v4281 = vadd.f32 %v4016, %v4280
      %v4282 = vpop.f32.mrb[0].mxu0
      %v4283 = vpop.f32.mrb[0].mxu0
      %v4284 = vadd.f32 %v4016, %v4283
      %v4285 = vpop.f32.mrb[0].mxu0
      %4286 = vmatprep.mubr.bf16.mxu0 0
      %4287 = vmatmul.mubr.bf16.gmra.mrb[0].mxu0 %v4080
      %v4288 = vpop.f32.mrb[0].mxu0
      %v4289 = vadd.f32 %v4016, %v4288
      %v4290 = vpop.f32.mrb[0].mxu0
      %v4291 = vpop.f32.mrb[0].mxu0
      %v4292 = vadd.f32 %v4016, %v4291
      %v4293 = vpop.f32.mrb[0].mxu0
      %4294 = vmatprep.mubr.bf16.mxu0 0
      %4295 = vmatmul.mubr.bf16.gmra.mrb[0].mxu0 %v4083
      %v4296 = vpop.f32.mrb[0].mxu0
      %v4297 = vadd.f32 %v4016, %v4296
      %v4298 = vpop.f32.mrb[0].mxu0
      %v4299 = vpop.f32.mrb[0].mxu0
      %v4300 = vadd.f32 %v4016, %v4299
      %v4301 = vpop.f32.mrb[0].mxu0
      %4302 = vmatprep.mubr.bf16.mxu0 0
      %4303 = vmatmul.mubr.bf16.gmra.mrb[0].mxu0 %v4086
      %v4304 = vpop.f32.mrb[0].mxu0
      %v4305 = vadd.f32 %v4016, %v4304
      %v4306 = vpop.f32.mrb[0].mxu0
      %v4307 = vpop.f32.mrb[0].mxu0
      %v4308 = vadd.f32 %v4016, %v4307
      %v4309 = vpop.f32.mrb[0].mxu0
      %4310 = vmatprep.mubr.bf16.mxu0 0
      %4311 = vmatmul.mubr.bf16.gmra.mrb[0].mxu0 %v4089
      %v4312 = vpop.f32.mrb[0].mxu0
      %v4313 = vadd.f32 %v4016, %v4312
      %v4314 = vpop.f32.mrb[0].mxu0
      %v4315 = vpop.f32.mrb[0].mxu0
      %v4316 = vadd.f32 %v4016, %v4315
      %v4317 = vpop.f32.mrb[0].mxu0
      %4318 = vmatprep.mubr.bf16.mxu0 0
      %4319 = vmatmul.mubr.bf16.gmra.mrb[0].mxu0 %v4092
      %v4320 = vpop.f32.mrb[0].mxu0
      %v4321 = vadd.f32 %v4016, %v4320
      %v4322 = vpop.f32.mrb[0].mxu0
      %v4323 = vpop.f32.mrb[0].mxu0
      %v4324 = vadd.f32 %v4016, %v4323
      %v4325 = vpop.f32.mrb[0].mxu0
      %4326 = vmatprep.mubr.bf16.mxu0 0
      %4327 = vmatmul.mubr.bf16.gmra.mrb[0].mxu0 %v4095
      %v4328 = vpop.f32.mrb[0].mxu0
      %v4329 = vadd.f32 %v4016, %v4328
      %v4330 = vpop.f32.mrb[0].mxu0
      %v4331 = vpop.f32.mrb[0].mxu0
      %v4332 = vadd.f32 %v4016, %v4331
      %v4333 = vpop.f32.mrb[0].mxu0
      %4334 = vmatprep.mubr.bf16.mxu0 0
      %4335 = vmatmul.mubr.bf16.gmra.mrb[0].mxu0 %v4098
      %v4336 = vpop.f32.mrb[0].mxu0
      %v4337 = vadd.f32 %v4016, %v4336
      %v4338 = vpop.f32.mrb[0].mxu0
      %v4339 = vpop.f32.mrb[0].mxu0
      %v4340 = vadd.f32 %v4016, %v4339
      %v4341 = vpop.f32.mrb[0].mxu0
      %4342 = vmatprep.mubr.bf16.mxu0 0
      %4343 = vmatmul.mubr.bf16.gmra.mrb[0].mxu0 %v4101
      %v4344 = vpop.f32.mrb[0].mxu0
      %v4345 = vadd.f32 %v4016, %v4344
      %v4346 = vpop.f32.mrb[0].mxu0
      %v4347 = vpop.f32.mrb[0].mxu0
      %v4348 = vadd.f32 %v4016, %v4347
      %v4349 = vpop.f32.mrb[0].mxu0
      %4350 = vmatprep.mubr.bf16.mxu0 0
      %4351 = vmatmul.mubr.bf16.gmra.mrb[0].mxu0 %v4104
      %v4352 = vpop.f32.mrb[0].mxu0
      %v4353 = vadd.f32 %v4016, %v4352
      %v4354 = vpop.f32.mrb[0].mxu0
      %v4355 = vpop.f32.mrb[0].mxu0
      %v4356 = vadd.f32 %v4016, %v4355
      %v4357 = vpop.f32.mrb[0].mxu0
      %4358 = vmatprep.mubr.bf16.mxu0 0
      %4359 = vmatmul.mubr.bf16.gmra.mrb[0].mxu0 %v4107
      %v4360 = vpop.f32.mrb[0].mxu0
      %v4361 = vadd.f32 %v4016, %v4360
      %v4362 = vpop.f32.mrb[0].mxu0
      %v4363 = vpop.f32.mrb[0].mxu0
      %v4364 = vadd.f32 %v4016, %v4363
      %v4365 = vpop.f32.mrb[0].mxu0
      %4366 = vmatprep.mubr.bf16.mxu0 0
      %4367 = vmatmul.mubr.bf16.gmra.mrb[0].mxu0 %v4110
      %v4368 = vpop.f32.mrb[0].mxu0
      %v4369 = vadd.f32 %v4016, %v4368
      %v4370 = vpop.f32.mrb[0].mxu0
      %v4371 = vpop.f32.mrb[0].mxu0
      %v4372 = vadd.f32 %v4016, %v4371
      %v4373 = vpop.f32.mrb[0].mxu0
      %4374 = vmatprep.mubr.bf16.mxu0 0
      %4375 = vmatmul.mubr.bf16.gmra.mrb[0].mxu0 %v4113
      %v4376 = vpop.f32.mrb[0].mxu0
      %v4377 = vadd.f32 %v4016, %v4376
      %v4378 = vpop.f32.mrb[0].mxu0
      %v4379 = vpop.f32.mrb[0].mxu0
      %v4380 = vadd.f32 %v4016, %v4379
      %v4381 = vpop.f32.mrb[0].mxu0
      %4382 = vmatprep.mubr.bf16.mxu0 0
      %4383 = vmatmul.mubr.bf16.gmra.mrb[0].mxu0 %v4116
      %v4384 = vpop.f32.mrb[0].mxu0
      %v4385 = vadd.f32 %v4016, %v4384
      %v4386 = vpop.f32.mrb[0].mxu0
      %v4387 = vpop.f32.mrb[0].mxu0
      %v4388 = vadd.f32 %v4016, %v4387
      %v4389 = vpop.f32.mrb[0].mxu0
      %4390 = vmatprep.mubr.bf16.mxu0 0
      %4391 = vmatmul.mubr.bf16.gmra.mrb[0].mxu0 %v4119
      %v4392 = vpop.f32.mrb[0].mxu0
      %v4393 = vadd.f32 %v4016, %v4392
      %v4394 = vpop.f32.mrb[0].mxu0
      %v4395 = vpop.f32.mrb[0].mxu0
      %v4396 = vadd.f32 %v4016, %v4395
      %v4397 = vpop.f32.mrb[0].mxu0
      %4398 = vmatprep.mubr.bf16.mxu0 0
      %4399 = vmatmul.mubr.bf16.gmra.mrb[0].mxu0 %v4122
      %v4400 = vpop.f32.mrb[0].mxu0
      %v4401 = vadd.f32 %v4016, %v4400
      %v4402 = vpop.f32.mrb[0].mxu0
      %v4403 = vpop.f32.mrb[0].mxu0
      %v4404 = vadd.f32 %v4016, %v4403
      %v4405 = vpop.f32.mrb[0].mxu0
      %4406 = vmatprep.mubr.bf16.mxu0 0
      %4407 = vmatmul.mubr.bf16.gmra.mrb[0].mxu0 %v4125
      %v4408 = vpop.f32.mrb[0].mxu0
      %v4409 = vadd.f32 %v4016, %v4408
      %v4410 = vpop.f32.mrb[0].mxu0
      %v4411 = vpop.f32.mrb[0].mxu0
      %v4412 = vadd.f32 %v4016, %v4411
      %v4413 = vpop.f32.mrb[0].mxu0
      %4414 = vmatprep.mubr.bf16.mxu0 0
      %4415 = vmatmul.mubr.bf16.gmra.mrb[0].mxu0 %v4128
      %v4416 = vpop.f32.mrb[0].mxu0
      %v4417 = vadd.f32 %v4016, %v4416
      %v4418 = vpop.f32.mrb[0].mxu0
      %v4419 = vpop.f32.mrb[0].mxu0
      %v4420 = vadd.f32 %v4016, %v4419
      %v4421 = vpop.f32.mrb[0].mxu0
      %4422 = vdwg.mxu0
      %v4423 = vmax.f32 %v4169, 0.0
      %v4424 = vmax.f32 %v4172, 0.0
      %v4425 = vmax.f32 %v4177, 0.0
      %v4426 = vmax.f32 %v4180, 0.0
      %v4427 = vmax.f32 %v4185, 0.0
      %v4428 = vmax.f32 %v4188, 0.0
      %v4429 = vmax.f32 %v4193, 0.0
      %v4430 = vmax.f32 %v4196, 0.0
      %v4431 = vmax.f32 %v4201, 0.0
      %v4432 = vmax.f32 %v4204, 0.0
      %v4433 = vmax.f32 %v4209, 0.0
      %v4434 = vmax.f32 %v4212, 0.0
      %v4435 = vmax.f32 %v4217, 0.0
      %v4436 = vmax.f32 %v4220, 0.0
      %v4437 = vmax.f32 %v4225, 0.0
      %v4438 = vmax.f32 %v4228, 0.0
      %v4439 = vmax.f32 %v4233, 0.0
      %v4440 = vmax.f32 %v4236, 0.0
      %v4441 = vmax.f32 %v4241, 0.0
      %v4442 = vmax.f32 %v4244, 0.0
      %v4443 = vmax.f32 %v4249, 0.0
      %v4444 = vmax.f32 %v4252, 0.0
      %v4445 = vmax.f32 %v4257, 0.0
      %v4446 = vmax.f32 %v4260, 0.0
      %v4447 = vmax.f32 %v4265, 0.0
      %v4448 = vmax.f32 %v4268, 0.0
      %v4449 = vmax.f32 %v4273, 0.0
      %v4450 = vmax.f32 %v4276, 0.0
      %v4451 = vmax.f32 %v4281, 0.0
      %v4452 = vmax.f32 %v4284, 0.0
      %v4453 = vmax.f32 %v4289, 0.0
      %v4454 = vmax.f32 %v4292, 0.0
      %v4455 = vmax.f32 %v4297, 0.0
      %v4456 = vmax.f32 %v4300, 0.0
      %v4457 = vmax.f32 %v4305, 0.0
      %v4458 = vmax.f32 %v4308, 0.0
      %v4459 = vmax.f32 %v4313, 0.0
      %v4460 = vmax.f32 %v4316, 0.0
      %v4461 = vmax.f32 %v4321, 0.0
      %v4462 = vmax.f32 %v4324, 0.0
      %v4463 = vmax.f32 %v4329, 0.0
      %v4464 = vmax.f32 %v4332, 0.0
      %v4465 = vmax.f32 %v4337, 0.0
      %v4466 = vmax.f32 %v4340, 0.0
      %v4467 = vmax.f32 %v4345, 0.0
      %v4468 = vmax.f32 %v4348, 0.0
      %v4469 = vmax.f32 %v4353, 0.0
      %v4470 = vmax.f32 %v4356, 0.0
      %v4471 = vmax.f32 %v4361, 0.0
      %v4472 = vmax.f32 %v4364, 0.0
      %v4473 = vmax.f32 %v4369, 0.0
      %v4474 = vmax.f32 %v4372, 0.0
      %v4475 = vmax.f32 %v4377, 0.0
      %v4476 = vmax.f32 %v4380, 0.0
      %v4477 = vmax.f32 %v4385, 0.0
      %v4478 = vmax.f32 %v4388, 0.0
      %v4479 = vmax.f32 %v4393, 0.0
      %v4480 = vmax.f32 %v4396, 0.0
      %v4481 = vmax.f32 %v4401, 0.0
      %v4482 = vmax.f32 %v4404, 0.0
      %v4483 = vmax.f32 %v4409, 0.0
      %v4484 = vmax.f32 %v4412, 0.0
      %v4485 = vmax.f32 %v4417, 0.0
      %v4486 = vmax.f32 %v4420, 0.0
      %v4487 = vsel %vm558, %v4423, -inf
      %v4488 = vsel %vm558, %v4425, -inf
      %v4489 = vmax.f32 %v4487, %v4488
      %v4490 = vsel %vm558, %v4424, -inf
      %v4491 = vsel %vm558, %v4426, -inf
      %v4492 = vmax.f32 %v4490, %v4491
      %v4493 = vsel %vm558, %v4427, -inf
      %v4494 = vsel %vm558, %v4429, -inf
      %v4495 = vmax.f32 %v4493, %v4494
      %v4496 = vsel %vm558, %v4428, -inf
      %v4497 = vsel %vm558, %v4430, -inf
      %v4498 = vmax.f32 %v4496, %v4497
      %v4499 = vsel %vm558, %v4431, -inf
      %v4500 = vsel %vm558, %v4433, -inf
      %v4501 = vmax.f32 %v4499, %v4500
      %v4502 = vsel %vm558, %v4432, -inf
      %v4503 = vsel %vm558, %v4434, -inf
      %v4504 = vmax.f32 %v4502, %v4503
      %v4505 = vsel %vm558, %v4435, -inf
      %v4506 = vsel %vm558, %v4437, -inf
      %v4507 = vmax.f32 %v4505, %v4506
      %v4508 = vsel %vm558, %v4436, -inf
      %v4509 = vsel %vm558, %v4438, -inf
      %v4510 = vmax.f32 %v4508, %v4509
      %v4511 = vsel %vm558, %v4439, -inf
      %v4512 = vsel %vm558, %v4441, -inf
      %v4513 = vmax.f32 %v4511, %v4512
      %v4514 = vsel %vm558, %v4440, -inf
      %v4515 = vsel %vm558, %v4442, -inf
      %v4516 = vmax.f32 %v4514, %v4515
      %v4517 = vsel %vm558, %v4443, -inf
      %v4518 = vsel %vm558, %v4445, -inf
      %v4519 = vmax.f32 %v4517, %v4518
      %v4520 = vsel %vm558, %v4444, -inf
      %v4521 = vsel %vm558, %v4446, -inf
      %v4522 = vmax.f32 %v4520, %v4521
      %v4523 = vsel %vm558, %v4447, -inf
      %v4524 = vsel %vm558, %v4449, -inf
      %v4525 = vmax.f32 %v4523, %v4524
      %v4526 = vsel %vm558, %v4448, -inf
      %v4527 = vsel %vm558, %v4450, -inf
      %v4528 = vmax.f32 %v4526, %v4527
      %v4529 = vsel %vm558, %v4451, -inf
      %v4530 = vsel %vm558, %v4453, -inf
      %v4531 = vmax.f32 %v4529, %v4530
      %v4532 = vsel %vm558, %v4452, -inf
      %v4533 = vsel %vm558, %v4454, -inf
      %v4534 = vmax.f32 %v4532, %v4533
      %v4535 = vsel %vm558, %v4455, -inf
      %v4536 = vsel %vm558, %v4457, -inf
      %v4537 = vmax.f32 %v4535, %v4536
      %v4538 = vsel %vm558, %v4456, -inf
      %v4539 = vsel %vm558, %v4458, -inf
      %v4540 = vmax.f32 %v4538, %v4539
      %v4541 = vsel %vm558, %v4459, -inf
      %v4542 = vsel %vm558, %v4461, -inf
      %v4543 = vmax.f32 %v4541, %v4542
      %v4544 = vsel %vm558, %v4460, -inf
      %v4545 = vsel %vm558, %v4462, -inf
      %v4546 = vmax.f32 %v4544, %v4545
      %v4547 = vsel %vm558, %v4463, -inf
      %v4548 = vsel %vm558, %v4465, -inf
      %v4549 = vmax.f32 %v4547, %v4548
      %v4550 = vsel %vm558, %v4464, -inf
      %v4551 = vsel %vm558, %v4466, -inf
      %v4552 = vmax.f32 %v4550, %v4551
      %v4553 = vsel %vm558, %v4467, -inf
      %v4554 = vsel %vm558, %v4469, -inf
      %v4555 = vmax.f32 %v4553, %v4554
      %v4556 = vsel %vm558, %v4468, -inf
      %v4557 = vsel %vm558, %v4470, -inf
      %v4558 = vmax.f32 %v4556, %v4557
      %v4559 = vsel %vm558, %v4471, -inf
      %v4560 = vsel %vm558, %v4473, -inf
      %v4561 = vmax.f32 %v4559, %v4560
      %v4562 = vsel %vm558, %v4472, -inf
      %v4563 = vsel %vm558, %v4474, -inf
      %v4564 = vmax.f32 %v4562, %v4563
      %v4565 = vsel %vm558, %v4475, -inf
      %v4566 = vsel %vm558, %v4477, -inf
      %v4567 = vmax.f32 %v4565, %v4566
      %v4568 = vsel %vm558, %v4476, -inf
      %v4569 = vsel %vm558, %v4478, -inf
      %v4570 = vmax.f32 %v4568, %v4569
      %v4571 = vsel %vm558, %v4479, -inf
      %v4572 = vsel %vm558, %v4481, -inf
      %v4573 = vmax.f32 %v4571, %v4572
      %v4574 = vsel %vm558, %v4480, -inf
      %v4575 = vsel %vm558, %v4482, -inf
      %v4576 = vmax.f32 %v4574, %v4575
      %v4577 = vsel %vm558, %v4483, -inf
      %v4578 = vsel %vm558, %v4485, -inf
      %v4579 = vmax.f32 %v4577, %v4578
      %v4580 = vsel %vm558, %v4484, -inf
      %v4581 = vsel %vm558, %v4486, -inf
      %v4582 = vmax.f32 %v4580, %v4581
      %v4615 = vcombine.high %v4489, %v4489
      %v4617 = vunpack.c.l.s4 1983009808
      %v4618 = vunpack.c.0.s8 %v4617
      %v4619 = vlaneseq
      %v4620 = vshrl.u32 %v4619, 7
      %v4621 = vsub.s32 %v4618, %v4620
      %v4622 = vrot.slane %v4489, %v4621
      %v4624 = vunpack.c.l.s4 1983009808
      %v4625 = vunpack.c.0.s8 %v4624
      %v4626 = vlaneseq
      %v4627 = vshrl.u32 %v4626, 7
      %v4628 = vsub.s32 %v4625, %v4627
      %v4629 = vrot.slane %v4615, %v4628
      %v4630 = vcombine.high %v4622, %v4622
      %v4631 = vcombine.high %v4629, %v4629
      %v4632 = vcombine.high %v4492, %v4492
      %v4634 = vunpack.c.l.s4 1983009808
      %v4635 = vunpack.c.0.s8 %v4634
      %v4636 = vlaneseq
      %v4637 = vshrl.u32 %v4636, 7
      %v4638 = vsub.s32 %v4635, %v4637
      %v4639 = vrot.slane %v4492, %v4638
      %v4641 = vunpack.c.l.s4 1983009808
      %v4642 = vunpack.c.0.s8 %v4641
      %v4643 = vlaneseq
      %v4644 = vshrl.u32 %v4643, 7
      %v4645 = vsub.s32 %v4642, %v4644
      %v4646 = vrot.slane %v4632, %v4645
      %v4647 = vcombine.high %v4639, %v4639
      %v4648 = vcombine.high %v4646, %v4646
      %v4649 = vcombine.high %v4495, %v4495
      %v4651 = vunpack.c.l.s4 1983009808
      %v4652 = vunpack.c.0.s8 %v4651
      %v4653 = vlaneseq
      %v4654 = vshrl.u32 %v4653, 7
      %v4655 = vsub.s32 %v4652, %v4654
      %v4656 = vrot.slane %v4495, %v4655
      %v4658 = vunpack.c.l.s4 1983009808
      %v4659 = vunpack.c.0.s8 %v4658
      %v4660 = vlaneseq
      %v4661 = vshrl.u32 %v4660, 7
      %v4662 = vsub.s32 %v4659, %v4661
      %v4663 = vrot.slane %v4649, %v4662
      %v4664 = vcombine.high %v4656, %v4656
      %v4665 = vcombine.high %v4663, %v4663
      %v4666 = vcombine.high %v4498, %v4498
      %v4668 = vunpack.c.l.s4 1983009808
      %v4669 = vunpack.c.0.s8 %v4668
      %v4670 = vlaneseq
      %v4671 = vshrl.u32 %v4670, 7
      %v4672 = vsub.s32 %v4669, %v4671
      %v4673 = vrot.slane %v4498, %v4672
      %v4675 = vunpack.c.l.s4 1983009808
      %v4676 = vunpack.c.0.s8 %v4675
      %v4677 = vlaneseq
      %v4678 = vshrl.u32 %v4677, 7
      %v4679 = vsub.s32 %v4676, %v4678
      %v4680 = vrot.slane %v4666, %v4679
      %v4681 = vcombine.high %v4673, %v4673
      %v4682 = vcombine.high %v4680, %v4680
      %v4683 = vcombine.high %v4501, %v4501
      %v4685 = vunpack.c.l.s4 1983009808
      %v4686 = vunpack.c.0.s8 %v4685
      %v4687 = vlaneseq
      %v4688 = vshrl.u32 %v4687, 7
      %v4689 = vsub.s32 %v4686, %v4688
      %v4690 = vrot.slane %v4501, %v4689
      %v4692 = vunpack.c.l.s4 1983009808
      %v4693 = vunpack.c.0.s8 %v4692
      %v4694 = vlaneseq
      %v4695 = vshrl.u32 %v4694, 7
      %v4696 = vsub.s32 %v4693, %v4695
      %v4697 = vrot.slane %v4683, %v4696
      %v4698 = vcombine.high %v4690, %v4690
      %v4699 = vcombine.high %v4697, %v4697
      %v4700 = vcombine.high %v4504, %v4504
      %v4702 = vunpack.c.l.s4 1983009808
      %v4703 = vunpack.c.0.s8 %v4702
      %v4704 = vlaneseq
      %v4705 = vshrl.u32 %v4704, 7
      %v4706 = vsub.s32 %v4703, %v4705
      %v4707 = vrot.slane %v4504, %v4706
      %v4709 = vunpack.c.l.s4 1983009808
      %v4710 = vunpack.c.0.s8 %v4709
      %v4711 = vlaneseq
      %v4712 = vshrl.u32 %v4711, 7
      %v4713 = vsub.s32 %v4710, %v4712
      %v4714 = vrot.slane %v4700, %v4713
      %v4715 = vcombine.high %v4707, %v4707
      %v4716 = vcombine.high %v4714, %v4714
      %v4717 = vcombine.high %v4507, %v4507
      %v4719 = vunpack.c.l.s4 1983009808
      %v4720 = vunpack.c.0.s8 %v4719
      %v4721 = vlaneseq
      %v4722 = vshrl.u32 %v4721, 7
      %v4723 = vsub.s32 %v4720, %v4722
      %v4724 = vrot.slane %v4507, %v4723
      %v4726 = vunpack.c.l.s4 1983009808
      %v4727 = vunpack.c.0.s8 %v4726
      %v4728 = vlaneseq
      %v4729 = vshrl.u32 %v4728, 7
      %v4730 = vsub.s32 %v4727, %v4729
      %v4731 = vrot.slane %v4717, %v4730
      %v4732 = vcombine.high %v4724, %v4724
      %v4733 = vcombine.high %v4731, %v4731
      %v4734 = vcombine.high %v4510, %v4510
      %v4736 = vunpack.c.l.s4 1983009808
      %v4737 = vunpack.c.0.s8 %v4736
      %v4738 = vlaneseq
      %v4739 = vshrl.u32 %v4738, 7
      %v4740 = vsub.s32 %v4737, %v4739
      %v4741 = vrot.slane %v4510, %v4740
      %v4743 = vunpack.c.l.s4 1983009808
      %v4744 = vunpack.c.0.s8 %v4743
      %v4745 = vlaneseq
      %v4746 = vshrl.u32 %v4745, 7
      %v4747 = vsub.s32 %v4744, %v4746
      %v4748 = vrot.slane %v4734, %v4747
      %v4749 = vcombine.high %v4741, %v4741
      %v4750 = vcombine.high %v4748, %v4748
      %v4751 = vcombine.high %v4513, %v4513
      %v4753 = vunpack.c.l.s4 1983009808
      %v4754 = vunpack.c.0.s8 %v4753
      %v4755 = vlaneseq
      %v4756 = vshrl.u32 %v4755, 7
      %v4757 = vsub.s32 %v4754, %v4756
      %v4758 = vrot.slane %v4513, %v4757
      %v4760 = vunpack.c.l.s4 1983009808
      %v4761 = vunpack.c.0.s8 %v4760
      %v4762 = vlaneseq
      %v4763 = vshrl.u32 %v4762, 7
      %v4764 = vsub.s32 %v4761, %v4763
      %v4765 = vrot.slane %v4751, %v4764
      %v4766 = vcombine.high %v4758, %v4758
      %v4767 = vcombine.high %v4765, %v4765
      %v4768 = vcombine.high %v4516, %v4516
      %v4770 = vunpack.c.l.s4 1983009808
      %v4771 = vunpack.c.0.s8 %v4770
      %v4772 = vlaneseq
      %v4773 = vshrl.u32 %v4772, 7
      %v4774 = vsub.s32 %v4771, %v4773
      %v4775 = vrot.slane %v4516, %v4774
      %v4777 = vunpack.c.l.s4 1983009808
      %v4778 = vunpack.c.0.s8 %v4777
      %v4779 = vlaneseq
      %v4780 = vshrl.u32 %v4779, 7
      %v4781 = vsub.s32 %v4778, %v4780
      %v4782 = vrot.slane %v4768, %v4781
      %v4783 = vcombine.high %v4775, %v4775
      %v4784 = vcombine.high %v4782, %v4782
      %v4785 = vcombine.high %v4519, %v4519
      %v4787 = vunpack.c.l.s4 1983009808
      %v4788 = vunpack.c.0.s8 %v4787
      %v4789 = vlaneseq
      %v4790 = vshrl.u32 %v4789, 7
      %v4791 = vsub.s32 %v4788, %v4790
      %v4792 = vrot.slane %v4519, %v4791
      %v4794 = vunpack.c.l.s4 1983009808
      %v4795 = vunpack.c.0.s8 %v4794
      %v4796 = vlaneseq
      %v4797 = vshrl.u32 %v4796, 7
      %v4798 = vsub.s32 %v4795, %v4797
      %v4799 = vrot.slane %v4785, %v4798
      %v4800 = vcombine.high %v4792, %v4792
      %v4801 = vcombine.high %v4799, %v4799
      %v4802 = vcombine.high %v4522, %v4522
      %v4804 = vunpack.c.l.s4 1983009808
      %v4805 = vunpack.c.0.s8 %v4804
      %v4806 = vlaneseq
      %v4807 = vshrl.u32 %v4806, 7
      %v4808 = vsub.s32 %v4805, %v4807
      %v4809 = vrot.slane %v4522, %v4808
      %v4811 = vunpack.c.l.s4 1983009808
      %v4812 = vunpack.c.0.s8 %v4811
      %v4813 = vlaneseq
      %v4814 = vshrl.u32 %v4813, 7
      %v4815 = vsub.s32 %v4812, %v4814
      %v4816 = vrot.slane %v4802, %v4815
      %v4817 = vcombine.high %v4809, %v4809
      %v4818 = vcombine.high %v4816, %v4816
      %v4819 = vcombine.high %v4525, %v4525
      %v4821 = vunpack.c.l.s4 1983009808
      %v4822 = vunpack.c.0.s8 %v4821
      %v4823 = vlaneseq
      %v4824 = vshrl.u32 %v4823, 7
      %v4825 = vsub.s32 %v4822, %v4824
      %v4826 = vrot.slane %v4525, %v4825
      %v4828 = vunpack.c.l.s4 1983009808
      %v4829 = vunpack.c.0.s8 %v4828
      %v4830 = vlaneseq
      %v4831 = vshrl.u32 %v4830, 7
      %v4832 = vsub.s32 %v4829, %v4831
      %v4833 = vrot.slane %v4819, %v4832
      %v4834 = vcombine.high %v4826, %v4826
      %v4835 = vcombine.high %v4833, %v4833
      %v4836 = vcombine.high %v4528, %v4528
      %v4838 = vunpack.c.l.s4 1983009808
      %v4839 = vunpack.c.0.s8 %v4838
      %v4840 = vlaneseq
      %v4841 = vshrl.u32 %v4840, 7
      %v4842 = vsub.s32 %v4839, %v4841
      %v4843 = vrot.slane %v4528, %v4842
      %v4845 = vunpack.c.l.s4 1983009808
      %v4846 = vunpack.c.0.s8 %v4845
      %v4847 = vlaneseq
      %v4848 = vshrl.u32 %v4847, 7
      %v4849 = vsub.s32 %v4846, %v4848
      %v4850 = vrot.slane %v4836, %v4849
      %v4851 = vcombine.high %v4843, %v4843
      %v4852 = vcombine.high %v4850, %v4850
      %v4853 = vcombine.high %v4531, %v4531
      %v4855 = vunpack.c.l.s4 1983009808
      %v4856 = vunpack.c.0.s8 %v4855
      %v4857 = vlaneseq
      %v4858 = vshrl.u32 %v4857, 7
      %v4859 = vsub.s32 %v4856, %v4858
      %v4860 = vrot.slane %v4531, %v4859
      %v4862 = vunpack.c.l.s4 1983009808
      %v4863 = vunpack.c.0.s8 %v4862
      %v4864 = vlaneseq
      %v4865 = vshrl.u32 %v4864, 7
      %v4866 = vsub.s32 %v4863, %v4865
      %v4867 = vrot.slane %v4853, %v4866
      %v4868 = vcombine.high %v4860, %v4860
      %v4869 = vcombine.high %v4867, %v4867
      %v4870 = vcombine.high %v4534, %v4534
      %v4872 = vunpack.c.l.s4 1983009808
      %v4873 = vunpack.c.0.s8 %v4872
      %v4874 = vlaneseq
      %v4875 = vshrl.u32 %v4874, 7
      %v4876 = vsub.s32 %v4873, %v4875
      %v4877 = vrot.slane %v4534, %v4876
      %v4879 = vunpack.c.l.s4 1983009808
      %v4880 = vunpack.c.0.s8 %v4879
      %v4881 = vlaneseq
      %v4882 = vshrl.u32 %v4881, 7
      %v4883 = vsub.s32 %v4880, %v4882
      %v4884 = vrot.slane %v4870, %v4883
      %v4885 = vcombine.high %v4877, %v4877
      %v4886 = vcombine.high %v4884, %v4884
      %v4887 = vcombine.high %v4537, %v4537
      %v4889 = vunpack.c.l.s4 1983009808
      %v4890 = vunpack.c.0.s8 %v4889
      %v4891 = vlaneseq
      %v4892 = vshrl.u32 %v4891, 7
      %v4893 = vsub.s32 %v4890, %v4892
      %v4894 = vrot.slane %v4537, %v4893
      %v4896 = vunpack.c.l.s4 1983009808
      %v4897 = vunpack.c.0.s8 %v4896
      %v4898 = vlaneseq
      %v4899 = vshrl.u32 %v4898, 7
      %v4900 = vsub.s32 %v4897, %v4899
      %v4901 = vrot.slane %v4887, %v4900
      %v4902 = vcombine.high %v4894, %v4894
      %v4903 = vcombine.high %v4901, %v4901
      %v4904 = vcombine.high %v4540, %v4540
      %v4906 = vunpack.c.l.s4 1983009808
      %v4907 = vunpack.c.0.s8 %v4906
      %v4908 = vlaneseq
      %v4909 = vshrl.u32 %v4908, 7
      %v4910 = vsub.s32 %v4907, %v4909
      %v4911 = vrot.slane %v4540, %v4910
      %v4913 = vunpack.c.l.s4 1983009808
      %v4914 = vunpack.c.0.s8 %v4913
      %v4915 = vlaneseq
      %v4916 = vshrl.u32 %v4915, 7
      %v4917 = vsub.s32 %v4914, %v4916
      %v4918 = vrot.slane %v4904, %v4917
      %v4919 = vcombine.high %v4911, %v4911
      %v4920 = vcombine.high %v4918, %v4918
      %v4921 = vcombine.high %v4543, %v4543
      %v4923 = vunpack.c.l.s4 1983009808
      %v4924 = vunpack.c.0.s8 %v4923
      %v4925 = vlaneseq
      %v4926 = vshrl.u32 %v4925, 7
      %v4927 = vsub.s32 %v4924, %v4926
      %v4928 = vrot.slane %v4543, %v4927
      %v4930 = vunpack.c.l.s4 1983009808
      %v4931 = vunpack.c.0.s8 %v4930
      %v4932 = vlaneseq
      %v4933 = vshrl.u32 %v4932, 7
      %v4934 = vsub.s32 %v4931, %v4933
      %v4935 = vrot.slane %v4921, %v4934
      %v4936 = vcombine.high %v4928, %v4928
      %v4937 = vcombine.high %v4935, %v4935
      %v4938 = vcombine.high %v4546, %v4546
      %v4940 = vunpack.c.l.s4 1983009808
      %v4941 = vunpack.c.0.s8 %v4940
      %v4942 = vlaneseq
      %v4943 = vshrl.u32 %v4942, 7
      %v4944 = vsub.s32 %v4941, %v4943
      %v4945 = vrot.slane %v4546, %v4944
      %v4947 = vunpack.c.l.s4 1983009808
      %v4948 = vunpack.c.0.s8 %v4947
      %v4949 = vlaneseq
      %v4950 = vshrl.u32 %v4949, 7
      %v4951 = vsub.s32 %v4948, %v4950
      %v4952 = vrot.slane %v4938, %v4951
      %v4953 = vcombine.high %v4945, %v4945
      %v4954 = vcombine.high %v4952, %v4952
      %v4955 = vcombine.high %v4549, %v4549
      %v4957 = vunpack.c.l.s4 1983009808
      %v4958 = vunpack.c.0.s8 %v4957
      %v4959 = vlaneseq
      %v4960 = vshrl.u32 %v4959, 7
      %v4961 = vsub.s32 %v4958, %v4960
      %v4962 = vrot.slane %v4549, %v4961
      %v4964 = vunpack.c.l.s4 1983009808
      %v4965 = vunpack.c.0.s8 %v4964
      %v4966 = vlaneseq
      %v4967 = vshrl.u32 %v4966, 7
      %v4968 = vsub.s32 %v4965, %v4967
      %v4969 = vrot.slane %v4955, %v4968
      %v4970 = vcombine.high %v4962, %v4962
      %v4971 = vcombine.high %v4969, %v4969
      %v4972 = vcombine.high %v4552, %v4552
      %v4974 = vunpack.c.l.s4 1983009808
      %v4975 = vunpack.c.0.s8 %v4974
      %v4976 = vlaneseq
      %v4977 = vshrl.u32 %v4976, 7
      %v4978 = vsub.s32 %v4975, %v4977
      %v4979 = vrot.slane %v4552, %v4978
      %v4981 = vunpack.c.l.s4 1983009808
      %v4982 = vunpack.c.0.s8 %v4981
      %v4983 = vlaneseq
      %v4984 = vshrl.u32 %v4983, 7
      %v4985 = vsub.s32 %v4982, %v4984
      %v4986 = vrot.slane %v4972, %v4985
      %v4987 = vcombine.high %v4979, %v4979
      %v4988 = vcombine.high %v4986, %v4986
      %v4989 = vcombine.high %v4555, %v4555
      %v4991 = vunpack.c.l.s4 1983009808
      %v4992 = vunpack.c.0.s8 %v4991
      %v4993 = vlaneseq
      %v4994 = vshrl.u32 %v4993, 7
      %v4995 = vsub.s32 %v4992, %v4994
      %v4996 = vrot.slane %v4555, %v4995
      %v4998 = vunpack.c.l.s4 1983009808
      %v4999 = vunpack.c.0.s8 %v4998
      %v5000 = vlaneseq
      %v5001 = vshrl.u32 %v5000, 7
      %v5002 = vsub.s32 %v4999, %v5001
      %v5003 = vrot.slane %v4989, %v5002
      %v5004 = vcombine.high %v4996, %v4996
      %v5005 = vcombine.high %v5003, %v5003
      %v5006 = vcombine.high %v4558, %v4558
      %v5008 = vunpack.c.l.s4 1983009808
      %v5009 = vunpack.c.0.s8 %v5008
      %v5010 = vlaneseq
      %v5011 = vshrl.u32 %v5010, 7
      %v5012 = vsub.s32 %v5009, %v5011
      %v5013 = vrot.slane %v4558, %v5012
      %v5015 = vunpack.c.l.s4 1983009808
      %v5016 = vunpack.c.0.s8 %v5015
      %v5017 = vlaneseq
      %v5018 = vshrl.u32 %v5017, 7
      %v5019 = vsub.s32 %v5016, %v5018
      %v5020 = vrot.slane %v5006, %v5019
      %v5021 = vcombine.high %v5013, %v5013
      %v5022 = vcombine.high %v5020, %v5020
      %v5023 = vcombine.high %v4561, %v4561
      %v5025 = vunpack.c.l.s4 1983009808
      %v5026 = vunpack.c.0.s8 %v5025
      %v5027 = vlaneseq
      %v5028 = vshrl.u32 %v5027, 7
      %v5029 = vsub.s32 %v5026, %v5028
      %v5030 = vrot.slane %v4561, %v5029
      %v5032 = vunpack.c.l.s4 1983009808
      %v5033 = vunpack.c.0.s8 %v5032
      %v5034 = vlaneseq
      %v5035 = vshrl.u32 %v5034, 7
      %v5036 = vsub.s32 %v5033, %v5035
      %v5037 = vrot.slane %v5023, %v5036
      %v5038 = vcombine.high %v5030, %v5030
      %v5039 = vcombine.high %v5037, %v5037
      %v5040 = vcombine.high %v4564, %v4564
      %v5042 = vunpack.c.l.s4 1983009808
      %v5043 = vunpack.c.0.s8 %v5042
      %v5044 = vlaneseq
      %v5045 = vshrl.u32 %v5044, 7
      %v5046 = vsub.s32 %v5043, %v5045
      %v5047 = vrot.slane %v4564, %v5046
      %v5049 = vunpack.c.l.s4 1983009808
      %v5050 = vunpack.c.0.s8 %v5049
      %v5051 = vlaneseq
      %v5052 = vshrl.u32 %v5051, 7
      %v5053 = vsub.s32 %v5050, %v5052
      %v5054 = vrot.slane %v5040, %v5053
      %v5055 = vcombine.high %v5047, %v5047
      %v5056 = vcombine.high %v5054, %v5054
      %v5057 = vcombine.high %v4567, %v4567
      %v5059 = vunpack.c.l.s4 1983009808
      %v5060 = vunpack.c.0.s8 %v5059
      %v5061 = vlaneseq
      %v5062 = vshrl.u32 %v5061, 7
      %v5063 = vsub.s32 %v5060, %v5062
      %v5064 = vrot.slane %v4567, %v5063
      %v5066 = vunpack.c.l.s4 1983009808
      %v5067 = vunpack.c.0.s8 %v5066
      %v5068 = vlaneseq
      %v5069 = vshrl.u32 %v5068, 7
      %v5070 = vsub.s32 %v5067, %v5069
      %v5071 = vrot.slane %v5057, %v5070
      %v5072 = vcombine.high %v5064, %v5064
      %v5073 = vcombine.high %v5071, %v5071
      %v5074 = vcombine.high %v4570, %v4570
      %v5076 = vunpack.c.l.s4 1983009808
      %v5077 = vunpack.c.0.s8 %v5076
      %v5078 = vlaneseq
      %v5079 = vshrl.u32 %v5078, 7
      %v5080 = vsub.s32 %v5077, %v5079
      %v5081 = vrot.slane %v4570, %v5080
      %v5083 = vunpack.c.l.s4 1983009808
      %v5084 = vunpack.c.0.s8 %v5083
      %v5085 = vlaneseq
      %v5086 = vshrl.u32 %v5085, 7
      %v5087 = vsub.s32 %v5084, %v5086
      %v5088 = vrot.slane %v5074, %v5087
      %v5089 = vcombine.high %v5081, %v5081
      %v5090 = vcombine.high %v5088, %v5088
      %v5091 = vcombine.high %v4573, %v4573
      %v5093 = vunpack.c.l.s4 1983009808
      %v5094 = vunpack.c.0.s8 %v5093
      %v5095 = vlaneseq
      %v5096 = vshrl.u32 %v5095, 7
      %v5097 = vsub.s32 %v5094, %v5096
      %v5098 = vrot.slane %v4573, %v5097
      %v5100 = vunpack.c.l.s4 1983009808
      %v5101 = vunpack.c.0.s8 %v5100
      %v5102 = vlaneseq
      %v5103 = vshrl.u32 %v5102, 7
      %v5104 = vsub.s32 %v5101, %v5103
      %v5105 = vrot.slane %v5091, %v5104
      %v5106 = vcombine.high %v5098, %v5098
      %v5107 = vcombine.high %v5105, %v5105
      %v5108 = vcombine.high %v4576, %v4576
      %v5110 = vunpack.c.l.s4 1983009808
      %v5111 = vunpack.c.0.s8 %v5110
      %v5112 = vlaneseq
      %v5113 = vshrl.u32 %v5112, 7
      %v5114 = vsub.s32 %v5111, %v5113
      %v5115 = vrot.slane %v4576, %v5114
      %v5117 = vunpack.c.l.s4 1983009808
      %v5118 = vunpack.c.0.s8 %v5117
      %v5119 = vlaneseq
      %v5120 = vshrl.u32 %v5119, 7
      %v5121 = vsub.s32 %v5118, %v5120
      %v5122 = vrot.slane %v5108, %v5121
      %v5123 = vcombine.high %v5115, %v5115
      %v5124 = vcombine.high %v5122, %v5122
      %v5125 = vcombine.high %v4579, %v4579
      %v5127 = vunpack.c.l.s4 1983009808
      %v5128 = vunpack.c.0.s8 %v5127
      %v5129 = vlaneseq
      %v5130 = vshrl.u32 %v5129, 7
      %v5131 = vsub.s32 %v5128, %v5130
      %v5132 = vrot.slane %v4579, %v5131
      %v5134 = vunpack.c.l.s4 1983009808
      %v5135 = vunpack.c.0.s8 %v5134
      %v5136 = vlaneseq
      %v5137 = vshrl.u32 %v5136, 7
      %v5138 = vsub.s32 %v5135, %v5137
      %v5139 = vrot.slane %v5125, %v5138
      %v5140 = vcombine.high %v5132, %v5132
      %v5141 = vcombine.high %v5139, %v5139
      %v5142 = vcombine.high %v4582, %v4582
      %v5144 = vunpack.c.l.s4 1983009808
      %v5145 = vunpack.c.0.s8 %v5144
      %v5146 = vlaneseq
      %v5147 = vshrl.u32 %v5146, 7
      %v5148 = vsub.s32 %v5145, %v5147
      %v5149 = vrot.slane %v4582, %v5148
      %v5151 = vunpack.c.l.s4 1983009808
      %v5152 = vunpack.c.0.s8 %v5151
      %v5153 = vlaneseq
      %v5154 = vshrl.u32 %v5153, 7
      %v5155 = vsub.s32 %v5152, %v5154
      %v5156 = vrot.slane %v5142, %v5155
      %v5157 = vcombine.high %v5149, %v5149
      %v5158 = vcombine.high %v5156, %v5156
      %v5287 = vsel %vm561, %v4622, -inf
      %v5288 = vrot.slane %v5287, 4
      %v5289 = vmax.f32 %v5287, %v5288
      %v5290 = vrot.slane %v5289, 2
      %v5291 = vmax.f32 %v5289, %v5290
      %v5292 = vrot.slane %v5291, 1
      %v5293 = vmax.f32 %v5291, %v5292
      %v5294 = vsel %vm561, %v4630, -inf
      %v5295 = vrot.slane %v5294, 4
      %v5296 = vmax.f32 %v5294, %v5295
      %v5297 = vrot.slane %v5296, 2
      %v5298 = vmax.f32 %v5296, %v5297
      %v5299 = vrot.slane %v5298, 1
      %v5300 = vmax.f32 %v5298, %v5299
      %v5301 = vsel %vm561, %v4629, -inf
      %v5302 = vrot.slane %v5301, 4
      %v5303 = vmax.f32 %v5301, %v5302
      %v5304 = vrot.slane %v5303, 2
      %v5305 = vmax.f32 %v5303, %v5304
      %v5306 = vrot.slane %v5305, 1
      %v5307 = vmax.f32 %v5305, %v5306
      %v5308 = vsel %vm561, %v4631, -inf
      %v5309 = vrot.slane %v5308, 4
      %v5310 = vmax.f32 %v5308, %v5309
      %v5311 = vrot.slane %v5310, 2
      %v5312 = vmax.f32 %v5310, %v5311
      %v5313 = vrot.slane %v5312, 1
      %v5314 = vmax.f32 %v5312, %v5313
      %v5315 = vsel %vm561, %v4639, -inf
      %v5316 = vrot.slane %v5315, 4
      %v5317 = vmax.f32 %v5315, %v5316
      %v5318 = vrot.slane %v5317, 2
      %v5319 = vmax.f32 %v5317, %v5318
      %v5320 = vrot.slane %v5319, 1
      %v5321 = vmax.f32 %v5319, %v5320
      %v5322 = vsel %vm561, %v4647, -inf
      %v5323 = vrot.slane %v5322, 4
      %v5324 = vmax.f32 %v5322, %v5323
      %v5325 = vrot.slane %v5324, 2
      %v5326 = vmax.f32 %v5324, %v5325
      %v5327 = vrot.slane %v5326, 1
      %v5328 = vmax.f32 %v5326, %v5327
      %v5329 = vsel %vm561, %v4646, -inf
      %v5330 = vrot.slane %v5329, 4
      %v5331 = vmax.f32 %v5329, %v5330
      %v5332 = vrot.slane %v5331, 2
      %v5333 = vmax.f32 %v5331, %v5332
      %v5334 = vrot.slane %v5333, 1
      %v5335 = vmax.f32 %v5333, %v5334
      %v5336 = vsel %vm561, %v4648, -inf
      %v5337 = vrot.slane %v5336, 4
      %v5338 = vmax.f32 %v5336, %v5337
      %v5339 = vrot.slane %v5338, 2
      %v5340 = vmax.f32 %v5338, %v5339
      %v5341 = vrot.slane %v5340, 1
      %v5342 = vmax.f32 %v5340, %v5341
      %v5343 = vsel %vm561, %v4656, -inf
      %v5344 = vrot.slane %v5343, 4
      %v5345 = vmax.f32 %v5343, %v5344
      %v5346 = vrot.slane %v5345, 2
      %v5347 = vmax.f32 %v5345, %v5346
      %v5348 = vrot.slane %v5347, 1
      %v5349 = vmax.f32 %v5347, %v5348
      %v5350 = vsel %vm561, %v4664, -inf
      %v5351 = vrot.slane %v5350, 4
      %v5352 = vmax.f32 %v5350, %v5351
      %v5353 = vrot.slane %v5352, 2
      %v5354 = vmax.f32 %v5352, %v5353
      %v5355 = vrot.slane %v5354, 1
      %v5356 = vmax.f32 %v5354, %v5355
      %v5357 = vsel %vm561, %v4663, -inf
      %v5358 = vrot.slane %v5357, 4
      %v5359 = vmax.f32 %v5357, %v5358
      %v5360 = vrot.slane %v5359, 2
      %v5361 = vmax.f32 %v5359, %v5360
      %v5362 = vrot.slane %v5361, 1
      %v5363 = vmax.f32 %v5361, %v5362
      %v5364 = vsel %vm561, %v4665, -inf
      %v5365 = vrot.slane %v5364, 4
      %v5366 = vmax.f32 %v5364, %v5365
      %v5367 = vrot.slane %v5366, 2
      %v5368 = vmax.f32 %v5366, %v5367
      %v5369 = vrot.slane %v5368, 1
      %v5370 = vmax.f32 %v5368, %v5369
      %v5371 = vsel %vm561, %v4673, -inf
      %v5372 = vrot.slane %v5371, 4
      %v5373 = vmax.f32 %v5371, %v5372
      %v5374 = vrot.slane %v5373, 2
      %v5375 = vmax.f32 %v5373, %v5374
      %v5376 = vrot.slane %v5375, 1
      %v5377 = vmax.f32 %v5375, %v5376
      %v5378 = vsel %vm561, %v4681, -inf
      %v5379 = vrot.slane %v5378, 4
      %v5380 = vmax.f32 %v5378, %v5379
      %v5381 = vrot.slane %v5380, 2
      %v5382 = vmax.f32 %v5380, %v5381
      %v5383 = vrot.slane %v5382, 1
      %v5384 = vmax.f32 %v5382, %v5383
      %v5385 = vsel %vm561, %v4680, -inf
      %v5386 = vrot.slane %v5385, 4
      %v5387 = vmax.f32 %v5385, %v5386
      %v5388 = vrot.slane %v5387, 2
      %v5389 = vmax.f32 %v5387, %v5388
      %v5390 = vrot.slane %v5389, 1
      %v5391 = vmax.f32 %v5389, %v5390
      %v5392 = vsel %vm561, %v4682, -inf
      %v5393 = vrot.slane %v5392, 4
      %v5394 = vmax.f32 %v5392, %v5393
      %v5395 = vrot.slane %v5394, 2
      %v5396 = vmax.f32 %v5394, %v5395
      %v5397 = vrot.slane %v5396, 1
      %v5398 = vmax.f32 %v5396, %v5397
      %v5399 = vsel %vm561, %v4690, -inf
      %v5400 = vrot.slane %v5399, 4
      %v5401 = vmax.f32 %v5399, %v5400
      %v5402 = vrot.slane %v5401, 2
      %v5403 = vmax.f32 %v5401, %v5402
      %v5404 = vrot.slane %v5403, 1
      %v5405 = vmax.f32 %v5403, %v5404
      %v5406 = vsel %vm561, %v4698, -inf
      %v5407 = vrot.slane %v5406, 4
      %v5408 = vmax.f32 %v5406, %v5407
      %v5409 = vrot.slane %v5408, 2
      %v5410 = vmax.f32 %v5408, %v5409
      %v5411 = vrot.slane %v5410, 1
      %v5412 = vmax.f32 %v5410, %v5411
      %v5413 = vsel %vm561, %v4697, -inf
      %v5414 = vrot.slane %v5413, 4
      %v5415 = vmax.f32 %v5413, %v5414
      %v5416 = vrot.slane %v5415, 2
      %v5417 = vmax.f32 %v5415, %v5416
      %v5418 = vrot.slane %v5417, 1
      %v5419 = vmax.f32 %v5417, %v5418
      %v5420 = vsel %vm561, %v4699, -inf
      %v5421 = vrot.slane %v5420, 4
      %v5422 = vmax.f32 %v5420, %v5421
      %v5423 = vrot.slane %v5422, 2
      %v5424 = vmax.f32 %v5422, %v5423
      %v5425 = vrot.slane %v5424, 1
      %v5426 = vmax.f32 %v5424, %v5425
      %v5427 = vsel %vm561, %v4707, -inf
      %v5428 = vrot.slane %v5427, 4
      %v5429 = vmax.f32 %v5427, %v5428
      %v5430 = vrot.slane %v5429, 2
      %v5431 = vmax.f32 %v5429, %v5430
      %v5432 = vrot.slane %v5431, 1
      %v5433 = vmax.f32 %v5431, %v5432
      %v5434 = vsel %vm561, %v4715, -inf
      %v5435 = vrot.slane %v5434, 4
      %v5436 = vmax.f32 %v5434, %v5435
      %v5437 = vrot.slane %v5436, 2
      %v5438 = vmax.f32 %v5436, %v5437
      %v5439 = vrot.slane %v5438, 1
      %v5440 = vmax.f32 %v5438, %v5439
      %v5441 = vsel %vm561, %v4714, -inf
      %v5442 = vrot.slane %v5441, 4
      %v5443 = vmax.f32 %v5441, %v5442
      %v5444 = vrot.slane %v5443, 2
      %v5445 = vmax.f32 %v5443, %v5444
      %v5446 = vrot.slane %v5445, 1
      %v5447 = vmax.f32 %v5445, %v5446
      %v5448 = vsel %vm561, %v4716, -inf
      %v5449 = vrot.slane %v5448, 4
      %v5450 = vmax.f32 %v5448, %v5449
      %v5451 = vrot.slane %v5450, 2
      %v5452 = vmax.f32 %v5450, %v5451
      %v5453 = vrot.slane %v5452, 1
      %v5454 = vmax.f32 %v5452, %v5453
      %v5455 = vsel %vm561, %v4724, -inf
      %v5456 = vrot.slane %v5455, 4
      %v5457 = vmax.f32 %v5455, %v5456
      %v5458 = vrot.slane %v5457, 2
      %v5459 = vmax.f32 %v5457, %v5458
      %v5460 = vrot.slane %v5459, 1
      %v5461 = vmax.f32 %v5459, %v5460
      %v5462 = vsel %vm561, %v4732, -inf
      %v5463 = vrot.slane %v5462, 4
      %v5464 = vmax.f32 %v5462, %v5463
      %v5465 = vrot.slane %v5464, 2
      %v5466 = vmax.f32 %v5464, %v5465
      %v5467 = vrot.slane %v5466, 1
      %v5468 = vmax.f32 %v5466, %v5467
      %v5469 = vsel %vm561, %v4731, -inf
      %v5470 = vrot.slane %v5469, 4
      %v5471 = vmax.f32 %v5469, %v5470
      %v5472 = vrot.slane %v5471, 2
      %v5473 = vmax.f32 %v5471, %v5472
      %v5474 = vrot.slane %v5473, 1
      %v5475 = vmax.f32 %v5473, %v5474
      %v5476 = vsel %vm561, %v4733, -inf
      %v5477 = vrot.slane %v5476, 4
      %v5478 = vmax.f32 %v5476, %v5477
      %v5479 = vrot.slane %v5478, 2
      %v5480 = vmax.f32 %v5478, %v5479
      %v5481 = vrot.slane %v5480, 1
      %v5482 = vmax.f32 %v5480, %v5481
      %v5483 = vsel %vm561, %v4741, -inf
      %v5484 = vrot.slane %v5483, 4
      %v5485 = vmax.f32 %v5483, %v5484
      %v5486 = vrot.slane %v5485, 2
      %v5487 = vmax.f32 %v5485, %v5486
      %v5488 = vrot.slane %v5487, 1
      %v5489 = vmax.f32 %v5487, %v5488
      %v5490 = vsel %vm561, %v4749, -inf
      %v5491 = vrot.slane %v5490, 4
      %v5492 = vmax.f32 %v5490, %v5491
      %v5493 = vrot.slane %v5492, 2
      %v5494 = vmax.f32 %v5492, %v5493
      %v5495 = vrot.slane %v5494, 1
      %v5496 = vmax.f32 %v5494, %v5495
      %v5497 = vsel %vm561, %v4748, -inf
      %v5498 = vrot.slane %v5497, 4
      %v5499 = vmax.f32 %v5497, %v5498
      %v5500 = vrot.slane %v5499, 2
      %v5501 = vmax.f32 %v5499, %v5500
      %v5502 = vrot.slane %v5501, 1
      %v5503 = vmax.f32 %v5501, %v5502
      %v5504 = vsel %vm561, %v4750, -inf
      %v5505 = vrot.slane %v5504, 4
      %v5506 = vmax.f32 %v5504, %v5505
      %v5507 = vrot.slane %v5506, 2
      %v5508 = vmax.f32 %v5506, %v5507
      %v5509 = vrot.slane %v5508, 1
      %v5510 = vmax.f32 %v5508, %v5509
      %v5511 = vsel %vm561, %v4758, -inf
      %v5512 = vrot.slane %v5511, 4
      %v5513 = vmax.f32 %v5511, %v5512
      %v5514 = vrot.slane %v5513, 2
      %v5515 = vmax.f32 %v5513, %v5514
      %v5516 = vrot.slane %v5515, 1
      %v5517 = vmax.f32 %v5515, %v5516
      %v5518 = vsel %vm561, %v4766, -inf
      %v5519 = vrot.slane %v5518, 4
      %v5520 = vmax.f32 %v5518, %v5519
      %v5521 = vrot.slane %v5520, 2
      %v5522 = vmax.f32 %v5520, %v5521
      %v5523 = vrot.slane %v5522, 1
      %v5524 = vmax.f32 %v5522, %v5523
      %v5525 = vsel %vm561, %v4765, -inf
      %v5526 = vrot.slane %v5525, 4
      %v5527 = vmax.f32 %v5525, %v5526
      %v5528 = vrot.slane %v5527, 2
      %v5529 = vmax.f32 %v5527, %v5528
      %v5530 = vrot.slane %v5529, 1
      %v5531 = vmax.f32 %v5529, %v5530
      %v5532 = vsel %vm561, %v4767, -inf
      %v5533 = vrot.slane %v5532, 4
      %v5534 = vmax.f32 %v5532, %v5533
      %v5535 = vrot.slane %v5534, 2
      %v5536 = vmax.f32 %v5534, %v5535
      %v5537 = vrot.slane %v5536, 1
      %v5538 = vmax.f32 %v5536, %v5537
      %v5539 = vsel %vm561, %v4775, -inf
      %v5540 = vrot.slane %v5539, 4
      %v5541 = vmax.f32 %v5539, %v5540
      %v5542 = vrot.slane %v5541, 2
      %v5543 = vmax.f32 %v5541, %v5542
      %v5544 = vrot.slane %v5543, 1
      %v5545 = vmax.f32 %v5543, %v5544
      %v5546 = vsel %vm561, %v4783, -inf
      %v5547 = vrot.slane %v5546, 4
      %v5548 = vmax.f32 %v5546, %v5547
      %v5549 = vrot.slane %v5548, 2
      %v5550 = vmax.f32 %v5548, %v5549
      %v5551 = vrot.slane %v5550, 1
      %v5552 = vmax.f32 %v5550, %v5551
      %v5553 = vsel %vm561, %v4782, -inf
      %v5554 = vrot.slane %v5553, 4
      %v5555 = vmax.f32 %v5553, %v5554
      %v5556 = vrot.slane %v5555, 2
      %v5557 = vmax.f32 %v5555, %v5556
      %v5558 = vrot.slane %v5557, 1
      %v5559 = vmax.f32 %v5557, %v5558
      %v5560 = vsel %vm561, %v4784, -inf
      %v5561 = vrot.slane %v5560, 4
      %v5562 = vmax.f32 %v5560, %v5561
      %v5563 = vrot.slane %v5562, 2
      %v5564 = vmax.f32 %v5562, %v5563
      %v5565 = vrot.slane %v5564, 1
      %v5566 = vmax.f32 %v5564, %v5565
      %v5567 = vsel %vm561, %v4792, -inf
      %v5568 = vrot.slane %v5567, 4
      %v5569 = vmax.f32 %v5567, %v5568
      %v5570 = vrot.slane %v5569, 2
      %v5571 = vmax.f32 %v5569, %v5570
      %v5572 = vrot.slane %v5571, 1
      %v5573 = vmax.f32 %v5571, %v5572
      %v5574 = vsel %vm561, %v4800, -inf
      %v5575 = vrot.slane %v5574, 4
      %v5576 = vmax.f32 %v5574, %v5575
      %v5577 = vrot.slane %v5576, 2
      %v5578 = vmax.f32 %v5576, %v5577
      %v5579 = vrot.slane %v5578, 1
      %v5580 = vmax.f32 %v5578, %v5579
      %v5581 = vsel %vm561, %v4799, -inf
      %v5582 = vrot.slane %v5581, 4
      %v5583 = vmax.f32 %v5581, %v5582
      %v5584 = vrot.slane %v5583, 2
      %v5585 = vmax.f32 %v5583, %v5584
      %v5586 = vrot.slane %v5585, 1
      %v5587 = vmax.f32 %v5585, %v5586
      %v5588 = vsel %vm561, %v4801, -inf
      %v5589 = vrot.slane %v5588, 4
      %v5590 = vmax.f32 %v5588, %v5589
      %v5591 = vrot.slane %v5590, 2
      %v5592 = vmax.f32 %v5590, %v5591
      %v5593 = vrot.slane %v5592, 1
      %v5594 = vmax.f32 %v5592, %v5593
      %v5595 = vsel %vm561, %v4809, -inf
      %v5596 = vrot.slane %v5595, 4
      %v5597 = vmax.f32 %v5595, %v5596
      %v5598 = vrot.slane %v5597, 2
      %v5599 = vmax.f32 %v5597, %v5598
      %v5600 = vrot.slane %v5599, 1
      %v5601 = vmax.f32 %v5599, %v5600
      %v5602 = vsel %vm561, %v4817, -inf
      %v5603 = vrot.slane %v5602, 4
      %v5604 = vmax.f32 %v5602, %v5603
      %v5605 = vrot.slane %v5604, 2
      %v5606 = vmax.f32 %v5604, %v5605
      %v5607 = vrot.slane %v5606, 1
      %v5608 = vmax.f32 %v5606, %v5607
      %v5609 = vsel %vm561, %v4816, -inf
      %v5610 = vrot.slane %v5609, 4
      %v5611 = vmax.f32 %v5609, %v5610
      %v5612 = vrot.slane %v5611, 2
      %v5613 = vmax.f32 %v5611, %v5612
      %v5614 = vrot.slane %v5613, 1
      %v5615 = vmax.f32 %v5613, %v5614
      %v5616 = vsel %vm561, %v4818, -inf
      %v5617 = vrot.slane %v5616, 4
      %v5618 = vmax.f32 %v5616, %v5617
      %v5619 = vrot.slane %v5618, 2
      %v5620 = vmax.f32 %v5618, %v5619
      %v5621 = vrot.slane %v5620, 1
      %v5622 = vmax.f32 %v5620, %v5621
      %v5623 = vsel %vm561, %v4826, -inf
      %v5624 = vrot.slane %v5623, 4
      %v5625 = vmax.f32 %v5623, %v5624
      %v5626 = vrot.slane %v5625, 2
      %v5627 = vmax.f32 %v5625, %v5626
      %v5628 = vrot.slane %v5627, 1
      %v5629 = vmax.f32 %v5627, %v5628
      %v5630 = vsel %vm561, %v4834, -inf
      %v5631 = vrot.slane %v5630, 4
      %v5632 = vmax.f32 %v5630, %v5631
      %v5633 = vrot.slane %v5632, 2
      %v5634 = vmax.f32 %v5632, %v5633
      %v5635 = vrot.slane %v5634, 1
      %v5636 = vmax.f32 %v5634, %v5635
      %v5637 = vsel %vm561, %v4833, -inf
      %v5638 = vrot.slane %v5637, 4
      %v5639 = vmax.f32 %v5637, %v5638
      %v5640 = vrot.slane %v5639, 2
      %v5641 = vmax.f32 %v5639, %v5640
      %v5642 = vrot.slane %v5641, 1
      %v5643 = vmax.f32 %v5641, %v5642
      %v5644 = vsel %vm561, %v4835, -inf
      %v5645 = vrot.slane %v5644, 4
      %v5646 = vmax.f32 %v5644, %v5645
      %v5647 = vrot.slane %v5646, 2
      %v5648 = vmax.f32 %v5646, %v5647
      %v5649 = vrot.slane %v5648, 1
      %v5650 = vmax.f32 %v5648, %v5649
      %v5651 = vsel %vm561, %v4843, -inf
      %v5652 = vrot.slane %v5651, 4
      %v5653 = vmax.f32 %v5651, %v5652
      %v5654 = vrot.slane %v5653, 2
      %v5655 = vmax.f32 %v5653, %v5654
      %v5656 = vrot.slane %v5655, 1
      %v5657 = vmax.f32 %v5655, %v5656
      %v5658 = vsel %vm561, %v4851, -inf
      %v5659 = vrot.slane %v5658, 4
      %v5660 = vmax.f32 %v5658, %v5659
      %v5661 = vrot.slane %v5660, 2
      %v5662 = vmax.f32 %v5660, %v5661
      %v5663 = vrot.slane %v5662, 1
      %v5664 = vmax.f32 %v5662, %v5663
      %v5665 = vsel %vm561, %v4850, -inf
      %v5666 = vrot.slane %v5665, 4
      %v5667 = vmax.f32 %v5665, %v5666
      %v5668 = vrot.slane %v5667, 2
      %v5669 = vmax.f32 %v5667, %v5668
      %v5670 = vrot.slane %v5669, 1
      %v5671 = vmax.f32 %v5669, %v5670
      %v5672 = vsel %vm561, %v4852, -inf
      %v5673 = vrot.slane %v5672, 4
      %v5674 = vmax.f32 %v5672, %v5673
      %v5675 = vrot.slane %v5674, 2
      %v5676 = vmax.f32 %v5674, %v5675
      %v5677 = vrot.slane %v5676, 1
      %v5678 = vmax.f32 %v5676, %v5677
      %v5679 = vsel %vm561, %v4860, -inf
      %v5680 = vrot.slane %v5679, 4
      %v5681 = vmax.f32 %v5679, %v5680
      %v5682 = vrot.slane %v5681, 2
      %v5683 = vmax.f32 %v5681, %v5682
      %v5684 = vrot.slane %v5683, 1
      %v5685 = vmax.f32 %v5683, %v5684
      %v5686 = vsel %vm561, %v4868, -inf
      %v5687 = vrot.slane %v5686, 4
      %v5688 = vmax.f32 %v5686, %v5687
      %v5689 = vrot.slane %v5688, 2
      %v5690 = vmax.f32 %v5688, %v5689
      %v5691 = vrot.slane %v5690, 1
      %v5692 = vmax.f32 %v5690, %v5691
      %v5693 = vsel %vm561, %v4867, -inf
      %v5694 = vrot.slane %v5693, 4
      %v5695 = vmax.f32 %v5693, %v5694
      %v5696 = vrot.slane %v5695, 2
      %v5697 = vmax.f32 %v5695, %v5696
      %v5698 = vrot.slane %v5697, 1
      %v5699 = vmax.f32 %v5697, %v5698
      %v5700 = vsel %vm561, %v4869, -inf
      %v5701 = vrot.slane %v5700, 4
      %v5702 = vmax.f32 %v5700, %v5701
      %v5703 = vrot.slane %v5702, 2
      %v5704 = vmax.f32 %v5702, %v5703
      %v5705 = vrot.slane %v5704, 1
      %v5706 = vmax.f32 %v5704, %v5705
      %v5707 = vsel %vm561, %v4877, -inf
      %v5708 = vrot.slane %v5707, 4
      %v5709 = vmax.f32 %v5707, %v5708
      %v5710 = vrot.slane %v5709, 2
      %v5711 = vmax.f32 %v5709, %v5710
      %v5712 = vrot.slane %v5711, 1
      %v5713 = vmax.f32 %v5711, %v5712
      %v5714 = vsel %vm561, %v4885, -inf
      %v5715 = vrot.slane %v5714, 4
      %v5716 = vmax.f32 %v5714, %v5715
      %v5717 = vrot.slane %v5716, 2
      %v5718 = vmax.f32 %v5716, %v5717
      %v5719 = vrot.slane %v5718, 1
      %v5720 = vmax.f32 %v5718, %v5719
      %v5721 = vsel %vm561, %v4884, -inf
      %v5722 = vrot.slane %v5721, 4
      %v5723 = vmax.f32 %v5721, %v5722
      %v5724 = vrot.slane %v5723, 2
      %v5725 = vmax.f32 %v5723, %v5724
      %v5726 = vrot.slane %v5725, 1
      %v5727 = vmax.f32 %v5725, %v5726
      %v5728 = vsel %vm561, %v4886, -inf
      %v5729 = vrot.slane %v5728, 4
      %v5730 = vmax.f32 %v5728, %v5729
      %v5731 = vrot.slane %v5730, 2
      %v5732 = vmax.f32 %v5730, %v5731
      %v5733 = vrot.slane %v5732, 1
      %v5734 = vmax.f32 %v5732, %v5733
      %v5735 = vsel %vm561, %v4894, -inf
      %v5736 = vrot.slane %v5735, 4
      %v5737 = vmax.f32 %v5735, %v5736
      %v5738 = vrot.slane %v5737, 2
      %v5739 = vmax.f32 %v5737, %v5738
      %v5740 = vrot.slane %v5739, 1
      %v5741 = vmax.f32 %v5739, %v5740
      %v5742 = vsel %vm561, %v4902, -inf
      %v5743 = vrot.slane %v5742, 4
      %v5744 = vmax.f32 %v5742, %v5743
      %v5745 = vrot.slane %v5744, 2
      %v5746 = vmax.f32 %v5744, %v5745
      %v5747 = vrot.slane %v5746, 1
      %v5748 = vmax.f32 %v5746, %v5747
      %v5749 = vsel %vm561, %v4901, -inf
      %v5750 = vrot.slane %v5749, 4
      %v5751 = vmax.f32 %v5749, %v5750
      %v5752 = vrot.slane %v5751, 2
      %v5753 = vmax.f32 %v5751, %v5752
      %v5754 = vrot.slane %v5753, 1
      %v5755 = vmax.f32 %v5753, %v5754
      %v5756 = vsel %vm561, %v4903, -inf
      %v5757 = vrot.slane %v5756, 4
      %v5758 = vmax.f32 %v5756, %v5757
      %v5759 = vrot.slane %v5758, 2
      %v5760 = vmax.f32 %v5758, %v5759
      %v5761 = vrot.slane %v5760, 1
      %v5762 = vmax.f32 %v5760, %v5761
      %v5763 = vsel %vm561, %v4911, -inf
      %v5764 = vrot.slane %v5763, 4
      %v5765 = vmax.f32 %v5763, %v5764
      %v5766 = vrot.slane %v5765, 2
      %v5767 = vmax.f32 %v5765, %v5766
      %v5768 = vrot.slane %v5767, 1
      %v5769 = vmax.f32 %v5767, %v5768
      %v5770 = vsel %vm561, %v4919, -inf
      %v5771 = vrot.slane %v5770, 4
      %v5772 = vmax.f32 %v5770, %v5771
      %v5773 = vrot.slane %v5772, 2
      %v5774 = vmax.f32 %v5772, %v5773
      %v5775 = vrot.slane %v5774, 1
      %v5776 = vmax.f32 %v5774, %v5775
      %v5777 = vsel %vm561, %v4918, -inf
      %v5778 = vrot.slane %v5777, 4
      %v5779 = vmax.f32 %v5777, %v5778
      %v5780 = vrot.slane %v5779, 2
      %v5781 = vmax.f32 %v5779, %v5780
      %v5782 = vrot.slane %v5781, 1
      %v5783 = vmax.f32 %v5781, %v5782
      %v5784 = vsel %vm561, %v4920, -inf
      %v5785 = vrot.slane %v5784, 4
      %v5786 = vmax.f32 %v5784, %v5785
      %v5787 = vrot.slane %v5786, 2
      %v5788 = vmax.f32 %v5786, %v5787
      %v5789 = vrot.slane %v5788, 1
      %v5790 = vmax.f32 %v5788, %v5789
      %v5791 = vsel %vm561, %v4928, -inf
      %v5792 = vrot.slane %v5791, 4
      %v5793 = vmax.f32 %v5791, %v5792
      %v5794 = vrot.slane %v5793, 2
      %v5795 = vmax.f32 %v5793, %v5794
      %v5796 = vrot.slane %v5795, 1
      %v5797 = vmax.f32 %v5795, %v5796
      %v5798 = vsel %vm561, %v4936, -inf
      %v5799 = vrot.slane %v5798, 4
      %v5800 = vmax.f32 %v5798, %v5799
      %v5801 = vrot.slane %v5800, 2
      %v5802 = vmax.f32 %v5800, %v5801
      %v5803 = vrot.slane %v5802, 1
      %v5804 = vmax.f32 %v5802, %v5803
      %v5805 = vsel %vm561, %v4935, -inf
      %v5806 = vrot.slane %v5805, 4
      %v5807 = vmax.f32 %v5805, %v5806
      %v5808 = vrot.slane %v5807, 2
      %v5809 = vmax.f32 %v5807, %v5808
      %v5810 = vrot.slane %v5809, 1
      %v5811 = vmax.f32 %v5809, %v5810
      %v5812 = vsel %vm561, %v4937, -inf
      %v5813 = vrot.slane %v5812, 4
      %v5814 = vmax.f32 %v5812, %v5813
      %v5815 = vrot.slane %v5814, 2
      %v5816 = vmax.f32 %v5814, %v5815
      %v5817 = vrot.slane %v5816, 1
      %v5818 = vmax.f32 %v5816, %v5817
      %v5819 = vsel %vm561, %v4945, -inf
      %v5820 = vrot.slane %v5819, 4
      %v5821 = vmax.f32 %v5819, %v5820
      %v5822 = vrot.slane %v5821, 2
      %v5823 = vmax.f32 %v5821, %v5822
      %v5824 = vrot.slane %v5823, 1
      %v5825 = vmax.f32 %v5823, %v5824
      %v5826 = vsel %vm561, %v4953, -inf
      %v5827 = vrot.slane %v5826, 4
      %v5828 = vmax.f32 %v5826, %v5827
      %v5829 = vrot.slane %v5828, 2
      %v5830 = vmax.f32 %v5828, %v5829
      %v5831 = vrot.slane %v5830, 1
      %v5832 = vmax.f32 %v5830, %v5831
      %v5833 = vsel %vm561, %v4952, -inf
      %v5834 = vrot.slane %v5833, 4
      %v5835 = vmax.f32 %v5833, %v5834
      %v5836 = vrot.slane %v5835, 2
      %v5837 = vmax.f32 %v5835, %v5836
      %v5838 = vrot.slane %v5837, 1
      %v5839 = vmax.f32 %v5837, %v5838
      %v5840 = vsel %vm561, %v4954, -inf
      %v5841 = vrot.slane %v5840, 4
      %v5842 = vmax.f32 %v5840, %v5841
      %v5843 = vrot.slane %v5842, 2
      %v5844 = vmax.f32 %v5842, %v5843
      %v5845 = vrot.slane %v5844, 1
      %v5846 = vmax.f32 %v5844, %v5845
      %v5847 = vsel %vm561, %v4962, -inf
      %v5848 = vrot.slane %v5847, 4
      %v5849 = vmax.f32 %v5847, %v5848
      %v5850 = vrot.slane %v5849, 2
      %v5851 = vmax.f32 %v5849, %v5850
      %v5852 = vrot.slane %v5851, 1
      %v5853 = vmax.f32 %v5851, %v5852
      %v5854 = vsel %vm561, %v4970, -inf
      %v5855 = vrot.slane %v5854, 4
      %v5856 = vmax.f32 %v5854, %v5855
      %v5857 = vrot.slane %v5856, 2
      %v5858 = vmax.f32 %v5856, %v5857
      %v5859 = vrot.slane %v5858, 1
      %v5860 = vmax.f32 %v5858, %v5859
      %v5861 = vsel %vm561, %v4969, -inf
      %v5862 = vrot.slane %v5861, 4
      %v5863 = vmax.f32 %v5861, %v5862
      %v5864 = vrot.slane %v5863, 2
      %v5865 = vmax.f32 %v5863, %v5864
      %v5866 = vrot.slane %v5865, 1
      %v5867 = vmax.f32 %v5865, %v5866
      %v5868 = vsel %vm561, %v4971, -inf
      %v5869 = vrot.slane %v5868, 4
      %v5870 = vmax.f32 %v5868, %v5869
      %v5871 = vrot.slane %v5870, 2
      %v5872 = vmax.f32 %v5870, %v5871
      %v5873 = vrot.slane %v5872, 1
      %v5874 = vmax.f32 %v5872, %v5873
      %v5875 = vsel %vm561, %v4979, -inf
      %v5876 = vrot.slane %v5875, 4
      %v5877 = vmax.f32 %v5875, %v5876
      %v5878 = vrot.slane %v5877, 2
      %v5879 = vmax.f32 %v5877, %v5878
      %v5880 = vrot.slane %v5879, 1
      %v5881 = vmax.f32 %v5879, %v5880
      %v5882 = vsel %vm561, %v4987, -inf
      %v5883 = vrot.slane %v5882, 4
      %v5884 = vmax.f32 %v5882, %v5883
      %v5885 = vrot.slane %v5884, 2
      %v5886 = vmax.f32 %v5884, %v5885
      %v5887 = vrot.slane %v5886, 1
      %v5888 = vmax.f32 %v5886, %v5887
      %v5889 = vsel %vm561, %v4986, -inf
      %v5890 = vrot.slane %v5889, 4
      %v5891 = vmax.f32 %v5889, %v5890
      %v5892 = vrot.slane %v5891, 2
      %v5893 = vmax.f32 %v5891, %v5892
      %v5894 = vrot.slane %v5893, 1
      %v5895 = vmax.f32 %v5893, %v5894
      %v5896 = vsel %vm561, %v4988, -inf
      %v5897 = vrot.slane %v5896, 4
      %v5898 = vmax.f32 %v5896, %v5897
      %v5899 = vrot.slane %v5898, 2
      %v5900 = vmax.f32 %v5898, %v5899
      %v5901 = vrot.slane %v5900, 1
      %v5902 = vmax.f32 %v5900, %v5901
      %v5903 = vsel %vm561, %v4996, -inf
      %v5904 = vrot.slane %v5903, 4
      %v5905 = vmax.f32 %v5903, %v5904
      %v5906 = vrot.slane %v5905, 2
      %v5907 = vmax.f32 %v5905, %v5906
      %v5908 = vrot.slane %v5907, 1
      %v5909 = vmax.f32 %v5907, %v5908
      %v5910 = vsel %vm561, %v5004, -inf
      %v5911 = vrot.slane %v5910, 4
      %v5912 = vmax.f32 %v5910, %v5911
      %v5913 = vrot.slane %v5912, 2
      %v5914 = vmax.f32 %v5912, %v5913
      %v5915 = vrot.slane %v5914, 1
      %v5916 = vmax.f32 %v5914, %v5915
      %v5917 = vsel %vm561, %v5003, -inf
      %v5918 = vrot.slane %v5917, 4
      %v5919 = vmax.f32 %v5917, %v5918
      %v5920 = vrot.slane %v5919, 2
      %v5921 = vmax.f32 %v5919, %v5920
      %v5922 = vrot.slane %v5921, 1
      %v5923 = vmax.f32 %v5921, %v5922
      %v5924 = vsel %vm561, %v5005, -inf
      %v5925 = vrot.slane %v5924, 4
      %v5926 = vmax.f32 %v5924, %v5925
      %v5927 = vrot.slane %v5926, 2
      %v5928 = vmax.f32 %v5926, %v5927
      %v5929 = vrot.slane %v5928, 1
      %v5930 = vmax.f32 %v5928, %v5929
      %v5931 = vsel %vm561, %v5013, -inf
      %v5932 = vrot.slane %v5931, 4
      %v5933 = vmax.f32 %v5931, %v5932
      %v5934 = vrot.slane %v5933, 2
      %v5935 = vmax.f32 %v5933, %v5934
      %v5936 = vrot.slane %v5935, 1
      %v5937 = vmax.f32 %v5935, %v5936
      %v5938 = vsel %vm561, %v5021, -inf
      %v5939 = vrot.slane %v5938, 4
      %v5940 = vmax.f32 %v5938, %v5939
      %v5941 = vrot.slane %v5940, 2
      %v5942 = vmax.f32 %v5940, %v5941
      %v5943 = vrot.slane %v5942, 1
      %v5944 = vmax.f32 %v5942, %v5943
      %v5945 = vsel %vm561, %v5020, -inf
      %v5946 = vrot.slane %v5945, 4
      %v5947 = vmax.f32 %v5945, %v5946
      %v5948 = vrot.slane %v5947, 2
      %v5949 = vmax.f32 %v5947, %v5948
      %v5950 = vrot.slane %v5949, 1
      %v5951 = vmax.f32 %v5949, %v5950
      %v5952 = vsel %vm561, %v5022, -inf
      %v5953 = vrot.slane %v5952, 4
      %v5954 = vmax.f32 %v5952, %v5953
      %v5955 = vrot.slane %v5954, 2
      %v5956 = vmax.f32 %v5954, %v5955
      %v5957 = vrot.slane %v5956, 1
      %v5958 = vmax.f32 %v5956, %v5957
      %v5959 = vsel %vm561, %v5030, -inf
      %v5960 = vrot.slane %v5959, 4
      %v5961 = vmax.f32 %v5959, %v5960
      %v5962 = vrot.slane %v5961, 2
      %v5963 = vmax.f32 %v5961, %v5962
      %v5964 = vrot.slane %v5963, 1
      %v5965 = vmax.f32 %v5963, %v5964
      %v5966 = vsel %vm561, %v5038, -inf
      %v5967 = vrot.slane %v5966, 4
      %v5968 = vmax.f32 %v5966, %v5967
      %v5969 = vrot.slane %v5968, 2
      %v5970 = vmax.f32 %v5968, %v5969
      %v5971 = vrot.slane %v5970, 1
      %v5972 = vmax.f32 %v5970, %v5971
      %v5973 = vsel %vm561, %v5037, -inf
      %v5974 = vrot.slane %v5973, 4
      %v5975 = vmax.f32 %v5973, %v5974
      %v5976 = vrot.slane %v5975, 2
      %v5977 = vmax.f32 %v5975, %v5976
      %v5978 = vrot.slane %v5977, 1
      %v5979 = vmax.f32 %v5977, %v5978
      %v5980 = vsel %vm561, %v5039, -inf
      %v5981 = vrot.slane %v5980, 4
      %v5982 = vmax.f32 %v5980, %v5981
      %v5983 = vrot.slane %v5982, 2
      %v5984 = vmax.f32 %v5982, %v5983
      %v5985 = vrot.slane %v5984, 1
      %v5986 = vmax.f32 %v5984, %v5985
      %v5987 = vsel %vm561, %v5047, -inf
      %v5988 = vrot.slane %v5987, 4
      %v5989 = vmax.f32 %v5987, %v5988
      %v5990 = vrot.slane %v5989, 2
      %v5991 = vmax.f32 %v5989, %v5990
      %v5992 = vrot.slane %v5991, 1
      %v5993 = vmax.f32 %v5991, %v5992
      %v5994 = vsel %vm561, %v5055, -inf
      %v5995 = vrot.slane %v5994, 4
      %v5996 = vmax.f32 %v5994, %v5995
      %v5997 = vrot.slane %v5996, 2
      %v5998 = vmax.f32 %v5996, %v5997
      %v5999 = vrot.slane %v5998, 1
      %v6000 = vmax.f32 %v5998, %v5999
      %v6001 = vsel %vm561, %v5054, -inf
      %v6002 = vrot.slane %v6001, 4
      %v6003 = vmax.f32 %v6001, %v6002
      %v6004 = vrot.slane %v6003, 2
      %v6005 = vmax.f32 %v6003, %v6004
      %v6006 = vrot.slane %v6005, 1
      %v6007 = vmax.f32 %v6005, %v6006
      %v6008 = vsel %vm561, %v5056, -inf
      %v6009 = vrot.slane %v6008, 4
      %v6010 = vmax.f32 %v6008, %v6009
      %v6011 = vrot.slane %v6010, 2
      %v6012 = vmax.f32 %v6010, %v6011
      %v6013 = vrot.slane %v6012, 1
      %v6014 = vmax.f32 %v6012, %v6013
      %v6015 = vsel %vm561, %v5064, -inf
      %v6016 = vrot.slane %v6015, 4
      %v6017 = vmax.f32 %v6015, %v6016
      %v6018 = vrot.slane %v6017, 2
      %v6019 = vmax.f32 %v6017, %v6018
      %v6020 = vrot.slane %v6019, 1
      %v6021 = vmax.f32 %v6019, %v6020
      %v6022 = vsel %vm561, %v5072, -inf
      %v6023 = vrot.slane %v6022, 4
      %v6024 = vmax.f32 %v6022, %v6023
      %v6025 = vrot.slane %v6024, 2
      %v6026 = vmax.f32 %v6024, %v6025
      %v6027 = vrot.slane %v6026, 1
      %v6028 = vmax.f32 %v6026, %v6027
      %v6029 = vsel %vm561, %v5071, -inf
      %v6030 = vrot.slane %v6029, 4
      %v6031 = vmax.f32 %v6029, %v6030
      %v6032 = vrot.slane %v6031, 2
      %v6033 = vmax.f32 %v6031, %v6032
      %v6034 = vrot.slane %v6033, 1
      %v6035 = vmax.f32 %v6033, %v6034
      %v6036 = vsel %vm561, %v5073, -inf
      %v6037 = vrot.slane %v6036, 4
      %v6038 = vmax.f32 %v6036, %v6037
      %v6039 = vrot.slane %v6038, 2
      %v6040 = vmax.f32 %v6038, %v6039
      %v6041 = vrot.slane %v6040, 1
      %v6042 = vmax.f32 %v6040, %v6041
      %v6043 = vsel %vm561, %v5081, -inf
      %v6044 = vrot.slane %v6043, 4
      %v6045 = vmax.f32 %v6043, %v6044
      %v6046 = vrot.slane %v6045, 2
      %v6047 = vmax.f32 %v6045, %v6046
      %v6048 = vrot.slane %v6047, 1
      %v6049 = vmax.f32 %v6047, %v6048
      %v6050 = vsel %vm561, %v5089, -inf
      %v6051 = vrot.slane %v6050, 4
      %v6052 = vmax.f32 %v6050, %v6051
      %v6053 = vrot.slane %v6052, 2
      %v6054 = vmax.f32 %v6052, %v6053
      %v6055 = vrot.slane %v6054, 1
      %v6056 = vmax.f32 %v6054, %v6055
      %v6057 = vsel %vm561, %v5088, -inf
      %v6058 = vrot.slane %v6057, 4
      %v6059 = vmax.f32 %v6057, %v6058
      %v6060 = vrot.slane %v6059, 2
      %v6061 = vmax.f32 %v6059, %v6060
      %v6062 = vrot.slane %v6061, 1
      %v6063 = vmax.f32 %v6061, %v6062
      %v6064 = vsel %vm561, %v5090, -inf
      %v6065 = vrot.slane %v6064, 4
      %v6066 = vmax.f32 %v6064, %v6065
      %v6067 = vrot.slane %v6066, 2
      %v6068 = vmax.f32 %v6066, %v6067
      %v6069 = vrot.slane %v6068, 1
      %v6070 = vmax.f32 %v6068, %v6069
      %v6071 = vsel %vm561, %v5098, -inf
      %v6072 = vrot.slane %v6071, 4
      %v6073 = vmax.f32 %v6071, %v6072
      %v6074 = vrot.slane %v6073, 2
      %v6075 = vmax.f32 %v6073, %v6074
      %v6076 = vrot.slane %v6075, 1
      %v6077 = vmax.f32 %v6075, %v6076
      %v6078 = vsel %vm561, %v5106, -inf
      %v6079 = vrot.slane %v6078, 4
      %v6080 = vmax.f32 %v6078, %v6079
      %v6081 = vrot.slane %v6080, 2
      %v6082 = vmax.f32 %v6080, %v6081
      %v6083 = vrot.slane %v6082, 1
      %v6084 = vmax.f32 %v6082, %v6083
      %v6085 = vsel %vm561, %v5105, -inf
      %v6086 = vrot.slane %v6085, 4
      %v6087 = vmax.f32 %v6085, %v6086
      %v6088 = vrot.slane %v6087, 2
      %v6089 = vmax.f32 %v6087, %v6088
      %v6090 = vrot.slane %v6089, 1
      %v6091 = vmax.f32 %v6089, %v6090
      %v6092 = vsel %vm561, %v5107, -inf
      %v6093 = vrot.slane %v6092, 4
      %v6094 = vmax.f32 %v6092, %v6093
      %v6095 = vrot.slane %v6094, 2
      %v6096 = vmax.f32 %v6094, %v6095
      %v6097 = vrot.slane %v6096, 1
      %v6098 = vmax.f32 %v6096, %v6097
      %v6099 = vsel %vm561, %v5115, -inf
      %v6100 = vrot.slane %v6099, 4
      %v6101 = vmax.f32 %v6099, %v6100
      %v6102 = vrot.slane %v6101, 2
      %v6103 = vmax.f32 %v6101, %v6102
      %v6104 = vrot.slane %v6103, 1
      %v6105 = vmax.f32 %v6103, %v6104
      %v6106 = vsel %vm561, %v5123, -inf
      %v6107 = vrot.slane %v6106, 4
      %v6108 = vmax.f32 %v6106, %v6107
      %v6109 = vrot.slane %v6108, 2
      %v6110 = vmax.f32 %v6108, %v6109
      %v6111 = vrot.slane %v6110, 1
      %v6112 = vmax.f32 %v6110, %v6111
      %v6113 = vsel %vm561, %v5122, -inf
      %v6114 = vrot.slane %v6113, 4
      %v6115 = vmax.f32 %v6113, %v6114
      %v6116 = vrot.slane %v6115, 2
      %v6117 = vmax.f32 %v6115, %v6116
      %v6118 = vrot.slane %v6117, 1
      %v6119 = vmax.f32 %v6117, %v6118
      %v6120 = vsel %vm561, %v5124, -inf
      %v6121 = vrot.slane %v6120, 4
      %v6122 = vmax.f32 %v6120, %v6121
      %v6123 = vrot.slane %v6122, 2
      %v6124 = vmax.f32 %v6122, %v6123
      %v6125 = vrot.slane %v6124, 1
      %v6126 = vmax.f32 %v6124, %v6125
      %v6127 = vsel %vm561, %v5132, -inf
      %v6128 = vrot.slane %v6127, 4
      %v6129 = vmax.f32 %v6127, %v6128
      %v6130 = vrot.slane %v6129, 2
      %v6131 = vmax.f32 %v6129, %v6130
      %v6132 = vrot.slane %v6131, 1
      %v6133 = vmax.f32 %v6131, %v6132
      %v6134 = vsel %vm561, %v5140, -inf
      %v6135 = vrot.slane %v6134, 4
      %v6136 = vmax.f32 %v6134, %v6135
      %v6137 = vrot.slane %v6136, 2
      %v6138 = vmax.f32 %v6136, %v6137
      %v6139 = vrot.slane %v6138, 1
      %v6140 = vmax.f32 %v6138, %v6139
      %v6141 = vsel %vm561, %v5139, -inf
      %v6142 = vrot.slane %v6141, 4
      %v6143 = vmax.f32 %v6141, %v6142
      %v6144 = vrot.slane %v6143, 2
      %v6145 = vmax.f32 %v6143, %v6144
      %v6146 = vrot.slane %v6145, 1
      %v6147 = vmax.f32 %v6145, %v6146
      %v6148 = vsel %vm561, %v5141, -inf
      %v6149 = vrot.slane %v6148, 4
      %v6150 = vmax.f32 %v6148, %v6149
      %v6151 = vrot.slane %v6150, 2
      %v6152 = vmax.f32 %v6150, %v6151
      %v6153 = vrot.slane %v6152, 1
      %v6154 = vmax.f32 %v6152, %v6153
      %v6155 = vsel %vm561, %v5149, -inf
      %v6156 = vrot.slane %v6155, 4
      %v6157 = vmax.f32 %v6155, %v6156
      %v6158 = vrot.slane %v6157, 2
      %v6159 = vmax.f32 %v6157, %v6158
      %v6160 = vrot.slane %v6159, 1
      %v6161 = vmax.f32 %v6159, %v6160
      %v6162 = vsel %vm561, %v5157, -inf
      %v6163 = vrot.slane %v6162, 4
      %v6164 = vmax.f32 %v6162, %v6163
      %v6165 = vrot.slane %v6164, 2
      %v6166 = vmax.f32 %v6164, %v6165
      %v6167 = vrot.slane %v6166, 1
      %v6168 = vmax.f32 %v6166, %v6167
      %v6169 = vsel %vm561, %v5156, -inf
      %v6170 = vrot.slane %v6169, 4
      %v6171 = vmax.f32 %v6169, %v6170
      %v6172 = vrot.slane %v6171, 2
      %v6173 = vmax.f32 %v6171, %v6172
      %v6174 = vrot.slane %v6173, 1
      %v6175 = vmax.f32 %v6173, %v6174
      %v6176 = vsel %vm561, %v5158, -inf
      %v6177 = vrot.slane %v6176, 4
      %v6178 = vmax.f32 %v6176, %v6177
      %v6179 = vrot.slane %v6178, 2
      %v6180 = vmax.f32 %v6178, %v6179
      %v6181 = vrot.slane %v6180, 1
      %v6182 = vmax.f32 %v6180, %v6181
      %6183 = vst.msk [vmem:[#allocation3] sm:$0xff] %vm558, 0.0
      %6184 = vst.msk [vmem:[#allocation3 + $0x8] sm:$0x3] %vm561, 0.0
      %s6185 = scalar_lea.vmem [#allocation3], 272
      %6186 = vst.msk [vmem:[%s6185] sm:$0xff] %vm558, 0.0
      %6187 = vst.msk [vmem:[%s6185 + $0x8] sm:$0x3] %vm561, 0.0
      %6188 = vst.msk [vmem:[#allocation3] sm:$0x1] %vm567, 0.0
      %6189 = vst.msk [vmem:[#allocation3 + $0x10] sm:$0x1] %vm567, 0.0
      %6190 = vst.msk [vmem:[#allocation3 + $0x20] sm:$0x1] %vm567, 0.0
      %6191 = vst.msk [vmem:[#allocation3 + $0x30] sm:$0x1] %vm567, 0.0
      %6192 = vst.msk [vmem:[#allocation3 + $0x40] sm:$0x1] %vm567, 0.0
      %6193 = vst.msk [vmem:[#allocation3 + $0x50] sm:$0x1] %vm567, 0.0
      %6194 = vst.msk [vmem:[#allocation3 + $0x60] sm:$0x1] %vm567, 0.0
      %6195 = vst.msk [vmem:[#allocation3 + $0x70] sm:$0x1] %vm567, 0.0
      %6196 = vst.msk [vmem:[#allocation3 + $0x80] sm:$0x1] %vm567, 0.0
      %6197 = vst.msk [vmem:[#allocation3 + $0x90] sm:$0x1] %vm567, 0.0
      %6198 = vst.msk [vmem:[#allocation3 + $0xa0] sm:$0x1] %vm567, 0.0
      %6199 = vst.msk [vmem:[#allocation3 + $0xb0] sm:$0x1] %vm567, 0.0
      %6200 = vst.msk [vmem:[#allocation3 + $0xc0] sm:$0x1] %vm567, 0.0
      %6201 = vst.msk [vmem:[#allocation3 + $0xd0] sm:$0x1] %vm567, 0.0
      %6202 = vst.msk [vmem:[#allocation3 + $0xe0] sm:$0x1] %vm567, 0.0
      %6203 = vst.msk [vmem:[#allocation3 + $0xf0] sm:$0x1] %vm567, 0.0
      %6204 = vst.msk [vmem:[#allocation3 + $0x100] sm:$0x1] %vm567, 0.0
      %6205 = vst.msk [vmem:[#allocation3 + $0x110] sm:$0x1] %vm567, 0.0
      %6206 = vst.msk [vmem:[#allocation3 + $0x9] sm:$0x1] %vm567, 0.0
      %6207 = vst.msk [vmem:[#allocation3 + $0x19] sm:$0x1] %vm567, 0.0
      %6208 = vst.msk [vmem:[#allocation3 + $0x29] sm:$0x1] %vm567, 0.0
      %6209 = vst.msk [vmem:[#allocation3 + $0x39] sm:$0x1] %vm567, 0.0
      %6210 = vst.msk [vmem:[#allocation3 + $0x49] sm:$0x1] %vm567, 0.0
      %6211 = vst.msk [vmem:[#allocation3 + $0x59] sm:$0x1] %vm567, 0.0
      %6212 = vst.msk [vmem:[#allocation3 + $0x69] sm:$0x1] %vm567, 0.0
      %6213 = vst.msk [vmem:[#allocation3 + $0x79] sm:$0x1] %vm567, 0.0
      %6214 = vst.msk [vmem:[#allocation3 + $0x89] sm:$0x1] %vm567, 0.0
      %6215 = vst.msk [vmem:[#allocation3 + $0x99] sm:$0x1] %vm567, 0.0
      %6216 = vst.msk [vmem:[#allocation3 + $0xa9] sm:$0x1] %vm567, 0.0
      %6217 = vst.msk [vmem:[#allocation3 + $0xb9] sm:$0x1] %vm567, 0.0
      %6218 = vst.msk [vmem:[#allocation3 + $0xc9] sm:$0x1] %vm567, 0.0
      %6219 = vst.msk [vmem:[#allocation3 + $0xd9] sm:$0x1] %vm567, 0.0
      %6220 = vst.msk [vmem:[#allocation3 + $0xe9] sm:$0x1] %vm567, 0.0
      %6221 = vst.msk [vmem:[#allocation3 + $0xf9] sm:$0x1] %vm567, 0.0
      %6222 = vst.msk [vmem:[#allocation3 + $0x109] sm:$0x1] %vm567, 0.0
      %6223 = vst.msk [vmem:[#allocation3 + $0x119] sm:$0x1] %vm567, 0.0
      %vm6352 = vcmask 1041409
      %v6353 = vsel %vm6352, %v5300, %v5293
      %vm6354 = vcmask 1042434
      %v6355 = vsel %vm6354, %v5307, %v6353
      %vm6356 = vcmask 1043459
      %v6357 = vsel %vm6356, %v5314, %v6355
      %vm6358 = vcmask 1044484
      %v6359 = vsel %vm6358, %v5321, %v6357
      %vm6360 = vcmask 1045509
      %v6361 = vsel %vm6360, %v5328, %v6359
      %vm6362 = vcmask 1046534
      %v6363 = vsel %vm6362, %v5335, %v6361
      %vm6364 = vcmask 1047559
      %v6365 = vsel %vm6364, %v5342, %v6363
      %v6366 = vsel %vm6352, %v5356, %v5349
      %v6367 = vsel %vm6354, %v5363, %v6366
      %v6368 = vsel %vm6356, %v5370, %v6367
      %v6369 = vsel %vm6358, %v5377, %v6368
      %v6370 = vsel %vm6360, %v5384, %v6369
      %v6371 = vsel %vm6362, %v5391, %v6370
      %v6372 = vsel %vm6364, %v5398, %v6371
      %v6373 = vsel %vm6352, %v5412, %v5405
      %v6374 = vsel %vm6354, %v5419, %v6373
      %v6375 = vsel %vm6356, %v5426, %v6374
      %v6376 = vsel %vm6358, %v5433, %v6375
      %v6377 = vsel %vm6360, %v5440, %v6376
      %v6378 = vsel %vm6362, %v5447, %v6377
      %v6379 = vsel %vm6364, %v5454, %v6378
      %v6380 = vsel %vm6352, %v5468, %v5461
      %v6381 = vsel %vm6354, %v5475, %v6380
      %v6382 = vsel %vm6356, %v5482, %v6381
      %v6383 = vsel %vm6358, %v5489, %v6382
      %v6384 = vsel %vm6360, %v5496, %v6383
      %v6385 = vsel %vm6362, %v5503, %v6384
      %v6386 = vsel %vm6364, %v5510, %v6385
      %v6387 = vsel %vm6352, %v5524, %v5517
      %v6388 = vsel %vm6354, %v5531, %v6387
      %v6389 = vsel %vm6356, %v5538, %v6388
      %v6390 = vsel %vm6358, %v5545, %v6389
      %v6391 = vsel %vm6360, %v5552, %v6390
      %v6392 = vsel %vm6362, %v5559, %v6391
      %v6393 = vsel %vm6364, %v5566, %v6392
      %v6394 = vsel %vm6352, %v5580, %v5573
      %v6395 = vsel %vm6354, %v5587, %v6394
      %v6396 = vsel %vm6356, %v5594, %v6395
      %v6397 = vsel %vm6358, %v5601, %v6396
      %v6398 = vsel %vm6360, %v5608, %v6397
      %v6399 = vsel %vm6362, %v5615, %v6398
      %v6400 = vsel %vm6364, %v5622, %v6399
      %v6401 = vsel %vm6352, %v5636, %v5629
      %v6402 = vsel %vm6354, %v5643, %v6401
      %v6403 = vsel %vm6356, %v5650, %v6402
      %v6404 = vsel %vm6358, %v5657, %v6403
      %v6405 = vsel %vm6360, %v5664, %v6404
      %v6406 = vsel %vm6362, %v5671, %v6405
      %v6407 = vsel %vm6364, %v5678, %v6406
      %v6408 = vsel %vm6352, %v5692, %v5685
      %v6409 = vsel %vm6354, %v5699, %v6408
      %v6410 = vsel %vm6356, %v5706, %v6409
      %v6411 = vsel %vm6358, %v5713, %v6410
      %v6412 = vsel %vm6360, %v5720, %v6411
      %v6413 = vsel %vm6362, %v5727, %v6412
      %v6414 = vsel %vm6364, %v5734, %v6413
      %v6415 = vsel %vm6352, %v5748, %v5741
      %v6416 = vsel %vm6354, %v5755, %v6415
      %v6417 = vsel %vm6356, %v5762, %v6416
      %v6418 = vsel %vm6358, %v5769, %v6417
      %v6419 = vsel %vm6360, %v5776, %v6418
      %v6420 = vsel %vm6362, %v5783, %v6419
      %v6421 = vsel %vm6364, %v5790, %v6420
      %v6422 = vsel %vm6352, %v5804, %v5797
      %v6423 = vsel %vm6354, %v5811, %v6422
      %v6424 = vsel %vm6356, %v5818, %v6423
      %v6425 = vsel %vm6358, %v5825, %v6424
      %v6426 = vsel %vm6360, %v5832, %v6425
      %v6427 = vsel %vm6362, %v5839, %v6426
      %v6428 = vsel %vm6364, %v5846, %v6427
      %v6429 = vsel %vm6352, %v5860, %v5853
      %v6430 = vsel %vm6354, %v5867, %v6429
      %v6431 = vsel %vm6356, %v5874, %v6430
      %v6432 = vsel %vm6358, %v5881, %v6431
      %v6433 = vsel %vm6360, %v5888, %v6432
      %v6434 = vsel %vm6362, %v5895, %v6433
      %v6435 = vsel %vm6364, %v5902, %v6434
      %v6436 = vsel %vm6352, %v5916, %v5909
      %v6437 = vsel %vm6354, %v5923, %v6436
      %v6438 = vsel %vm6356, %v5930, %v6437
      %v6439 = vsel %vm6358, %v5937, %v6438
      %v6440 = vsel %vm6360, %v5944, %v6439
      %v6441 = vsel %vm6362, %v5951, %v6440
      %v6442 = vsel %vm6364, %v5958, %v6441
      %v6443 = vsel %vm6352, %v5972, %v5965
      %v6444 = vsel %vm6354, %v5979, %v6443
      %v6445 = vsel %vm6356, %v5986, %v6444
      %v6446 = vsel %vm6358, %v5993, %v6445
      %v6447 = vsel %vm6360, %v6000, %v6446
      %v6448 = vsel %vm6362, %v6007, %v6447
      %v6449 = vsel %vm6364, %v6014, %v6448
      %v6450 = vsel %vm6352, %v6028, %v6021
      %v6451 = vsel %vm6354, %v6035, %v6450
      %v6452 = vsel %vm6356, %v6042, %v6451
      %v6453 = vsel %vm6358, %v6049, %v6452
      %v6454 = vsel %vm6360, %v6056, %v6453
      %v6455 = vsel %vm6362, %v6063, %v6454
      %v6456 = vsel %vm6364, %v6070, %v6455
      %v6457 = vsel %vm6352, %v6084, %v6077
      %v6458 = vsel %vm6354, %v6091, %v6457
      %v6459 = vsel %vm6356, %v6098, %v6458
      %v6460 = vsel %vm6358, %v6105, %v6459
      %v6461 = vsel %vm6360, %v6112, %v6460
      %v6462 = vsel %vm6362, %v6119, %v6461
      %v6463 = vsel %vm6364, %v6126, %v6462
      %v6464 = vsel %vm6352, %v6140, %v6133
      %v6465 = vsel %vm6354, %v6147, %v6464
      %v6466 = vsel %vm6356, %v6154, %v6465
      %v6467 = vsel %vm6358, %v6161, %v6466
      %v6468 = vsel %vm6360, %v6168, %v6467
      %v6469 = vsel %vm6362, %v6175, %v6468
      %v6470 = vsel %vm6364, %v6182, %v6469
      %s6487 = scalar_lea.vmem [#allocation3], 16
      %6488 = vst.msk [vmem:[%s6487 + $0x1] sm:$0xff] %vm558, %v6365
      %6489 = vst.msk [vmem:[%s6487 + $0x11] sm:$0xff] %vm558, %v6372
      %6490 = vst.msk [vmem:[%s6487 + $0x21] sm:$0xff] %vm558, %v6379
      %6491 = vst.msk [vmem:[%s6487 + $0x31] sm:$0xff] %vm558, %v6386
      %6492 = vst.msk [vmem:[%s6487 + $0x41] sm:$0xff] %vm558, %v6393
      %6493 = vst.msk [vmem:[%s6487 + $0x51] sm:$0xff] %vm558, %v6400
      %6494 = vst.msk [vmem:[%s6487 + $0x61] sm:$0xff] %vm558, %v6407
      %6495 = vst.msk [vmem:[%s6487 + $0x71] sm:$0xff] %vm558, %v6414
      %6496 = vst.msk [vmem:[%s6487 + $0x81] sm:$0xff] %vm558, %v6421
      %6497 = vst.msk [vmem:[%s6487 + $0x91] sm:$0xff] %vm558, %v6428
      %6498 = vst.msk [vmem:[%s6487 + $0xa1] sm:$0xff] %vm558, %v6435
      %6499 = vst.msk [vmem:[%s6487 + $0xb1] sm:$0xff] %vm558, %v6442
      %6500 = vst.msk [vmem:[%s6487 + $0xc1] sm:$0xff] %vm558, %v6449
      %6501 = vst.msk [vmem:[%s6487 + $0xd1] sm:$0xff] %vm558, %v6456
      %6502 = vst.msk [vmem:[%s6487 + $0xe1] sm:$0xff] %vm558, %v6463
      %6503 = vst.msk [vmem:[%s6487 + $0xf1] sm:$0xff] %vm558, %v6470
      %v6504 = vld [vmem:[#allocation3] sm:$0xff]
      %v6505 = vld [vmem:[#allocation3 + $0x10] sm:$0xff]
      %v6506 = vld [vmem:[#allocation3 + $0x20] sm:$0xff]
      %v6507 = vld [vmem:[#allocation3 + $0x30] sm:$0xff]
      %v6508 = vld [vmem:[#allocation3 + $0x40] sm:$0xff]
      %v6509 = vld [vmem:[#allocation3 + $0x50] sm:$0xff]
      %v6510 = vld [vmem:[#allocation3 + $0x60] sm:$0xff]
      %v6511 = vld [vmem:[#allocation3 + $0x70] sm:$0xff]
      %v6512 = vld [vmem:[#allocation3 + $0x80] sm:$0xff]
      %v6513 = vld [vmem:[#allocation3 + $0x90] sm:$0xff]
      %v6514 = vld [vmem:[#allocation3 + $0xa0] sm:$0xff]
      %v6515 = vld [vmem:[#allocation3 + $0xb0] sm:$0xff]
      %v6516 = vld [vmem:[#allocation3 + $0xc0] sm:$0xff]
      %v6517 = vld [vmem:[#allocation3 + $0xd0] sm:$0xff]
      %v6518 = vld [vmem:[#allocation3 + $0xe0] sm:$0xff]
      %v6519 = vld [vmem:[#allocation3 + $0xf0] sm:$0xff]
      %6520 = vst.msk [vmem:[#allocation9] sm:$0xff] %vm558, %v6504
      %6521 = vst.msk [vmem:[#allocation9 + $0x18] sm:$0xff] %vm558, %v6505
      %6522 = vst.msk [vmem:[#allocation9 + $0x30] sm:$0xff] %vm558, %v6506
      %6523 = vst.msk [vmem:[#allocation9 + $0x48] sm:$0xff] %vm558, %v6507
      %6524 = vst.msk [vmem:[#allocation9 + $0x60] sm:$0xff] %vm558, %v6508
      %6525 = vst.msk [vmem:[#allocation9 + $0x78] sm:$0xff] %vm558, %v6509
      %6526 = vst.msk [vmem:[#allocation9 + $0x90] sm:$0xff] %vm558, %v6510
      %6527 = vst.msk [vmem:[#allocation9 + $0xa8] sm:$0xff] %vm558, %v6511
      %6528 = vst.msk [vmem:[#allocation9 + $0xc0] sm:$0xff] %vm558, %v6512
      %6529 = vst.msk [vmem:[#allocation9 + $0xd8] sm:$0xff] %vm558, %v6513
      %6530 = vst.msk [vmem:[#allocation9 + $0xf0] sm:$0xff] %vm558, %v6514
      %6531 = vst.msk [vmem:[#allocation9 + $0x108] sm:$0xff] %vm558, %v6515
      %6532 = vst.msk [vmem:[#allocation9 + $0x120] sm:$0xff] %vm558, %v6516
      %6533 = vst.msk [vmem:[#allocation9 + $0x138] sm:$0xff] %vm558, %v6517
      %6534 = vst.msk [vmem:[#allocation9 + $0x150] sm:$0xff] %vm558, %v6518
      %6535 = vst.msk [vmem:[#allocation9 + $0x168] sm:$0xff] %vm558, %v6519
      %v6536 = vld [vmem:[#allocation3 + $0x1] sm:$0xff]
      %v6537 = vld [vmem:[#allocation3 + $0x11] sm:$0xff]
      %v6538 = vld [vmem:[#allocation3 + $0x21] sm:$0xff]
      %v6539 = vld [vmem:[#allocation3 + $0x31] sm:$0xff]
      %v6540 = vld [vmem:[#allocation3 + $0x41] sm:$0xff]
      %v6541 = vld [vmem:[#allocation3 + $0x51] sm:$0xff]
      %v6542 = vld [vmem:[#allocation3 + $0x61] sm:$0xff]
      %v6543 = vld [vmem:[#allocation3 + $0x71] sm:$0xff]
      %v6544 = vld [vmem:[#allocation3 + $0x81] sm:$0xff]
      %v6545 = vld [vmem:[#allocation3 + $0x91] sm:$0xff]
      %v6546 = vld [vmem:[#allocation3 + $0xa1] sm:$0xff]
      %v6547 = vld [vmem:[#allocation3 + $0xb1] sm:$0xff]
      %v6548 = vld [vmem:[#allocation3 + $0xc1] sm:$0xff]
      %v6549 = vld [vmem:[#allocation3 + $0xd1] sm:$0xff]
      %v6550 = vld [vmem:[#allocation3 + $0xe1] sm:$0xff]
      %v6551 = vld [vmem:[#allocation3 + $0xf1] sm:$0xff]
      %6568 = vrot.lane.b32.xlu0 %v6536, 4
      %v6569 = vpop.permute.xlu0 %6568
      %6570 = vrot.lane.b32.xlu0 %v6537, 4
      %v6571 = vpop.permute.xlu0 %6570
      %6572 = vrot.lane.b32.xlu0 %v6538, 4
      %v6573 = vpop.permute.xlu0 %6572
      %6574 = vrot.lane.b32.xlu0 %v6539, 4
      %v6575 = vpop.permute.xlu0 %6574
      %6576 = vrot.lane.b32.xlu0 %v6540, 4
      %v6577 = vpop.permute.xlu0 %6576
      %6578 = vrot.lane.b32.xlu0 %v6541, 4
      %v6579 = vpop.permute.xlu0 %6578
      %6580 = vrot.lane.b32.xlu0 %v6542, 4
      %v6581 = vpop.permute.xlu0 %6580
      %6582 = vrot.lane.b32.xlu0 %v6543, 4
      %v6583 = vpop.permute.xlu0 %6582
      %6584 = vrot.lane.b32.xlu0 %v6544, 4
      %v6585 = vpop.permute.xlu0 %6584
      %6586 = vrot.lane.b32.xlu0 %v6545, 4
      %v6587 = vpop.permute.xlu0 %6586
      %6588 = vrot.lane.b32.xlu0 %v6546, 4
      %v6589 = vpop.permute.xlu0 %6588
      %6590 = vrot.lane.b32.xlu0 %v6547, 4
      %v6591 = vpop.permute.xlu0 %6590
      %6592 = vrot.lane.b32.xlu0 %v6548, 4
      %v6593 = vpop.permute.xlu0 %6592
      %6594 = vrot.lane.b32.xlu0 %v6549, 4
      %v6595 = vpop.permute.xlu0 %6594
      %6596 = vrot.lane.b32.xlu0 %v6550, 4
      %v6597 = vpop.permute.xlu0 %6596
      %6598 = vrot.lane.b32.xlu0 %v6551, 4
      %v6599 = vpop.permute.xlu0 %6598
      %6616 = vst.msk [vmem:[#allocation9] sm:$0xff] %vm1149, %v6569
      %6617 = vst.msk [vmem:[#allocation9 + $0x18] sm:$0xff] %vm1149, %v6571
      %6618 = vst.msk [vmem:[#allocation9 + $0x30] sm:$0xff] %vm1149, %v6573
      %6619 = vst.msk [vmem:[#allocation9 + $0x48] sm:$0xff] %vm1149, %v6575
      %6620 = vst.msk [vmem:[#allocation9 + $0x60] sm:$0xff] %vm1149, %v6577
      %6621 = vst.msk [vmem:[#allocation9 + $0x78] sm:$0xff] %vm1149, %v6579
      %6622 = vst.msk [vmem:[#allocation9 + $0x90] sm:$0xff] %vm1149, %v6581
      %6623 = vst.msk [vmem:[#allocation9 + $0xa8] sm:$0xff] %vm1149, %v6583
      %6624 = vst.msk [vmem:[#allocation9 + $0xc0] sm:$0xff] %vm1149, %v6585
      %6625 = vst.msk [vmem:[#allocation9 + $0xd8] sm:$0xff] %vm1149, %v6587
      %6626 = vst.msk [vmem:[#allocation9 + $0xf0] sm:$0xff] %vm1149, %v6589
      %6627 = vst.msk [vmem:[#allocation9 + $0x108] sm:$0xff] %vm1149, %v6591
      %6628 = vst.msk [vmem:[#allocation9 + $0x120] sm:$0xff] %vm1149, %v6593
      %6629 = vst.msk [vmem:[#allocation9 + $0x138] sm:$0xff] %vm1149, %v6595
      %6630 = vst.msk [vmem:[#allocation9 + $0x150] sm:$0xff] %vm1149, %v6597
      %6631 = vst.msk [vmem:[#allocation9 + $0x168] sm:$0xff] %vm1149, %v6599
      %v6632 = vld [vmem:[#allocation3 + $0x2] sm:$0xff]
      %v6633 = vld [vmem:[#allocation3 + $0x12] sm:$0xff]
      %v6634 = vld [vmem:[#allocation3 + $0x22] sm:$0xff]
      %v6635 = vld [vmem:[#allocation3 + $0x32] sm:$0xff]
      %v6636 = vld [vmem:[#allocation3 + $0x42] sm:$0xff]
      %v6637 = vld [vmem:[#allocation3 + $0x52] sm:$0xff]
      %v6638 = vld [vmem:[#allocation3 + $0x62] sm:$0xff]
      %v6639 = vld [vmem:[#allocation3 + $0x72] sm:$0xff]
      %v6640 = vld [vmem:[#allocation3 + $0x82] sm:$0xff]
      %v6641 = vld [vmem:[#allocation3 + $0x92] sm:$0xff]
      %v6642 = vld [vmem:[#allocation3 + $0xa2] sm:$0xff]
      %v6643 = vld [vmem:[#allocation3 + $0xb2] sm:$0xff]
      %v6644 = vld [vmem:[#allocation3 + $0xc2] sm:$0xff]
      %v6645 = vld [vmem:[#allocation3 + $0xd2] sm:$0xff]
      %v6646 = vld [vmem:[#allocation3 + $0xe2] sm:$0xff]
      %v6647 = vld [vmem:[#allocation3 + $0xf2] sm:$0xff]
      %6664 = vrot.lane.b32.xlu0 %v6632, 8
      %v6665 = vpop.permute.xlu0 %6664
      %6666 = vrot.lane.b32.xlu0 %v6633, 8
      %v6667 = vpop.permute.xlu0 %6666
      %6668 = vrot.lane.b32.xlu0 %v6634, 8
      %v6669 = vpop.permute.xlu0 %6668
      %6670 = vrot.lane.b32.xlu0 %v6635, 8
      %v6671 = vpop.permute.xlu0 %6670
      %6672 = vrot.lane.b32.xlu0 %v6636, 8
      %v6673 = vpop.permute.xlu0 %6672
      %6674 = vrot.lane.b32.xlu0 %v6637, 8
      %v6675 = vpop.permute.xlu0 %6674
      %6676 = vrot.lane.b32.xlu0 %v6638, 8
      %v6677 = vpop.permute.xlu0 %6676
      %6678 = vrot.lane.b32.xlu0 %v6639, 8
      %v6679 = vpop.permute.xlu0 %6678
      %6680 = vrot.lane.b32.xlu0 %v6640, 8
      %v6681 = vpop.permute.xlu0 %6680
      %6682 = vrot.lane.b32.xlu0 %v6641, 8
      %v6683 = vpop.permute.xlu0 %6682
      %6684 = vrot.lane.b32.xlu0 %v6642, 8
      %v6685 = vpop.permute.xlu0 %6684
      %6686 = vrot.lane.b32.xlu0 %v6643, 8
      %v6687 = vpop.permute.xlu0 %6686
      %6688 = vrot.lane.b32.xlu0 %v6644, 8
      %v6689 = vpop.permute.xlu0 %6688
      %6690 = vrot.lane.b32.xlu0 %v6645, 8
      %v6691 = vpop.permute.xlu0 %6690
      %6692 = vrot.lane.b32.xlu0 %v6646, 8
      %v6693 = vpop.permute.xlu0 %6692
      %6694 = vrot.lane.b32.xlu0 %v6647, 8
      %v6695 = vpop.permute.xlu0 %6694
      %6712 = vst.msk [vmem:[#allocation9] sm:$0xff] %vm1534, %v6665
      %6713 = vst.msk [vmem:[#allocation9 + $0x18] sm:$0xff] %vm1534, %v6667
      %6714 = vst.msk [vmem:[#allocation9 + $0x30] sm:$0xff] %vm1534, %v6669
      %6715 = vst.msk [vmem:[#allocation9 + $0x48] sm:$0xff] %vm1534, %v6671
      %6716 = vst.msk [vmem:[#allocation9 + $0x60] sm:$0xff] %vm1534, %v6673
      %6717 = vst.msk [vmem:[#allocation9 + $0x78] sm:$0xff] %vm1534, %v6675
      %6718 = vst.msk [vmem:[#allocation9 + $0x90] sm:$0xff] %vm1534, %v6677
      %6719 = vst.msk [vmem:[#allocation9 + $0xa8] sm:$0xff] %vm1534, %v6679
      %6720 = vst.msk [vmem:[#allocation9 + $0xc0] sm:$0xff] %vm1534, %v6681
      %6721 = vst.msk [vmem:[#allocation9 + $0xd8] sm:$0xff] %vm1534, %v6683
      %6722 = vst.msk [vmem:[#allocation9 + $0xf0] sm:$0xff] %vm1534, %v6685
      %6723 = vst.msk [vmem:[#allocation9 + $0x108] sm:$0xff] %vm1534, %v6687
      %6724 = vst.msk [vmem:[#allocation9 + $0x120] sm:$0xff] %vm1534, %v6689
      %6725 = vst.msk [vmem:[#allocation9 + $0x138] sm:$0xff] %vm1534, %v6691
      %6726 = vst.msk [vmem:[#allocation9 + $0x150] sm:$0xff] %vm1534, %v6693
      %6727 = vst.msk [vmem:[#allocation9 + $0x168] sm:$0xff] %vm1534, %v6695
      %v6728 = vld [vmem:[%s6487] sm:$0xff]
      %v6729 = vld [vmem:[%s6487 + $0x10] sm:$0xff]
      %v6730 = vld [vmem:[%s6487 + $0x20] sm:$0xff]
      %v6731 = vld [vmem:[%s6487 + $0x30] sm:$0xff]
      %v6732 = vld [vmem:[%s6487 + $0x40] sm:$0xff]
      %v6733 = vld [vmem:[%s6487 + $0x50] sm:$0xff]
      %v6734 = vld [vmem:[%s6487 + $0x60] sm:$0xff]
      %v6735 = vld [vmem:[%s6487 + $0x70] sm:$0xff]
      %v6736 = vld [vmem:[%s6487 + $0x80] sm:$0xff]
      %v6737 = vld [vmem:[%s6487 + $0x90] sm:$0xff]
      %v6738 = vld [vmem:[%s6487 + $0xa0] sm:$0xff]
      %v6739 = vld [vmem:[%s6487 + $0xb0] sm:$0xff]
      %v6740 = vld [vmem:[%s6487 + $0xc0] sm:$0xff]
      %v6741 = vld [vmem:[%s6487 + $0xd0] sm:$0xff]
      %v6742 = vld [vmem:[%s6487 + $0xe0] sm:$0xff]
      %v6743 = vld [vmem:[%s6487 + $0xf0] sm:$0xff]
      %6760 = vrot.lane.b32.xlu0 %v6728, 12
      %v6761 = vpop.permute.xlu0 %6760
      %6762 = vrot.lane.b32.xlu0 %v6729, 12
      %v6763 = vpop.permute.xlu0 %6762
      %6764 = vrot.lane.b32.xlu0 %v6730, 12
      %v6765 = vpop.permute.xlu0 %6764
      %6766 = vrot.lane.b32.xlu0 %v6731, 12
      %v6767 = vpop.permute.xlu0 %6766
      %6768 = vrot.lane.b32.xlu0 %v6732, 12
      %v6769 = vpop.permute.xlu0 %6768
      %6770 = vrot.lane.b32.xlu0 %v6733, 12
      %v6771 = vpop.permute.xlu0 %6770
      %6772 = vrot.lane.b32.xlu0 %v6734, 12
      %v6773 = vpop.permute.xlu0 %6772
      %6774 = vrot.lane.b32.xlu0 %v6735, 12
      %v6775 = vpop.permute.xlu0 %6774
      %6776 = vrot.lane.b32.xlu0 %v6736, 12
      %v6777 = vpop.permute.xlu0 %6776
      %6778 = vrot.lane.b32.xlu0 %v6737, 12
      %v6779 = vpop.permute.xlu0 %6778
      %6780 = vrot.lane.b32.xlu0 %v6738, 12
      %v6781 = vpop.permute.xlu0 %6780
      %6782 = vrot.lane.b32.xlu0 %v6739, 12
      %v6783 = vpop.permute.xlu0 %6782
      %6784 = vrot.lane.b32.xlu0 %v6740, 12
      %v6785 = vpop.permute.xlu0 %6784
      %6786 = vrot.lane.b32.xlu0 %v6741, 12
      %v6787 = vpop.permute.xlu0 %6786
      %6788 = vrot.lane.b32.xlu0 %v6742, 12
      %v6789 = vpop.permute.xlu0 %6788
      %6790 = vrot.lane.b32.xlu0 %v6743, 12
      %v6791 = vpop.permute.xlu0 %6790
      %6808 = vst.msk [vmem:[#allocation9] sm:$0xff] %vm1919, %v6761
      %6809 = vst.msk [vmem:[#allocation9 + $0x18] sm:$0xff] %vm1919, %v6763
      %6810 = vst.msk [vmem:[#allocation9 + $0x30] sm:$0xff] %vm1919, %v6765
      %6811 = vst.msk [vmem:[#allocation9 + $0x48] sm:$0xff] %vm1919, %v6767
      %6812 = vst.msk [vmem:[#allocation9 + $0x60] sm:$0xff] %vm1919, %v6769
      %6813 = vst.msk [vmem:[#allocation9 + $0x78] sm:$0xff] %vm1919, %v6771
      %6814 = vst.msk [vmem:[#allocation9 + $0x90] sm:$0xff] %vm1919, %v6773
      %6815 = vst.msk [vmem:[#allocation9 + $0xa8] sm:$0xff] %vm1919, %v6775
      %6816 = vst.msk [vmem:[#allocation9 + $0xc0] sm:$0xff] %vm1919, %v6777
      %6817 = vst.msk [vmem:[#allocation9 + $0xd8] sm:$0xff] %vm1919, %v6779
      %6818 = vst.msk [vmem:[#allocation9 + $0xf0] sm:$0xff] %vm1919, %v6781
      %6819 = vst.msk [vmem:[#allocation9 + $0x108] sm:$0xff] %vm1919, %v6783
      %6820 = vst.msk [vmem:[#allocation9 + $0x120] sm:$0xff] %vm1919, %v6785
      %6821 = vst.msk [vmem:[#allocation9 + $0x138] sm:$0xff] %vm1919, %v6787
      %6822 = vst.msk [vmem:[#allocation9 + $0x150] sm:$0xff] %vm1919, %v6789
      %6823 = vst.msk [vmem:[#allocation9 + $0x168] sm:$0xff] %vm1919, %v6791
      %v6824 = vld [vmem:[%s6487 + $0x1] sm:$0xff]
      %v6825 = vld [vmem:[%s6487 + $0x11] sm:$0xff]
      %v6826 = vld [vmem:[%s6487 + $0x21] sm:$0xff]
      %v6827 = vld [vmem:[%s6487 + $0x31] sm:$0xff]
      %v6828 = vld [vmem:[%s6487 + $0x41] sm:$0xff]
      %v6829 = vld [vmem:[%s6487 + $0x51] sm:$0xff]
      %v6830 = vld [vmem:[%s6487 + $0x61] sm:$0xff]
      %v6831 = vld [vmem:[%s6487 + $0x71] sm:$0xff]
      %v6832 = vld [vmem:[%s6487 + $0x81] sm:$0xff]
      %v6833 = vld [vmem:[%s6487 + $0x91] sm:$0xff]
      %v6834 = vld [vmem:[%s6487 + $0xa1] sm:$0xff]
      %v6835 = vld [vmem:[%s6487 + $0xb1] sm:$0xff]
      %v6836 = vld [vmem:[%s6487 + $0xc1] sm:$0xff]
      %v6837 = vld [vmem:[%s6487 + $0xd1] sm:$0xff]
      %v6838 = vld [vmem:[%s6487 + $0xe1] sm:$0xff]
      %v6839 = vld [vmem:[%s6487 + $0xf1] sm:$0xff]
      %6856 = vrot.lane.b32.xlu0 %v6824, 16
      %v6857 = vpop.permute.xlu0 %6856
      %6858 = vrot.lane.b32.xlu0 %v6825, 16
      %v6859 = vpop.permute.xlu0 %6858
      %6860 = vrot.lane.b32.xlu0 %v6826, 16
      %v6861 = vpop.permute.xlu0 %6860
      %6862 = vrot.lane.b32.xlu0 %v6827, 16
      %v6863 = vpop.permute.xlu0 %6862
      %6864 = vrot.lane.b32.xlu0 %v6828, 16
      %v6865 = vpop.permute.xlu0 %6864
      %6866 = vrot.lane.b32.xlu0 %v6829, 16
      %v6867 = vpop.permute.xlu0 %6866
      %6868 = vrot.lane.b32.xlu0 %v6830, 16
      %v6869 = vpop.permute.xlu0 %6868
      %6870 = vrot.lane.b32.xlu0 %v6831, 16
      %v6871 = vpop.permute.xlu0 %6870
      %6872 = vrot.lane.b32.xlu0 %v6832, 16
      %v6873 = vpop.permute.xlu0 %6872
      %6874 = vrot.lane.b32.xlu0 %v6833, 16
      %v6875 = vpop.permute.xlu0 %6874
      %6876 = vrot.lane.b32.xlu0 %v6834, 16
      %v6877 = vpop.permute.xlu0 %6876
      %6878 = vrot.lane.b32.xlu0 %v6835, 16
      %v6879 = vpop.permute.xlu0 %6878
      %6880 = vrot.lane.b32.xlu0 %v6836, 16
      %v6881 = vpop.permute.xlu0 %6880
      %6882 = vrot.lane.b32.xlu0 %v6837, 16
      %v6883 = vpop.permute.xlu0 %6882
      %6884 = vrot.lane.b32.xlu0 %v6838, 16
      %v6885 = vpop.permute.xlu0 %6884
      %6886 = vrot.lane.b32.xlu0 %v6839, 16
      %v6887 = vpop.permute.xlu0 %6886
      %6904 = vst.msk [vmem:[#allocation9] sm:$0xff] %vm2304, %v6857
      %6905 = vst.msk [vmem:[#allocation9 + $0x18] sm:$0xff] %vm2304, %v6859
      %6906 = vst.msk [vmem:[#allocation9 + $0x30] sm:$0xff] %vm2304, %v6861
      %6907 = vst.msk [vmem:[#allocation9 + $0x48] sm:$0xff] %vm2304, %v6863
      %6908 = vst.msk [vmem:[#allocation9 + $0x60] sm:$0xff] %vm2304, %v6865
      %6909 = vst.msk [vmem:[#allocation9 + $0x78] sm:$0xff] %vm2304, %v6867
      %6910 = vst.msk [vmem:[#allocation9 + $0x90] sm:$0xff] %vm2304, %v6869
      %6911 = vst.msk [vmem:[#allocation9 + $0xa8] sm:$0xff] %vm2304, %v6871
      %6912 = vst.msk [vmem:[#allocation9 + $0xc0] sm:$0xff] %vm2304, %v6873
      %6913 = vst.msk [vmem:[#allocation9 + $0xd8] sm:$0xff] %vm2304, %v6875
      %6914 = vst.msk [vmem:[#allocation9 + $0xf0] sm:$0xff] %vm2304, %v6877
      %6915 = vst.msk [vmem:[#allocation9 + $0x108] sm:$0xff] %vm2304, %v6879
      %6916 = vst.msk [vmem:[#allocation9 + $0x120] sm:$0xff] %vm2304, %v6881
      %6917 = vst.msk [vmem:[#allocation9 + $0x138] sm:$0xff] %vm2304, %v6883
      %6918 = vst.msk [vmem:[#allocation9 + $0x150] sm:$0xff] %vm2304, %v6885
      %6919 = vst.msk [vmem:[#allocation9 + $0x168] sm:$0xff] %vm2304, %v6887
      %v6920 = vld [vmem:[%s6487 + $0x2] sm:$0xff]
      %v6921 = vld [vmem:[%s6487 + $0x12] sm:$0xff]
      %v6922 = vld [vmem:[%s6487 + $0x22] sm:$0xff]
      %v6923 = vld [vmem:[%s6487 + $0x32] sm:$0xff]
      %v6924 = vld [vmem:[%s6487 + $0x42] sm:$0xff]
      %v6925 = vld [vmem:[%s6487 + $0x52] sm:$0xff]
      %v6926 = vld [vmem:[%s6487 + $0x62] sm:$0xff]
      %v6927 = vld [vmem:[%s6487 + $0x72] sm:$0xff]
      %v6928 = vld [vmem:[%s6487 + $0x82] sm:$0xff]
      %v6929 = vld [vmem:[%s6487 + $0x92] sm:$0xff]
      %v6930 = vld [vmem:[%s6487 + $0xa2] sm:$0xff]
      %v6931 = vld [vmem:[%s6487 + $0xb2] sm:$0xff]
      %v6932 = vld [vmem:[%s6487 + $0xc2] sm:$0xff]
      %v6933 = vld [vmem:[%s6487 + $0xd2] sm:$0xff]
      %v6934 = vld [vmem:[%s6487 + $0xe2] sm:$0xff]
      %v6935 = vld [vmem:[%s6487 + $0xf2] sm:$0xff]
      %6952 = vrot.lane.b32.xlu0 %v6920, 20
      %v6953 = vpop.permute.xlu0 %6952
      %6954 = vrot.lane.b32.xlu0 %v6921, 20
      %v6955 = vpop.permute.xlu0 %6954
      %6956 = vrot.lane.b32.xlu0 %v6922, 20
      %v6957 = vpop.permute.xlu0 %6956
      %6958 = vrot.lane.b32.xlu0 %v6923, 20
      %v6959 = vpop.permute.xlu0 %6958
      %6960 = vrot.lane.b32.xlu0 %v6924, 20
      %v6961 = vpop.permute.xlu0 %6960
      %6962 = vrot.lane.b32.xlu0 %v6925, 20
      %v6963 = vpop.permute.xlu0 %6962
      %6964 = vrot.lane.b32.xlu0 %v6926, 20
      %v6965 = vpop.permute.xlu0 %6964
      %6966 = vrot.lane.b32.xlu0 %v6927, 20
      %v6967 = vpop.permute.xlu0 %6966
      %6968 = vrot.lane.b32.xlu0 %v6928, 20
      %v6969 = vpop.permute.xlu0 %6968
      %6970 = vrot.lane.b32.xlu0 %v6929, 20
      %v6971 = vpop.permute.xlu0 %6970
      %6972 = vrot.lane.b32.xlu0 %v6930, 20
      %v6973 = vpop.permute.xlu0 %6972
      %6974 = vrot.lane.b32.xlu0 %v6931, 20
      %v6975 = vpop.permute.xlu0 %6974
      %6976 = vrot.lane.b32.xlu0 %v6932, 20
      %v6977 = vpop.permute.xlu0 %6976
      %6978 = vrot.lane.b32.xlu0 %v6933, 20
      %v6979 = vpop.permute.xlu0 %6978
      %6980 = vrot.lane.b32.xlu0 %v6934, 20
      %v6981 = vpop.permute.xlu0 %6980
      %6982 = vrot.lane.b32.xlu0 %v6935, 20
      %v6983 = vpop.permute.xlu0 %6982
      %7000 = vst.msk [vmem:[#allocation9] sm:$0xff] %vm2689, %v6953
      %7001 = vst.msk [vmem:[#allocation9 + $0x18] sm:$0xff] %vm2689, %v6955
      %7002 = vst.msk [vmem:[#allocation9 + $0x30] sm:$0xff] %vm2689, %v6957
      %7003 = vst.msk [vmem:[#allocation9 + $0x48] sm:$0xff] %vm2689, %v6959
      %7004 = vst.msk [vmem:[#allocation9 + $0x60] sm:$0xff] %vm2689, %v6961
      %7005 = vst.msk [vmem:[#allocation9 + $0x78] sm:$0xff] %vm2689, %v6963
      %7006 = vst.msk [vmem:[#allocation9 + $0x90] sm:$0xff] %vm2689, %v6965
      %7007 = vst.msk [vmem:[#allocation9 + $0xa8] sm:$0xff] %vm2689, %v6967
      %7008 = vst.msk [vmem:[#allocation9 + $0xc0] sm:$0xff] %vm2689, %v6969
      %7009 = vst.msk [vmem:[#allocation9 + $0xd8] sm:$0xff] %vm2689, %v6971
      %7010 = vst.msk [vmem:[#allocation9 + $0xf0] sm:$0xff] %vm2689, %v6973
      %7011 = vst.msk [vmem:[#allocation9 + $0x108] sm:$0xff] %vm2689, %v6975
      %7012 = vst.msk [vmem:[#allocation9 + $0x120] sm:$0xff] %vm2689, %v6977
      %7013 = vst.msk [vmem:[#allocation9 + $0x138] sm:$0xff] %vm2689, %v6979
      %7014 = vst.msk [vmem:[#allocation9 + $0x150] sm:$0xff] %vm2689, %v6981
      %7015 = vst.msk [vmem:[#allocation9 + $0x168] sm:$0xff] %vm2689, %v6983
      %s7016 = scalar_lea.vmem [#allocation3], 32
      %v7017 = vld [vmem:[%s7016] sm:$0xff]
      %v7018 = vld [vmem:[%s7016 + $0x10] sm:$0xff]
      %v7019 = vld [vmem:[%s7016 + $0x20] sm:$0xff]
      %v7020 = vld [vmem:[%s7016 + $0x30] sm:$0xff]
      %v7021 = vld [vmem:[%s7016 + $0x40] sm:$0xff]
      %v7022 = vld [vmem:[%s7016 + $0x50] sm:$0xff]
      %v7023 = vld [vmem:[%s7016 + $0x60] sm:$0xff]
      %v7024 = vld [vmem:[%s7016 + $0x70] sm:$0xff]
      %v7025 = vld [vmem:[%s7016 + $0x80] sm:$0xff]
      %v7026 = vld [vmem:[%s7016 + $0x90] sm:$0xff]
      %v7027 = vld [vmem:[%s7016 + $0xa0] sm:$0xff]
      %v7028 = vld [vmem:[%s7016 + $0xb0] sm:$0xff]
      %v7029 = vld [vmem:[%s7016 + $0xc0] sm:$0xff]
      %v7030 = vld [vmem:[%s7016 + $0xd0] sm:$0xff]
      %v7031 = vld [vmem:[%s7016 + $0xe0] sm:$0xff]
      %v7032 = vld [vmem:[%s7016 + $0xf0] sm:$0xff]
      %7049 = vrot.lane.b32.xlu0 %v7017, 24
      %v7050 = vpop.permute.xlu0 %7049
      %7051 = vrot.lane.b32.xlu0 %v7018, 24
      %v7052 = vpop.permute.xlu0 %7051
      %7053 = vrot.lane.b32.xlu0 %v7019, 24
      %v7054 = vpop.permute.xlu0 %7053
      %7055 = vrot.lane.b32.xlu0 %v7020, 24
      %v7056 = vpop.permute.xlu0 %7055
      %7057 = vrot.lane.b32.xlu0 %v7021, 24
      %v7058 = vpop.permute.xlu0 %7057
      %7059 = vrot.lane.b32.xlu0 %v7022, 24
      %v7060 = vpop.permute.xlu0 %7059
      %7061 = vrot.lane.b32.xlu0 %v7023, 24
      %v7062 = vpop.permute.xlu0 %7061
      %7063 = vrot.lane.b32.xlu0 %v7024, 24
      %v7064 = vpop.permute.xlu0 %7063
      %7065 = vrot.lane.b32.xlu0 %v7025, 24
      %v7066 = vpop.permute.xlu0 %7065
      %7067 = vrot.lane.b32.xlu0 %v7026, 24
      %v7068 = vpop.permute.xlu0 %7067
      %7069 = vrot.lane.b32.xlu0 %v7027, 24
      %v7070 = vpop.permute.xlu0 %7069
      %7071 = vrot.lane.b32.xlu0 %v7028, 24
      %v7072 = vpop.permute.xlu0 %7071
      %7073 = vrot.lane.b32.xlu0 %v7029, 24
      %v7074 = vpop.permute.xlu0 %7073
      %7075 = vrot.lane.b32.xlu0 %v7030, 24
      %v7076 = vpop.permute.xlu0 %7075
      %7077 = vrot.lane.b32.xlu0 %v7031, 24
      %v7078 = vpop.permute.xlu0 %7077
      %7079 = vrot.lane.b32.xlu0 %v7032, 24
      %v7080 = vpop.permute.xlu0 %7079
      %7097 = vst.msk [vmem:[#allocation9] sm:$0xff] %vm3075, %v7050
      %7098 = vst.msk [vmem:[#allocation9 + $0x18] sm:$0xff] %vm3075, %v7052
      %7099 = vst.msk [vmem:[#allocation9 + $0x30] sm:$0xff] %vm3075, %v7054
      %7100 = vst.msk [vmem:[#allocation9 + $0x48] sm:$0xff] %vm3075, %v7056
      %7101 = vst.msk [vmem:[#allocation9 + $0x60] sm:$0xff] %vm3075, %v7058
      %7102 = vst.msk [vmem:[#allocation9 + $0x78] sm:$0xff] %vm3075, %v7060
      %7103 = vst.msk [vmem:[#allocation9 + $0x90] sm:$0xff] %vm3075, %v7062
      %7104 = vst.msk [vmem:[#allocation9 + $0xa8] sm:$0xff] %vm3075, %v7064
      %7105 = vst.msk [vmem:[#allocation9 + $0xc0] sm:$0xff] %vm3075, %v7066
      %7106 = vst.msk [vmem:[#allocation9 + $0xd8] sm:$0xff] %vm3075, %v7068
      %7107 = vst.msk [vmem:[#allocation9 + $0xf0] sm:$0xff] %vm3075, %v7070
      %7108 = vst.msk [vmem:[#allocation9 + $0x108] sm:$0xff] %vm3075, %v7072
      %7109 = vst.msk [vmem:[#allocation9 + $0x120] sm:$0xff] %vm3075, %v7074
      %7110 = vst.msk [vmem:[#allocation9 + $0x138] sm:$0xff] %vm3075, %v7076
      %7111 = vst.msk [vmem:[#allocation9 + $0x150] sm:$0xff] %vm3075, %v7078
      %7112 = vst.msk [vmem:[#allocation9 + $0x168] sm:$0xff] %vm3075, %v7080
      %v7113 = vld [vmem:[%s7016 + $0x1] sm:$0xff]
      %v7114 = vld [vmem:[%s7016 + $0x11] sm:$0xff]
      %v7115 = vld [vmem:[%s7016 + $0x21] sm:$0xff]
      %v7116 = vld [vmem:[%s7016 + $0x31] sm:$0xff]
      %v7117 = vld [vmem:[%s7016 + $0x41] sm:$0xff]
      %v7118 = vld [vmem:[%s7016 + $0x51] sm:$0xff]
      %v7119 = vld [vmem:[%s7016 + $0x61] sm:$0xff]
      %v7120 = vld [vmem:[%s7016 + $0x71] sm:$0xff]
      %v7121 = vld [vmem:[%s7016 + $0x81] sm:$0xff]
      %v7122 = vld [vmem:[%s7016 + $0x91] sm:$0xff]
      %v7123 = vld [vmem:[%s7016 + $0xa1] sm:$0xff]
      %v7124 = vld [vmem:[%s7016 + $0xb1] sm:$0xff]
      %v7125 = vld [vmem:[%s7016 + $0xc1] sm:$0xff]
      %v7126 = vld [vmem:[%s7016 + $0xd1] sm:$0xff]
      %v7127 = vld [vmem:[%s7016 + $0xe1] sm:$0xff]
      %v7128 = vld [vmem:[%s7016 + $0xf1] sm:$0xff]
      %7145 = vrot.lane.b32.xlu0 %v7113, 28
      %v7146 = vpop.permute.xlu0 %7145
      %7147 = vrot.lane.b32.xlu0 %v7114, 28
      %v7148 = vpop.permute.xlu0 %7147
      %7149 = vrot.lane.b32.xlu0 %v7115, 28
      %v7150 = vpop.permute.xlu0 %7149
      %7151 = vrot.lane.b32.xlu0 %v7116, 28
      %v7152 = vpop.permute.xlu0 %7151
      %7153 = vrot.lane.b32.xlu0 %v7117, 28
      %v7154 = vpop.permute.xlu0 %7153
      %7155 = vrot.lane.b32.xlu0 %v7118, 28
      %v7156 = vpop.permute.xlu0 %7155
      %7157 = vrot.lane.b32.xlu0 %v7119, 28
      %v7158 = vpop.permute.xlu0 %7157
      %7159 = vrot.lane.b32.xlu0 %v7120, 28
      %v7160 = vpop.permute.xlu0 %7159
      %7161 = vrot.lane.b32.xlu0 %v7121, 28
      %v7162 = vpop.permute.xlu0 %7161
      %7163 = vrot.lane.b32.xlu0 %v7122, 28
      %v7164 = vpop.permute.xlu0 %7163
      %7165 = vrot.lane.b32.xlu0 %v7123, 28
      %v7166 = vpop.permute.xlu0 %7165
      %7167 = vrot.lane.b32.xlu0 %v7124, 28
      %v7168 = vpop.permute.xlu0 %7167
      %7169 = vrot.lane.b32.xlu0 %v7125, 28
      %v7170 = vpop.permute.xlu0 %7169
      %7171 = vrot.lane.b32.xlu0 %v7126, 28
      %v7172 = vpop.permute.xlu0 %7171
      %7173 = vrot.lane.b32.xlu0 %v7127, 28
      %v7174 = vpop.permute.xlu0 %7173
      %7175 = vrot.lane.b32.xlu0 %v7128, 28
      %v7176 = vpop.permute.xlu0 %7175
      %7193 = vst.msk [vmem:[#allocation9] sm:$0xff] %vm3460, %v7146
      %7194 = vst.msk [vmem:[#allocation9 + $0x18] sm:$0xff] %vm3460, %v7148
      %7195 = vst.msk [vmem:[#allocation9 + $0x30] sm:$0xff] %vm3460, %v7150
      %7196 = vst.msk [vmem:[#allocation9 + $0x48] sm:$0xff] %vm3460, %v7152
      %7197 = vst.msk [vmem:[#allocation9 + $0x60] sm:$0xff] %vm3460, %v7154
      %7198 = vst.msk [vmem:[#allocation9 + $0x78] sm:$0xff] %vm3460, %v7156
      %7199 = vst.msk [vmem:[#allocation9 + $0x90] sm:$0xff] %vm3460, %v7158
      %7200 = vst.msk [vmem:[#allocation9 + $0xa8] sm:$0xff] %vm3460, %v7160
      %7201 = vst.msk [vmem:[#allocation9 + $0xc0] sm:$0xff] %vm3460, %v7162
      %7202 = vst.msk [vmem:[#allocation9 + $0xd8] sm:$0xff] %vm3460, %v7164
      %7203 = vst.msk [vmem:[#allocation9 + $0xf0] sm:$0xff] %vm3460, %v7166
      %7204 = vst.msk [vmem:[#allocation9 + $0x108] sm:$0xff] %vm3460, %v7168
      %7205 = vst.msk [vmem:[#allocation9 + $0x120] sm:$0xff] %vm3460, %v7170
      %7206 = vst.msk [vmem:[#allocation9 + $0x138] sm:$0xff] %vm3460, %v7172
      %7207 = vst.msk [vmem:[#allocation9 + $0x150] sm:$0xff] %vm3460, %v7174
      %7208 = vst.msk [vmem:[#allocation9 + $0x168] sm:$0xff] %vm3460, %v7176
      %v7209 = vld [vmem:[%s7016 + $0x2] sm:$0xff]
      %v7210 = vld [vmem:[%s7016 + $0x12] sm:$0xff]
      %v7211 = vld [vmem:[%s7016 + $0x22] sm:$0xff]
      %v7212 = vld [vmem:[%s7016 + $0x32] sm:$0xff]
      %v7213 = vld [vmem:[%s7016 + $0x42] sm:$0xff]
      %v7214 = vld [vmem:[%s7016 + $0x52] sm:$0xff]
      %v7215 = vld [vmem:[%s7016 + $0x62] sm:$0xff]
      %v7216 = vld [vmem:[%s7016 + $0x72] sm:$0xff]
      %v7217 = vld [vmem:[%s7016 + $0x82] sm:$0xff]
      %v7218 = vld [vmem:[%s7016 + $0x92] sm:$0xff]
      %v7219 = vld [vmem:[%s7016 + $0xa2] sm:$0xff]
      %v7220 = vld [vmem:[%s7016 + $0xb2] sm:$0xff]
      %v7221 = vld [vmem:[%s7016 + $0xc2] sm:$0xff]
      %v7222 = vld [vmem:[%s7016 + $0xd2] sm:$0xff]
      %v7223 = vld [vmem:[%s7016 + $0xe2] sm:$0xff]
      %v7224 = vld [vmem:[%s7016 + $0xf2] sm:$0xff]
      %7241 = vrot.lane.b32.xlu0 %v7209, 32
      %v7242 = vpop.permute.xlu0 %7241
      %7243 = vrot.lane.b32.xlu0 %v7210, 32
      %v7244 = vpop.permute.xlu0 %7243
      %7245 = vrot.lane.b32.xlu0 %v7211, 32
      %v7246 = vpop.permute.xlu0 %7245
      %7247 = vrot.lane.b32.xlu0 %v7212, 32
      %v7248 = vpop.permute.xlu0 %7247
      %7249 = vrot.lane.b32.xlu0 %v7213, 32
      %v7250 = vpop.permute.xlu0 %7249
      %7251 = vrot.lane.b32.xlu0 %v7214, 32
      %v7252 = vpop.permute.xlu0 %7251
      %7253 = vrot.lane.b32.xlu0 %v7215, 32
      %v7254 = vpop.permute.xlu0 %7253
      %7255 = vrot.lane.b32.xlu0 %v7216, 32
      %v7256 = vpop.permute.xlu0 %7255
      %7257 = vrot.lane.b32.xlu0 %v7217, 32
      %v7258 = vpop.permute.xlu0 %7257
      %7259 = vrot.lane.b32.xlu0 %v7218, 32
      %v7260 = vpop.permute.xlu0 %7259
      %7261 = vrot.lane.b32.xlu0 %v7219, 32
      %v7262 = vpop.permute.xlu0 %7261
      %7263 = vrot.lane.b32.xlu0 %v7220, 32
      %v7264 = vpop.permute.xlu0 %7263
      %7265 = vrot.lane.b32.xlu0 %v7221, 32
      %v7266 = vpop.permute.xlu0 %7265
      %7267 = vrot.lane.b32.xlu0 %v7222, 32
      %v7268 = vpop.permute.xlu0 %7267
      %7269 = vrot.lane.b32.xlu0 %v7223, 32
      %v7270 = vpop.permute.xlu0 %7269
      %7271 = vrot.lane.b32.xlu0 %v7224, 32
      %v7272 = vpop.permute.xlu0 %7271
      %7289 = vst.msk [vmem:[#allocation9] sm:$0xff] %vm3845, %v7242
      %7290 = vst.msk [vmem:[#allocation9 + $0x18] sm:$0xff] %vm3845, %v7244
      %7291 = vst.msk [vmem:[#allocation9 + $0x30] sm:$0xff] %vm3845, %v7246
      %7292 = vst.msk [vmem:[#allocation9 + $0x48] sm:$0xff] %vm3845, %v7248
      %7293 = vst.msk [vmem:[#allocation9 + $0x60] sm:$0xff] %vm3845, %v7250
      %7294 = vst.msk [vmem:[#allocation9 + $0x78] sm:$0xff] %vm3845, %v7252
      %7295 = vst.msk [vmem:[#allocation9 + $0x90] sm:$0xff] %vm3845, %v7254
      %7296 = vst.msk [vmem:[#allocation9 + $0xa8] sm:$0xff] %vm3845, %v7256
      %7297 = vst.msk [vmem:[#allocation9 + $0xc0] sm:$0xff] %vm3845, %v7258
      %7298 = vst.msk [vmem:[#allocation9 + $0xd8] sm:$0xff] %vm3845, %v7260
      %7299 = vst.msk [vmem:[#allocation9 + $0xf0] sm:$0xff] %vm3845, %v7262
      %7300 = vst.msk [vmem:[#allocation9 + $0x108] sm:$0xff] %vm3845, %v7264
      %7301 = vst.msk [vmem:[#allocation9 + $0x120] sm:$0xff] %vm3845, %v7266
      %7302 = vst.msk [vmem:[#allocation9 + $0x138] sm:$0xff] %vm3845, %v7268
      %7303 = vst.msk [vmem:[#allocation9 + $0x150] sm:$0xff] %vm3845, %v7270
      %7304 = vst.msk [vmem:[#allocation9 + $0x168] sm:$0xff] %vm3845, %v7272
      %v7305 = vld [vmem:[#allocation9] sm:$0xff]
      %v7306 = vld [vmem:[#allocation9 + $0x18] sm:$0xff]
      %v7307 = vld [vmem:[#allocation9 + $0x30] sm:$0xff]
      %v7308 = vld [vmem:[#allocation9 + $0x48] sm:$0xff]
      %v7309 = vld [vmem:[#allocation9 + $0x60] sm:$0xff]
      %v7310 = vld [vmem:[#allocation9 + $0x78] sm:$0xff]
      %v7311 = vld [vmem:[#allocation9 + $0x90] sm:$0xff]
      %v7312 = vld [vmem:[#allocation9 + $0xa8] sm:$0xff]
      %v7313 = vld [vmem:[#allocation9 + $0xc0] sm:$0xff]
      %v7314 = vld [vmem:[#allocation9 + $0xd8] sm:$0xff]
      %v7315 = vld [vmem:[#allocation9 + $0xf0] sm:$0xff]
      %v7316 = vld [vmem:[#allocation9 + $0x108] sm:$0xff]
      %v7317 = vld [vmem:[#allocation9 + $0x120] sm:$0xff]
      %v7318 = vld [vmem:[#allocation9 + $0x138] sm:$0xff]
      %v7319 = vld [vmem:[#allocation9 + $0x150] sm:$0xff]
      %v7320 = vld [vmem:[#allocation9 + $0x168] sm:$0xff]
      %v7321 = vpack.c.bf16 %v7306, %v7305
      %v7322 = vpack.c.bf16 %v7308, %v7307
      %v7323 = vpack.c.bf16 %v7310, %v7309
      %v7324 = vpack.c.bf16 %v7312, %v7311
      %v7325 = vpack.c.bf16 %v7314, %v7313
      %v7326 = vpack.c.bf16 %v7316, %v7315
      %v7327 = vpack.c.bf16 %v7318, %v7317
      %v7328 = vpack.c.bf16 %v7320, %v7319
      %v7329 = vld [vmem:[%s3] sm:$0xf]
      %v7330 = vld [vmem:[%s3 + $0x4] sm:$0xf]
      %v7331 = vld [vmem:[%s3 + $0x8] sm:$0xf]
      %v7332 = vld [vmem:[%s3 + $0xc] sm:$0xf]
      %v7333 = vld [vmem:[%s3 + $0x10] sm:$0x3]
      %v7334 = vld [vmem:[%s4] sm:$0x1]
      %v7336 = vlaneseq
      %v7337 = vshrl.u32 %v7336, 7
      %v7338 = vsub.s32 0, %v7337
      %v7339 = vrot.slane %v7334, %v7338
      %v7346 = vunpack.c.l.b16 %v7329
      %v7347 = vunpack.c.l.b16 %v7330
      %v7348 = vunpack.c.l.b16 %v7331
      %v7349 = vunpack.c.l.b16 %v7332
      %v7350 = vunpack.c.l.b16 %v7333
      %v7351 = vpack.c.b16 %v7347, %v7346
      %v7352 = vpack.c.b16 %v7349, %v7348
      %v7353 = vpack.c.b16 %v7350, %v7350
      %v7357 = vsel %vm4033, %v7321, 0
      %v7360 = vsel %vm4033, %v7322, 0
      %v7363 = vsel %vm4033, %v7323, 0
      %v7366 = vsel %vm4033, %v7324, 0
      %v7369 = vsel %vm4033, %v7325, 0
      %v7372 = vsel %vm4033, %v7326, 0
      %v7375 = vsel %vm4033, %v7327, 0
      %v7378 = vsel %vm4033, %v7328, 0
      %v7381 = vsel %vm4130, %v7353, 0
      %7383 = vmatprep.subr.bf16.mxu0 0
      %7384 = vmatpush1.bf16.msra.mxu0 %v7351
      %7385 = vmatprep.subr.bf16.mxu0 0
      %7386 = vmatpush1.bf16.msra.mxu0 %v7352
      %7387 = vmatprep.subr.bf16.mxu0 0
      %7388 = vmatpush1.bf16.msra.mxu0 %v7381
      %7389 = vmatprep.subr.bf16.mxu0 0
      %7390 = vmatpush1.bf16.msra.mxu0 0
      %7391 = vmatprep.subr.bf16.mxu0 0
      %7392 = vmatpush1.bf16.msra.mxu0 0
      %7393 = vmatprep.subr.bf16.mxu0 0
      %7394 = vmatpush1.bf16.msra.mxu0 0
      %7395 = vmatprep.subr.bf16.mxu0 0
      %7396 = vmatpush1.bf16.msra.mxu0 0
      %7397 = vmatprep.subr.bf16.mxu0 0
      %7398 = vmatpush1.bf16.msra.mxu0 0
      %7399 = vmatprep.subr.bf16.mxu0 0
      %7400 = vmatpush1.bf16.msra.mxu0 0
      %7401 = vmatprep.subr.bf16.mxu0 0
      %7402 = vmatpush1.bf16.msra.mxu0 0
      %7403 = vmatprep.subr.bf16.mxu0 0
      %7404 = vmatpush1.bf16.msra.mxu0 0
      %7405 = vmatprep.subr.bf16.mxu0 0
      %7406 = vmatpush1.bf16.msra.mxu0 0
      %7407 = vmatprep.subr.bf16.mxu0 0
      %7408 = vmatpush1.bf16.msra.mxu0 0
      %7409 = vmatprep.subr.bf16.mxu0 0
      %7410 = vmatpush1.bf16.msra.mxu0 0
      %7411 = vmatprep.subr.bf16.mxu0 0
      %7412 = vmatpush1.bf16.msra.mxu0 0
      %7413 = vmatprep.subr.bf16.mxu0 0
      %7414 = vmatpush1.bf16.msra.mxu0 0
      %7415 = vmatprep.mubr.bf16.mxu0 0
      %7416 = vmatmul.mubr.bf16.gmra.mrb[0].mxu0 %v7357
      %v7417 = vpop.f32.mrb[0].mxu0
      %v7418 = vadd.f32 %v7339, %v7417
      %v7419 = vpop.f32.mrb[0].mxu0
      %v7420 = vpop.f32.mrb[0].mxu0
      %v7421 = vadd.f32 %v7339, %v7420
      %v7422 = vpop.f32.mrb[0].mxu0
      %7423 = vmatprep.mubr.bf16.mxu0 0
      %7424 = vmatmul.mubr.bf16.gmra.mrb[0].mxu0 %v7360
      %v7425 = vpop.f32.mrb[0].mxu0
      %v7426 = vadd.f32 %v7339, %v7425
      %v7427 = vpop.f32.mrb[0].mxu0
      %v7428 = vpop.f32.mrb[0].mxu0
      %v7429 = vadd.f32 %v7339, %v7428
      %v7430 = vpop.f32.mrb[0].mxu0
      %7431 = vmatprep.mubr.bf16.mxu0 0
      %7432 = vmatmul.mubr.bf16.gmra.mrb[0].mxu0 %v7363
      %v7433 = vpop.f32.mrb[0].mxu0
      %v7434 = vadd.f32 %v7339, %v7433
      %v7435 = vpop.f32.mrb[0].mxu0
      %v7436 = vpop.f32.mrb[0].mxu0
      %v7437 = vadd.f32 %v7339, %v7436
      %v7438 = vpop.f32.mrb[0].mxu0
      %7439 = vmatprep.mubr.bf16.mxu0 0
      %7440 = vmatmul.mubr.bf16.gmra.mrb[0].mxu0 %v7366
      %v7441 = vpop.f32.mrb[0].mxu0
      %v7442 = vadd.f32 %v7339, %v7441
      %v7443 = vpop.f32.mrb[0].mxu0
      %v7444 = vpop.f32.mrb[0].mxu0
      %v7445 = vadd.f32 %v7339, %v7444
      %v7446 = vpop.f32.mrb[0].mxu0
      %7447 = vmatprep.mubr.bf16.mxu0 0
      %7448 = vmatmul.mubr.bf16.gmra.mrb[0].mxu0 %v7369
      %v7449 = vpop.f32.mrb[0].mxu0
      %v7450 = vadd.f32 %v7339, %v7449
      %v7451 = vpop.f32.mrb[0].mxu0
      %v7452 = vpop.f32.mrb[0].mxu0
      %v7453 = vadd.f32 %v7339, %v7452
      %v7454 = vpop.f32.mrb[0].mxu0
      %7455 = vmatprep.mubr.bf16.mxu0 0
      %7456 = vmatmul.mubr.bf16.gmra.mrb[0].mxu0 %v7372
      %v7457 = vpop.f32.mrb[0].mxu0
      %v7458 = vadd.f32 %v7339, %v7457
      %v7459 = vpop.f32.mrb[0].mxu0
      %v7460 = vpop.f32.mrb[0].mxu0
      %v7461 = vadd.f32 %v7339, %v7460
      %v7462 = vpop.f32.mrb[0].mxu0
      %7463 = vmatprep.mubr.bf16.mxu0 0
      %7464 = vmatmul.mubr.bf16.gmra.mrb[0].mxu0 %v7375
      %v7465 = vpop.f32.mrb[0].mxu0
      %v7466 = vadd.f32 %v7339, %v7465
      %v7467 = vpop.f32.mrb[0].mxu0
      %v7468 = vpop.f32.mrb[0].mxu0
      %v7469 = vadd.f32 %v7339, %v7468
      %v7470 = vpop.f32.mrb[0].mxu0
      %7471 = vmatprep.mubr.bf16.mxu0 0
      %7472 = vmatmul.mubr.bf16.gmra.mrb[0].mxu0 %v7378
      %v7473 = vpop.f32.mrb[0].mxu0
      %v7474 = vadd.f32 %v7339, %v7473
      %v7475 = vpop.f32.mrb[0].mxu0
      %v7476 = vpop.f32.mrb[0].mxu0
      %v7477 = vadd.f32 %v7339, %v7476
      %v7478 = vpop.f32.mrb[0].mxu0
      %7479 = vdwg.mxu0
      %v7480 = vmax.f32 %v7418, 0.0
      %v7481 = vmax.f32 %v7421, 0.0
      %v7482 = vmax.f32 %v7426, 0.0
      %v7483 = vmax.f32 %v7429, 0.0
      %v7484 = vmax.f32 %v7434, 0.0
      %v7485 = vmax.f32 %v7437, 0.0
      %v7486 = vmax.f32 %v7442, 0.0
      %v7487 = vmax.f32 %v7445, 0.0
      %v7488 = vmax.f32 %v7450, 0.0
      %v7489 = vmax.f32 %v7453, 0.0
      %v7490 = vmax.f32 %v7458, 0.0
      %v7491 = vmax.f32 %v7461, 0.0
      %v7492 = vmax.f32 %v7466, 0.0
      %v7493 = vmax.f32 %v7469, 0.0
      %v7494 = vmax.f32 %v7474, 0.0
      %v7495 = vmax.f32 %v7477, 0.0
      %vm7496 = vcmask 64512
      %v7497 = vsel %vm7496, %v7480, -inf
      %v7498 = vsel %vm7496, %v7481, -inf
      %v7499 = vmax.f32 %v7497, %v7498
      %v7500 = vsel %vm7496, %v7482, -inf
      %v7501 = vsel %vm7496, %v7483, -inf
      %v7502 = vmax.f32 %v7500, %v7501
      %v7503 = vsel %vm7496, %v7484, -inf
      %v7504 = vsel %vm7496, %v7485, -inf
      %v7505 = vmax.f32 %v7503, %v7504
      %v7506 = vsel %vm7496, %v7486, -inf
      %v7507 = vsel %vm7496, %v7487, -inf
      %v7508 = vmax.f32 %v7506, %v7507
      %v7509 = vsel %vm7496, %v7488, -inf
      %v7510 = vsel %vm7496, %v7489, -inf
      %v7511 = vmax.f32 %v7509, %v7510
      %v7512 = vsel %vm7496, %v7490, -inf
      %v7513 = vsel %vm7496, %v7491, -inf
      %v7514 = vmax.f32 %v7512, %v7513
      %v7515 = vsel %vm7496, %v7492, -inf
      %v7516 = vsel %vm7496, %v7493, -inf
      %v7517 = vmax.f32 %v7515, %v7516
      %v7518 = vsel %vm7496, %v7494, -inf
      %v7519 = vsel %vm7496, %v7495, -inf
      %v7520 = vmax.f32 %v7518, %v7519
      %v7529 = vcombine.high %v7499, %v7499
      %v7531 = vunpack.c.l.s4 1983009808
      %v7532 = vunpack.c.0.s8 %v7531
      %v7533 = vlaneseq
      %v7534 = vshrl.u32 %v7533, 7
      %v7535 = vsub.s32 %v7532, %v7534
      %v7536 = vrot.slane %v7499, %v7535
      %v7538 = vunpack.c.l.s4 1983009808
      %v7539 = vunpack.c.0.s8 %v7538
      %v7540 = vlaneseq
      %v7541 = vshrl.u32 %v7540, 7
      %v7542 = vsub.s32 %v7539, %v7541
      %v7543 = vrot.slane %v7529, %v7542
      %v7544 = vcombine.high %v7536, %v7536
      %v7545 = vcombine.high %v7543, %v7543
      %v7546 = vcombine.high %v7502, %v7502
      %v7548 = vunpack.c.l.s4 1983009808
      %v7549 = vunpack.c.0.s8 %v7548
      %v7550 = vlaneseq
      %v7551 = vshrl.u32 %v7550, 7
      %v7552 = vsub.s32 %v7549, %v7551
      %v7553 = vrot.slane %v7502, %v7552
      %v7555 = vunpack.c.l.s4 1983009808
      %v7556 = vunpack.c.0.s8 %v7555
      %v7557 = vlaneseq
      %v7558 = vshrl.u32 %v7557, 7
      %v7559 = vsub.s32 %v7556, %v7558
      %v7560 = vrot.slane %v7546, %v7559
      %v7561 = vcombine.high %v7553, %v7553
      %v7562 = vcombine.high %v7560, %v7560
      %v7563 = vcombine.high %v7505, %v7505
      %v7565 = vunpack.c.l.s4 1983009808
      %v7566 = vunpack.c.0.s8 %v7565
      %v7567 = vlaneseq
      %v7568 = vshrl.u32 %v7567, 7
      %v7569 = vsub.s32 %v7566, %v7568
      %v7570 = vrot.slane %v7505, %v7569
      %v7572 = vunpack.c.l.s4 1983009808
      %v7573 = vunpack.c.0.s8 %v7572
      %v7574 = vlaneseq
      %v7575 = vshrl.u32 %v7574, 7
      %v7576 = vsub.s32 %v7573, %v7575
      %v7577 = vrot.slane %v7563, %v7576
      %v7578 = vcombine.high %v7570, %v7570
      %v7579 = vcombine.high %v7577, %v7577
      %v7580 = vcombine.high %v7508, %v7508
      %v7582 = vunpack.c.l.s4 1983009808
      %v7583 = vunpack.c.0.s8 %v7582
      %v7584 = vlaneseq
      %v7585 = vshrl.u32 %v7584, 7
      %v7586 = vsub.s32 %v7583, %v7585
      %v7587 = vrot.slane %v7508, %v7586
      %v7589 = vunpack.c.l.s4 1983009808
      %v7590 = vunpack.c.0.s8 %v7589
      %v7591 = vlaneseq
      %v7592 = vshrl.u32 %v7591, 7
      %v7593 = vsub.s32 %v7590, %v7592
      %v7594 = vrot.slane %v7580, %v7593
      %v7595 = vcombine.high %v7587, %v7587
      %v7596 = vcombine.high %v7594, %v7594
      %v7597 = vcombine.high %v7511, %v7511
      %v7599 = vunpack.c.l.s4 1983009808
      %v7600 = vunpack.c.0.s8 %v7599
      %v7601 = vlaneseq
      %v7602 = vshrl.u32 %v7601, 7
      %v7603 = vsub.s32 %v7600, %v7602
      %v7604 = vrot.slane %v7511, %v7603
      %v7606 = vunpack.c.l.s4 1983009808
      %v7607 = vunpack.c.0.s8 %v7606
      %v7608 = vlaneseq
      %v7609 = vshrl.u32 %v7608, 7
      %v7610 = vsub.s32 %v7607, %v7609
      %v7611 = vrot.slane %v7597, %v7610
      %v7612 = vcombine.high %v7604, %v7604
      %v7613 = vcombine.high %v7611, %v7611
      %v7614 = vcombine.high %v7514, %v7514
      %v7616 = vunpack.c.l.s4 1983009808
      %v7617 = vunpack.c.0.s8 %v7616
      %v7618 = vlaneseq
      %v7619 = vshrl.u32 %v7618, 7
      %v7620 = vsub.s32 %v7617, %v7619
      %v7621 = vrot.slane %v7514, %v7620
      %v7623 = vunpack.c.l.s4 1983009808
      %v7624 = vunpack.c.0.s8 %v7623
      %v7625 = vlaneseq
      %v7626 = vshrl.u32 %v7625, 7
      %v7627 = vsub.s32 %v7624, %v7626
      %v7628 = vrot.slane %v7614, %v7627
      %v7629 = vcombine.high %v7621, %v7621
      %v7630 = vcombine.high %v7628, %v7628
      %v7631 = vcombine.high %v7517, %v7517
      %v7633 = vunpack.c.l.s4 1983009808
      %v7634 = vunpack.c.0.s8 %v7633
      %v7635 = vlaneseq
      %v7636 = vshrl.u32 %v7635, 7
      %v7637 = vsub.s32 %v7634, %v7636
      %v7638 = vrot.slane %v7517, %v7637
      %v7640 = vunpack.c.l.s4 1983009808
      %v7641 = vunpack.c.0.s8 %v7640
      %v7642 = vlaneseq
      %v7643 = vshrl.u32 %v7642, 7
      %v7644 = vsub.s32 %v7641, %v7643
      %v7645 = vrot.slane %v7631, %v7644
      %v7646 = vcombine.high %v7638, %v7638
      %v7647 = vcombine.high %v7645, %v7645
      %v7648 = vcombine.high %v7520, %v7520
      %v7650 = vunpack.c.l.s4 1983009808
      %v7651 = vunpack.c.0.s8 %v7650
      %v7652 = vlaneseq
      %v7653 = vshrl.u32 %v7652, 7
      %v7654 = vsub.s32 %v7651, %v7653
      %v7655 = vrot.slane %v7520, %v7654
      %v7657 = vunpack.c.l.s4 1983009808
      %v7658 = vunpack.c.0.s8 %v7657
      %v7659 = vlaneseq
      %v7660 = vshrl.u32 %v7659, 7
      %v7661 = vsub.s32 %v7658, %v7660
      %v7662 = vrot.slane %v7648, %v7661
      %v7663 = vcombine.high %v7655, %v7655
      %v7664 = vcombine.high %v7662, %v7662
      %vm7697 = vcmask 58368
      %v7698 = vsel %vm7697, %v7536, -inf
      %v7699 = vrot.slane %v7698, 4
      %v7700 = vmax.f32 %v7698, %v7699
      %v7701 = vrot.slane %v7700, 2
      %v7702 = vmax.f32 %v7700, %v7701
      %v7703 = vrot.slane %v7702, 1
      %v7704 = vmax.f32 %v7702, %v7703
      %v7705 = vsel %vm7697, %v7544, -inf
      %v7706 = vrot.slane %v7705, 4
      %v7707 = vmax.f32 %v7705, %v7706
      %v7708 = vrot.slane %v7707, 2
      %v7709 = vmax.f32 %v7707, %v7708
      %v7710 = vrot.slane %v7709, 1
      %v7711 = vmax.f32 %v7709, %v7710
      %v7712 = vsel %vm7697, %v7543, -inf
      %v7713 = vrot.slane %v7712, 4
      %v7714 = vmax.f32 %v7712, %v7713
      %v7715 = vrot.slane %v7714, 2
      %v7716 = vmax.f32 %v7714, %v7715
      %v7717 = vrot.slane %v7716, 1
      %v7718 = vmax.f32 %v7716, %v7717
      %v7719 = vsel %vm7697, %v7545, -inf
      %v7720 = vrot.slane %v7719, 4
      %v7721 = vmax.f32 %v7719, %v7720
      %v7722 = vrot.slane %v7721, 2
      %v7723 = vmax.f32 %v7721, %v7722
      %v7724 = vrot.slane %v7723, 1
      %v7725 = vmax.f32 %v7723, %v7724
      %v7726 = vsel %vm7697, %v7553, -inf
      %v7727 = vrot.slane %v7726, 4
      %v7728 = vmax.f32 %v7726, %v7727
      %v7729 = vrot.slane %v7728, 2
      %v7730 = vmax.f32 %v7728, %v7729
      %v7731 = vrot.slane %v7730, 1
      %v7732 = vmax.f32 %v7730, %v7731
      %v7733 = vsel %vm7697, %v7561, -inf
      %v7734 = vrot.slane %v7733, 4
      %v7735 = vmax.f32 %v7733, %v7734
      %v7736 = vrot.slane %v7735, 2
      %v7737 = vmax.f32 %v7735, %v7736
      %v7738 = vrot.slane %v7737, 1
      %v7739 = vmax.f32 %v7737, %v7738
      %v7740 = vsel %vm7697, %v7560, -inf
      %v7741 = vrot.slane %v7740, 4
      %v7742 = vmax.f32 %v7740, %v7741
      %v7743 = vrot.slane %v7742, 2
      %v7744 = vmax.f32 %v7742, %v7743
      %v7745 = vrot.slane %v7744, 1
      %v7746 = vmax.f32 %v7744, %v7745
      %v7747 = vsel %vm7697, %v7562, -inf
      %v7748 = vrot.slane %v7747, 4
      %v7749 = vmax.f32 %v7747, %v7748
      %v7750 = vrot.slane %v7749, 2
      %v7751 = vmax.f32 %v7749, %v7750
      %v7752 = vrot.slane %v7751, 1
      %v7753 = vmax.f32 %v7751, %v7752
      %v7754 = vsel %vm7697, %v7570, -inf
      %v7755 = vrot.slane %v7754, 4
      %v7756 = vmax.f32 %v7754, %v7755
      %v7757 = vrot.slane %v7756, 2
      %v7758 = vmax.f32 %v7756, %v7757
      %v7759 = vrot.slane %v7758, 1
      %v7760 = vmax.f32 %v7758, %v7759
      %v7761 = vsel %vm7697, %v7578, -inf
      %v7762 = vrot.slane %v7761, 4
      %v7763 = vmax.f32 %v7761, %v7762
      %v7764 = vrot.slane %v7763, 2
      %v7765 = vmax.f32 %v7763, %v7764
      %v7766 = vrot.slane %v7765, 1
      %v7767 = vmax.f32 %v7765, %v7766
      %v7768 = vsel %vm7697, %v7577, -inf
      %v7769 = vrot.slane %v7768, 4
      %v7770 = vmax.f32 %v7768, %v7769
      %v7771 = vrot.slane %v7770, 2
      %v7772 = vmax.f32 %v7770, %v7771
      %v7773 = vrot.slane %v7772, 1
      %v7774 = vmax.f32 %v7772, %v7773
      %v7775 = vsel %vm7697, %v7579, -inf
      %v7776 = vrot.slane %v7775, 4
      %v7777 = vmax.f32 %v7775, %v7776
      %v7778 = vrot.slane %v7777, 2
      %v7779 = vmax.f32 %v7777, %v7778
      %v7780 = vrot.slane %v7779, 1
      %v7781 = vmax.f32 %v7779, %v7780
      %v7782 = vsel %vm7697, %v7587, -inf
      %v7783 = vrot.slane %v7782, 4
      %v7784 = vmax.f32 %v7782, %v7783
      %v7785 = vrot.slane %v7784, 2
      %v7786 = vmax.f32 %v7784, %v7785
      %v7787 = vrot.slane %v7786, 1
      %v7788 = vmax.f32 %v7786, %v7787
      %v7789 = vsel %vm7697, %v7595, -inf
      %v7790 = vrot.slane %v7789, 4
      %v7791 = vmax.f32 %v7789, %v7790
      %v7792 = vrot.slane %v7791, 2
      %v7793 = vmax.f32 %v7791, %v7792
      %v7794 = vrot.slane %v7793, 1
      %v7795 = vmax.f32 %v7793, %v7794
      %v7796 = vsel %vm7697, %v7594, -inf
      %v7797 = vrot.slane %v7796, 4
      %v7798 = vmax.f32 %v7796, %v7797
      %v7799 = vrot.slane %v7798, 2
      %v7800 = vmax.f32 %v7798, %v7799
      %v7801 = vrot.slane %v7800, 1
      %v7802 = vmax.f32 %v7800, %v7801
      %v7803 = vsel %vm7697, %v7596, -inf
      %v7804 = vrot.slane %v7803, 4
      %v7805 = vmax.f32 %v7803, %v7804
      %v7806 = vrot.slane %v7805, 2
      %v7807 = vmax.f32 %v7805, %v7806
      %v7808 = vrot.slane %v7807, 1
      %v7809 = vmax.f32 %v7807, %v7808
      %v7810 = vsel %vm7697, %v7604, -inf
      %v7811 = vrot.slane %v7810, 4
      %v7812 = vmax.f32 %v7810, %v7811
      %v7813 = vrot.slane %v7812, 2
      %v7814 = vmax.f32 %v7812, %v7813
      %v7815 = vrot.slane %v7814, 1
      %v7816 = vmax.f32 %v7814, %v7815
      %v7817 = vsel %vm7697, %v7612, -inf
      %v7818 = vrot.slane %v7817, 4
      %v7819 = vmax.f32 %v7817, %v7818
      %v7820 = vrot.slane %v7819, 2
      %v7821 = vmax.f32 %v7819, %v7820
      %v7822 = vrot.slane %v7821, 1
      %v7823 = vmax.f32 %v7821, %v7822
      %v7824 = vsel %vm7697, %v7611, -inf
      %v7825 = vrot.slane %v7824, 4
      %v7826 = vmax.f32 %v7824, %v7825
      %v7827 = vrot.slane %v7826, 2
      %v7828 = vmax.f32 %v7826, %v7827
      %v7829 = vrot.slane %v7828, 1
      %v7830 = vmax.f32 %v7828, %v7829
      %v7831 = vsel %vm7697, %v7613, -inf
      %v7832 = vrot.slane %v7831, 4
      %v7833 = vmax.f32 %v7831, %v7832
      %v7834 = vrot.slane %v7833, 2
      %v7835 = vmax.f32 %v7833, %v7834
      %v7836 = vrot.slane %v7835, 1
      %v7837 = vmax.f32 %v7835, %v7836
      %v7838 = vsel %vm7697, %v7621, -inf
      %v7839 = vrot.slane %v7838, 4
      %v7840 = vmax.f32 %v7838, %v7839
      %v7841 = vrot.slane %v7840, 2
      %v7842 = vmax.f32 %v7840, %v7841
      %v7843 = vrot.slane %v7842, 1
      %v7844 = vmax.f32 %v7842, %v7843
      %v7845 = vsel %vm7697, %v7629, -inf
      %v7846 = vrot.slane %v7845, 4
      %v7847 = vmax.f32 %v7845, %v7846
      %v7848 = vrot.slane %v7847, 2
      %v7849 = vmax.f32 %v7847, %v7848
      %v7850 = vrot.slane %v7849, 1
      %v7851 = vmax.f32 %v7849, %v7850
      %v7852 = vsel %vm7697, %v7628, -inf
      %v7853 = vrot.slane %v7852, 4
      %v7854 = vmax.f32 %v7852, %v7853
      %v7855 = vrot.slane %v7854, 2
      %v7856 = vmax.f32 %v7854, %v7855
      %v7857 = vrot.slane %v7856, 1
      %v7858 = vmax.f32 %v7856, %v7857
      %v7859 = vsel %vm7697, %v7630, -inf
      %v7860 = vrot.slane %v7859, 4
      %v7861 = vmax.f32 %v7859, %v7860
      %v7862 = vrot.slane %v7861, 2
      %v7863 = vmax.f32 %v7861, %v7862
      %v7864 = vrot.slane %v7863, 1
      %v7865 = vmax.f32 %v7863, %v7864
      %v7866 = vsel %vm7697, %v7638, -inf
      %v7867 = vrot.slane %v7866, 4
      %v7868 = vmax.f32 %v7866, %v7867
      %v7869 = vrot.slane %v7868, 2
      %v7870 = vmax.f32 %v7868, %v7869
      %v7871 = vrot.slane %v7870, 1
      %v7872 = vmax.f32 %v7870, %v7871
      %v7873 = vsel %vm7697, %v7646, -inf
      %v7874 = vrot.slane %v7873, 4
      %v7875 = vmax.f32 %v7873, %v7874
      %v7876 = vrot.slane %v7875, 2
      %v7877 = vmax.f32 %v7875, %v7876
      %v7878 = vrot.slane %v7877, 1
      %v7879 = vmax.f32 %v7877, %v7878
      %v7880 = vsel %vm7697, %v7645, -inf
      %v7881 = vrot.slane %v7880, 4
      %v7882 = vmax.f32 %v7880, %v7881
      %v7883 = vrot.slane %v7882, 2
      %v7884 = vmax.f32 %v7882, %v7883
      %v7885 = vrot.slane %v7884, 1
      %v7886 = vmax.f32 %v7884, %v7885
      %v7887 = vsel %vm7697, %v7647, -inf
      %v7888 = vrot.slane %v7887, 4
      %v7889 = vmax.f32 %v7887, %v7888
      %v7890 = vrot.slane %v7889, 2
      %v7891 = vmax.f32 %v7889, %v7890
      %v7892 = vrot.slane %v7891, 1
      %v7893 = vmax.f32 %v7891, %v7892
      %v7894 = vsel %vm7697, %v7655, -inf
      %v7895 = vrot.slane %v7894, 4
      %v7896 = vmax.f32 %v7894, %v7895
      %v7897 = vrot.slane %v7896, 2
      %v7898 = vmax.f32 %v7896, %v7897
      %v7899 = vrot.slane %v7898, 1
      %v7900 = vmax.f32 %v7898, %v7899
      %v7901 = vsel %vm7697, %v7663, -inf
      %v7902 = vrot.slane %v7901, 4
      %v7903 = vmax.f32 %v7901, %v7902
      %v7904 = vrot.slane %v7903, 2
      %v7905 = vmax.f32 %v7903, %v7904
      %v7906 = vrot.slane %v7905, 1
      %v7907 = vmax.f32 %v7905, %v7906
      %v7908 = vsel %vm7697, %v7662, -inf
      %v7909 = vrot.slane %v7908, 4
      %v7910 = vmax.f32 %v7908, %v7909
      %v7911 = vrot.slane %v7910, 2
      %v7912 = vmax.f32 %v7910, %v7911
      %v7913 = vrot.slane %v7912, 1
      %v7914 = vmax.f32 %v7912, %v7913
      %v7915 = vsel %vm7697, %v7664, -inf
      %v7916 = vrot.slane %v7915, 4
      %v7917 = vmax.f32 %v7915, %v7916
      %v7918 = vrot.slane %v7917, 2
      %v7919 = vmax.f32 %v7917, %v7918
      %v7920 = vrot.slane %v7919, 1
      %v7921 = vmax.f32 %v7919, %v7920
      %vm7922 = vcmask 62464
      %7923 = vst.msk [vmem:[#allocation4] sm:$0x3f] %vm7922, 0.0
      %s7924 = scalar_lea.vmem [#allocation4], 72
      %7925 = vst.msk [vmem:[%s7924] sm:$0x3f] %vm7922, 0.0
      %vm7926 = vcmask 57344
      %7927 = vst.msk [vmem:[#allocation4] sm:$0x1] %vm7926, 0.0
      %7928 = vst.msk [vmem:[#allocation4 + $0x8] sm:$0x1] %vm7926, 0.0
      %7929 = vst.msk [vmem:[#allocation4 + $0x10] sm:$0x1] %vm7926, 0.0
      %7930 = vst.msk [vmem:[#allocation4 + $0x18] sm:$0x1] %vm7926, 0.0
      %7931 = vst.msk [vmem:[#allocation4 + $0x20] sm:$0x1] %vm7926, 0.0
      %7932 = vst.msk [vmem:[#allocation4 + $0x28] sm:$0x1] %vm7926, 0.0
      %7933 = vst.msk [vmem:[#allocation4 + $0x30] sm:$0x1] %vm7926, 0.0
      %7934 = vst.msk [vmem:[#allocation4 + $0x38] sm:$0x1] %vm7926, 0.0
      %7935 = vst.msk [vmem:[#allocation4 + $0x40] sm:$0x1] %vm7926, 0.0
      %7936 = vst.msk [vmem:[#allocation4 + $0x48] sm:$0x1] %vm7926, 0.0
      %7937 = vst.msk [vmem:[#allocation4 + $0x5] sm:$0x1] %vm7926, 0.0
      %7938 = vst.msk [vmem:[#allocation4 + $0xd] sm:$0x1] %vm7926, 0.0
      %7939 = vst.msk [vmem:[#allocation4 + $0x15] sm:$0x1] %vm7926, 0.0
      %7940 = vst.msk [vmem:[#allocation4 + $0x1d] sm:$0x1] %vm7926, 0.0
      %7941 = vst.msk [vmem:[#allocation4 + $0x25] sm:$0x1] %vm7926, 0.0
      %7942 = vst.msk [vmem:[#allocation4 + $0x2d] sm:$0x1] %vm7926, 0.0
      %7943 = vst.msk [vmem:[#allocation4 + $0x35] sm:$0x1] %vm7926, 0.0
      %7944 = vst.msk [vmem:[#allocation4 + $0x3d] sm:$0x1] %vm7926, 0.0
      %7945 = vst.msk [vmem:[#allocation4 + $0x45] sm:$0x1] %vm7926, 0.0
      %7946 = vst.msk [vmem:[#allocation4 + $0x4d] sm:$0x1] %vm7926, 0.0
      %v7979 = vsel %vm6352, %v7711, %v7704
      %v7980 = vsel %vm6354, %v7718, %v7979
      %v7981 = vsel %vm6356, %v7725, %v7980
      %v7982 = vsel %vm6352, %v7739, %v7732
      %v7983 = vsel %vm6354, %v7746, %v7982
      %v7984 = vsel %vm6356, %v7753, %v7983
      %v7985 = vsel %vm6352, %v7767, %v7760
      %v7986 = vsel %vm6354, %v7774, %v7985
      %v7987 = vsel %vm6356, %v7781, %v7986
      %v7988 = vsel %vm6352, %v7795, %v7788
      %v7989 = vsel %vm6354, %v7802, %v7988
      %v7990 = vsel %vm6356, %v7809, %v7989
      %v7991 = vsel %vm6352, %v7823, %v7816
      %v7992 = vsel %vm6354, %v7830, %v7991
      %v7993 = vsel %vm6356, %v7837, %v7992
      %v7994 = vsel %vm6352, %v7851, %v7844
      %v7995 = vsel %vm6354, %v7858, %v7994
      %v7996 = vsel %vm6356, %v7865, %v7995
      %v7997 = vsel %vm6352, %v7879, %v7872
      %v7998 = vsel %vm6354, %v7886, %v7997
      %v7999 = vsel %vm6356, %v7893, %v7998
      %v8000 = vsel %vm6352, %v7907, %v7900
      %v8001 = vsel %vm6354, %v7914, %v8000
      %v8002 = vsel %vm6356, %v7921, %v8001
      %s8011 = scalar_lea.vmem [#allocation4], 8
      %vm8012 = vcmask 60416
      %8013 = vst.msk [vmem:[%s8011 + $0x1] sm:$0xf] %vm8012, %v7981
      %8014 = vst.msk [vmem:[%s8011 + $0x9] sm:$0xf] %vm8012, %v7984
      %8015 = vst.msk [vmem:[%s8011 + $0x11] sm:$0xf] %vm8012, %v7987
      %8016 = vst.msk [vmem:[%s8011 + $0x19] sm:$0xf] %vm8012, %v7990
      %8017 = vst.msk [vmem:[%s8011 + $0x21] sm:$0xf] %vm8012, %v7993
      %8018 = vst.msk [vmem:[%s8011 + $0x29] sm:$0xf] %vm8012, %v7996
      %8019 = vst.msk [vmem:[%s8011 + $0x31] sm:$0xf] %vm8012, %v7999
      %8020 = vst.msk [vmem:[%s8011 + $0x39] sm:$0xf] %vm8012, %v8002
      %v8021 = vld [vmem:[#allocation4] sm:$0xf]
      %v8022 = vld [vmem:[#allocation4 + $0x8] sm:$0xf]
      %v8023 = vld [vmem:[#allocation4 + $0x10] sm:$0xf]
      %v8024 = vld [vmem:[#allocation4 + $0x18] sm:$0xf]
      %v8025 = vld [vmem:[#allocation4 + $0x20] sm:$0xf]
      %v8026 = vld [vmem:[#allocation4 + $0x28] sm:$0xf]
      %v8027 = vld [vmem:[#allocation4 + $0x30] sm:$0xf]
      %v8028 = vld [vmem:[#allocation4 + $0x38] sm:$0xf]
      %v8037 = vcombine.low %v8021, %v8022
      %v8038 = vcombine.low %v8023, %v8024
      %v8039 = vcombine.low %v8025, %v8026
      %v8040 = vcombine.low %v8027, %v8028
      %8045 = vst.msk [vmem:[#allocation9] sm:$0xff] %vm7496, %v8037
      %8046 = vst.msk [vmem:[#allocation9 + $0x18] sm:$0xff] %vm7496, %v8038
      %8047 = vst.msk [vmem:[#allocation9 + $0x30] sm:$0xff] %vm7496, %v8039
      %8048 = vst.msk [vmem:[#allocation9 + $0x48] sm:$0xff] %vm7496, %v8040
      %v8049 = vld [vmem:[#allocation4 + $0x1] sm:$0xf]
      %v8050 = vld [vmem:[#allocation4 + $0x9] sm:$0xf]
      %v8051 = vld [vmem:[#allocation4 + $0x11] sm:$0xf]
      %v8052 = vld [vmem:[#allocation4 + $0x19] sm:$0xf]
      %v8053 = vld [vmem:[#allocation4 + $0x21] sm:$0xf]
      %v8054 = vld [vmem:[#allocation4 + $0x29] sm:$0xf]
      %v8055 = vld [vmem:[#allocation4 + $0x31] sm:$0xf]
      %v8056 = vld [vmem:[#allocation4 + $0x39] sm:$0xf]
      %v8065 = vcombine.low %v8049, %v8050
      %v8066 = vcombine.low %v8051, %v8052
      %v8067 = vcombine.low %v8053, %v8054
      %v8068 = vcombine.low %v8055, %v8056
      %8069 = vrot.lane.b32.xlu0 %v8065, 8
      %v8070 = vpop.permute.xlu0 %8069
      %8071 = vrot.lane.b32.xlu0 %v8066, 8
      %v8072 = vpop.permute.xlu0 %8071
      %8073 = vrot.lane.b32.xlu0 %v8067, 8
      %v8074 = vpop.permute.xlu0 %8073
      %8075 = vrot.lane.b32.xlu0 %v8068, 8
      %v8076 = vpop.permute.xlu0 %8075
      %vm8081 = vcmask 130112
      %8082 = vst.msk [vmem:[#allocation9] sm:$0xff] %vm8081, %v8070
      %8083 = vst.msk [vmem:[#allocation9 + $0x18] sm:$0xff] %vm8081, %v8072
      %8084 = vst.msk [vmem:[#allocation9 + $0x30] sm:$0xff] %vm8081, %v8074
      %8085 = vst.msk [vmem:[#allocation9 + $0x48] sm:$0xff] %vm8081, %v8076
      %v8086 = vld [vmem:[#allocation4 + $0x2] sm:$0xf]
      %v8087 = vld [vmem:[#allocation4 + $0xa] sm:$0xf]
      %v8088 = vld [vmem:[#allocation4 + $0x12] sm:$0xf]
      %v8089 = vld [vmem:[#allocation4 + $0x1a] sm:$0xf]
      %v8090 = vld [vmem:[#allocation4 + $0x22] sm:$0xf]
      %v8091 = vld [vmem:[#allocation4 + $0x2a] sm:$0xf]
      %v8092 = vld [vmem:[#allocation4 + $0x32] sm:$0xf]
      %v8093 = vld [vmem:[#allocation4 + $0x3a] sm:$0xf]
      %v8102 = vcombine.low %v8086, %v8087
      %v8103 = vcombine.low %v8088, %v8089
      %v8104 = vcombine.low %v8090, %v8091
      %v8105 = vcombine.low %v8092, %v8093
      %8106 = vrot.lane.b32.xlu0 %v8102, 16
      %v8107 = vpop.permute.xlu0 %8106
      %8108 = vrot.lane.b32.xlu0 %v8103, 16
      %v8109 = vpop.permute.xlu0 %8108
      %8110 = vrot.lane.b32.xlu0 %v8104, 16
      %v8111 = vpop.permute.xlu0 %8110
      %8112 = vrot.lane.b32.xlu0 %v8105, 16
      %v8113 = vpop.permute.xlu0 %8112
      %vm8118 = vcmask 195712
      %8119 = vst.msk [vmem:[#allocation9] sm:$0xff] %vm8118, %v8107
      %8120 = vst.msk [vmem:[#allocation9 + $0x18] sm:$0xff] %vm8118, %v8109
      %8121 = vst.msk [vmem:[#allocation9 + $0x30] sm:$0xff] %vm8118, %v8111
      %8122 = vst.msk [vmem:[#allocation9 + $0x48] sm:$0xff] %vm8118, %v8113
      %v8123 = vld [vmem:[%s8011] sm:$0xf]
      %v8124 = vld [vmem:[%s8011 + $0x8] sm:$0xf]
      %v8125 = vld [vmem:[%s8011 + $0x10] sm:$0xf]
      %v8126 = vld [vmem:[%s8011 + $0x18] sm:$0xf]
      %v8127 = vld [vmem:[%s8011 + $0x20] sm:$0xf]
      %v8128 = vld [vmem:[%s8011 + $0x28] sm:$0xf]
      %v8129 = vld [vmem:[%s8011 + $0x30] sm:$0xf]
      %v8130 = vld [vmem:[%s8011 + $0x38] sm:$0xf]
      %v8139 = vcombine.low %v8123, %v8124
      %v8140 = vcombine.low %v8125, %v8126
      %v8141 = vcombine.low %v8127, %v8128
      %v8142 = vcombine.low %v8129, %v8130
      %8143 = vrot.lane.b32.xlu0 %v8139, 24
      %v8144 = vpop.permute.xlu0 %8143
      %8145 = vrot.lane.b32.xlu0 %v8140, 24
      %v8146 = vpop.permute.xlu0 %8145
      %8147 = vrot.lane.b32.xlu0 %v8141, 24
      %v8148 = vpop.permute.xlu0 %8147
      %8149 = vrot.lane.b32.xlu0 %v8142, 24
      %v8150 = vpop.permute.xlu0 %8149
      %vm8155 = vcmask 261312
      %8156 = vst.msk [vmem:[#allocation9] sm:$0xff] %vm8155, %v8144
      %8157 = vst.msk [vmem:[#allocation9 + $0x18] sm:$0xff] %vm8155, %v8146
      %8158 = vst.msk [vmem:[#allocation9 + $0x30] sm:$0xff] %vm8155, %v8148
      %8159 = vst.msk [vmem:[#allocation9 + $0x48] sm:$0xff] %vm8155, %v8150
      %v8160 = vld [vmem:[%s8011 + $0x1] sm:$0xf]
      %v8161 = vld [vmem:[%s8011 + $0x9] sm:$0xf]
      %v8162 = vld [vmem:[%s8011 + $0x11] sm:$0xf]
      %v8163 = vld [vmem:[%s8011 + $0x19] sm:$0xf]
      %v8164 = vld [vmem:[%s8011 + $0x21] sm:$0xf]
      %v8165 = vld [vmem:[%s8011 + $0x29] sm:$0xf]
      %v8166 = vld [vmem:[%s8011 + $0x31] sm:$0xf]
      %v8167 = vld [vmem:[%s8011 + $0x39] sm:$0xf]
      %v8176 = vcombine.low %v8160, %v8161
      %v8177 = vcombine.low %v8162, %v8163
      %v8178 = vcombine.low %v8164, %v8165
      %v8179 = vcombine.low %v8166, %v8167
      %8180 = vrot.lane.b32.xlu0 %v8176, 32
      %v8181 = vpop.permute.xlu0 %8180
      %8182 = vrot.lane.b32.xlu0 %v8177, 32
      %v8183 = vpop.permute.xlu0 %8182
      %8184 = vrot.lane.b32.xlu0 %v8178, 32
      %v8185 = vpop.permute.xlu0 %8184
      %8186 = vrot.lane.b32.xlu0 %v8179, 32
      %v8187 = vpop.permute.xlu0 %8186
      %vm8192 = vcmask 326912
      %8193 = vst.msk [vmem:[#allocation9] sm:$0xff] %vm8192, %v8181
      %8194 = vst.msk [vmem:[#allocation9 + $0x18] sm:$0xff] %vm8192, %v8183
      %8195 = vst.msk [vmem:[#allocation9 + $0x30] sm:$0xff] %vm8192, %v8185
      %8196 = vst.msk [vmem:[#allocation9 + $0x48] sm:$0xff] %vm8192, %v8187
      %v8197 = vld [vmem:[%s8011 + $0x2] sm:$0xf]
      %v8198 = vld [vmem:[%s8011 + $0xa] sm:$0xf]
      %v8199 = vld [vmem:[%s8011 + $0x12] sm:$0xf]
      %v8200 = vld [vmem:[%s8011 + $0x1a] sm:$0xf]
      %v8201 = vld [vmem:[%s8011 + $0x22] sm:$0xf]
      %v8202 = vld [vmem:[%s8011 + $0x2a] sm:$0xf]
      %v8203 = vld [vmem:[%s8011 + $0x32] sm:$0xf]
      %v8204 = vld [vmem:[%s8011 + $0x3a] sm:$0xf]
      %v8213 = vcombine.low %v8197, %v8198
      %v8214 = vcombine.low %v8199, %v8200
      %v8215 = vcombine.low %v8201, %v8202
      %v8216 = vcombine.low %v8203, %v8204
      %8217 = vrot.lane.b32.xlu0 %v8213, 40
      %v8218 = vpop.permute.xlu0 %8217
      %8219 = vrot.lane.b32.xlu0 %v8214, 40
      %v8220 = vpop.permute.xlu0 %8219
      %8221 = vrot.lane.b32.xlu0 %v8215, 40
      %v8222 = vpop.permute.xlu0 %8221
      %8223 = vrot.lane.b32.xlu0 %v8216, 40
      %v8224 = vpop.permute.xlu0 %8223
      %vm8229 = vcmask 392512
      %8230 = vst.msk [vmem:[#allocation9] sm:$0xff] %vm8229, %v8218
      %8231 = vst.msk [vmem:[#allocation9 + $0x18] sm:$0xff] %vm8229, %v8220
      %8232 = vst.msk [vmem:[#allocation9 + $0x30] sm:$0xff] %vm8229, %v8222
      %8233 = vst.msk [vmem:[#allocation9 + $0x48] sm:$0xff] %vm8229, %v8224
      %s8234 = scalar_lea.vmem [#allocation4], 16
      %v8235 = vld [vmem:[%s8234] sm:$0xf]
      %v8236 = vld [vmem:[%s8234 + $0x8] sm:$0xf]
      %v8237 = vld [vmem:[%s8234 + $0x10] sm:$0xf]
      %v8238 = vld [vmem:[%s8234 + $0x18] sm:$0xf]
      %v8239 = vld [vmem:[%s8234 + $0x20] sm:$0xf]
      %v8240 = vld [vmem:[%s8234 + $0x28] sm:$0xf]
      %v8241 = vld [vmem:[%s8234 + $0x30] sm:$0xf]
      %v8242 = vld [vmem:[%s8234 + $0x38] sm:$0xf]
      %v8251 = vcombine.low %v8235, %v8236
      %v8252 = vcombine.low %v8237, %v8238
      %v8253 = vcombine.low %v8239, %v8240
      %v8254 = vcombine.low %v8241, %v8242
      %8255 = vrot.lane.b32.xlu0 %v8251, 48
      %v8256 = vpop.permute.xlu0 %8255
      %8257 = vrot.lane.b32.xlu0 %v8252, 48
      %v8258 = vpop.permute.xlu0 %8257
      %8259 = vrot.lane.b32.xlu0 %v8253, 48
      %v8260 = vpop.permute.xlu0 %8259
      %8261 = vrot.lane.b32.xlu0 %v8254, 48
      %v8262 = vpop.permute.xlu0 %8261
      %vm8267 = vcmask 458112
      %8268 = vst.msk [vmem:[#allocation9] sm:$0xff] %vm8267, %v8256
      %8269 = vst.msk [vmem:[#allocation9 + $0x18] sm:$0xff] %vm8267, %v8258
      %8270 = vst.msk [vmem:[#allocation9 + $0x30] sm:$0xff] %vm8267, %v8260
      %8271 = vst.msk [vmem:[#allocation9 + $0x48] sm:$0xff] %vm8267, %v8262
      %v8272 = vld [vmem:[%s8234 + $0x1] sm:$0xf]
      %v8273 = vld [vmem:[%s8234 + $0x9] sm:$0xf]
      %v8274 = vld [vmem:[%s8234 + $0x11] sm:$0xf]
      %v8275 = vld [vmem:[%s8234 + $0x19] sm:$0xf]
      %v8276 = vld [vmem:[%s8234 + $0x21] sm:$0xf]
      %v8277 = vld [vmem:[%s8234 + $0x29] sm:$0xf]
      %v8278 = vld [vmem:[%s8234 + $0x31] sm:$0xf]
      %v8279 = vld [vmem:[%s8234 + $0x39] sm:$0xf]
      %v8288 = vcombine.low %v8272, %v8273
      %v8289 = vcombine.low %v8274, %v8275
      %v8290 = vcombine.low %v8276, %v8277
      %v8291 = vcombine.low %v8278, %v8279
      %8292 = vrot.lane.b32.xlu0 %v8288, 56
      %v8293 = vpop.permute.xlu0 %8292
      %8294 = vrot.lane.b32.xlu0 %v8289, 56
      %v8295 = vpop.permute.xlu0 %8294
      %8296 = vrot.lane.b32.xlu0 %v8290, 56
      %v8297 = vpop.permute.xlu0 %8296
      %8298 = vrot.lane.b32.xlu0 %v8291, 56
      %v8299 = vpop.permute.xlu0 %8298
      %vm8304 = vcmask 523712
      %8305 = vst.msk [vmem:[#allocation9] sm:$0xff] %vm8304, %v8293
      %8306 = vst.msk [vmem:[#allocation9 + $0x18] sm:$0xff] %vm8304, %v8295
      %8307 = vst.msk [vmem:[#allocation9 + $0x30] sm:$0xff] %vm8304, %v8297
      %8308 = vst.msk [vmem:[#allocation9 + $0x48] sm:$0xff] %vm8304, %v8299
      %v8309 = vld [vmem:[%s8234 + $0x2] sm:$0xf]
      %v8310 = vld [vmem:[%s8234 + $0xa] sm:$0xf]
      %v8311 = vld [vmem:[%s8234 + $0x12] sm:$0xf]
      %v8312 = vld [vmem:[%s8234 + $0x1a] sm:$0xf]
      %v8313 = vld [vmem:[%s8234 + $0x22] sm:$0xf]
      %v8314 = vld [vmem:[%s8234 + $0x2a] sm:$0xf]
      %v8315 = vld [vmem:[%s8234 + $0x32] sm:$0xf]
      %v8316 = vld [vmem:[%s8234 + $0x3a] sm:$0xf]
      %v8325 = vcombine.low %v8309, %v8310
      %v8326 = vcombine.low %v8311, %v8312
      %v8327 = vcombine.low %v8313, %v8314
      %v8328 = vcombine.low %v8315, %v8316
      %8329 = vrot.lane.b32.xlu0 %v8325, 64
      %v8330 = vpop.permute.xlu0 %8329
      %8331 = vrot.lane.b32.xlu0 %v8326, 64
      %v8332 = vpop.permute.xlu0 %8331
      %8333 = vrot.lane.b32.xlu0 %v8327, 64
      %v8334 = vpop.permute.xlu0 %8333
      %8335 = vrot.lane.b32.xlu0 %v8328, 64
      %v8336 = vpop.permute.xlu0 %8335
      %vm8341 = vcmask 589312
      %8342 = vst.msk [vmem:[#allocation9] sm:$0xff] %vm8341, %v8330
      %8343 = vst.msk [vmem:[#allocation9 + $0x18] sm:$0xff] %vm8341, %v8332
      %8344 = vst.msk [vmem:[#allocation9 + $0x30] sm:$0xff] %vm8341, %v8334
      %8345 = vst.msk [vmem:[#allocation9 + $0x48] sm:$0xff] %vm8341, %v8336
      %v8346 = vld [vmem:[#allocation9] sm:$0xff]
      %v8347 = vld [vmem:[#allocation9 + $0x18] sm:$0xff]
      %v8348 = vld [vmem:[#allocation9 + $0x30] sm:$0xff]
      %v8349 = vld [vmem:[#allocation9 + $0x48] sm:$0xff]
      %v8350 = vpack.c.bf16 %v8347, %v8346
      %v8351 = vpack.c.bf16 %v8349, %v8348
      %v8352 = vld [vmem:[%s5] sm:$0xf]
      %v8353 = vld [vmem:[%s5 + $0x4] sm:$0xf]
      %v8354 = vld [vmem:[%s5 + $0x8] sm:$0xf]
      %v8355 = vld [vmem:[%s5 + $0xc] sm:$0xf]
      %v8356 = vld [vmem:[%s5 + $0x10] sm:$0xf]
      %v8357 = vld [vmem:[%s5 + $0x14] sm:$0xf]
      %v8358 = vld [vmem:[%s5 + $0x18] sm:$0xf]
      %v8359 = vld [vmem:[%s5 + $0x1c] sm:$0xf]
      %v8360 = vld [vmem:[%s5 + $0x20] sm:$0xf]
      %v8361 = vld [vmem:[%s6] sm:$0x1]
      %v8363 = vlaneseq
      %v8364 = vshrl.u32 %v8363, 7
      %v8365 = vsub.s32 0, %v8364
      %v8366 = vrot.slane %v8361, %v8365
      %v8377 = vunpack.c.l.b16 %v8352
      %v8378 = vunpack.c.l.b16 %v8353
      %v8379 = vunpack.c.l.b16 %v8354
      %v8380 = vunpack.c.l.b16 %v8355
      %v8381 = vunpack.c.l.b16 %v8356
      %v8382 = vunpack.c.l.b16 %v8357
      %v8383 = vunpack.c.l.b16 %v8358
      %v8384 = vunpack.c.l.b16 %v8359
      %v8385 = vunpack.c.l.b16 %v8360
      %v8386 = vpack.c.b16 %v8378, %v8377
      %v8387 = vpack.c.b16 %v8380, %v8379
      %v8388 = vpack.c.b16 %v8382, %v8381
      %v8389 = vpack.c.b16 %v8384, %v8383
      %v8390 = vpack.c.b16 %v8385, %v8385
      %vm8395 = vcmask 588800
      %v8397 = vsel %vm8395, %v8350, 0
      %v8400 = vsel %vm8395, %v8351, 0
      %vm8402 = vcmask 1043456
      %v8404 = vsel %vm8402, %v8390, 0
      %8406 = vmatprep.subr.bf16.mxu0 0
      %8407 = vmatpush1.bf16.msra.mxu0 %v8386
      %8408 = vmatprep.subr.bf16.mxu0 0
      %8409 = vmatpush1.bf16.msra.mxu0 %v8387
      %8410 = vmatprep.subr.bf16.mxu0 0
      %8411 = vmatpush1.bf16.msra.mxu0 %v8388
      %8412 = vmatprep.subr.bf16.mxu0 0
      %8413 = vmatpush1.bf16.msra.mxu0 %v8389
      %8414 = vmatprep.subr.bf16.mxu0 0
      %8415 = vmatpush1.bf16.msra.mxu0 %v8404
      %8416 = vmatprep.subr.bf16.mxu0 0
      %8417 = vmatpush1.bf16.msra.mxu0 0
      %8418 = vmatprep.subr.bf16.mxu0 0
      %8419 = vmatpush1.bf16.msra.mxu0 0
      %8420 = vmatprep.subr.bf16.mxu0 0
      %8421 = vmatpush1.bf16.msra.mxu0 0
      %8422 = vmatprep.subr.bf16.mxu0 0
      %8423 = vmatpush1.bf16.msra.mxu0 0
      %8424 = vmatprep.subr.bf16.mxu0 0
      %8425 = vmatpush1.bf16.msra.mxu0 0
      %8426 = vmatprep.subr.bf16.mxu0 0
      %8427 = vmatpush1.bf16.msra.mxu0 0
      %8428 = vmatprep.subr.bf16.mxu0 0
      %8429 = vmatpush1.bf16.msra.mxu0 0
      %8430 = vmatprep.subr.bf16.mxu0 0
      %8431 = vmatpush1.bf16.msra.mxu0 0
      %8432 = vmatprep.subr.bf16.mxu0 0
      %8433 = vmatpush1.bf16.msra.mxu0 0
      %8434 = vmatprep.subr.bf16.mxu0 0
      %8435 = vmatpush1.bf16.msra.mxu0 0
      %8436 = vmatprep.subr.bf16.mxu0 0
      %8437 = vmatpush1.bf16.msra.mxu0 0
      %8438 = vmatprep.mubr.bf16.mxu0 0
      %8439 = vmatmul.mubr.bf16.gmra.mrb[0].mxu0 %v8397
      %v8440 = vpop.f32.mrb[0].mxu0
      %v8441 = vadd.f32 %v8366, %v8440
      %v8442 = vpop.f32.mrb[0].mxu0
      %v8443 = vpop.f32.mrb[0].mxu0
      %v8444 = vadd.f32 %v8366, %v8443
      %v8445 = vpop.f32.mrb[0].mxu0
      %8446 = vmatprep.mubr.bf16.mxu0 0
      %8447 = vmatmul.mubr.bf16.gmra.mrb[0].mxu0 %v8400
      %v8448 = vpop.f32.mrb[0].mxu0
      %v8449 = vadd.f32 %v8366, %v8448
      %v8450 = vpop.f32.mrb[0].mxu0
      %v8451 = vpop.f32.mrb[0].mxu0
      %v8452 = vadd.f32 %v8366, %v8451
      %v8453 = vpop.f32.mrb[0].mxu0
      %8454 = vdwg.mxu0
      %v8455 = vmax.f32 %v8441, 0.0
      %v8456 = vmax.f32 %v8444, 0.0
      %v8457 = vmax.f32 %v8449, 0.0
      %v8458 = vmax.f32 %v8452, 0.0
      %v8463 = vcombine.high %v8455, %v8455
      %v8464 = vcombine.high %v8456, %v8456
      %v8465 = vcombine.high %v8457, %v8457
      %v8466 = vcombine.high %v8458, %v8458
      %vm8471 = vcmask 128000
      %8472 = vst.msk [vmem:[#allocation5] sm:$0x3f] %vm8471, 0.0
      %s8473 = scalar_lea.vmem [#allocation5], 72
      %8474 = vst.msk [vmem:[%s8473] sm:$0x3f] %vm8471, 0.0
      %vm8475 = vcmask 122880
      %8476 = vst.msk [vmem:[#allocation5] sm:$0x1] %vm8475, 0.0
      %8477 = vst.msk [vmem:[#allocation5 + $0x8] sm:$0x1] %vm8475, 0.0
      %8478 = vst.msk [vmem:[#allocation5 + $0x10] sm:$0x1] %vm8475, 0.0
      %8479 = vst.msk [vmem:[#allocation5 + $0x18] sm:$0x1] %vm8475, 0.0
      %8480 = vst.msk [vmem:[#allocation5 + $0x20] sm:$0x1] %vm8475, 0.0
      %8481 = vst.msk [vmem:[#allocation5 + $0x28] sm:$0x1] %vm8475, 0.0
      %8482 = vst.msk [vmem:[#allocation5 + $0x30] sm:$0x1] %vm8475, 0.0
      %8483 = vst.msk [vmem:[#allocation5 + $0x38] sm:$0x1] %vm8475, 0.0
      %8484 = vst.msk [vmem:[#allocation5 + $0x40] sm:$0x1] %vm8475, 0.0
      %8485 = vst.msk [vmem:[#allocation5 + $0x48] sm:$0x1] %vm8475, 0.0
      %8486 = vst.msk [vmem:[#allocation5 + $0x5] sm:$0x1] %vm8475, 0.0
      %8487 = vst.msk [vmem:[#allocation5 + $0xd] sm:$0x1] %vm8475, 0.0
      %8488 = vst.msk [vmem:[#allocation5 + $0x15] sm:$0x1] %vm8475, 0.0
      %8489 = vst.msk [vmem:[#allocation5 + $0x1d] sm:$0x1] %vm8475, 0.0
      %8490 = vst.msk [vmem:[#allocation5 + $0x25] sm:$0x1] %vm8475, 0.0
      %8491 = vst.msk [vmem:[#allocation5 + $0x2d] sm:$0x1] %vm8475, 0.0
      %8492 = vst.msk [vmem:[#allocation5 + $0x35] sm:$0x1] %vm8475, 0.0
      %8493 = vst.msk [vmem:[#allocation5 + $0x3d] sm:$0x1] %vm8475, 0.0
      %8494 = vst.msk [vmem:[#allocation5 + $0x45] sm:$0x1] %vm8475, 0.0
      %8495 = vst.msk [vmem:[#allocation5 + $0x4d] sm:$0x1] %vm8475, 0.0
      %s8496 = scalar_lea.vmem [#allocation5], 8
      %vm8497 = vcmask 125952
      %8498 = vst.msk [vmem:[%s8496 + $0x1] sm:$0xf] %vm8497, %v8455
      %8499 = vst.msk [vmem:[%s8496 + $0x9] sm:$0xf] %vm8497, %v8463
      %8500 = vst.msk [vmem:[%s8496 + $0x11] sm:$0xf] %vm8497, %v8456
      %8501 = vst.msk [vmem:[%s8496 + $0x19] sm:$0xf] %vm8497, %v8464
      %8502 = vst.msk [vmem:[%s8496 + $0x21] sm:$0xf] %vm8497, %v8457
      %8503 = vst.msk [vmem:[%s8496 + $0x29] sm:$0xf] %vm8497, %v8465
      %8504 = vst.msk [vmem:[%s8496 + $0x31] sm:$0xf] %vm8497, %v8458
      %8505 = vst.msk [vmem:[%s8496 + $0x39] sm:$0xf] %vm8497, %v8466
      %v8506 = vld [vmem:[#allocation5] sm:$0xf]
      %v8507 = vld [vmem:[#allocation5 + $0x8] sm:$0xf]
      %v8508 = vld [vmem:[#allocation5 + $0x10] sm:$0xf]
      %v8509 = vld [vmem:[#allocation5 + $0x18] sm:$0xf]
      %v8510 = vld [vmem:[#allocation5 + $0x20] sm:$0xf]
      %v8511 = vld [vmem:[#allocation5 + $0x28] sm:$0xf]
      %v8512 = vld [vmem:[#allocation5 + $0x30] sm:$0xf]
      %v8513 = vld [vmem:[#allocation5 + $0x38] sm:$0xf]
      %v8522 = vcombine.low %v8506, %v8507
      %v8523 = vcombine.low %v8508, %v8509
      %v8524 = vcombine.low %v8510, %v8511
      %v8525 = vcombine.low %v8512, %v8513
      %vm8530 = vcmask 130048
      %8531 = vst.msk [vmem:[#allocation9] sm:$0xff] %vm8530, %v8522
      %8532 = vst.msk [vmem:[#allocation9 + $0x18] sm:$0xff] %vm8530, %v8523
      %8533 = vst.msk [vmem:[#allocation9 + $0x30] sm:$0xff] %vm8530, %v8524
      %8534 = vst.msk [vmem:[#allocation9 + $0x48] sm:$0xff] %vm8530, %v8525
      %v8535 = vld [vmem:[#allocation5 + $0x1] sm:$0xf]
      %v8536 = vld [vmem:[#allocation5 + $0x9] sm:$0xf]
      %v8537 = vld [vmem:[#allocation5 + $0x11] sm:$0xf]
      %v8538 = vld [vmem:[#allocation5 + $0x19] sm:$0xf]
      %v8539 = vld [vmem:[#allocation5 + $0x21] sm:$0xf]
      %v8540 = vld [vmem:[#allocation5 + $0x29] sm:$0xf]
      %v8541 = vld [vmem:[#allocation5 + $0x31] sm:$0xf]
      %v8542 = vld [vmem:[#allocation5 + $0x39] sm:$0xf]
      %v8551 = vcombine.low %v8535, %v8536
      %v8552 = vcombine.low %v8537, %v8538
      %v8553 = vcombine.low %v8539, %v8540
      %v8554 = vcombine.low %v8541, %v8542
      %8555 = vrot.lane.b32.xlu0 %v8551, 16
      %v8556 = vpop.permute.xlu0 %8555
      %8557 = vrot.lane.b32.xlu0 %v8552, 16
      %v8558 = vpop.permute.xlu0 %8557
      %8559 = vrot.lane.b32.xlu0 %v8553, 16
      %v8560 = vpop.permute.xlu0 %8559
      %8561 = vrot.lane.b32.xlu0 %v8554, 16
      %v8562 = vpop.permute.xlu0 %8561
      %vm8567 = vcmask 261248
      %8568 = vst.msk [vmem:[#allocation9] sm:$0xff] %vm8567, %v8556
      %8569 = vst.msk [vmem:[#allocation9 + $0x18] sm:$0xff] %vm8567, %v8558
      %8570 = vst.msk [vmem:[#allocation9 + $0x30] sm:$0xff] %vm8567, %v8560
      %8571 = vst.msk [vmem:[#allocation9 + $0x48] sm:$0xff] %vm8567, %v8562
      %v8572 = vld [vmem:[#allocation5 + $0x2] sm:$0xf]
      %v8573 = vld [vmem:[#allocation5 + $0xa] sm:$0xf]
      %v8574 = vld [vmem:[#allocation5 + $0x12] sm:$0xf]
      %v8575 = vld [vmem:[#allocation5 + $0x1a] sm:$0xf]
      %v8576 = vld [vmem:[#allocation5 + $0x22] sm:$0xf]
      %v8577 = vld [vmem:[#allocation5 + $0x2a] sm:$0xf]
      %v8578 = vld [vmem:[#allocation5 + $0x32] sm:$0xf]
      %v8579 = vld [vmem:[#allocation5 + $0x3a] sm:$0xf]
      %v8588 = vcombine.low %v8572, %v8573
      %v8589 = vcombine.low %v8574, %v8575
      %v8590 = vcombine.low %v8576, %v8577
      %v8591 = vcombine.low %v8578, %v8579
      %8592 = vrot.lane.b32.xlu0 %v8588, 32
      %v8593 = vpop.permute.xlu0 %8592
      %8594 = vrot.lane.b32.xlu0 %v8589, 32
      %v8595 = vpop.permute.xlu0 %8594
      %8596 = vrot.lane.b32.xlu0 %v8590, 32
      %v8597 = vpop.permute.xlu0 %8596
      %8598 = vrot.lane.b32.xlu0 %v8591, 32
      %v8599 = vpop.permute.xlu0 %8598
      %vm8604 = vcmask 392448
      %8605 = vst.msk [vmem:[#allocation9] sm:$0xff] %vm8604, %v8593
      %8606 = vst.msk [vmem:[#allocation9 + $0x18] sm:$0xff] %vm8604, %v8595
      %8607 = vst.msk [vmem:[#allocation9 + $0x30] sm:$0xff] %vm8604, %v8597
      %8608 = vst.msk [vmem:[#allocation9 + $0x48] sm:$0xff] %vm8604, %v8599
      %v8609 = vld [vmem:[%s8496] sm:$0xf]
      %v8610 = vld [vmem:[%s8496 + $0x8] sm:$0xf]
      %v8611 = vld [vmem:[%s8496 + $0x10] sm:$0xf]
      %v8612 = vld [vmem:[%s8496 + $0x18] sm:$0xf]
      %v8613 = vld [vmem:[%s8496 + $0x20] sm:$0xf]
      %v8614 = vld [vmem:[%s8496 + $0x28] sm:$0xf]
      %v8615 = vld [vmem:[%s8496 + $0x30] sm:$0xf]
      %v8616 = vld [vmem:[%s8496 + $0x38] sm:$0xf]
      %v8625 = vcombine.low %v8609, %v8610
      %v8626 = vcombine.low %v8611, %v8612
      %v8627 = vcombine.low %v8613, %v8614
      %v8628 = vcombine.low %v8615, %v8616
      %8629 = vrot.lane.b32.xlu0 %v8625, 48
      %v8630 = vpop.permute.xlu0 %8629
      %8631 = vrot.lane.b32.xlu0 %v8626, 48
      %v8632 = vpop.permute.xlu0 %8631
      %8633 = vrot.lane.b32.xlu0 %v8627, 48
      %v8634 = vpop.permute.xlu0 %8633
      %8635 = vrot.lane.b32.xlu0 %v8628, 48
      %v8636 = vpop.permute.xlu0 %8635
      %vm8641 = vcmask 523648
      %8642 = vst.msk [vmem:[#allocation9] sm:$0xff] %vm8641, %v8630
      %8643 = vst.msk [vmem:[#allocation9 + $0x18] sm:$0xff] %vm8641, %v8632
      %8644 = vst.msk [vmem:[#allocation9 + $0x30] sm:$0xff] %vm8641, %v8634
      %8645 = vst.msk [vmem:[#allocation9 + $0x48] sm:$0xff] %vm8641, %v8636
      %v8646 = vld [vmem:[%s8496 + $0x1] sm:$0xf]
      %v8647 = vld [vmem:[%s8496 + $0x9] sm:$0xf]
      %v8648 = vld [vmem:[%s8496 + $0x11] sm:$0xf]
      %v8649 = vld [vmem:[%s8496 + $0x19] sm:$0xf]
      %v8650 = vld [vmem:[%s8496 + $0x21] sm:$0xf]
      %v8651 = vld [vmem:[%s8496 + $0x29] sm:$0xf]
      %v8652 = vld [vmem:[%s8496 + $0x31] sm:$0xf]
      %v8653 = vld [vmem:[%s8496 + $0x39] sm:$0xf]
      %v8662 = vcombine.low %v8646, %v8647
      %v8663 = vcombine.low %v8648, %v8649
      %v8664 = vcombine.low %v8650, %v8651
      %v8665 = vcombine.low %v8652, %v8653
      %8666 = vrot.lane.b32.xlu0 %v8662, 64
      %v8667 = vpop.permute.xlu0 %8666
      %8668 = vrot.lane.b32.xlu0 %v8663, 64
      %v8669 = vpop.permute.xlu0 %8668
      %8670 = vrot.lane.b32.xlu0 %v8664, 64
      %v8671 = vpop.permute.xlu0 %8670
      %8672 = vrot.lane.b32.xlu0 %v8665, 64
      %v8673 = vpop.permute.xlu0 %8672
      %vm8678 = vcmask 654848
      %8679 = vst.msk [vmem:[#allocation9] sm:$0xff] %vm8678, %v8667
      %8680 = vst.msk [vmem:[#allocation9 + $0x18] sm:$0xff] %vm8678, %v8669
      %8681 = vst.msk [vmem:[#allocation9 + $0x30] sm:$0xff] %vm8678, %v8671
      %8682 = vst.msk [vmem:[#allocation9 + $0x48] sm:$0xff] %vm8678, %v8673
      %v8683 = vld [vmem:[%s8496 + $0x2] sm:$0xf]
      %v8684 = vld [vmem:[%s8496 + $0xa] sm:$0xf]
      %v8685 = vld [vmem:[%s8496 + $0x12] sm:$0xf]
      %v8686 = vld [vmem:[%s8496 + $0x1a] sm:$0xf]
      %v8687 = vld [vmem:[%s8496 + $0x22] sm:$0xf]
      %v8688 = vld [vmem:[%s8496 + $0x2a] sm:$0xf]
      %v8689 = vld [vmem:[%s8496 + $0x32] sm:$0xf]
      %v8690 = vld [vmem:[%s8496 + $0x3a] sm:$0xf]
      %v8699 = vcombine.low %v8683, %v8684
      %v8700 = vcombine.low %v8685, %v8686
      %v8701 = vcombine.low %v8687, %v8688
      %v8702 = vcombine.low %v8689, %v8690
      %8703 = vrot.lane.b32.xlu0 %v8699, 80
      %v8704 = vpop.permute.xlu0 %8703
      %8705 = vrot.lane.b32.xlu0 %v8700, 80
      %v8706 = vpop.permute.xlu0 %8705
      %8707 = vrot.lane.b32.xlu0 %v8701, 80
      %v8708 = vpop.permute.xlu0 %8707
      %8709 = vrot.lane.b32.xlu0 %v8702, 80
      %v8710 = vpop.permute.xlu0 %8709
      %vm8715 = vcmask 786048
      %8716 = vst.msk [vmem:[#allocation9] sm:$0xff] %vm8715, %v8704
      %8717 = vst.msk [vmem:[#allocation9 + $0x18] sm:$0xff] %vm8715, %v8706
      %8718 = vst.msk [vmem:[#allocation9 + $0x30] sm:$0xff] %vm8715, %v8708
      %8719 = vst.msk [vmem:[#allocation9 + $0x48] sm:$0xff] %vm8715, %v8710
      %s8720 = scalar_lea.vmem [#allocation5], 16
      %v8721 = vld [vmem:[%s8720] sm:$0xf]
      %v8722 = vld [vmem:[%s8720 + $0x8] sm:$0xf]
      %v8723 = vld [vmem:[%s8720 + $0x10] sm:$0xf]
      %v8724 = vld [vmem:[%s8720 + $0x18] sm:$0xf]
      %v8725 = vld [vmem:[%s8720 + $0x20] sm:$0xf]
      %v8726 = vld [vmem:[%s8720 + $0x28] sm:$0xf]
      %v8727 = vld [vmem:[%s8720 + $0x30] sm:$0xf]
      %v8728 = vld [vmem:[%s8720 + $0x38] sm:$0xf]
      %v8737 = vcombine.low %v8721, %v8722
      %v8738 = vcombine.low %v8723, %v8724
      %v8739 = vcombine.low %v8725, %v8726
      %v8740 = vcombine.low %v8727, %v8728
      %8741 = vrot.lane.b32.xlu0 %v8737, 96
      %v8742 = vpop.permute.xlu0 %8741
      %8743 = vrot.lane.b32.xlu0 %v8738, 96
      %v8744 = vpop.permute.xlu0 %8743
      %8745 = vrot.lane.b32.xlu0 %v8739, 96
      %v8746 = vpop.permute.xlu0 %8745
      %8747 = vrot.lane.b32.xlu0 %v8740, 96
      %v8748 = vpop.permute.xlu0 %8747
      %vm8753 = vcmask 917248
      %8754 = vst.msk [vmem:[#allocation9] sm:$0xff] %vm8753, %v8742
      %8755 = vst.msk [vmem:[#allocation9 + $0x18] sm:$0xff] %vm8753, %v8744
      %8756 = vst.msk [vmem:[#allocation9 + $0x30] sm:$0xff] %vm8753, %v8746
      %8757 = vst.msk [vmem:[#allocation9 + $0x48] sm:$0xff] %vm8753, %v8748
      %v8758 = vld [vmem:[%s8720 + $0x1] sm:$0xf]
      %v8759 = vld [vmem:[%s8720 + $0x9] sm:$0xf]
      %v8760 = vld [vmem:[%s8720 + $0x11] sm:$0xf]
      %v8761 = vld [vmem:[%s8720 + $0x19] sm:$0xf]
      %v8762 = vld [vmem:[%s8720 + $0x21] sm:$0xf]
      %v8763 = vld [vmem:[%s8720 + $0x29] sm:$0xf]
      %v8764 = vld [vmem:[%s8720 + $0x31] sm:$0xf]
      %v8765 = vld [vmem:[%s8720 + $0x39] sm:$0xf]
      %v8774 = vcombine.low %v8758, %v8759
      %v8775 = vcombine.low %v8760, %v8761
      %v8776 = vcombine.low %v8762, %v8763
      %v8777 = vcombine.low %v8764, %v8765
      %8778 = vrot.lane.b32.xlu0 %v8774, 112
      %v8779 = vpop.permute.xlu0 %8778
      %8780 = vrot.lane.b32.xlu0 %v8775, 112
      %v8781 = vpop.permute.xlu0 %8780
      %8782 = vrot.lane.b32.xlu0 %v8776, 112
      %v8783 = vpop.permute.xlu0 %8782
      %8784 = vrot.lane.b32.xlu0 %v8777, 112
      %v8785 = vpop.permute.xlu0 %8784
      %vm8790 = vcmask 1048448
      %8791 = vst.msk [vmem:[#allocation9] sm:$0xff] %vm8790, %v8779
      %8792 = vst.msk [vmem:[#allocation9 + $0x18] sm:$0xff] %vm8790, %v8781
      %8793 = vst.msk [vmem:[#allocation9 + $0x30] sm:$0xff] %vm8790, %v8783
      %8794 = vst.msk [vmem:[#allocation9 + $0x48] sm:$0xff] %vm8790, %v8785
      %v8795 = vld [vmem:[%s8720 + $0x2] sm:$0xf]
      %v8796 = vld [vmem:[%s8720 + $0xa] sm:$0xf]
      %v8797 = vld [vmem:[%s8720 + $0x12] sm:$0xf]
      %v8798 = vld [vmem:[%s8720 + $0x1a] sm:$0xf]
      %v8799 = vld [vmem:[%s8720 + $0x22] sm:$0xf]
      %v8800 = vld [vmem:[%s8720 + $0x2a] sm:$0xf]
      %v8801 = vld [vmem:[%s8720 + $0x32] sm:$0xf]
      %v8802 = vld [vmem:[%s8720 + $0x3a] sm:$0xf]
      %v8811 = vcombine.low %v8795, %v8796
      %v8812 = vcombine.low %v8797, %v8798
      %v8813 = vcombine.low %v8799, %v8800
      %v8814 = vcombine.low %v8801, %v8802
      %8819 = vst.msk [vmem:[#allocation9 + $0x8] sm:$0xff] %vm8530, %v8811
      %8820 = vst.msk [vmem:[#allocation9 + $0x20] sm:$0xff] %vm8530, %v8812
      %8821 = vst.msk [vmem:[#allocation9 + $0x38] sm:$0xff] %vm8530, %v8813
      %8822 = vst.msk [vmem:[#allocation9 + $0x50] sm:$0xff] %vm8530, %v8814
      %v8823 = vld [vmem:[#allocation9] sm:$0xff]
      %v8824 = vld [vmem:[#allocation9 + $0x8] sm:$0xff]
      %v8825 = vld [vmem:[#allocation9 + $0x18] sm:$0xff]
      %v8826 = vld [vmem:[#allocation9 + $0x20] sm:$0xff]
      %v8827 = vld [vmem:[#allocation9 + $0x30] sm:$0xff]
      %v8828 = vld [vmem:[#allocation9 + $0x38] sm:$0xff]
      %v8829 = vld [vmem:[#allocation9 + $0x48] sm:$0xff]
      %v8830 = vld [vmem:[#allocation9 + $0x50] sm:$0xff]
      %v8831 = vpack.c.bf16 %v8825, %v8823
      %v8832 = vpack.c.bf16 %v8826, %v8824
      %v8833 = vpack.c.bf16 %v8829, %v8827
      %v8834 = vpack.c.bf16 %v8830, %v8828
      %v8835 = vld [vmem:[%s7] sm:$0xf]
      %v8836 = vld [vmem:[%s7 + $0x4] sm:$0xf]
      %v8837 = vld [vmem:[%s7 + $0x8] sm:$0xf]
      %v8838 = vld [vmem:[%s7 + $0xc] sm:$0xf]
      %v8839 = vld [vmem:[%s7 + $0x10] sm:$0xf]
      %v8840 = vld [vmem:[%s7 + $0x14] sm:$0xf]
      %v8841 = vld [vmem:[%s7 + $0x18] sm:$0xf]
      %v8842 = vld [vmem:[%s7 + $0x1c] sm:$0xf]
      %v8843 = vld [vmem:[%s7 + $0x20] sm:$0xf]
      %v8844 = vld [vmem:[%s7 + $0x24] sm:$0xf]
      %v8845 = vld [vmem:[%s7 + $0x28] sm:$0xf]
      %v8846 = vld [vmem:[%s7 + $0x2c] sm:$0xf]
      %v8847 = vld [vmem:[%s7 + $0x30] sm:$0xf]
      %v8848 = vld [vmem:[%s7 + $0x34] sm:$0xf]
      %v8849 = vld [vmem:[%s7 + $0x38] sm:$0xf]
      %v8850 = vld [vmem:[%s7 + $0x3c] sm:$0xf]
      %v8851 = vld [vmem:[%s7 + $0x40] sm:$0xf]
      %v8852 = vld [vmem:[%s7 + $0x44] sm:$0xf]
      %v8853 = vld [vmem:[%s8] sm:$0x1]
      %v8855 = vlaneseq
      %v8856 = vshrl.u32 %v8855, 7
      %v8857 = vsub.s32 0, %v8856
      %v8858 = vrot.slane %v8853, %v8857
      %v8878 = vunpack.c.l.b16 %v8835
      %v8879 = vunpack.c.l.b16 %v8836
      %v8880 = vunpack.c.l.b16 %v8837
      %v8881 = vunpack.c.l.b16 %v8838
      %v8882 = vunpack.c.l.b16 %v8839
      %v8883 = vunpack.c.l.b16 %v8840
      %v8884 = vunpack.c.l.b16 %v8841
      %v8885 = vunpack.c.l.b16 %v8842
      %v8886 = vunpack.c.l.b16 %v8843
      %v8887 = vunpack.c.l.b16 %v8844
      %v8888 = vunpack.c.l.b16 %v8845
      %v8889 = vunpack.c.l.b16 %v8846
      %v8890 = vunpack.c.l.b16 %v8847
      %v8891 = vunpack.c.l.b16 %v8848
      %v8892 = vunpack.c.l.b16 %v8849
      %v8893 = vunpack.c.l.b16 %v8850
      %v8894 = vunpack.c.l.b16 %v8851
      %v8895 = vunpack.c.l.b16 %v8852
      %v8896 = vpack.c.b16 %v8879, %v8878
      %v8897 = vpack.c.b16 %v8881, %v8880
      %v8898 = vpack.c.b16 %v8883, %v8882
      %v8899 = vpack.c.b16 %v8885, %v8884
      %v8900 = vpack.c.b16 %v8887, %v8886
      %v8901 = vpack.c.b16 %v8889, %v8888
      %v8902 = vpack.c.b16 %v8891, %v8890
      %v8903 = vpack.c.b16 %v8893, %v8892
      %v8904 = vpack.c.b16 %v8895, %v8894
      %v8915 = vsel %vm8530, %v8832, 0
      %v8918 = vsel %vm8530, %v8834, 0
      %8920 = vmatprep.subr.bf16.mxu0 0
      %8921 = vmatpush1.bf16.msra.mxu0 %v8896
      %8922 = vmatprep.subr.bf16.mxu0 0
      %8923 = vmatpush1.bf16.msra.mxu0 %v8897
      %8924 = vmatprep.subr.bf16.mxu0 0
      %8925 = vmatpush1.bf16.msra.mxu0 %v8898
      %8926 = vmatprep.subr.bf16.mxu0 0
      %8927 = vmatpush1.bf16.msra.mxu0 %v8899
      %8928 = vmatprep.subr.bf16.mxu0 0
      %8929 = vmatpush1.bf16.msra.mxu0 %v8900
      %8930 = vmatprep.subr.bf16.mxu0 0
      %8931 = vmatpush1.bf16.msra.mxu0 %v8901
      %8932 = vmatprep.subr.bf16.mxu0 0
      %8933 = vmatpush1.bf16.msra.mxu0 %v8902
      %8934 = vmatprep.subr.bf16.mxu0 0
      %8935 = vmatpush1.bf16.msra.mxu0 %v8903
      %8936 = vmatprep.subr.bf16.mxu0 0
      %8937 = vmatpush1.bf16.msra.mxu0 %v8904
      %8938 = vmatprep.subr.bf16.mxu0 0
      %8939 = vmatpush1.bf16.msra.mxu0 0
      %8940 = vmatprep.subr.bf16.mxu0 0
      %8941 = vmatpush1.bf16.msra.mxu0 0
      %8942 = vmatprep.subr.bf16.mxu0 0
      %8943 = vmatpush1.bf16.msra.mxu0 0
      %8944 = vmatprep.subr.bf16.mxu0 0
      %8945 = vmatpush1.bf16.msra.mxu0 0
      %8946 = vmatprep.subr.bf16.mxu0 0
      %8947 = vmatpush1.bf16.msra.mxu0 0
      %8948 = vmatprep.subr.bf16.mxu0 0
      %8949 = vmatpush1.bf16.msra.mxu0 0
      %8950 = vmatprep.subr.bf16.mxu0 0
      %8951 = vmatpush1.bf16.msra.mxu0 0
      %8952 = vmatprep.mubr.bf16.mxu0 %v8915
      %8953 = vmatmul.mubr.bf16.gmra.mrb[0].mxu0 %v8831
      %v8954 = vpop.f32.mrb[0].mxu0
      %v8955 = vadd.f32 %v8858, %v8954
      %v8956 = vpop.f32.mrb[0].mxu0
      %v8957 = vpop.f32.mrb[0].mxu0
      %v8958 = vadd.f32 %v8858, %v8957
      %v8959 = vpop.f32.mrb[0].mxu0
      %8960 = vmatprep.mubr.bf16.mxu0 %v8918
      %8961 = vmatmul.mubr.bf16.gmra.mrb[0].mxu0 %v8833
      %v8962 = vpop.f32.mrb[0].mxu0
      %v8963 = vadd.f32 %v8858, %v8962
      %v8964 = vpop.f32.mrb[0].mxu0
      %v8965 = vpop.f32.mrb[0].mxu0
      %v8966 = vadd.f32 %v8858, %v8965
      %v8967 = vpop.f32.mrb[0].mxu0
      %8968 = vdwg.mxu0
      %v8969 = vmax.f32 %v8955, 0.0
      %v8970 = vmax.f32 %v8958, 0.0
      %v8971 = vmax.f32 %v8963, 0.0
      %v8972 = vmax.f32 %v8966, 0.0
      %v8977 = vcombine.high %v8969, %v8969
      %v8978 = vcombine.high %v8970, %v8970
      %v8979 = vcombine.high %v8971, %v8971
      %v8980 = vcombine.high %v8972, %v8972
      %v8985 = vsel %vm8497, %v8969, -inf
      %v8986 = vsel %vm8497, %v8977, -inf
      %v8987 = vmax.f32 %v8985, %v8986
      %v8988 = vsel %vm8497, %v8970, -inf
      %v8989 = vsel %vm8497, %v8978, -inf
      %v8990 = vmax.f32 %v8988, %v8989
      %v8991 = vsel %vm8497, %v8971, -inf
      %v8992 = vsel %vm8497, %v8979, -inf
      %v8993 = vmax.f32 %v8991, %v8992
      %v8994 = vsel %vm8497, %v8972, -inf
      %v8995 = vsel %vm8497, %v8980, -inf
      %v8996 = vmax.f32 %v8994, %v8995
      %8997 = vst.msk [vmem:[#allocation6] sm:$0x3f] %vm8471, 0.0
      %s8998 = scalar_lea.vmem [#allocation6], 40
      %8999 = vst.msk [vmem:[%s8998] sm:$0x3f] %vm8471, 0.0
      %9000 = vst.msk [vmem:[#allocation6] sm:$0x1] %vm8475, 0.0
      %9001 = vst.msk [vmem:[#allocation6 + $0x8] sm:$0x1] %vm8475, 0.0
      %9002 = vst.msk [vmem:[#allocation6 + $0x10] sm:$0x1] %vm8475, 0.0
      %9003 = vst.msk [vmem:[#allocation6 + $0x18] sm:$0x1] %vm8475, 0.0
      %9004 = vst.msk [vmem:[#allocation6 + $0x20] sm:$0x1] %vm8475, 0.0
      %9005 = vst.msk [vmem:[#allocation6 + $0x28] sm:$0x1] %vm8475, 0.0
      %9006 = vst.msk [vmem:[#allocation6 + $0x5] sm:$0x1] %vm8475, 0.0
      %9007 = vst.msk [vmem:[#allocation6 + $0xd] sm:$0x1] %vm8475, 0.0
      %9008 = vst.msk [vmem:[#allocation6 + $0x15] sm:$0x1] %vm8475, 0.0
      %9009 = vst.msk [vmem:[#allocation6 + $0x1d] sm:$0x1] %vm8475, 0.0
      %9010 = vst.msk [vmem:[#allocation6 + $0x25] sm:$0x1] %vm8475, 0.0
      %9011 = vst.msk [vmem:[#allocation6 + $0x2d] sm:$0x1] %vm8475, 0.0
      %s9012 = scalar_lea.vmem [#allocation6], 8
      %9013 = vst.msk [vmem:[%s9012 + $0x1] sm:$0xf] %vm8497, %v8987
      %9014 = vst.msk [vmem:[%s9012 + $0x9] sm:$0xf] %vm8497, %v8990
      %9015 = vst.msk [vmem:[%s9012 + $0x11] sm:$0xf] %vm8497, %v8993
      %9016 = vst.msk [vmem:[%s9012 + $0x19] sm:$0xf] %vm8497, %v8996
      %v9017 = vld [vmem:[#allocation6] sm:$0xf]
      %v9018 = vld [vmem:[#allocation6 + $0x8] sm:$0xf]
      %v9019 = vld [vmem:[#allocation6 + $0x10] sm:$0xf]
      %v9020 = vld [vmem:[#allocation6 + $0x18] sm:$0xf]
      %v9025 = vcombine.low %v9017, %v9018
      %v9026 = vcombine.low %v9019, %v9020
      %9029 = vst.msk [vmem:[#allocation9] sm:$0xff] %vm8530, %v9025
      %9030 = vst.msk [vmem:[#allocation9 + $0x18] sm:$0xff] %vm8530, %v9026
      %v9031 = vld [vmem:[#allocation6 + $0x1] sm:$0xf]
      %v9032 = vld [vmem:[#allocation6 + $0x9] sm:$0xf]
      %v9033 = vld [vmem:[#allocation6 + $0x11] sm:$0xf]
      %v9034 = vld [vmem:[#allocation6 + $0x19] sm:$0xf]
      %v9039 = vcombine.low %v9031, %v9032
      %v9040 = vcombine.low %v9033, %v9034
      %9041 = vrot.lane.b32.xlu0 %v9039, 16
      %v9042 = vpop.permute.xlu0 %9041
      %9043 = vrot.lane.b32.xlu0 %v9040, 16
      %v9044 = vpop.permute.xlu0 %9043
      %9047 = vst.msk [vmem:[#allocation9] sm:$0xff] %vm8567, %v9042
      %9048 = vst.msk [vmem:[#allocation9 + $0x18] sm:$0xff] %vm8567, %v9044
      %v9049 = vld [vmem:[#allocation6 + $0x2] sm:$0xf]
      %v9050 = vld [vmem:[#allocation6 + $0xa] sm:$0xf]
      %v9051 = vld [vmem:[#allocation6 + $0x12] sm:$0xf]
      %v9052 = vld [vmem:[#allocation6 + $0x1a] sm:$0xf]
      %v9057 = vcombine.low %v9049, %v9050
      %v9058 = vcombine.low %v9051, %v9052
      %9059 = vrot.lane.b32.xlu0 %v9057, 32
      %v9060 = vpop.permute.xlu0 %9059
      %9061 = vrot.lane.b32.xlu0 %v9058, 32
      %v9062 = vpop.permute.xlu0 %9061
      %9065 = vst.msk [vmem:[#allocation9] sm:$0xff] %vm8604, %v9060
      %9066 = vst.msk [vmem:[#allocation9 + $0x18] sm:$0xff] %vm8604, %v9062
      %v9067 = vld [vmem:[%s9012] sm:$0xf]
      %v9068 = vld [vmem:[%s9012 + $0x8] sm:$0xf]
      %v9069 = vld [vmem:[%s9012 + $0x10] sm:$0xf]
      %v9070 = vld [vmem:[%s9012 + $0x18] sm:$0xf]
      %v9075 = vcombine.low %v9067, %v9068
      %v9076 = vcombine.low %v9069, %v9070
      %9077 = vrot.lane.b32.xlu0 %v9075, 48
      %v9078 = vpop.permute.xlu0 %9077
      %9079 = vrot.lane.b32.xlu0 %v9076, 48
      %v9080 = vpop.permute.xlu0 %9079
      %9083 = vst.msk [vmem:[#allocation9] sm:$0xff] %vm8641, %v9078
      %9084 = vst.msk [vmem:[#allocation9 + $0x18] sm:$0xff] %vm8641, %v9080
      %v9085 = vld [vmem:[%s9012 + $0x1] sm:$0xf]
      %v9086 = vld [vmem:[%s9012 + $0x9] sm:$0xf]
      %v9087 = vld [vmem:[%s9012 + $0x11] sm:$0xf]
      %v9088 = vld [vmem:[%s9012 + $0x19] sm:$0xf]
      %v9093 = vcombine.low %v9085, %v9086
      %v9094 = vcombine.low %v9087, %v9088
      %9095 = vrot.lane.b32.xlu0 %v9093, 64
      %v9096 = vpop.permute.xlu0 %9095
      %9097 = vrot.lane.b32.xlu0 %v9094, 64
      %v9098 = vpop.permute.xlu0 %9097
      %9101 = vst.msk [vmem:[#allocation9] sm:$0xff] %vm8678, %v9096
      %9102 = vst.msk [vmem:[#allocation9 + $0x18] sm:$0xff] %vm8678, %v9098
      %v9103 = vld [vmem:[%s9012 + $0x2] sm:$0xf]
      %v9104 = vld [vmem:[%s9012 + $0xa] sm:$0xf]
      %v9105 = vld [vmem:[%s9012 + $0x12] sm:$0xf]
      %v9106 = vld [vmem:[%s9012 + $0x1a] sm:$0xf]
      %v9111 = vcombine.low %v9103, %v9104
      %v9112 = vcombine.low %v9105, %v9106
      %9113 = vrot.lane.b32.xlu0 %v9111, 80
      %v9114 = vpop.permute.xlu0 %9113
      %9115 = vrot.lane.b32.xlu0 %v9112, 80
      %v9116 = vpop.permute.xlu0 %9115
      %9119 = vst.msk [vmem:[#allocation9] sm:$0xff] %vm8715, %v9114
      %9120 = vst.msk [vmem:[#allocation9 + $0x18] sm:$0xff] %vm8715, %v9116
      %s9121 = scalar_lea.vmem [#allocation6], 16
      %v9122 = vld [vmem:[%s9121] sm:$0xf]
      %v9123 = vld [vmem:[%s9121 + $0x8] sm:$0xf]
      %v9124 = vld [vmem:[%s9121 + $0x10] sm:$0xf]
      %v9125 = vld [vmem:[%s9121 + $0x18] sm:$0xf]
      %v9130 = vcombine.low %v9122, %v9123
      %v9131 = vcombine.low %v9124, %v9125
      %9132 = vrot.lane.b32.xlu0 %v9130, 96
      %v9133 = vpop.permute.xlu0 %9132
      %9134 = vrot.lane.b32.xlu0 %v9131, 96
      %v9135 = vpop.permute.xlu0 %9134
      %9138 = vst.msk [vmem:[#allocation9] sm:$0xff] %vm8753, %v9133
      %9139 = vst.msk [vmem:[#allocation9 + $0x18] sm:$0xff] %vm8753, %v9135
      %v9140 = vld [vmem:[%s9121 + $0x1] sm:$0xf]
      %v9141 = vld [vmem:[%s9121 + $0x9] sm:$0xf]
      %v9142 = vld [vmem:[%s9121 + $0x11] sm:$0xf]
      %v9143 = vld [vmem:[%s9121 + $0x19] sm:$0xf]
      %v9148 = vcombine.low %v9140, %v9141
      %v9149 = vcombine.low %v9142, %v9143
      %9150 = vrot.lane.b32.xlu0 %v9148, 112
      %v9151 = vpop.permute.xlu0 %9150
      %9152 = vrot.lane.b32.xlu0 %v9149, 112
      %v9153 = vpop.permute.xlu0 %9152
      %9156 = vst.msk [vmem:[#allocation9] sm:$0xff] %vm8790, %v9151
      %9157 = vst.msk [vmem:[#allocation9 + $0x18] sm:$0xff] %vm8790, %v9153
      %v9158 = vld [vmem:[%s9121 + $0x2] sm:$0xf]
      %v9159 = vld [vmem:[%s9121 + $0xa] sm:$0xf]
      %v9160 = vld [vmem:[%s9121 + $0x12] sm:$0xf]
      %v9161 = vld [vmem:[%s9121 + $0x1a] sm:$0xf]
      %v9166 = vcombine.low %v9158, %v9159
      %v9167 = vcombine.low %v9160, %v9161
      %9170 = vst.msk [vmem:[#allocation9 + $0x8] sm:$0xff] %vm8530, %v9166
      %9171 = vst.msk [vmem:[#allocation9 + $0x20] sm:$0xff] %vm8530, %v9167
      %v9172 = vld [vmem:[#allocation9] sm:$0xff]
      %v9173 = vld [vmem:[#allocation9 + $0x8] sm:$0xff]
      %v9174 = vld [vmem:[#allocation9 + $0x18] sm:$0xff]
      %v9175 = vld [vmem:[#allocation9 + $0x20] sm:$0xff]
      %v9176 = vpack.c.bf16 %v9174, %v9172
      %v9177 = vpack.c.bf16 %v9175, %v9173
      %v9178 = vld [vmem:[%s9] sm:$0xf]
      %v9179 = vld [vmem:[%s9 + $0x4] sm:$0xf]
      %v9180 = vld [vmem:[%s9 + $0x8] sm:$0xf]
      %v9181 = vld [vmem:[%s9 + $0xc] sm:$0xf]
      %v9182 = vld [vmem:[%s9 + $0x10] sm:$0xf]
      %v9183 = vld [vmem:[%s9 + $0x14] sm:$0xf]
      %v9184 = vld [vmem:[%s9 + $0x18] sm:$0xf]
      %v9185 = vld [vmem:[%s9 + $0x1c] sm:$0xf]
      %v9186 = vld [vmem:[%s9 + $0x20] sm:$0xf]
      %v9187 = vld [vmem:[%s9 + $0x24] sm:$0xf]
      %v9188 = vld [vmem:[%s9 + $0x28] sm:$0xf]
      %v9189 = vld [vmem:[%s9 + $0x2c] sm:$0xf]
      %v9190 = vld [vmem:[%s9 + $0x30] sm:$0xf]
      %v9191 = vld [vmem:[%s9 + $0x34] sm:$0xf]
      %v9192 = vld [vmem:[%s9 + $0x38] sm:$0xf]
      %v9193 = vld [vmem:[%s9 + $0x3c] sm:$0xf]
      %v9194 = vld [vmem:[%s9 + $0x40] sm:$0xf]
      %v9195 = vld [vmem:[%s9 + $0x44] sm:$0xf]
      %v9196 = vld [vmem:[%s10] sm:$0x1]
      %v9198 = vlaneseq
      %v9199 = vshrl.u32 %v9198, 7
      %v9200 = vsub.s32 0, %v9199
      %v9201 = vrot.slane %v9196, %v9200
      %v9221 = vunpack.c.l.b16 %v9178
      %v9222 = vunpack.c.l.b16 %v9179
      %v9223 = vunpack.c.l.b16 %v9180
      %v9224 = vunpack.c.l.b16 %v9181
      %v9225 = vunpack.c.l.b16 %v9182
      %v9226 = vunpack.c.l.b16 %v9183
      %v9227 = vunpack.c.l.b16 %v9184
      %v9228 = vunpack.c.l.b16 %v9185
      %v9229 = vunpack.c.l.b16 %v9186
      %v9230 = vunpack.c.l.b16 %v9187
      %v9231 = vunpack.c.l.b16 %v9188
      %v9232 = vunpack.c.l.b16 %v9189
      %v9233 = vunpack.c.l.b16 %v9190
      %v9234 = vunpack.c.l.b16 %v9191
      %v9235 = vunpack.c.l.b16 %v9192
      %v9236 = vunpack.c.l.b16 %v9193
      %v9237 = vunpack.c.l.b16 %v9194
      %v9238 = vunpack.c.l.b16 %v9195
      %v9239 = vpack.c.b16 %v9222, %v9221
      %v9240 = vpack.c.b16 %v9224, %v9223
      %v9241 = vpack.c.b16 %v9226, %v9225
      %v9242 = vpack.c.b16 %v9228, %v9227
      %v9243 = vpack.c.b16 %v9230, %v9229
      %v9244 = vpack.c.b16 %v9232, %v9231
      %v9245 = vpack.c.b16 %v9234, %v9233
      %v9246 = vpack.c.b16 %v9236, %v9235
      %v9247 = vpack.c.b16 %v9238, %v9237
      %v9258 = vsel %vm8530, %v9177, 0
      %9260 = vmatprep.subr.bf16.mxu0 0
      %9261 = vmatpush1.bf16.msra.mxu0 %v9239
      %9262 = vmatprep.subr.bf16.mxu0 0
      %9263 = vmatpush1.bf16.msra.mxu0 %v9240
      %9264 = vmatprep.subr.bf16.mxu0 0
      %9265 = vmatpush1.bf16.msra.mxu0 %v9241
      %9266 = vmatprep.subr.bf16.mxu0 0
      %9267 = vmatpush1.bf16.msra.mxu0 %v9242
      %9268 = vmatprep.subr.bf16.mxu0 0
      %9269 = vmatpush1.bf16.msra.mxu0 %v9243
      %9270 = vmatprep.subr.bf16.mxu0 0
      %9271 = vmatpush1.bf16.msra.mxu0 %v9244
      %9272 = vmatprep.subr.bf16.mxu0 0
      %9273 = vmatpush1.bf16.msra.mxu0 %v9245
      %9274 = vmatprep.subr.bf16.mxu0 0
      %9275 = vmatpush1.bf16.msra.mxu0 %v9246
      %9276 = vmatprep.subr.bf16.mxu0 0
      %9277 = vmatpush1.bf16.msra.mxu0 %v9247
      %9278 = vmatprep.subr.bf16.mxu0 0
      %9279 = vmatpush1.bf16.msra.mxu0 0
      %9280 = vmatprep.subr.bf16.mxu0 0
      %9281 = vmatpush1.bf16.msra.mxu0 0
      %9282 = vmatprep.subr.bf16.mxu0 0
      %9283 = vmatpush1.bf16.msra.mxu0 0
      %9284 = vmatprep.subr.bf16.mxu0 0
      %9285 = vmatpush1.bf16.msra.mxu0 0
      %9286 = vmatprep.subr.bf16.mxu0 0
      %9287 = vmatpush1.bf16.msra.mxu0 0
      %9288 = vmatprep.subr.bf16.mxu0 0
      %9289 = vmatpush1.bf16.msra.mxu0 0
      %9290 = vmatprep.subr.bf16.mxu0 0
      %9291 = vmatpush1.bf16.msra.mxu0 0
      %9292 = vmatprep.mubr.bf16.mxu0 %v9258
      %9293 = vmatmul.mubr.bf16.gmra.mrb[0].mxu0 %v9176
      %v9294 = vpop.f32.mrb[0].mxu0
      %v9295 = vadd.f32 %v9201, %v9294
      %v9296 = vpop.f32.mrb[0].mxu0
      %v9297 = vpop.f32.mrb[0].mxu0
      %v9298 = vadd.f32 %v9201, %v9297
      %v9299 = vpop.f32.mrb[0].mxu0
      %9300 = vdwg.mxu0
      %v9301 = vmax.f32 %v9295, 0.0
      %v9302 = vmax.f32 %v9298, 0.0
      %v9305 = vcombine.high %v9301, %v9301
      %v9306 = vcombine.high %v9302, %v9302
      %vm9309 = vcmask 259072
      %9310 = vst.msk [vmem:[#allocation7] sm:$0x3f] %vm9309, 0.0
      %s9311 = scalar_lea.vmem [#allocation7], 40
      %9312 = vst.msk [vmem:[%s9311] sm:$0x3f] %vm9309, 0.0
      %vm9313 = vcmask 253952
      %9314 = vst.msk [vmem:[#allocation7] sm:$0x1] %vm9313, 0.0
      %9315 = vst.msk [vmem:[#allocation7 + $0x8] sm:$0x1] %vm9313, 0.0
      %9316 = vst.msk [vmem:[#allocation7 + $0x10] sm:$0x1] %vm9313, 0.0
      %9317 = vst.msk [vmem:[#allocation7 + $0x18] sm:$0x1] %vm9313, 0.0
      %9318 = vst.msk [vmem:[#allocation7 + $0x20] sm:$0x1] %vm9313, 0.0
      %9319 = vst.msk [vmem:[#allocation7 + $0x28] sm:$0x1] %vm9313, 0.0
      %9320 = vst.msk [vmem:[#allocation7 + $0x5] sm:$0x1] %vm9313, 0.0
      %9321 = vst.msk [vmem:[#allocation7 + $0xd] sm:$0x1] %vm9313, 0.0
      %9322 = vst.msk [vmem:[#allocation7 + $0x15] sm:$0x1] %vm9313, 0.0
      %9323 = vst.msk [vmem:[#allocation7 + $0x1d] sm:$0x1] %vm9313, 0.0
      %9324 = vst.msk [vmem:[#allocation7 + $0x25] sm:$0x1] %vm9313, 0.0
      %9325 = vst.msk [vmem:[#allocation7 + $0x2d] sm:$0x1] %vm9313, 0.0
      %s9326 = scalar_lea.vmem [#allocation7], 8
      %vm9327 = vcmask 257024
      %9328 = vst.msk [vmem:[%s9326 + $0x1] sm:$0xf] %vm9327, %v9301
      %9329 = vst.msk [vmem:[%s9326 + $0x9] sm:$0xf] %vm9327, %v9305
      %9330 = vst.msk [vmem:[%s9326 + $0x11] sm:$0xf] %vm9327, %v9302
      %9331 = vst.msk [vmem:[%s9326 + $0x19] sm:$0xf] %vm9327, %v9306
      %v9332 = vld [vmem:[#allocation7] sm:$0xf]
      %v9333 = vld [vmem:[#allocation7 + $0x8] sm:$0xf]
      %v9334 = vld [vmem:[#allocation7 + $0x10] sm:$0xf]
      %v9335 = vld [vmem:[#allocation7 + $0x18] sm:$0xf]
      %v9340 = vcombine.low %v9332, %v9333
      %v9341 = vcombine.low %v9334, %v9335
      %vm9344 = vcmask 261120
      %9345 = vst.msk [vmem:[#allocation9] sm:$0xff] %vm9344, %v9340
      %9346 = vst.msk [vmem:[#allocation9 + $0x18] sm:$0xff] %vm9344, %v9341
      %v9347 = vld [vmem:[#allocation7 + $0x1] sm:$0xf]
      %v9348 = vld [vmem:[#allocation7 + $0x9] sm:$0xf]
      %v9349 = vld [vmem:[#allocation7 + $0x11] sm:$0xf]
      %v9350 = vld [vmem:[#allocation7 + $0x19] sm:$0xf]
      %v9355 = vcombine.low %v9347, %v9348
      %v9356 = vcombine.low %v9349, %v9350
      %9357 = vrot.lane.b32.xlu0 %v9355, 32
      %v9358 = vpop.permute.xlu0 %9357
      %9359 = vrot.lane.b32.xlu0 %v9356, 32
      %v9360 = vpop.permute.xlu0 %9359
      %vm9363 = vcmask 523520
      %9364 = vst.msk [vmem:[#allocation9] sm:$0xff] %vm9363, %v9358
      %9365 = vst.msk [vmem:[#allocation9 + $0x18] sm:$0xff] %vm9363, %v9360
      %v9366 = vld [vmem:[#allocation7 + $0x2] sm:$0xf]
      %v9367 = vld [vmem:[#allocation7 + $0xa] sm:$0xf]
      %v9368 = vld [vmem:[#allocation7 + $0x12] sm:$0xf]
      %v9369 = vld [vmem:[#allocation7 + $0x1a] sm:$0xf]
      %v9374 = vcombine.low %v9366, %v9367
      %v9375 = vcombine.low %v9368, %v9369
      %9376 = vrot.lane.b32.xlu0 %v9374, 64
      %v9377 = vpop.permute.xlu0 %9376
      %9378 = vrot.lane.b32.xlu0 %v9375, 64
      %v9379 = vpop.permute.xlu0 %9378
      %vm9382 = vcmask 785920
      %9383 = vst.msk [vmem:[#allocation9] sm:$0xff] %vm9382, %v9377
      %9384 = vst.msk [vmem:[#allocation9 + $0x18] sm:$0xff] %vm9382, %v9379
      %v9385 = vld [vmem:[%s9326] sm:$0xf]
      %v9386 = vld [vmem:[%s9326 + $0x8] sm:$0xf]
      %v9387 = vld [vmem:[%s9326 + $0x10] sm:$0xf]
      %v9388 = vld [vmem:[%s9326 + $0x18] sm:$0xf]
      %v9393 = vcombine.low %v9385, %v9386
      %v9394 = vcombine.low %v9387, %v9388
      %9395 = vrot.lane.b32.xlu0 %v9393, 96
      %v9396 = vpop.permute.xlu0 %9395
      %9397 = vrot.lane.b32.xlu0 %v9394, 96
      %v9398 = vpop.permute.xlu0 %9397
      %vm9401 = vcmask 1048320
      %9402 = vst.msk [vmem:[#allocation9] sm:$0xff] %vm9401, %v9396
      %9403 = vst.msk [vmem:[#allocation9 + $0x18] sm:$0xff] %vm9401, %v9398
      %v9404 = vld [vmem:[%s9326 + $0x1] sm:$0xf]
      %v9405 = vld [vmem:[%s9326 + $0x9] sm:$0xf]
      %v9406 = vld [vmem:[%s9326 + $0x11] sm:$0xf]
      %v9407 = vld [vmem:[%s9326 + $0x19] sm:$0xf]
      %v9412 = vcombine.low %v9404, %v9405
      %v9413 = vcombine.low %v9406, %v9407
      %9416 = vst.msk [vmem:[#allocation9 + $0x8] sm:$0xff] %vm9344, %v9412
      %9417 = vst.msk [vmem:[#allocation9 + $0x20] sm:$0xff] %vm9344, %v9413
      %v9418 = vld [vmem:[%s9326 + $0x2] sm:$0xf]
      %v9419 = vld [vmem:[%s9326 + $0xa] sm:$0xf]
      %v9420 = vld [vmem:[%s9326 + $0x12] sm:$0xf]
      %v9421 = vld [vmem:[%s9326 + $0x1a] sm:$0xf]
      %v9426 = vcombine.low %v9418, %v9419
      %v9427 = vcombine.low %v9420, %v9421
      %9428 = vrot.lane.b32.xlu0 %v9426, 32
      %v9429 = vpop.permute.xlu0 %9428
      %9430 = vrot.lane.b32.xlu0 %v9427, 32
      %v9431 = vpop.permute.xlu0 %9430
      %9434 = vst.msk [vmem:[#allocation9 + $0x8] sm:$0xff] %vm9363, %v9429
      %9435 = vst.msk [vmem:[#allocation9 + $0x20] sm:$0xff] %vm9363, %v9431
      %s9436 = scalar_lea.vmem [#allocation7], 16
      %v9437 = vld [vmem:[%s9436] sm:$0xf]
      %v9438 = vld [vmem:[%s9436 + $0x8] sm:$0xf]
      %v9439 = vld [vmem:[%s9436 + $0x10] sm:$0xf]
      %v9440 = vld [vmem:[%s9436 + $0x18] sm:$0xf]
      %v9445 = vcombine.low %v9437, %v9438
      %v9446 = vcombine.low %v9439, %v9440
      %9447 = vrot.lane.b32.xlu0 %v9445, 64
      %v9448 = vpop.permute.xlu0 %9447
      %9449 = vrot.lane.b32.xlu0 %v9446, 64
      %v9450 = vpop.permute.xlu0 %9449
      %9453 = vst.msk [vmem:[#allocation9 + $0x8] sm:$0xff] %vm9382, %v9448
      %9454 = vst.msk [vmem:[#allocation9 + $0x20] sm:$0xff] %vm9382, %v9450
      %v9455 = vld [vmem:[%s9436 + $0x1] sm:$0xf]
      %v9456 = vld [vmem:[%s9436 + $0x9] sm:$0xf]
      %v9457 = vld [vmem:[%s9436 + $0x11] sm:$0xf]
      %v9458 = vld [vmem:[%s9436 + $0x19] sm:$0xf]
      %v9463 = vcombine.low %v9455, %v9456
      %v9464 = vcombine.low %v9457, %v9458
      %9465 = vrot.lane.b32.xlu0 %v9463, 96
      %v9466 = vpop.permute.xlu0 %9465
      %9467 = vrot.lane.b32.xlu0 %v9464, 96
      %v9468 = vpop.permute.xlu0 %9467
      %9471 = vst.msk [vmem:[#allocation9 + $0x8] sm:$0xff] %vm9401, %v9466
      %9472 = vst.msk [vmem:[#allocation9 + $0x20] sm:$0xff] %vm9401, %v9468
      %v9473 = vld [vmem:[%s9436 + $0x2] sm:$0xf]
      %v9474 = vld [vmem:[%s9436 + $0xa] sm:$0xf]
      %v9475 = vld [vmem:[%s9436 + $0x12] sm:$0xf]
      %v9476 = vld [vmem:[%s9436 + $0x1a] sm:$0xf]
      %v9481 = vcombine.low %v9473, %v9474
      %v9482 = vcombine.low %v9475, %v9476
      %9485 = vst.msk [vmem:[#allocation9 + $0x10] sm:$0xff] %vm9344, %v9481
      %9486 = vst.msk [vmem:[#allocation9 + $0x28] sm:$0xff] %vm9344, %v9482
      %v9487 = vld [vmem:[#allocation9] sm:$0xff]
      %v9488 = vld [vmem:[#allocation9 + $0x8] sm:$0xff]
      %v9489 = vld [vmem:[#allocation9 + $0x10] sm:$0xff]
      %v9490 = vld [vmem:[#allocation9 + $0x18] sm:$0xff]
      %v9491 = vld [vmem:[#allocation9 + $0x20] sm:$0xff]
      %v9492 = vld [vmem:[#allocation9 + $0x28] sm:$0xff]
      %v9493 = vpack.c.bf16 %v9490, %v9487
      %v9494 = vpack.c.bf16 %v9491, %v9488
      %v9495 = vpack.c.bf16 %v9492, %v9489
      %v9496 = vld [vmem:[%s11] sm:$0xf]
      %v9497 = vld [vmem:[%s11 + $0x4] sm:$0xf]
      %v9498 = vld [vmem:[%s11 + $0x8] sm:$0xf]
      %v9499 = vld [vmem:[%s11 + $0xc] sm:$0xf]
      %v9500 = vld [vmem:[%s11 + $0x10] sm:$0xf]
      %v9501 = vld [vmem:[%s11 + $0x14] sm:$0xf]
      %v9502 = vld [vmem:[%s11 + $0x18] sm:$0xf]
      %v9503 = vld [vmem:[%s11 + $0x1c] sm:$0xf]
      %v9504 = vld [vmem:[%s11 + $0x20] sm:$0xf]
      %v9505 = vld [vmem:[%s11 + $0x24] sm:$0xf]
      %v9506 = vld [vmem:[%s11 + $0x28] sm:$0xf]
      %v9507 = vld [vmem:[%s11 + $0x2c] sm:$0xf]
      %v9508 = vld [vmem:[%s11 + $0x30] sm:$0xf]
      %v9509 = vld [vmem:[%s11 + $0x34] sm:$0xf]
      %v9510 = vld [vmem:[%s11 + $0x38] sm:$0xf]
      %v9511 = vld [vmem:[%s11 + $0x3c] sm:$0xf]
      %v9512 = vld [vmem:[%s11 + $0x40] sm:$0xf]
      %v9513 = vld [vmem:[%s11 + $0x44] sm:$0xf]
      %v9514 = vld [vmem:[%s11 + $0x48] sm:$0xf]
      %v9515 = vld [vmem:[%s11 + $0x4c] sm:$0xf]
      %v9516 = vld [vmem:[%s11 + $0x50] sm:$0xf]
      %v9517 = vld [vmem:[%s11 + $0x54] sm:$0xf]
      %v9518 = vld [vmem:[%s11 + $0x58] sm:$0xf]
      %v9519 = vld [vmem:[%s11 + $0x5c] sm:$0xf]
      %v9520 = vld [vmem:[%s11 + $0x60] sm:$0xf]
      %v9521 = vld [vmem:[%s11 + $0x64] sm:$0xf]
      %v9522 = vld [vmem:[%s11 + $0x68] sm:$0xf]
      %v9523 = vld [vmem:[%s11 + $0x6c] sm:$0xf]
      %v9524 = vld [vmem:[%s11 + $0x70] sm:$0xf]
      %v9525 = vld [vmem:[%s11 + $0x74] sm:$0xf]
      %v9526 = vld [vmem:[%s11 + $0x78] sm:$0xf]
      %v9527 = vld [vmem:[%s11 + $0x7c] sm:$0xf]
      %v9528 = vld [vmem:[%s11 + $0x80] sm:$0xf]
      %v9529 = vld [vmem:[%s11 + $0x84] sm:$0xf]
      %v9530 = vld [vmem:[%s11 + $0x88] sm:$0xf]
      %v9531 = vld [vmem:[%s11 + $0x8c] sm:$0xf]
      %v9532 = vld [vmem:[%s12] sm:$0x1]
      %v9534 = vlaneseq
      %v9535 = vshrl.u32 %v9534, 7
      %v9536 = vsub.s32 0, %v9535
      %v9537 = vrot.slane %v9532, %v9536
      %v9575 = vunpack.c.l.b16 %v9496
      %v9576 = vunpack.c.l.b16 %v9497
      %v9577 = vunpack.c.l.b16 %v9498
      %v9578 = vunpack.c.l.b16 %v9499
      %v9579 = vunpack.c.l.b16 %v9500
      %v9580 = vunpack.c.l.b16 %v9501
      %v9581 = vunpack.c.l.b16 %v9502
      %v9582 = vunpack.c.l.b16 %v9503
      %v9583 = vunpack.c.l.b16 %v9504
      %v9584 = vunpack.c.l.b16 %v9505
      %v9585 = vunpack.c.l.b16 %v9506
      %v9586 = vunpack.c.l.b16 %v9507
      %v9587 = vunpack.c.l.b16 %v9508
      %v9588 = vunpack.c.l.b16 %v9509
      %v9589 = vunpack.c.l.b16 %v9510
      %v9590 = vunpack.c.l.b16 %v9511
      %v9591 = vunpack.c.l.b16 %v9512
      %v9592 = vunpack.c.l.b16 %v9513
      %v9593 = vunpack.c.l.b16 %v9514
      %v9594 = vunpack.c.l.b16 %v9515
      %v9595 = vunpack.c.l.b16 %v9516
      %v9596 = vunpack.c.l.b16 %v9517
      %v9597 = vunpack.c.l.b16 %v9518
      %v9598 = vunpack.c.l.b16 %v9519
      %v9599 = vunpack.c.l.b16 %v9520
      %v9600 = vunpack.c.l.b16 %v9521
      %v9601 = vunpack.c.l.b16 %v9522
      %v9602 = vunpack.c.l.b16 %v9523
      %v9603 = vunpack.c.l.b16 %v9524
      %v9604 = vunpack.c.l.b16 %v9525
      %v9605 = vunpack.c.l.b16 %v9526
      %v9606 = vunpack.c.l.b16 %v9527
      %v9607 = vunpack.c.l.b16 %v9528
      %v9608 = vunpack.c.l.b16 %v9529
      %v9609 = vunpack.c.l.b16 %v9530
      %v9610 = vunpack.c.l.b16 %v9531
      %v9611 = vpack.c.b16 %v9576, %v9575
      %v9612 = vpack.c.b16 %v9578, %v9577
      %v9613 = vpack.c.b16 %v9580, %v9579
      %v9614 = vpack.c.b16 %v9582, %v9581
      %v9615 = vpack.c.b16 %v9584, %v9583
      %v9616 = vpack.c.b16 %v9586, %v9585
      %v9617 = vpack.c.b16 %v9588, %v9587
      %v9618 = vpack.c.b16 %v9590, %v9589
      %v9619 = vpack.c.b16 %v9592, %v9591
      %v9620 = vpack.c.b16 %v9594, %v9593
      %v9621 = vpack.c.b16 %v9596, %v9595
      %v9622 = vpack.c.b16 %v9598, %v9597
      %v9623 = vpack.c.b16 %v9600, %v9599
      %v9624 = vpack.c.b16 %v9602, %v9601
      %v9625 = vpack.c.b16 %v9604, %v9603
      %v9626 = vpack.c.b16 %v9606, %v9605
      %v9627 = vpack.c.b16 %v9608, %v9607
      %v9628 = vpack.c.b16 %v9610, %v9609
      %v9648 = vsel %vm9344, %v9495, 0
      %9650 = vmatprep.subr.bf16.mxu0 0
      %9651 = vmatpush1.bf16.msra.mxu0 %v9611
      %9652 = vmatprep.subr.bf16.mxu0 0
      %9653 = vmatpush1.bf16.msra.mxu0 %v9612
      %9654 = vmatprep.subr.bf16.mxu0 0
      %9655 = vmatpush1.bf16.msra.mxu0 %v9613
      %9656 = vmatprep.subr.bf16.mxu0 0
      %9657 = vmatpush1.bf16.msra.mxu0 %v9614
      %9658 = vmatprep.subr.bf16.mxu0 0
      %9659 = vmatpush1.bf16.msra.mxu0 %v9615
      %9660 = vmatprep.subr.bf16.mxu0 0
      %9661 = vmatpush1.bf16.msra.mxu0 %v9616
      %9662 = vmatprep.subr.bf16.mxu0 0
      %9663 = vmatpush1.bf16.msra.mxu0 %v9617
      %9664 = vmatprep.subr.bf16.mxu0 0
      %9665 = vmatpush1.bf16.msra.mxu0 %v9618
      %9666 = vmatprep.subr.bf16.mxu0 0
      %9667 = vmatpush1.bf16.msra.mxu0 %v9619
      %9668 = vmatprep.subr.bf16.mxu0 0
      %9669 = vmatpush1.bf16.msra.mxu0 %v9620
      %9670 = vmatprep.subr.bf16.mxu0 0
      %9671 = vmatpush1.bf16.msra.mxu0 %v9621
      %9672 = vmatprep.subr.bf16.mxu0 0
      %9673 = vmatpush1.bf16.msra.mxu0 %v9622
      %9674 = vmatprep.subr.bf16.mxu0 0
      %9675 = vmatpush1.bf16.msra.mxu0 %v9623
      %9676 = vmatprep.subr.bf16.mxu0 0
      %9677 = vmatpush1.bf16.msra.mxu0 %v9624
      %9678 = vmatprep.subr.bf16.mxu0 0
      %9679 = vmatpush1.bf16.msra.mxu0 %v9625
      %9680 = vmatprep.subr.bf16.mxu0 0
      %9681 = vmatpush1.bf16.msra.mxu0 %v9626
      %9682 = vmatprep.mubr.bf16.mxu0 %v9494
      %9683 = vmatmul.mubr.bf16.gmra.mrb[0].mxu0 %v9493
      %v9684 = vpop.f32.mrb[0].mxu0
      %v9685 = vadd.f32 %v9537, %v9684
      %v9686 = vpop.f32.mrb[0].mxu0
      %v9687 = vpop.f32.mrb[0].mxu0
      %v9688 = vadd.f32 %v9537, %v9687
      %v9689 = vpop.f32.mrb[0].mxu0
      %9690 = vdwg.mxu0
      %9691 = vmatprep.subr.bf16.mxu0 0
      %9692 = vmatpush1.bf16.msra.mxu0 %v9627
      %9693 = vmatprep.subr.bf16.mxu0 0
      %9694 = vmatpush1.bf16.msra.mxu0 %v9628
      %9695 = vmatprep.subr.bf16.mxu0 0
      %9696 = vmatpush1.bf16.msra.mxu0 0
      %9697 = vmatprep.subr.bf16.mxu0 0
      %9698 = vmatpush1.bf16.msra.mxu0 0
      %9699 = vmatprep.subr.bf16.mxu0 0
      %9700 = vmatpush1.bf16.msra.mxu0 0
      %9701 = vmatprep.subr.bf16.mxu0 0
      %9702 = vmatpush1.bf16.msra.mxu0 0
      %9703 = vmatprep.subr.bf16.mxu0 0
      %9704 = vmatpush1.bf16.msra.mxu0 0
      %9705 = vmatprep.subr.bf16.mxu0 0
      %9706 = vmatpush1.bf16.msra.mxu0 0
      %9707 = vmatprep.subr.bf16.mxu0 0
      %9708 = vmatpush1.bf16.msra.mxu0 0
      %9709 = vmatprep.subr.bf16.mxu0 0
      %9710 = vmatpush1.bf16.msra.mxu0 0
      %9711 = vmatprep.subr.bf16.mxu0 0
      %9712 = vmatpush1.bf16.msra.mxu0 0
      %9713 = vmatprep.subr.bf16.mxu0 0
      %9714 = vmatpush1.bf16.msra.mxu0 0
      %9715 = vmatprep.subr.bf16.mxu0 0
      %9716 = vmatpush1.bf16.msra.mxu0 0
      %9717 = vmatprep.subr.bf16.mxu0 0
      %9718 = vmatpush1.bf16.msra.mxu0 0
      %9719 = vmatprep.subr.bf16.mxu0 0
      %9720 = vmatpush1.bf16.msra.mxu0 0
      %9721 = vmatprep.subr.bf16.mxu0 0
      %9722 = vmatpush1.bf16.msra.mxu0 0
      %9723 = vmatprep.mubr.bf16.mxu0 0
      %9724 = vmatmul.mubr.bf16.gmra.mrb[0].mxu0 %v9648
      %v9725 = vpop.f32.mrb[0].mxu0
      %v9726 = vadd.f32 %v9685, %v9725
      %v9727 = vpop.f32.mrb[0].mxu0
      %v9728 = vpop.f32.mrb[0].mxu0
      %v9729 = vadd.f32 %v9688, %v9728
      %v9730 = vpop.f32.mrb[0].mxu0
      %9731 = vdwg.mxu0
      %v9732 = vmax.f32 %v9726, 0.0
      %v9733 = vmax.f32 %v9729, 0.0
      %v9736 = vcombine.high %v9732, %v9732
      %v9737 = vcombine.high %v9733, %v9733
      %v9740 = vsel %vm9327, %v9732, -inf
      %v9741 = vsel %vm9327, %v9736, -inf
      %v9742 = vmax.f32 %v9740, %v9741
      %v9743 = vsel %vm9327, %v9733, -inf
      %v9744 = vsel %vm9327, %v9737, -inf
      %v9745 = vmax.f32 %v9743, %v9744
      %9746 = vst.msk [vmem:[#allocation8] sm:$0xf] %vm9327, %v9742
      %9747 = vst.msk [vmem:[#allocation8 + $0x4] sm:$0xf] %vm9327, %v9745
      %v9748 = vld [vmem:[#allocation8] sm:$0x7]
      %vm9749 = vcmask 256000
      %9750 = vst.msk [vmem:[#allocation9] sm:$0x7] %vm9749, %v9748
      %v9751 = vld [vmem:[#allocation8 + $0x1] sm:$0x7]
      %9753 = vrot.lane.b32.xlu0 %v9751, 32
      %v9754 = vpop.permute.xlu0 %9753
      %vm9756 = vcmask 518400
      %9757 = vst.msk [vmem:[#allocation9] sm:$0x7] %vm9756, %v9754
      %s9758 = scalar_lea.vmem [#allocation8], 4
      %v9759 = vld [vmem:[%s9758] sm:$0x7]
      %9761 = vrot.lane.b32.xlu0 %v9759, 64
      %v9762 = vpop.permute.xlu0 %9761
      %vm9764 = vcmask 780800
      %9765 = vst.msk [vmem:[#allocation9] sm:$0x7] %vm9764, %v9762
      %v9766 = vld [vmem:[%s9758 + $0x1] sm:$0x7]
      %9768 = vrot.lane.b32.xlu0 %v9766, 96
      %v9769 = vpop.permute.xlu0 %9768
      %vm9771 = vcmask 1043200
      %9772 = vst.msk [vmem:[#allocation9] sm:$0x7] %vm9771, %v9769
      %v9773 = vld [vmem:[#allocation9] sm:$0x7]
      %v9774 = vpack.c.bf16 %v9773, %v9773
      %v9775 = vld [vmem:[%s13] sm:$0xf]
      %v9776 = vld [vmem:[%s13 + $0x4] sm:$0xf]
      %v9777 = vld [vmem:[%s13 + $0x8] sm:$0xf]
      %v9778 = vld [vmem:[%s13 + $0xc] sm:$0xf]
      %v9779 = vld [vmem:[%s13 + $0x10] sm:$0xf]
      %v9780 = vld [vmem:[%s13 + $0x14] sm:$0xf]
      %v9781 = vld [vmem:[%s13 + $0x18] sm:$0xf]
      %v9782 = vld [vmem:[%s13 + $0x1c] sm:$0xf]
      %v9783 = vld [vmem:[%s13 + $0x20] sm:$0xf]
      %v9784 = vld [vmem:[%s13 + $0x24] sm:$0xf]
      %v9785 = vld [vmem:[%s13 + $0x28] sm:$0xf]
      %v9786 = vld [vmem:[%s13 + $0x2c] sm:$0xf]
      %v9787 = vld [vmem:[%s13 + $0x30] sm:$0xf]
      %v9788 = vld [vmem:[%s13 + $0x34] sm:$0xf]
      %v9789 = vld [vmem:[%s13 + $0x38] sm:$0xf]
      %v9790 = vld [vmem:[%s13 + $0x3c] sm:$0xf]
      %v9791 = vld [vmem:[%s14] sm:$0x1]
      %v9793 = vlaneseq
      %v9794 = vshrl.u32 %v9793, 7
      %v9795 = vsub.s32 0, %v9794
      %v9796 = vrot.slane %v9791, %v9795
      %v9814 = vunpack.c.l.b16 %v9775
      %v9815 = vunpack.c.l.b16 %v9776
      %v9816 = vunpack.c.l.b16 %v9777
      %v9817 = vunpack.c.l.b16 %v9778
      %v9818 = vunpack.c.l.b16 %v9779
      %v9819 = vunpack.c.l.b16 %v9780
      %v9820 = vunpack.c.l.b16 %v9781
      %v9821 = vunpack.c.l.b16 %v9782
      %v9822 = vunpack.c.l.b16 %v9783
      %v9823 = vunpack.c.l.b16 %v9784
      %v9824 = vunpack.c.l.b16 %v9785
      %v9825 = vunpack.c.l.b16 %v9786
      %v9826 = vunpack.c.l.b16 %v9787
      %v9827 = vunpack.c.l.b16 %v9788
      %v9828 = vunpack.c.l.b16 %v9789
      %v9829 = vunpack.c.l.b16 %v9790
      %v9830 = vpack.c.b16 %v9815, %v9814
      %v9831 = vpack.c.b16 %v9817, %v9816
      %v9832 = vpack.c.b16 %v9819, %v9818
      %v9833 = vpack.c.b16 %v9821, %v9820
      %v9834 = vpack.c.b16 %v9823, %v9822
      %v9835 = vpack.c.b16 %v9825, %v9824
      %v9836 = vpack.c.b16 %v9827, %v9826
      %v9837 = vpack.c.b16 %v9829, %v9828
      %9846 = vmatprep.subr.bf16.mxu0 0
      %9847 = vmatpush1.bf16.msra.mxu0 %v9830
      %9848 = vmatprep.subr.bf16.mxu0 0
      %9849 = vmatpush1.bf16.msra.mxu0 %v9831
      %9850 = vmatprep.subr.bf16.mxu0 0
      %9851 = vmatpush1.bf16.msra.mxu0 %v9832
      %9852 = vmatprep.subr.bf16.mxu0 0
      %9853 = vmatpush1.bf16.msra.mxu0 %v9833
      %9854 = vmatprep.subr.bf16.mxu0 0
      %9855 = vmatpush1.bf16.msra.mxu0 %v9834
      %9856 = vmatprep.subr.bf16.mxu0 0
      %9857 = vmatpush1.bf16.msra.mxu0 %v9835
      %9858 = vmatprep.subr.bf16.mxu0 0
      %9859 = vmatpush1.bf16.msra.mxu0 %v9836
      %9860 = vmatprep.subr.bf16.mxu0 0
      %9861 = vmatpush1.bf16.msra.mxu0 %v9837
      %9862 = vmatprep.subr.bf16.mxu0 0
      %9863 = vmatpush1.bf16.msra.mxu0 0
      %9864 = vmatprep.subr.bf16.mxu0 0
      %9865 = vmatpush1.bf16.msra.mxu0 0
      %9866 = vmatprep.subr.bf16.mxu0 0
      %9867 = vmatpush1.bf16.msra.mxu0 0
      %9868 = vmatprep.subr.bf16.mxu0 0
      %9869 = vmatpush1.bf16.msra.mxu0 0
      %9870 = vmatprep.subr.bf16.mxu0 0
      %9871 = vmatpush1.bf16.msra.mxu0 0
      %9872 = vmatprep.subr.bf16.mxu0 0
      %9873 = vmatpush1.bf16.msra.mxu0 0
      %9874 = vmatprep.subr.bf16.mxu0 0
      %9875 = vmatpush1.bf16.msra.mxu0 0
      %9876 = vmatprep.subr.bf16.mxu0 0
      %9877 = vmatpush1.bf16.msra.mxu0 0
      %9878 = vmatprep.mubr.bf16.mxu0 0
      %9879 = vmatmul.mubr.bf16.gmra.mrb[0].mxu0 %v9774
      %v9880 = vpop.f32.mrb[0].mxu0
      %v9881 = vadd.f32 %v9796, %v9880
      %v9882 = vpop.f32.mrb[0].mxu0
      %v9883 = vpop.f32.mrb[0].mxu0
      %v9884 = vpop.f32.mrb[0].mxu0
      %9885 = vdwg.mxu0
      %v9886 = vmax.f32 %v9881, 0.0
      %9887 = vst.msk [vmem:[%s492] sm:$0x7] %vm9749, %v9886
      %p9888 = scmp.lt.s32.totalorder %s26, 1
      %s9889 = scalar_select %p9888, %s26, 1
      %s9890 = smul.addr %s9889, 4
      %s9891 = scalar_lea.vmem %s15, %s9890
      // Predicated region
      $region81: #{vgg_feature_extractor.1} parent=79 // pred_check
        %p9892 = pneg %p364
      $region82: #{vgg_feature_extractor.1} parent=79 // pred_check_branch
        %9894 = sbr.rel (%p9892) target = $region84
      $region83: #{vgg_feature_extractor.1} parent=79 // pred_region
        _
      $region84: #{vgg_feature_extractor.1} parent=79 // pred_fallthru
        _
    $region80: #{vgg_feature_extractor.1} parent=5 // pred_fallthru
      _
    %p9895 = scmp.le.s32.totalorder 2, %s21
    // Predicated region
    $region85: #{vgg_feature_extractor.1} parent=5 // pred_check
      %p9896 = pneg %p9895
    $region86: #{vgg_feature_extractor.1} parent=5 // pred_check_branch
      %9898 = sbr.rel (%p9896) target = $region88
    $region87: #{vgg_feature_extractor.1} parent=5 // pred_region
      %s9899 = ssub.s32 %s21, 2
      // Predicated region
      $region89: #{vgg_feature_extractor.1} parent=87 // pred_check
        %p9900 = pneg %p370
      $region90: #{vgg_feature_extractor.1} parent=87 // pred_check_branch
        %9902 = sbr.rel (%p9900) target = $region92
      $region91: #{vgg_feature_extractor.1} parent=87 // pred_region
        %p9903 = scmp.lt.s32.totalorder %s27, 1
        %s9904 = scalar_select %p9903, %s27, 1
        %s9905 = smul.addr %s9904, 4
        %s9906 = scalar_lea.vmem %s15, %s9905
      $region92: #{vgg_feature_extractor.1} parent=87 // pred_fallthru
        _
    $region88: #{vgg_feature_extractor.1} parent=5 // pred_fallthru
      _
  $region6: #{vgg_feature_extractor.1} parent=0 // loop_footer
    %s25 = sadd.s32 1, %s21
  $region7: #{vgg_feature_extractor.1} parent=0 // loop_footer_branch
    %20 = sbr.rel target = $region3
  $region8: #{vgg_feature_extractor.1} parent=0 // loop_exit
    _

</llo_original>
